<compile_context>
chip_gen: v7x
topology: tpu7x:2x2x1
jax: 0.10.0
libtpu: 0.0.40
codegen_flags: <defaults>
</compile_context>

<pallas_src>
import jax
import jax.numpy as jnp
from jax.experimental import pallas as pl
from jax.experimental.pallas import tpu as pltpu

BN_EPS = 1e-5
LANE = 128
XYZ_PAD = 8          # pad the 3 xyz channels up to one sublane-aligned chunk
TILE_M = 128         # rows per grid step (fills MXU rows; 2 tiles -> 2 TCs on v7x)
N_PARAMS = 26        # number of prepared parameter arrays
BIG = {16: 0, 18: 1, 20: 2}   # flat-param index -> scratch slot (w7, w8, w9)


# --------------------------------------------------------------------------
# Shared 12-layer dense chain (used by the kernel body AND the JAX reference)
# --------------------------------------------------------------------------
def _mlp_chain(xyz, get):
    """xyz: (M, XYZ_PAD) f32 (cols >= 3 are zero).

    get(i) -> i-th prepared parameter value.  The kernel's `get` injects the
    DMA wait for the large tail weights right before their first use.
    """
    x = xyz.astype(jnp.bfloat16)   # cast activations once; accumulate in f32

    def dense(h, w, b, relu=True):
        acc = jnp.dot(h, w, preferred_element_type=jnp.float32) + b
        if relu:
            return jnp.maximum(acc, 0.0).astype(jnp.bfloat16)
        return acc

    # sa1: Conv2d(1x1)+BN2d+ReLU x3   (input = xyz only)
    h = dense(x, get(0), get(1))
    h = dense(h, get(2), get(3))
    h = dense(h, get(4), get(5))                                   # (M, 128)

    # sa2: first layer sees concat([xyz, l1_points]) -> split-weight form
    acc = (jnp.dot(x, get(6), preferred_element_type=jnp.float32)
           + jnp.dot(h, get(7), preferred_element_type=jnp.float32) + get(8))
    h = jnp.maximum(acc, 0.0).astype(jnp.bfloat16)
    h = dense(h, get(9), get(10))
    h = dense(h, get(11), get(12))                                 # (M, 256)

    # sa3: first layer sees concat([xyz, l2_points]) -> split-weight form
    acc = (jnp.dot(x, get(13), preferred_element_type=jnp.float32)
           + jnp.dot(h, get(14), preferred_element_type=jnp.float32) + get(15))
    h = jnp.maximum(acc, 0.0).astype(jnp.bfloat16)
    h = dense(h, get(16), get(17))       # w7: 256 -> 512   (DMA wait here)
    h = dense(h, get(18), get(19))       # w8: 512 -> 1024  (DMA wait here)

    # head: fc1+bn1+relu (drop1=id), fc2+bn2+relu (drop2=id), fc3
    h = dense(h, get(20), get(21))       # w9: 1024 -> 512  (DMA wait here)
    h = dense(h, get(22), get(23))
    return dense(h, get(24), get(25), relu=False)      # (M, 128-padded) f32


# --------------------------------------------------------------------------
# Pallas kernel: entire forward in one body, big tail weights DMA'd manually
# --------------------------------------------------------------------------
def _pointnet2_kernel(*refs):
    x_ref = refs[0]
    p_refs = refs[1:1 + N_PARAMS]
    o_ref = refs[1 + N_PARAMS]
    big_bufs = refs[2 + N_PARAMS:2 + N_PARAMS + len(BIG)]
    sem = refs[2 + N_PARAMS + len(BIG)]

    # Kick off HBM->VMEM copies of the three large tail weights so they
    # overlap with the sa1/sa2 matmuls.
    copies = {}
    for idx, slot in BIG.items():
        cp = pltpu.make_async_copy(p_refs[idx], big_bufs[slot], sem.at[slot])
        cp.start()
        copies[idx] = (cp, big_bufs[slot])

    def get(i):
        if i in copies:
            cp, buf = copies[i]
            cp.wait()            # block only right before first use
            return buf[...]
        return p_refs[i][...]

    o_ref[...] = _mlp_chain(x_ref[...], get).astype(o_ref.dtype)


def _prep_xyz(x):
    """(B, N, 3, 1) -> (B*N, XYZ_PAD) f32, zero-padded channels."""
    B, N, C, _ = x.shape
    xyz = x[..., 0].reshape(B * N, C).astype(jnp.float32)
    return jnp.pad(xyz, ((0, 0), (0, XYZ_PAD - C)))


def pointnet2_forward(x, flat_params, num_classes):
    xyz = _prep_xyz(x)
    M = xyz.shape[0]
    M_pad = ((M + TILE_M - 1) // TILE_M) * TILE_M
    if M_pad != M:
        xyz = jnp.pad(xyz, ((0, M_pad - M), (0, 0)))
    n_tiles = M_pad // TILE_M
    out_lanes = flat_params[-1].shape[1]   # fc3 bias width (lane-padded classes)

    inputs = (xyz,) + tuple(flat_params)

    # xyz is tiled along M; small weights are full-array VMEM blocks with a
    # constant index_map (DMA'd once, revisited across M-tiles); the three big
    # tail weights stay in HBM (pl.ANY) and are DMA'd manually in the kernel.
    in_specs = [pl.BlockSpec((TILE_M, XYZ_PAD), lambda i: (i, 0))]
    for j, a in enumerate(flat_params):
        if j in BIG:
            in_specs.append(pl.BlockSpec(memory_space=pl.ANY))
        else:
            in_specs.append(pl.BlockSpec(a.shape, lambda i: (0, 0)))

    scratch_shapes = (
        [pltpu.VMEM(flat_params[j].shape, flat_params[j].dtype)
         for j in sorted(BIG)]
        + [pltpu.SemaphoreType.DMA((len(BIG),))]
    )

    # Advisory cost estimate for XLA's scheduler.
    flops = 2 * M_pad * sum(int(a.shape[0]) * int(a.shape[1])
                            for a in flat_params if a.shape[0] > 1)
    weight_bytes = sum(int(a.size) * a.dtype.itemsize for a in flat_params)
    bytes_accessed = (weight_bytes + M_pad * XYZ_PAD * 4
                      + M_pad * int(out_lanes) * 4)

    out = pl.pallas_call(
        _pointnet2_kernel,
        out_shape=jax.ShapeDtypeStruct((M_pad, out_lanes), jnp.float32),
        grid=(n_tiles,),
        in_specs=in_specs,
        out_specs=pl.BlockSpec((TILE_M, out_lanes), lambda i: (i, 0)),
        scratch_shapes=scratch_shapes,
        compiler_params=pltpu.CompilerParams(
            dimension_semantics=("parallel",)),
        cost_estimate=pl.CostEstimate(
            flops=flops, transcendentals=0, bytes_accessed=bytes_accessed),
    )(*inputs)
    return out[:M, :num_classes]


def pointnet2_reference(x, flat_params, num_classes):
    """Pure-JAX reference using the exact same prepared (bf16) parameters."""
    return _mlp_chain(_prep_xyz(x), lambda i: flat_params[i])[:, :num_classes]


# --------------------------------------------------------------------------
# Deterministic parameter init (shapes from the module __init__)
# --------------------------------------------------------------------------
def _init_conv_bn(key, cin, cout):
    kw, kb, kg, kbe, km, kv = jax.random.split(key, 6)
    return dict(
        w=jax.random.normal(kw, (cin, cout), jnp.float32) * 0.1,
        b=jax.random.normal(kb, (cout,), jnp.float32) * 0.05,
        gamma=1.0 + 0.1 * jax.random.normal(kg, (cout,), jnp.float32),
        beta=0.05 * jax.random.normal(kbe, (cout,), jnp.float32),
        mean=0.05 * jax.random.normal(km, (cout,), jnp.float32),
        var=1.0 + 0.1 * jax.random.uniform(kv, (cout,), jnp.float32),
    )


def init_params(key, num_classes):
    keys = iter(jax.random.split(key, 16))

    def mlp(cin, channels):
        layers = []
        for cout in channels:
            layers.append(_init_conv_bn(next(keys), cin, cout))
            cin = cout
        return layers

    params = {
        "sa1": mlp(3, [64, 64, 128]),
        "sa2": mlp(128 + 3, [128, 128, 256]),
        "sa3": mlp(256 + 3, [256, 512, 1024]),
        "fc1": _init_conv_bn(next(keys), 1024, 512),
        "fc2": _init_conv_bn(next(keys), 512, 256),
    }
    kw, kb = jax.random.split(next(keys))
    params["fc3"] = {
        "w": jax.random.normal(kw, (256, num_classes), jnp.float32) * 0.1,
        "b": jax.random.normal(kb, (num_classes,), jnp.float32) * 0.05,
    }
    return params


# --------------------------------------------------------------------------
# One-time parameter preparation: fold BN, pad ragged dims, cast to bf16
# --------------------------------------------------------------------------
def _fold_bn(p):
    s = p["gamma"] / jnp.sqrt(p["var"] + BN_EPS)
    return p["w"] * s[None, :], (p["b"] - p["mean"]) * s + p["beta"]


def _pad_rows(w, k_pad):
    k, n = w.shape
    if k >= k_pad:
        return w
    return jnp.concatenate([w, jnp.zeros((k_pad - k, n), w.dtype)], axis=0)


def prepare_params(params, num_classes, weight_dtype=jnp.bfloat16):
    """BN folding + padding + dtype cast, done once outside the jitted forward."""
    flat = []

    def emit(w, b):
        flat.append(w.astype(weight_dtype))
        flat.append(b.reshape(1, -1).astype(jnp.float32))

    # sa1: input is xyz only (K=3 padded to XYZ_PAD with zero rows)
    w, b = _fold_bn(params["sa1"][0])
    emit(_pad_rows(w, XYZ_PAD), b)
    for p in params["sa1"][1:]:
        emit(*_fold_bn(p))

    # sa2 / sa3: first layer input is concat([xyz(3), feats]) -> split weight
    for name in ("sa2", "sa3"):
        w, b = _fold_bn(params[name][0])
        flat.append(_pad_rows(w[:3], XYZ_PAD).astype(weight_dtype))   # xyz part
        flat.append(w[3:].astype(weight_dtype))                       # feature part
        flat.append(b.reshape(1, -1).astype(jnp.float32))
        for p in params[name][1:]:
            emit(*_fold_bn(p))

    # head
    emit(*_fold_bn(params["fc1"]))
    emit(*_fold_bn(params["fc2"]))

    # fc3 (no BN): pad output channels to a lane-dense multiple of 128
    w, b = params["fc3"]["w"], params["fc3"]["b"]
    n_pad = ((num_classes + LANE - 1) // LANE) * LANE
    w = jnp.concatenate(
        [w, jnp.zeros((w.shape[0], n_pad - num_classes), w.dtype)], axis=1)
    b = jnp.concatenate([b, jnp.zeros((n_pad - num_classes,), b.dtype)])
    emit(w, b)

    assert len(flat) == N_PARAMS
    return tuple(flat)


# --------------------------------------------------------------------------
if __name__ == "__main__":
    num_classes = 10
    # N must be 1 (the module's view(B,-1) -> Linear(1024) constraint); the
    # batch dim supplies the M rows that fill the MXU / both v7x TensorCores.
    B, N = 256, 1

    key = jax.random.PRNGKey(0)
    kx, kp = jax.random.split(key)
    x = jax.random.normal(kx, (B, N, 3, 1), jnp.float32)
    params = init_params(kp, num_classes)
    flat = prepare_params(params, num_classes)  # BN folded, padded, bf16 — once

    fwd = jax.jit(pointnet2_forward, static_argnames="num_classes")
    out = jax.block_until_ready(fwd(x, flat, num_classes=num_classes))
    ref = pointnet2_reference(x, flat, num_classes)

    assert out.shape == (B, num_classes), out.shape
    assert jnp.allclose(out, ref, atol=5e-3, rtol=5e-3), "mismatch vs JAX reference"
    print("KERNEL_OK")
</pallas_src>

<mosaic_0001>
module attributes {stable_mosaic.version = 11 : i64} {
  func.func @_pointnet2_kernel(%arg0: i32, %arg1: memref<128x8xf32, #tpu.memory_space<vmem>>, %arg2: memref<8x64xbf16, #tpu.memory_space<vmem>>, %arg3: memref<1x64xf32, #tpu.memory_space<vmem>>, %arg4: memref<64x64xbf16, #tpu.memory_space<vmem>>, %arg5: memref<1x64xf32, #tpu.memory_space<vmem>>, %arg6: memref<64x128xbf16, #tpu.memory_space<vmem>>, %arg7: memref<1x128xf32, #tpu.memory_space<vmem>>, %arg8: memref<8x128xbf16, #tpu.memory_space<vmem>>, %arg9: memref<128x128xbf16, #tpu.memory_space<vmem>>, %arg10: memref<1x128xf32, #tpu.memory_space<vmem>>, %arg11: memref<128x128xbf16, #tpu.memory_space<vmem>>, %arg12: memref<1x128xf32, #tpu.memory_space<vmem>>, %arg13: memref<128x256xbf16, #tpu.memory_space<vmem>>, %arg14: memref<1x256xf32, #tpu.memory_space<vmem>>, %arg15: memref<8x256xbf16, #tpu.memory_space<vmem>>, %arg16: memref<256x256xbf16, #tpu.memory_space<vmem>>, %arg17: memref<1x256xf32, #tpu.memory_space<vmem>>, %arg18: memref<256x512xbf16, #tpu.memory_space<any>>, %arg19: memref<1x512xf32, #tpu.memory_space<vmem>>, %arg20: memref<512x1024xbf16, #tpu.memory_space<any>>, %arg21: memref<1x1024xf32, #tpu.memory_space<vmem>>, %arg22: memref<1024x512xbf16, #tpu.memory_space<any>>, %arg23: memref<1x512xf32, #tpu.memory_space<vmem>>, %arg24: memref<512x256xbf16, #tpu.memory_space<vmem>>, %arg25: memref<1x256xf32, #tpu.memory_space<vmem>>, %arg26: memref<256x128xbf16, #tpu.memory_space<vmem>>, %arg27: memref<1x128xf32, #tpu.memory_space<vmem>>, %arg28: memref<128x128xf32, #tpu.memory_space<vmem>>, %arg29: memref<256x512xbf16, #tpu.memory_space<vmem>>, %arg30: memref<512x1024xbf16, #tpu.memory_space<vmem>>, %arg31: memref<1024x512xbf16, #tpu.memory_space<vmem>>, %arg32: memref<3x!tpu.dma_semaphore, #tpu.memory_space<semaphore_mem>>) attributes {dimension_semantics = [#tpu.dimension_semantics<parallel>], iteration_bounds = array<i64: 2>, scalar_prefetch = 0 : i64, scratch_operands = 4 : i64, tpu.core_type = #tpu.core_type<tc>, window_params = [{transform_indices = @transform_0, window_bounds = array<i64: 128, 8>}, {pipeline_mode = #tpu.pipeline_mode<synchronous>, transform_indices = @transform_1, window_bounds = array<i64: 8, 64>}, {pipeline_mode = #tpu.pipeline_mode<synchronous>, transform_indices = @transform_2, window_bounds = array<i64: 1, 64>}, {pipeline_mode = #tpu.pipeline_mode<synchronous>, transform_indices = @transform_3, window_bounds = array<i64: 64, 64>}, {pipeline_mode = #tpu.pipeline_mode<synchronous>, transform_indices = @transform_4, window_bounds = array<i64: 1, 64>}, {pipeline_mode = #tpu.pipeline_mode<synchronous>, transform_indices = @transform_5, window_bounds = array<i64: 64, 128>}, {pipeline_mode = #tpu.pipeline_mode<synchronous>, transform_indices = @transform_6, window_bounds = array<i64: 1, 128>}, {pipeline_mode = #tpu.pipeline_mode<synchronous>, transform_indices = @transform_7, window_bounds = array<i64: 8, 128>}, {pipeline_mode = #tpu.pipeline_mode<synchronous>, transform_indices = @transform_8, window_bounds = array<i64: 128, 128>}, {pipeline_mode = #tpu.pipeline_mode<synchronous>, transform_indices = @transform_9, window_bounds = array<i64: 1, 128>}, {pipeline_mode = #tpu.pipeline_mode<synchronous>, transform_indices = @transform_10, window_bounds = array<i64: 128, 128>}, {pipeline_mode = #tpu.pipeline_mode<synchronous>, transform_indices = @transform_11, window_bounds = array<i64: 1, 128>}, {pipeline_mode = #tpu.pipeline_mode<synchronous>, transform_indices = @transform_12, window_bounds = array<i64: 128, 256>}, {pipeline_mode = #tpu.pipeline_mode<synchronous>, transform_indices = @transform_13, window_bounds = array<i64: 1, 256>}, {pipeline_mode = #tpu.pipeline_mode<synchronous>, transform_indices = @transform_14, window_bounds = array<i64: 8, 256>}, {pipeline_mode = #tpu.pipeline_mode<synchronous>, transform_indices = @transform_15, window_bounds = array<i64: 256, 256>}, {pipeline_mode = #tpu.pipeline_mode<synchronous>, transform_indices = @transform_16, window_bounds = array<i64: 1, 256>}, {}, {pipeline_mode = #tpu.pipeline_mode<synchronous>, transform_indices = @transform_18, window_bounds = array<i64: 1, 512>}, {}, {pipeline_mode = #tpu.pipeline_mode<synchronous>, transform_indices = @transform_20, window_bounds = array<i64: 1, 1024>}, {}, {pipeline_mode = #tpu.pipeline_mode<synchronous>, transform_indices = @transform_22, window_bounds = array<i64: 1, 512>}, {pipeline_mode = #tpu.pipeline_mode<synchronous>, transform_indices = @transform_23, window_bounds = array<i64: 512, 256>}, {pipeline_mode = #tpu.pipeline_mode<synchronous>, transform_indices = @transform_24, window_bounds = array<i64: 1, 256>}, {pipeline_mode = #tpu.pipeline_mode<synchronous>, transform_indices = @transform_25, window_bounds = array<i64: 256, 128>}, {pipeline_mode = #tpu.pipeline_mode<synchronous>, transform_indices = @transform_26, window_bounds = array<i64: 1, 128>}, {transform_indices = @transform_27, window_bounds = array<i64: 128, 128>}]} {
    %c0_i32 = arith.constant 0 : i32
    %0 = tpu.memref_slice %arg32[%c0_i32] : memref<3x!tpu.dma_semaphore, #tpu.memory_space<semaphore_mem>> -> memref<1x!tpu.dma_semaphore, #tpu.memory_space<semaphore_mem>>
    %1 = tpu.memref_squeeze %0 : memref<1x!tpu.dma_semaphore, #tpu.memory_space<semaphore_mem>> -> memref<!tpu.dma_semaphore, #tpu.memory_space<semaphore_mem>>
    tpu.enqueue_dma source(%arg18 : memref<256x512xbf16, #tpu.memory_space<any>>) target(%arg29 : memref<256x512xbf16, #tpu.memory_space<vmem>>) target_semaphore(%1 : memref<!tpu.dma_semaphore, #tpu.memory_space<semaphore_mem>>)
    %c1_i32 = arith.constant 1 : i32
    %2 = tpu.memref_slice %arg32[%c1_i32] : memref<3x!tpu.dma_semaphore, #tpu.memory_space<semaphore_mem>> -> memref<1x!tpu.dma_semaphore, #tpu.memory_space<semaphore_mem>>
    %3 = tpu.memref_squeeze %2 : memref<1x!tpu.dma_semaphore, #tpu.memory_space<semaphore_mem>> -> memref<!tpu.dma_semaphore, #tpu.memory_space<semaphore_mem>>
    tpu.enqueue_dma source(%arg20 : memref<512x1024xbf16, #tpu.memory_space<any>>) target(%arg30 : memref<512x1024xbf16, #tpu.memory_space<vmem>>) target_semaphore(%3 : memref<!tpu.dma_semaphore, #tpu.memory_space<semaphore_mem>>)
    %c2_i32 = arith.constant 2 : i32
    %4 = tpu.memref_slice %arg32[%c2_i32] : memref<3x!tpu.dma_semaphore, #tpu.memory_space<semaphore_mem>> -> memref<1x!tpu.dma_semaphore, #tpu.memory_space<semaphore_mem>>
    %5 = tpu.memref_squeeze %4 : memref<1x!tpu.dma_semaphore, #tpu.memory_space<semaphore_mem>> -> memref<!tpu.dma_semaphore, #tpu.memory_space<semaphore_mem>>
    tpu.enqueue_dma source(%arg22 : memref<1024x512xbf16, #tpu.memory_space<any>>) target(%arg31 : memref<1024x512xbf16, #tpu.memory_space<vmem>>) target_semaphore(%5 : memref<!tpu.dma_semaphore, #tpu.memory_space<semaphore_mem>>)
    %c0 = arith.constant 0 : index
    %c0_0 = arith.constant 0 : index
    %6 = vector.load %arg1[%c0, %c0_0] : memref<128x8xf32, #tpu.memory_space<vmem>>, vector<128x8xf32>
    %7 = arith.truncf %6 : vector<128x8xf32> to vector<128x8xbf16>
    %c0_1 = arith.constant 0 : index
    %c0_2 = arith.constant 0 : index
    %8 = vector.load %arg2[%c0_1, %c0_2] : memref<8x64xbf16, #tpu.memory_space<vmem>>, vector<8x64xbf16>
    %c0_3 = arith.constant 0 : index
    %c0_4 = arith.constant 0 : index
    %9 = vector.load %arg3[%c0_3, %c0_4] : memref<1x64xf32, #tpu.memory_space<vmem>>, vector<1x64xf32>
    %cst = arith.constant dense<0.000000e+00> : vector<128x64xf32>
    %10 = tpu.matmul %7, %8, %cst {dimension_numbers = #tpu.dot_dimension_numbers<[1], [0], [0], [1], [0, 0, 1, 1], [], []>} : vector<128x8xbf16>, vector<8x64xbf16>, vector<128x64xf32> -> vector<128x64xf32>
    %11 = vector.broadcast %9 : vector<1x64xf32> to vector<128x64xf32>
    %12 = arith.addf %10, %11 : vector<128x64xf32>
    %cst_5 = arith.constant 0.000000e+00 : f32
    %13 = vector.broadcast %cst_5 : f32 to vector<128x64xf32>
    %14 = arith.maximumf %12, %13 : vector<128x64xf32>
    %15 = arith.truncf %14 : vector<128x64xf32> to vector<128x64xbf16>
    %c0_6 = arith.constant 0 : index
    %c0_7 = arith.constant 0 : index
    %16 = vector.load %arg4[%c0_6, %c0_7] : memref<64x64xbf16, #tpu.memory_space<vmem>>, vector<64x64xbf16>
    %c0_8 = arith.constant 0 : index
    %c0_9 = arith.constant 0 : index
    %17 = vector.load %arg5[%c0_8, %c0_9] : memref<1x64xf32, #tpu.memory_space<vmem>>, vector<1x64xf32>
    %cst_10 = arith.constant dense<0.000000e+00> : vector<128x64xf32>
    %18 = tpu.matmul %15, %16, %cst_10 {dimension_numbers = #tpu.dot_dimension_numbers<[1], [0], [0], [1], [0, 0, 1, 1], [], []>} : vector<128x64xbf16>, vector<64x64xbf16>, vector<128x64xf32> -> vector<128x64xf32>
    %19 = vector.broadcast %17 : vector<1x64xf32> to vector<128x64xf32>
    %20 = arith.addf %18, %19 : vector<128x64xf32>
    %cst_11 = arith.constant 0.000000e+00 : f32
    %21 = vector.broadcast %cst_11 : f32 to vector<128x64xf32>
    %22 = arith.maximumf %20, %21 : vector<128x64xf32>
    %23 = arith.truncf %22 : vector<128x64xf32> to vector<128x64xbf16>
    %c0_12 = arith.constant 0 : index
    %c0_13 = arith.constant 0 : index
    %24 = vector.load %arg6[%c0_12, %c0_13] : memref<64x128xbf16, #tpu.memory_space<vmem>>, vector<64x128xbf16>
    %c0_14 = arith.constant 0 : index
    %c0_15 = arith.constant 0 : index
    %25 = vector.load %arg7[%c0_14, %c0_15] : memref<1x128xf32, #tpu.memory_space<vmem>>, vector<1x128xf32>
    %cst_16 = arith.constant dense<0.000000e+00> : vector<128x128xf32>
    %26 = tpu.matmul %23, %24, %cst_16 {dimension_numbers = #tpu.dot_dimension_numbers<[1], [0], [0], [1], [0, 0, 1, 1], [], []>} : vector<128x64xbf16>, vector<64x128xbf16>, vector<128x128xf32> -> vector<128x128xf32>
    %27 = vector.broadcast %25 : vector<1x128xf32> to vector<128x128xf32>
    %28 = arith.addf %26, %27 : vector<128x128xf32>
    %cst_17 = arith.constant 0.000000e+00 : f32
    %29 = vector.broadcast %cst_17 : f32 to vector<128x128xf32>
    %30 = arith.maximumf %28, %29 : vector<128x128xf32>
    %31 = arith.truncf %30 : vector<128x128xf32> to vector<128x128xbf16>
    %c0_18 = arith.constant 0 : index
    %c0_19 = arith.constant 0 : index
    %32 = vector.load %arg8[%c0_18, %c0_19] : memref<8x128xbf16, #tpu.memory_space<vmem>>, vector<8x128xbf16>
    %cst_20 = arith.constant dense<0.000000e+00> : vector<128x128xf32>
    %33 = tpu.matmul %7, %32, %cst_20 {dimension_numbers = #tpu.dot_dimension_numbers<[1], [0], [0], [1], [0, 0, 1, 1], [], []>} : vector<128x8xbf16>, vector<8x128xbf16>, vector<128x128xf32> -> vector<128x128xf32>
    %c0_21 = arith.constant 0 : index
    %c0_22 = arith.constant 0 : index
    %34 = vector.load %arg9[%c0_21, %c0_22] : memref<128x128xbf16, #tpu.memory_space<vmem>>, vector<128x128xbf16>
    %cst_23 = arith.constant dense<0.000000e+00> : vector<128x128xf32>
    %35 = tpu.matmul %31, %34, %cst_23 {dimension_numbers = #tpu.dot_dimension_numbers<[1], [0], [0], [1], [0, 0, 1, 1], [], []>} : vector<128x128xbf16>, vector<128x128xbf16>, vector<128x128xf32> -> vector<128x128xf32>
    %36 = arith.addf %33, %35 : vector<128x128xf32>
    %c0_24 = arith.constant 0 : index
    %c0_25 = arith.constant 0 : index
    %37 = vector.load %arg10[%c0_24, %c0_25] : memref<1x128xf32, #tpu.memory_space<vmem>>, vector<1x128xf32>
    %38 = vector.broadcast %37 : vector<1x128xf32> to vector<128x128xf32>
    %39 = arith.addf %36, %38 : vector<128x128xf32>
    %cst_26 = arith.constant 0.000000e+00 : f32
    %40 = vector.broadcast %cst_26 : f32 to vector<128x128xf32>
    %41 = arith.maximumf %39, %40 : vector<128x128xf32>
    %42 = arith.truncf %41 : vector<128x128xf32> to vector<128x128xbf16>
    %c0_27 = arith.constant 0 : index
    %c0_28 = arith.constant 0 : index
    %43 = vector.load %arg11[%c0_27, %c0_28] : memref<128x128xbf16, #tpu.memory_space<vmem>>, vector<128x128xbf16>
    %c0_29 = arith.constant 0 : index
    %c0_30 = arith.constant 0 : index
    %44 = vector.load %arg12[%c0_29, %c0_30] : memref<1x128xf32, #tpu.memory_space<vmem>>, vector<1x128xf32>
    %cst_31 = arith.constant dense<0.000000e+00> : vector<128x128xf32>
    %45 = tpu.matmul %42, %43, %cst_31 {dimension_numbers = #tpu.dot_dimension_numbers<[1], [0], [0], [1], [0, 0, 1, 1], [], []>} : vector<128x128xbf16>, vector<128x128xbf16>, vector<128x128xf32> -> vector<128x128xf32>
    %46 = vector.broadcast %44 : vector<1x128xf32> to vector<128x128xf32>
    %47 = arith.addf %45, %46 : vector<128x128xf32>
    %cst_32 = arith.constant 0.000000e+00 : f32
    %48 = vector.broadcast %cst_32 : f32 to vector<128x128xf32>
    %49 = arith.maximumf %47, %48 : vector<128x128xf32>
    %50 = arith.truncf %49 : vector<128x128xf32> to vector<128x128xbf16>
    %c0_33 = arith.constant 0 : index
    %c0_34 = arith.constant 0 : index
    %51 = vector.load %arg13[%c0_33, %c0_34] : memref<128x256xbf16, #tpu.memory_space<vmem>>, vector<128x256xbf16>
    %c0_35 = arith.constant 0 : index
    %c0_36 = arith.constant 0 : index
    %52 = vector.load %arg14[%c0_35, %c0_36] : memref<1x256xf32, #tpu.memory_space<vmem>>, vector<1x256xf32>
    %cst_37 = arith.constant dense<0.000000e+00> : vector<128x256xf32>
    %53 = tpu.matmul %50, %51, %cst_37 {dimension_numbers = #tpu.dot_dimension_numbers<[1], [0], [0], [1], [0, 0, 1, 1], [], []>} : vector<128x128xbf16>, vector<128x256xbf16>, vector<128x256xf32> -> vector<128x256xf32>
    %54 = vector.broadcast %52 : vector<1x256xf32> to vector<128x256xf32>
    %55 = arith.addf %53, %54 : vector<128x256xf32>
    %cst_38 = arith.constant 0.000000e+00 : f32
    %56 = vector.broadcast %cst_38 : f32 to vector<128x256xf32>
    %57 = arith.maximumf %55, %56 : vector<128x256xf32>
    %58 = arith.truncf %57 : vector<128x256xf32> to vector<128x256xbf16>
    %c0_39 = arith.constant 0 : index
    %c0_40 = arith.constant 0 : index
    %59 = vector.load %arg15[%c0_39, %c0_40] : memref<8x256xbf16, #tpu.memory_space<vmem>>, vector<8x256xbf16>
    %cst_41 = arith.constant dense<0.000000e+00> : vector<128x256xf32>
    %60 = tpu.matmul %7, %59, %cst_41 {dimension_numbers = #tpu.dot_dimension_numbers<[1], [0], [0], [1], [0, 0, 1, 1], [], []>} : vector<128x8xbf16>, vector<8x256xbf16>, vector<128x256xf32> -> vector<128x256xf32>
    %c0_42 = arith.constant 0 : index
    %c0_43 = arith.constant 0 : index
    %61 = vector.load %arg16[%c0_42, %c0_43] : memref<256x256xbf16, #tpu.memory_space<vmem>>, vector<256x256xbf16>
    %cst_44 = arith.constant dense<0.000000e+00> : vector<128x256xf32>
    %62 = tpu.matmul %58, %61, %cst_44 {dimension_numbers = #tpu.dot_dimension_numbers<[1], [0], [0], [1], [0, 0, 1, 1], [], []>} : vector<128x256xbf16>, vector<256x256xbf16>, vector<128x256xf32> -> vector<128x256xf32>
    %63 = arith.addf %60, %62 : vector<128x256xf32>
    %c0_45 = arith.constant 0 : index
    %c0_46 = arith.constant 0 : index
    %64 = vector.load %arg17[%c0_45, %c0_46] : memref<1x256xf32, #tpu.memory_space<vmem>>, vector<1x256xf32>
    %65 = vector.broadcast %64 : vector<1x256xf32> to vector<128x256xf32>
    %66 = arith.addf %63, %65 : vector<128x256xf32>
    %cst_47 = arith.constant 0.000000e+00 : f32
    %67 = vector.broadcast %cst_47 : f32 to vector<128x256xf32>
    %68 = arith.maximumf %66, %67 : vector<128x256xf32>
    %69 = arith.truncf %68 : vector<128x256xf32> to vector<128x256xbf16>
    %c0_i32_48 = arith.constant 0 : i32
    %70 = tpu.memref_slice %arg32[%c0_i32_48] : memref<3x!tpu.dma_semaphore, #tpu.memory_space<semaphore_mem>> -> memref<1x!tpu.dma_semaphore, #tpu.memory_space<semaphore_mem>>
    %71 = tpu.memref_squeeze %70 : memref<1x!tpu.dma_semaphore, #tpu.memory_space<semaphore_mem>> -> memref<!tpu.dma_semaphore, #tpu.memory_space<semaphore_mem>>
    tpu.wait_dma2 semaphore(%71 : memref<!tpu.dma_semaphore, #tpu.memory_space<semaphore_mem>>) src(%arg18 : memref<256x512xbf16, #tpu.memory_space<any>>) dst(%arg29 : memref<256x512xbf16, #tpu.memory_space<vmem>>)
    %c0_49 = arith.constant 0 : index
    %c0_50 = arith.constant 0 : index
    %72 = vector.load %arg29[%c0_49, %c0_50] : memref<256x512xbf16, #tpu.memory_space<vmem>>, vector<256x512xbf16>
    %c0_51 = arith.constant 0 : index
    %c0_52 = arith.constant 0 : index
    %73 = vector.load %arg19[%c0_51, %c0_52] : memref<1x512xf32, #tpu.memory_space<vmem>>, vector<1x512xf32>
    %cst_53 = arith.constant dense<0.000000e+00> : vector<128x512xf32>
    %74 = tpu.matmul %69, %72, %cst_53 {dimension_numbers = #tpu.dot_dimension_numbers<[1], [0], [0], [1], [0, 0, 1, 1], [], []>} : vector<128x256xbf16>, vector<256x512xbf16>, vector<128x512xf32> -> vector<128x512xf32>
    %75 = vector.broadcast %73 : vector<1x512xf32> to vector<128x512xf32>
    %76 = arith.addf %74, %75 : vector<128x512xf32>
    %cst_54 = arith.constant 0.000000e+00 : f32
    %77 = vector.broadcast %cst_54 : f32 to vector<128x512xf32>
    %78 = arith.maximumf %76, %77 : vector<128x512xf32>
    %79 = arith.truncf %78 : vector<128x512xf32> to vector<128x512xbf16>
    %c1_i32_55 = arith.constant 1 : i32
    %80 = tpu.memref_slice %arg32[%c1_i32_55] : memref<3x!tpu.dma_semaphore, #tpu.memory_space<semaphore_mem>> -> memref<1x!tpu.dma_semaphore, #tpu.memory_space<semaphore_mem>>
    %81 = tpu.memref_squeeze %80 : memref<1x!tpu.dma_semaphore, #tpu.memory_space<semaphore_mem>> -> memref<!tpu.dma_semaphore, #tpu.memory_space<semaphore_mem>>
    tpu.wait_dma2 semaphore(%81 : memref<!tpu.dma_semaphore, #tpu.memory_space<semaphore_mem>>) src(%arg20 : memref<512x1024xbf16, #tpu.memory_space<any>>) dst(%arg30 : memref<512x1024xbf16, #tpu.memory_space<vmem>>)
    %c0_56 = arith.constant 0 : index
    %c0_57 = arith.constant 0 : index
    %82 = vector.load %arg30[%c0_56, %c0_57] : memref<512x1024xbf16, #tpu.memory_space<vmem>>, vector<512x1024xbf16>
    %c0_58 = arith.constant 0 : index
    %c0_59 = arith.constant 0 : index
    %83 = vector.load %arg21[%c0_58, %c0_59] : memref<1x1024xf32, #tpu.memory_space<vmem>>, vector<1x1024xf32>
    %cst_60 = arith.constant dense<0.000000e+00> : vector<128x1024xf32>
    %84 = tpu.matmul %79, %82, %cst_60 {dimension_numbers = #tpu.dot_dimension_numbers<[1], [0], [0], [1], [0, 0, 1, 1], [], []>} : vector<128x512xbf16>, vector<512x1024xbf16>, vector<128x1024xf32> -> vector<128x1024xf32>
    %85 = vector.broadcast %83 : vector<1x1024xf32> to vector<128x1024xf32>
    %86 = arith.addf %84, %85 : vector<128x1024xf32>
    %cst_61 = arith.constant 0.000000e+00 : f32
    %87 = vector.broadcast %cst_61 : f32 to vector<128x1024xf32>
    %88 = arith.maximumf %86, %87 : vector<128x1024xf32>
    %89 = arith.truncf %88 : vector<128x1024xf32> to vector<128x1024xbf16>
    %c2_i32_62 = arith.constant 2 : i32
    %90 = tpu.memref_slice %arg32[%c2_i32_62] : memref<3x!tpu.dma_semaphore, #tpu.memory_space<semaphore_mem>> -> memref<1x!tpu.dma_semaphore, #tpu.memory_space<semaphore_mem>>
    %91 = tpu.memref_squeeze %90 : memref<1x!tpu.dma_semaphore, #tpu.memory_space<semaphore_mem>> -> memref<!tpu.dma_semaphore, #tpu.memory_space<semaphore_mem>>
    tpu.wait_dma2 semaphore(%91 : memref<!tpu.dma_semaphore, #tpu.memory_space<semaphore_mem>>) src(%arg22 : memref<1024x512xbf16, #tpu.memory_space<any>>) dst(%arg31 : memref<1024x512xbf16, #tpu.memory_space<vmem>>)
    %c0_63 = arith.constant 0 : index
    %c0_64 = arith.constant 0 : index
    %92 = vector.load %arg31[%c0_63, %c0_64] : memref<1024x512xbf16, #tpu.memory_space<vmem>>, vector<1024x512xbf16>
    %c0_65 = arith.constant 0 : index
    %c0_66 = arith.constant 0 : index
    %93 = vector.load %arg23[%c0_65, %c0_66] : memref<1x512xf32, #tpu.memory_space<vmem>>, vector<1x512xf32>
    %cst_67 = arith.constant dense<0.000000e+00> : vector<128x512xf32>
    %94 = tpu.matmul %89, %92, %cst_67 {dimension_numbers = #tpu.dot_dimension_numbers<[1], [0], [0], [1], [0, 0, 1, 1], [], []>} : vector<128x1024xbf16>, vector<1024x512xbf16>, vector<128x512xf32> -> vector<128x512xf32>
    %95 = vector.broadcast %93 : vector<1x512xf32> to vector<128x512xf32>
    %96 = arith.addf %94, %95 : vector<128x512xf32>
    %cst_68 = arith.constant 0.000000e+00 : f32
    %97 = vector.broadcast %cst_68 : f32 to vector<128x512xf32>
    %98 = arith.maximumf %96, %97 : vector<128x512xf32>
    %99 = arith.truncf %98 : vector<128x512xf32> to vector<128x512xbf16>
    %c0_69 = arith.constant 0 : index
    %c0_70 = arith.constant 0 : index
    %100 = vector.load %arg24[%c0_69, %c0_70] : memref<512x256xbf16, #tpu.memory_space<vmem>>, vector<512x256xbf16>
    %c0_71 = arith.constant 0 : index
    %c0_72 = arith.constant 0 : index
    %101 = vector.load %arg25[%c0_71, %c0_72] : memref<1x256xf32, #tpu.memory_space<vmem>>, vector<1x256xf32>
    %cst_73 = arith.constant dense<0.000000e+00> : vector<128x256xf32>
    %102 = tpu.matmul %99, %100, %cst_73 {dimension_numbers = #tpu.dot_dimension_numbers<[1], [0], [0], [1], [0, 0, 1, 1], [], []>} : vector<128x512xbf16>, vector<512x256xbf16>, vector<128x256xf32> -> vector<128x256xf32>
    %103 = vector.broadcast %101 : vector<1x256xf32> to vector<128x256xf32>
    %104 = arith.addf %102, %103 : vector<128x256xf32>
    %cst_74 = arith.constant 0.000000e+00 : f32
    %105 = vector.broadcast %cst_74 : f32 to vector<128x256xf32>
    %106 = arith.maximumf %104, %105 : vector<128x256xf32>
    %107 = arith.truncf %106 : vector<128x256xf32> to vector<128x256xbf16>
    %c0_75 = arith.constant 0 : index
    %c0_76 = arith.constant 0 : index
    %108 = vector.load %arg26[%c0_75, %c0_76] : memref<256x128xbf16, #tpu.memory_space<vmem>>, vector<256x128xbf16>
    %c0_77 = arith.constant 0 : index
    %c0_78 = arith.constant 0 : index
    %109 = vector.load %arg27[%c0_77, %c0_78] : memref<1x128xf32, #tpu.memory_space<vmem>>, vector<1x128xf32>
    %cst_79 = arith.constant dense<0.000000e+00> : vector<128x128xf32>
    %110 = tpu.matmul %107, %108, %cst_79 {dimension_numbers = #tpu.dot_dimension_numbers<[1], [0], [0], [1], [0, 0, 1, 1], [], []>} : vector<128x256xbf16>, vector<256x128xbf16>, vector<128x128xf32> -> vector<128x128xf32>
    %111 = vector.broadcast %109 : vector<1x128xf32> to vector<128x128xf32>
    %112 = arith.addf %110, %111 : vector<128x128xf32>
    %c0_80 = arith.constant 0 : index
    %c0_81 = arith.constant 0 : index
    %113 = vector.load %arg28[%c0_80, %c0_81] : memref<128x128xf32, #tpu.memory_space<vmem>>, vector<128x128xf32>
    tpu.vector_store %arg28[%c0_80, %c0_81], %112 {strides = array<i32>} : memref<128x128xf32, #tpu.memory_space<vmem>>, vector<128x128xf32>,
    return
  }
  func.func @transform_0(%arg0: i32) -> (i32, i32) {
    %c0_i32 = arith.constant 0 : i32
    %c0_i32_0 = arith.constant 0 : i32
    return %arg0, %c0_i32 : i32, i32
  }
  func.func @transform_1(%arg0: i32) -> (i32, i32) {
    %c0_i32 = arith.constant 0 : i32
    %c0_i32_0 = arith.constant 0 : i32
    %c0_i32_1 = arith.constant 0 : i32
    return %c0_i32, %c0_i32_0 : i32, i32
  }
  func.func @transform_2(%arg0: i32) -> (i32, i32) {
    %c0_i32 = arith.constant 0 : i32
    %c0_i32_0 = arith.constant 0 : i32
    %c0_i32_1 = arith.constant 0 : i32
    return %c0_i32, %c0_i32_0 : i32, i32
  }
  func.func @transform_3(%arg0: i32) -> (i32, i32) {
    %c0_i32 = arith.constant 0 : i32
    %c0_i32_0 = arith.constant 0 : i32
    %c0_i32_1 = arith.constant 0 : i32
    return %c0_i32, %c0_i32_0 : i32, i32
  }
  func.func @transform_4(%arg0: i32) -> (i32, i32) {
    %c0_i32 = arith.constant 0 : i32
    %c0_i32_0 = arith.constant 0 : i32
    %c0_i32_1 = arith.constant 0 : i32
    return %c0_i32, %c0_i32_0 : i32, i32
  }
  func.func @transform_5(%arg0: i32) -> (i32, i32) {
    %c0_i32 = arith.constant 0 : i32
    %c0_i32_0 = arith.constant 0 : i32
    %c0_i32_1 = arith.constant 0 : i32
    return %c0_i32, %c0_i32_0 : i32, i32
  }
  func.func @transform_6(%arg0: i32) -> (i32, i32) {
    %c0_i32 = arith.constant 0 : i32
    %c0_i32_0 = arith.constant 0 : i32
    %c0_i32_1 = arith.constant 0 : i32
    return %c0_i32, %c0_i32_0 : i32, i32
  }
  func.func @transform_7(%arg0: i32) -> (i32, i32) {
    %c0_i32 = arith.constant 0 : i32
    %c0_i32_0 = arith.constant 0 : i32
    %c0_i32_1 = arith.constant 0 : i32
    return %c0_i32, %c0_i32_0 : i32, i32
  }
  func.func @transform_8(%arg0: i32) -> (i32, i32) {
    %c0_i32 = arith.constant 0 : i32
    %c0_i32_0 = arith.constant 0 : i32
    %c0_i32_1 = arith.constant 0 : i32
    return %c0_i32, %c0_i32_0 : i32, i32
  }
  func.func @transform_9(%arg0: i32) -> (i32, i32) {
    %c0_i32 = arith.constant 0 : i32
    %c0_i32_0 = arith.constant 0 : i32
    %c0_i32_1 = arith.constant 0 : i32
    return %c0_i32, %c0_i32_0 : i32, i32
  }
  func.func @transform_10(%arg0: i32) -> (i32, i32) {
    %c0_i32 = arith.constant 0 : i32
    %c0_i32_0 = arith.constant 0 : i32
    %c0_i32_1 = arith.constant 0 : i32
    return %c0_i32, %c0_i32_0 : i32, i32
  }
  func.func @transform_11(%arg0: i32) -> (i32, i32) {
    %c0_i32 = arith.constant 0 : i32
    %c0_i32_0 = arith.constant 0 : i32
    %c0_i32_1 = arith.constant 0 : i32
    return %c0_i32, %c0_i32_0 : i32, i32
  }
  func.func @transform_12(%arg0: i32) -> (i32, i32) {
    %c0_i32 = arith.constant 0 : i32
    %c0_i32_0 = arith.constant 0 : i32
    %c0_i32_1 = arith.constant 0 : i32
    return %c0_i32, %c0_i32_0 : i32, i32
  }
  func.func @transform_13(%arg0: i32) -> (i32, i32) {
    %c0_i32 = arith.constant 0 : i32
    %c0_i32_0 = arith.constant 0 : i32
    %c0_i32_1 = arith.constant 0 : i32
    return %c0_i32, %c0_i32_0 : i32, i32
  }
  func.func @transform_14(%arg0: i32) -> (i32, i32) {
    %c0_i32 = arith.constant 0 : i32
    %c0_i32_0 = arith.constant 0 : i32
    %c0_i32_1 = arith.constant 0 : i32
    return %c0_i32, %c0_i32_0 : i32, i32
  }
  func.func @transform_15(%arg0: i32) -> (i32, i32) {
    %c0_i32 = arith.constant 0 : i32
    %c0_i32_0 = arith.constant 0 : i32
    %c0_i32_1 = arith.constant 0 : i32
    return %c0_i32, %c0_i32_0 : i32, i32
  }
  func.func @transform_16(%arg0: i32) -> (i32, i32) {
    %c0_i32 = arith.constant 0 : i32
    %c0_i32_0 = arith.constant 0 : i32
    %c0_i32_1 = arith.constant 0 : i32
    return %c0_i32, %c0_i32_0 : i32, i32
  }
  func.func @transform_18(%arg0: i32) -> (i32, i32) {
    %c0_i32 = arith.constant 0 : i32
    %c0_i32_0 = arith.constant 0 : i32
    %c0_i32_1 = arith.constant 0 : i32
    return %c0_i32, %c0_i32_0 : i32, i32
  }
  func.func @transform_20(%arg0: i32) -> (i32, i32) {
    %c0_i32 = arith.constant 0 : i32
    %c0_i32_0 = arith.constant 0 : i32
    %c0_i32_1 = arith.constant 0 : i32
    return %c0_i32, %c0_i32_0 : i32, i32
  }
  func.func @transform_22(%arg0: i32) -> (i32, i32) {
    %c0_i32 = arith.constant 0 : i32
    %c0_i32_0 = arith.constant 0 : i32
    %c0_i32_1 = arith.constant 0 : i32
    return %c0_i32, %c0_i32_0 : i32, i32
  }
  func.func @transform_23(%arg0: i32) -> (i32, i32) {
    %c0_i32 = arith.constant 0 : i32
    %c0_i32_0 = arith.constant 0 : i32
    %c0_i32_1 = arith.constant 0 : i32
    return %c0_i32, %c0_i32_0 : i32, i32
  }
  func.func @transform_24(%arg0: i32) -> (i32, i32) {
    %c0_i32 = arith.constant 0 : i32
    %c0_i32_0 = arith.constant 0 : i32
    %c0_i32_1 = arith.constant 0 : i32
    return %c0_i32, %c0_i32_0 : i32, i32
  }
  func.func @transform_25(%arg0: i32) -> (i32, i32) {
    %c0_i32 = arith.constant 0 : i32
    %c0_i32_0 = arith.constant 0 : i32
    %c0_i32_1 = arith.constant 0 : i32
    return %c0_i32, %c0_i32_0 : i32, i32
  }
  func.func @transform_26(%arg0: i32) -> (i32, i32) {
    %c0_i32 = arith.constant 0 : i32
    %c0_i32_0 = arith.constant 0 : i32
    %c0_i32_1 = arith.constant 0 : i32
    return %c0_i32, %c0_i32_0 : i32, i32
  }
  func.func @transform_27(%arg0: i32) -> (i32, i32) {
    %c0_i32 = arith.constant 0 : i32
    %c0_i32_0 = arith.constant 0 : i32
    return %arg0, %c0_i32 : i32, i32
  }
}

</mosaic_0001>

<llo_original>
// kernel: pointnet2_forward.1
$region0: #{pointnet2_forward.1}
  #allocation0 [shape = 'u32[]', space=smem, size = 0x4, offset = 0x4, fixed_abs, tag = 'smem constant byte address 0x4 - core index']
  #allocation1 [shape = 'u32[144,128]{1,0:T(1,128)}', space=vmem, size = 0x12000, scoped, tag = 'internal scratch']
  #allocation2 [shape = 'bf16[256,512]{1,0:T(16,128)(2,1)}', space=vmem, size = 0x40000, scoped, tag = 'scratch operand']
  #allocation3 [shape = 'bf16[512,1024]{1,0:T(16,128)(2,1)}', space=vmem, size = 0x100000, scoped, tag = 'scratch operand']
  #allocation4 [shape = 'bf16[1024,512]{1,0:T(16,128)(2,1)}', space=vmem, size = 0x100000, scoped, tag = 'scratch operand']
  #allocation5 [shape = 's32[3]{0}', space=sflag, size = 0xc, scoped, tag = 'scratch operand']
  #allocation29 [shape = 's32[]', space=sflag, size = 0x4, offset = 0, fixed_abs, tag = 'sflag constant byte address 0x0 - dummy sync flag']
  #allocation30 [shape = 's32[]', space=sflag, size = 0x4, offset = 0, fixed_abs, tag = 'sflag constant byte address 0x0 - dummy sync flag']
  #allocation32 [shape = 's32[]', space=sflag, size = 0x4, offset = 0, fixed_abs, tag = 'sflag constant byte address 0x0 - dummy sync flag']
  %s0 = inlined_call_operand.vmem [shape: f32[256,8], index: 0, kind: input, shape index: {}]
  %s1 = inlined_call_operand.hbm [shape: bf16[8,64], index: 1, kind: input, shape index: {}]
  %s2 = inlined_call_operand.hbm [shape: f32[1,64], index: 2, kind: input, shape index: {}]
  %s3 = inlined_call_operand.hbm [shape: bf16[64,64], index: 3, kind: input, shape index: {}]
  %s4 = inlined_call_operand.hbm [shape: f32[1,64], index: 4, kind: input, shape index: {}]
  %s5 = inlined_call_operand.hbm [shape: bf16[64,128], index: 5, kind: input, shape index: {}]
  %s6 = inlined_call_operand.hbm [shape: f32[1,128], index: 6, kind: input, shape index: {}]
  %s7 = inlined_call_operand.hbm [shape: bf16[8,128], index: 7, kind: input, shape index: {}]
  %s8 = inlined_call_operand.vmem [shape: bf16[128,128], index: 8, kind: input, shape index: {}]
  %s9 = inlined_call_operand.hbm [shape: f32[1,128], index: 9, kind: input, shape index: {}]
  %s10 = inlined_call_operand.hbm [shape: bf16[128,128], index: 10, kind: input, shape index: {}]
  %s11 = inlined_call_operand.hbm [shape: f32[1,128], index: 11, kind: input, shape index: {}]
  %s12 = inlined_call_operand.hbm [shape: bf16[128,256], index: 12, kind: input, shape index: {}]
  %s13 = inlined_call_operand.vmem [shape: f32[1,256], index: 13, kind: input, shape index: {}]
  %s14 = inlined_call_operand.vmem [shape: bf16[8,256], index: 14, kind: input, shape index: {}]
  %s15 = inlined_call_operand.vmem [shape: bf16[256,256], index: 15, kind: input, shape index: {}]
  %s16 = inlined_call_operand.hbm [shape: f32[1,256], index: 16, kind: input, shape index: {}]
  %s17 = inlined_call_operand.vmem [shape: bf16[256,512], index: 17, kind: input, shape index: {}]
  %s18 = inlined_call_operand.vmem [shape: f32[1,512], index: 18, kind: input, shape index: {}]
  %s19 = inlined_call_operand.hbm [shape: bf16[512,1024], index: 19, kind: input, shape index: {}]
  %s20 = inlined_call_operand.hbm [shape: f32[1,1024], index: 20, kind: input, shape index: {}]
  %s21 = inlined_call_operand.hbm [shape: bf16[1024,512], index: 21, kind: input, shape index: {}]
  %s22 = inlined_call_operand.vmem [shape: f32[1,512], index: 22, kind: input, shape index: {}]
  %s23 = inlined_call_operand.hbm [shape: bf16[512,256], index: 23, kind: input, shape index: {}]
  %s24 = inlined_call_operand.vmem [shape: f32[1,256], index: 24, kind: input, shape index: {}]
  %s25 = inlined_call_operand.hbm [shape: bf16[256,128], index: 25, kind: input, shape index: {}]
  %s26 = inlined_call_operand.vmem [shape: f32[1,128], index: 26, kind: input, shape index: {}]
  %s27 = inlined_call_operand.vmem [shape: f32[256,128], index: 27, kind: output, shape index: {}]
  %s28 = sld [smem:[#allocation0]]
  $region226: #{pointnet2_forward.1} parent=0
    _
  %s30 = ssub.s32 1, %s28
  %s31 = scalar_select 0, %s30, %s28
  $region1: #{pointnet2_forward.1} parent=0
    #allocation6 [shape = 'u8[2048]{0}', space=vmem, size = 0x800, scoped, tag = 'input window, operand 1, single buffered']
    #allocation7 [shape = 's32[2]{0}', space=sflag, size = 0x8, scoped, tag = 'scoped memory for pointnet2_forward.1']
    #allocation8 [shape = 'u8[512]{0}', space=vmem, size = 0x400, scoped, tag = 'input window, operand 2, single buffered']
    #allocation9 [shape = 's32[1]{0}', space=sflag, size = 0x4, scoped, tag = 'scoped memory for pointnet2_forward.1']
    #allocation10 [shape = 'u8[16384]{0}', space=vmem, size = 0x4000, scoped, tag = 'input window, operand 3, single buffered']
    #allocation11 [shape = 'u8[512]{0}', space=vmem, size = 0x400, scoped, tag = 'input window, operand 4, single buffered']
    #allocation12 [shape = 's32[1]{0}', space=sflag, size = 0x4, scoped, tag = 'scoped memory for pointnet2_forward.1']
    #allocation13 [shape = 'u8[16384]{0}', space=vmem, size = 0x4000, scoped, tag = 'input window, operand 5, single buffered']
    #allocation14 [shape = 'u8[512]{0}', space=vmem, size = 0x400, scoped, tag = 'input window, operand 6, single buffered']
    #allocation15 [shape = 's32[1]{0}', space=sflag, size = 0x4, scoped, tag = 'scoped memory for pointnet2_forward.1']
    #allocation16 [shape = 'u8[2048]{0}', space=vmem, size = 0x800, scoped, tag = 'input window, operand 7, single buffered']
    #allocation17 [shape = 'u8[512]{0}', space=vmem, size = 0x400, scoped, tag = 'input window, operand 9, single buffered']
    #allocation18 [shape = 's32[1]{0}', space=sflag, size = 0x4, scoped, tag = 'scoped memory for pointnet2_forward.1']
    #allocation19 [shape = 'u8[32768]{0}', space=vmem, size = 0x8000, scoped, tag = 'input window, operand 10, single buffered']
    #allocation20 [shape = 'u8[512]{0}', space=vmem, size = 0x400, scoped, tag = 'input window, operand 11, single buffered']
    #allocation21 [shape = 's32[1]{0}', space=sflag, size = 0x4, scoped, tag = 'scoped memory for pointnet2_forward.1']
    #allocation22 [shape = 'u8[65536]{0}', space=vmem, size = 0x10000, scoped, tag = 'input window, operand 12, single buffered']
    #allocation23 [shape = 'u8[1024]{0}', space=vmem, size = 0x400, scoped, tag = 'input window, operand 16, single buffered']
    #allocation24 [shape = 's32[1]{0}', space=sflag, size = 0x4, scoped, tag = 'scoped memory for pointnet2_forward.1']
    #allocation25 [shape = 'u8[4096]{0}', space=vmem, size = 0x1000, scoped, tag = 'input window, operand 20, single buffered']
    #allocation26 [shape = 'u8[262144]{0}', space=vmem, size = 0x40000, scoped, tag = 'input window, operand 23, single buffered']
    #allocation27 [shape = 's32[1]{0}', space=sflag, size = 0x4, scoped, tag = 'scoped memory for pointnet2_forward.1']
    #allocation28 [shape = 'u8[65536]{0}', space=vmem, size = 0x10000, scoped, tag = 'input window, operand 25, single buffered']
    %32 = vsyncpa [#allocation7], 0
    %33 = vsyncpa [#allocation9], 0
    %34 = vsyncpa [#allocation12], 0
    %35 = vsyncpa [#allocation15], 0
    %36 = vsyncpa [#allocation18], 0
    %37 = vsyncpa [#allocation21], 0
    %38 = vsyncpa [#allocation24], 0
    %39 = vsyncpa [#allocation27], 0
    loop: start=0, step=1, limit=4
    $region2: #{pointnet2_forward.1} parent=1 // loop_pre_header
      _
    $region3: #{pointnet2_forward.1} parent=1 // loop_header
      %s41 = sphi 0, %s45
      %p42 = scmp.ge.s32.totalorder %s41, 4
      %s51 = sphi 0, %s53
      %s54 = sphi 0, %s51
      %s55 = sphi 0, %s54
      %s71 = sphi 0, %s55
      %s75 = sphi 0, %s75
      %s77 = sphi 0, %s75
      %s78 = sphi 0, %s77
      %s92 = sphi 0, %s78
      %s96 = sphi 0, %s96
      %s98 = sphi 0, %s96
      %s99 = sphi 0, %s98
      %s113 = sphi 0, %s99
      %s117 = sphi 0, %s117
      %s119 = sphi 0, %s117
      %s120 = sphi 0, %s119
      %s134 = sphi 0, %s120
      %s138 = sphi 0, %s138
      %s140 = sphi 0, %s138
      %s141 = sphi 0, %s140
      %s155 = sphi 0, %s141
      %s159 = sphi 0, %s159
      %s161 = sphi 0, %s159
      %s162 = sphi 0, %s161
      %s176 = sphi 0, %s162
      %s180 = sphi 0, %s180
      %s182 = sphi 0, %s180
      %s183 = sphi 0, %s182
      %s197 = sphi 0, %s183
      %s201 = sphi 0, %s201
      %s203 = sphi 0, %s201
      %s204 = sphi 0, %s203
      %s218 = sphi 0, %s204
      %s222 = sphi 0, %s222
      %s224 = sphi 0, %s222
      %s225 = sphi 0, %s224
      %s239 = sphi 0, %s225
      %s243 = sphi 0, %s243
      %s245 = sphi 0, %s243
      %s246 = sphi 0, %s245
      %s260 = sphi 0, %s246
      %s264 = sphi 0, %s264
      %s266 = sphi 0, %s264
      %s267 = sphi 0, %s266
      %s281 = sphi 0, %s267
      %s285 = sphi 0, %s285
      %s287 = sphi 0, %s285
      %s288 = sphi 0, %s287
      %s302 = sphi 0, %s288
      %s306 = sphi 0, %s306
      %s308 = sphi 0, %s306
      %s309 = sphi 0, %s308
      %s323 = sphi 0, %s309
      %s327 = sphi 0, %s327
      %s329 = sphi 0, %s327
      %s330 = sphi 0, %s329
      %s344 = sphi 0, %s330
      %s348 = sphi 0, %s348
      %s350 = sphi 0, %s348
      %s351 = sphi 0, %s350
      %s365 = sphi 0, %s351
      %s369 = sphi 0, %s369
      %s371 = sphi 0, %s369
      %s372 = sphi 0, %s371
      %s386 = sphi 0, %s372
      %s390 = sphi 0, %s390
      %s392 = sphi 0, %s390
      %s393 = sphi 0, %s392
      %s407 = sphi 0, %s393
      %s411 = sphi 0, %s411
      %s413 = sphi 0, %s411
      %s414 = sphi 0, %s413
      %s428 = sphi 0, %s414
      %s432 = sphi 0, %s432
      %s434 = sphi 0, %s432
      %s435 = sphi 0, %s434
      %s449 = sphi 0, %s435
      %s453 = sphi 0, %s453
      %s455 = sphi 0, %s453
      %s456 = sphi 0, %s455
      %s470 = sphi 0, %s456
      %s474 = sphi 0, %s474
      %s476 = sphi 0, %s474
      %s477 = sphi 0, %s476
      %s491 = sphi 0, %s477
      %s495 = sphi 0, %s495
      %s497 = sphi 0, %s495
      %s498 = sphi 0, %s497
      %s512 = sphi 0, %s498
      %s516 = sphi 0, %s516
      %s518 = sphi 0, %s516
      %s519 = sphi 0, %s518
      %s533 = sphi 0, %s519
      %s537 = sphi 0, %s537
      %s539 = sphi 0, %s537
      %s540 = sphi 0, %s539
      %s554 = sphi 0, %s540
      %s560 = sphi 0, %s562
      %s563 = sphi 0, %s560
      %s564 = sphi 0, %s563
      %s580 = sphi 0, %s564
    $region4: #{pointnet2_forward.1} parent=1 // loop_header_branch
      %44 = sbr.rel (%p42) target = $region8
    $region5: #{pointnet2_forward.1} parent=1 // loop_body
      %s46 = ssub.s32 %s41, 1
      %s47 = ssub.s32 %s41, 2
      %s48 = sadd.s32 %s41, 1
      %s49 = ssub.s32 %s41, %s48
      %p50 = scmp.eq.s32.totalorder %s49, 0
      %s52 = sadd.s32 %s51, 1
      %s53 = scalar_select %p50, %s51, %s52
      %p56 = pneg %p50
      %p57 = scmp.eq.s32.totalorder %s41, 1
      %p58 = por %p56, %p57
      %p59 = scmp.ne.s32.totalorder %s51, %s54
      %p60 = scmp.eq.s32.totalorder %s41, 0
      %p61 = por %p59, %p60
      %p62 = scmp.ne.s32.totalorder %s51, %s54
      %p63 = scmp.eq.s32.totalorder %s46, 1
      %p64 = por %p62, %p63
      %p65 = scmp.ne.s32.totalorder %s54, %s55
      %p66 = scmp.eq.s32.totalorder %s46, 0
      %p67 = por %p65, %p66
      %p68 = scmp.ne.s32.totalorder %s54, %s55
      %p69 = scmp.eq.s32.totalorder %s47, 1
      %p70 = por %p68, %p69
      %p72 = scmp.ne.s32.totalorder %s55, %s71
      %p73 = scmp.eq.s32.totalorder %s47, 0
      %p74 = por %p72, %p73
      %s76 = sadd.s32 %s75, 1
      %p79 = scmp.eq.s32.totalorder %s41, 1
      %p80 = scmp.ne.s32.totalorder %s75, %s77
      %p81 = scmp.eq.s32.totalorder %s41, 0
      %p82 = por %p80, %p81
      %p83 = scmp.ne.s32.totalorder %s75, %s77
      %p84 = scmp.eq.s32.totalorder %s46, 1
      %p85 = por %p83, %p84
      %p86 = scmp.ne.s32.totalorder %s77, %s78
      %p87 = scmp.eq.s32.totalorder %s46, 0
      %p88 = por %p86, %p87
      %p89 = scmp.ne.s32.totalorder %s77, %s78
      %p90 = scmp.eq.s32.totalorder %s47, 1
      %p91 = por %p89, %p90
      %p93 = scmp.ne.s32.totalorder %s78, %s92
      %p94 = scmp.eq.s32.totalorder %s47, 0
      %p95 = por %p93, %p94
      %s97 = sadd.s32 %s96, 1
      %p100 = scmp.eq.s32.totalorder %s41, 1
      %p101 = scmp.ne.s32.totalorder %s96, %s98
      %p102 = scmp.eq.s32.totalorder %s41, 0
      %p103 = por %p101, %p102
      %p104 = scmp.ne.s32.totalorder %s96, %s98
      %p105 = scmp.eq.s32.totalorder %s46, 1
      %p106 = por %p104, %p105
      %p107 = scmp.ne.s32.totalorder %s98, %s99
      %p108 = scmp.eq.s32.totalorder %s46, 0
      %p109 = por %p107, %p108
      %p110 = scmp.ne.s32.totalorder %s98, %s99
      %p111 = scmp.eq.s32.totalorder %s47, 1
      %p112 = por %p110, %p111
      %p114 = scmp.ne.s32.totalorder %s99, %s113
      %p115 = scmp.eq.s32.totalorder %s47, 0
      %p116 = por %p114, %p115
      %s118 = sadd.s32 %s117, 1
      %p121 = scmp.eq.s32.totalorder %s41, 1
      %p122 = scmp.ne.s32.totalorder %s117, %s119
      %p123 = scmp.eq.s32.totalorder %s41, 0
      %p124 = por %p122, %p123
      %p125 = scmp.ne.s32.totalorder %s117, %s119
      %p126 = scmp.eq.s32.totalorder %s46, 1
      %p127 = por %p125, %p126
      %p128 = scmp.ne.s32.totalorder %s119, %s120
      %p129 = scmp.eq.s32.totalorder %s46, 0
      %p130 = por %p128, %p129
      %p131 = scmp.ne.s32.totalorder %s119, %s120
      %p132 = scmp.eq.s32.totalorder %s47, 1
      %p133 = por %p131, %p132
      %p135 = scmp.ne.s32.totalorder %s120, %s134
      %p136 = scmp.eq.s32.totalorder %s47, 0
      %p137 = por %p135, %p136
      %s139 = sadd.s32 %s138, 1
      %p142 = scmp.eq.s32.totalorder %s41, 1
      %p143 = scmp.ne.s32.totalorder %s138, %s140
      %p144 = scmp.eq.s32.totalorder %s41, 0
      %p145 = por %p143, %p144
      %p146 = scmp.ne.s32.totalorder %s138, %s140
      %p147 = scmp.eq.s32.totalorder %s46, 1
      %p148 = por %p146, %p147
      %p149 = scmp.ne.s32.totalorder %s140, %s141
      %p150 = scmp.eq.s32.totalorder %s46, 0
      %p151 = por %p149, %p150
      %p152 = scmp.ne.s32.totalorder %s140, %s141
      %p153 = scmp.eq.s32.totalorder %s47, 1
      %p154 = por %p152, %p153
      %p156 = scmp.ne.s32.totalorder %s141, %s155
      %p157 = scmp.eq.s32.totalorder %s47, 0
      %p158 = por %p156, %p157
      %s160 = sadd.s32 %s159, 1
      %p163 = scmp.eq.s32.totalorder %s41, 1
      %p164 = scmp.ne.s32.totalorder %s159, %s161
      %p165 = scmp.eq.s32.totalorder %s41, 0
      %p166 = por %p164, %p165
      %p167 = scmp.ne.s32.totalorder %s159, %s161
      %p168 = scmp.eq.s32.totalorder %s46, 1
      %p169 = por %p167, %p168
      %p170 = scmp.ne.s32.totalorder %s161, %s162
      %p171 = scmp.eq.s32.totalorder %s46, 0
      %p172 = por %p170, %p171
      %p173 = scmp.ne.s32.totalorder %s161, %s162
      %p174 = scmp.eq.s32.totalorder %s47, 1
      %p175 = por %p173, %p174
      %p177 = scmp.ne.s32.totalorder %s162, %s176
      %p178 = scmp.eq.s32.totalorder %s47, 0
      %p179 = por %p177, %p178
      %s181 = sadd.s32 %s180, 1
      %p184 = scmp.eq.s32.totalorder %s41, 1
      %p185 = scmp.ne.s32.totalorder %s180, %s182
      %p186 = scmp.eq.s32.totalorder %s41, 0
      %p187 = por %p185, %p186
      %p188 = scmp.ne.s32.totalorder %s180, %s182
      %p189 = scmp.eq.s32.totalorder %s46, 1
      %p190 = por %p188, %p189
      %p191 = scmp.ne.s32.totalorder %s182, %s183
      %p192 = scmp.eq.s32.totalorder %s46, 0
      %p193 = por %p191, %p192
      %p194 = scmp.ne.s32.totalorder %s182, %s183
      %p195 = scmp.eq.s32.totalorder %s47, 1
      %p196 = por %p194, %p195
      %p198 = scmp.ne.s32.totalorder %s183, %s197
      %p199 = scmp.eq.s32.totalorder %s47, 0
      %p200 = por %p198, %p199
      %s202 = sadd.s32 %s201, 1
      %p205 = scmp.eq.s32.totalorder %s41, 1
      %p206 = scmp.ne.s32.totalorder %s201, %s203
      %p207 = scmp.eq.s32.totalorder %s41, 0
      %p208 = por %p206, %p207
      %p209 = scmp.ne.s32.totalorder %s201, %s203
      %p210 = scmp.eq.s32.totalorder %s46, 1
      %p211 = por %p209, %p210
      %p212 = scmp.ne.s32.totalorder %s203, %s204
      %p213 = scmp.eq.s32.totalorder %s46, 0
      %p214 = por %p212, %p213
      %p215 = scmp.ne.s32.totalorder %s203, %s204
      %p216 = scmp.eq.s32.totalorder %s47, 1
      %p217 = por %p215, %p216
      %p219 = scmp.ne.s32.totalorder %s204, %s218
      %p220 = scmp.eq.s32.totalorder %s47, 0
      %p221 = por %p219, %p220
      %s223 = sadd.s32 %s222, 1
      %p226 = scmp.eq.s32.totalorder %s41, 1
      %p227 = scmp.ne.s32.totalorder %s222, %s224
      %p228 = scmp.eq.s32.totalorder %s41, 0
      %p229 = por %p227, %p228
      %p230 = scmp.ne.s32.totalorder %s222, %s224
      %p231 = scmp.eq.s32.totalorder %s46, 1
      %p232 = por %p230, %p231
      %p233 = scmp.ne.s32.totalorder %s224, %s225
      %p234 = scmp.eq.s32.totalorder %s46, 0
      %p235 = por %p233, %p234
      %p236 = scmp.ne.s32.totalorder %s224, %s225
      %p237 = scmp.eq.s32.totalorder %s47, 1
      %p238 = por %p236, %p237
      %p240 = scmp.ne.s32.totalorder %s225, %s239
      %p241 = scmp.eq.s32.totalorder %s47, 0
      %p242 = por %p240, %p241
      %s244 = sadd.s32 %s243, 1
      %p247 = scmp.eq.s32.totalorder %s41, 1
      %p248 = scmp.ne.s32.totalorder %s243, %s245
      %p249 = scmp.eq.s32.totalorder %s41, 0
      %p250 = por %p248, %p249
      %p251 = scmp.ne.s32.totalorder %s243, %s245
      %p252 = scmp.eq.s32.totalorder %s46, 1
      %p253 = por %p251, %p252
      %p254 = scmp.ne.s32.totalorder %s245, %s246
      %p255 = scmp.eq.s32.totalorder %s46, 0
      %p256 = por %p254, %p255
      %p257 = scmp.ne.s32.totalorder %s245, %s246
      %p258 = scmp.eq.s32.totalorder %s47, 1
      %p259 = por %p257, %p258
      %p261 = scmp.ne.s32.totalorder %s246, %s260
      %p262 = scmp.eq.s32.totalorder %s47, 0
      %p263 = por %p261, %p262
      %s265 = sadd.s32 %s264, 1
      %p268 = scmp.eq.s32.totalorder %s41, 1
      %p269 = scmp.ne.s32.totalorder %s264, %s266
      %p270 = scmp.eq.s32.totalorder %s41, 0
      %p271 = por %p269, %p270
      %p272 = scmp.ne.s32.totalorder %s264, %s266
      %p273 = scmp.eq.s32.totalorder %s46, 1
      %p274 = por %p272, %p273
      %p275 = scmp.ne.s32.totalorder %s266, %s267
      %p276 = scmp.eq.s32.totalorder %s46, 0
      %p277 = por %p275, %p276
      %p278 = scmp.ne.s32.totalorder %s266, %s267
      %p279 = scmp.eq.s32.totalorder %s47, 1
      %p280 = por %p278, %p279
      %p282 = scmp.ne.s32.totalorder %s267, %s281
      %p283 = scmp.eq.s32.totalorder %s47, 0
      %p284 = por %p282, %p283
      %s286 = sadd.s32 %s285, 1
      %p289 = scmp.eq.s32.totalorder %s41, 1
      %p290 = scmp.ne.s32.totalorder %s285, %s287
      %p291 = scmp.eq.s32.totalorder %s41, 0
      %p292 = por %p290, %p291
      %p293 = scmp.ne.s32.totalorder %s285, %s287
      %p294 = scmp.eq.s32.totalorder %s46, 1
      %p295 = por %p293, %p294
      %p296 = scmp.ne.s32.totalorder %s287, %s288
      %p297 = scmp.eq.s32.totalorder %s46, 0
      %p298 = por %p296, %p297
      %p299 = scmp.ne.s32.totalorder %s287, %s288
      %p300 = scmp.eq.s32.totalorder %s47, 1
      %p301 = por %p299, %p300
      %p303 = scmp.ne.s32.totalorder %s288, %s302
      %p304 = scmp.eq.s32.totalorder %s47, 0
      %p305 = por %p303, %p304
      %s307 = sadd.s32 %s306, 1
      %p310 = scmp.eq.s32.totalorder %s41, 1
      %p311 = scmp.ne.s32.totalorder %s306, %s308
      %p312 = scmp.eq.s32.totalorder %s41, 0
      %p313 = por %p311, %p312
      %p314 = scmp.ne.s32.totalorder %s306, %s308
      %p315 = scmp.eq.s32.totalorder %s46, 1
      %p316 = por %p314, %p315
      %p317 = scmp.ne.s32.totalorder %s308, %s309
      %p318 = scmp.eq.s32.totalorder %s46, 0
      %p319 = por %p317, %p318
      %p320 = scmp.ne.s32.totalorder %s308, %s309
      %p321 = scmp.eq.s32.totalorder %s47, 1
      %p322 = por %p320, %p321
      %p324 = scmp.ne.s32.totalorder %s309, %s323
      %p325 = scmp.eq.s32.totalorder %s47, 0
      %p326 = por %p324, %p325
      %s328 = sadd.s32 %s327, 1
      %p331 = scmp.eq.s32.totalorder %s41, 1
      %p332 = scmp.ne.s32.totalorder %s327, %s329
      %p333 = scmp.eq.s32.totalorder %s41, 0
      %p334 = por %p332, %p333
      %p335 = scmp.ne.s32.totalorder %s327, %s329
      %p336 = scmp.eq.s32.totalorder %s46, 1
      %p337 = por %p335, %p336
      %p338 = scmp.ne.s32.totalorder %s329, %s330
      %p339 = scmp.eq.s32.totalorder %s46, 0
      %p340 = por %p338, %p339
      %p341 = scmp.ne.s32.totalorder %s329, %s330
      %p342 = scmp.eq.s32.totalorder %s47, 1
      %p343 = por %p341, %p342
      %p345 = scmp.ne.s32.totalorder %s330, %s344
      %p346 = scmp.eq.s32.totalorder %s47, 0
      %p347 = por %p345, %p346
      %s349 = sadd.s32 %s348, 1
      %p352 = scmp.eq.s32.totalorder %s41, 1
      %p353 = scmp.ne.s32.totalorder %s348, %s350
      %p354 = scmp.eq.s32.totalorder %s41, 0
      %p355 = por %p353, %p354
      %p356 = scmp.ne.s32.totalorder %s348, %s350
      %p357 = scmp.eq.s32.totalorder %s46, 1
      %p358 = por %p356, %p357
      %p359 = scmp.ne.s32.totalorder %s350, %s351
      %p360 = scmp.eq.s32.totalorder %s46, 0
      %p361 = por %p359, %p360
      %p362 = scmp.ne.s32.totalorder %s350, %s351
      %p363 = scmp.eq.s32.totalorder %s47, 1
      %p364 = por %p362, %p363
      %p366 = scmp.ne.s32.totalorder %s351, %s365
      %p367 = scmp.eq.s32.totalorder %s47, 0
      %p368 = por %p366, %p367
      %s370 = sadd.s32 %s369, 1
      %p373 = scmp.eq.s32.totalorder %s41, 1
      %p374 = scmp.ne.s32.totalorder %s369, %s371
      %p375 = scmp.eq.s32.totalorder %s41, 0
      %p376 = por %p374, %p375
      %p377 = scmp.ne.s32.totalorder %s369, %s371
      %p378 = scmp.eq.s32.totalorder %s46, 1
      %p379 = por %p377, %p378
      %p380 = scmp.ne.s32.totalorder %s371, %s372
      %p381 = scmp.eq.s32.totalorder %s46, 0
      %p382 = por %p380, %p381
      %p383 = scmp.ne.s32.totalorder %s371, %s372
      %p384 = scmp.eq.s32.totalorder %s47, 1
      %p385 = por %p383, %p384
      %p387 = scmp.ne.s32.totalorder %s372, %s386
      %p388 = scmp.eq.s32.totalorder %s47, 0
      %p389 = por %p387, %p388
      %s391 = sadd.s32 %s390, 1
      %p394 = scmp.eq.s32.totalorder %s41, 1
      %p395 = scmp.ne.s32.totalorder %s390, %s392
      %p396 = scmp.eq.s32.totalorder %s41, 0
      %p397 = por %p395, %p396
      %p398 = scmp.ne.s32.totalorder %s390, %s392
      %p399 = scmp.eq.s32.totalorder %s46, 1
      %p400 = por %p398, %p399
      %p401 = scmp.ne.s32.totalorder %s392, %s393
      %p402 = scmp.eq.s32.totalorder %s46, 0
      %p403 = por %p401, %p402
      %p404 = scmp.ne.s32.totalorder %s392, %s393
      %p405 = scmp.eq.s32.totalorder %s47, 1
      %p406 = por %p404, %p405
      %p408 = scmp.ne.s32.totalorder %s393, %s407
      %p409 = scmp.eq.s32.totalorder %s47, 0
      %p410 = por %p408, %p409
      %s412 = sadd.s32 %s411, 1
      %p415 = scmp.eq.s32.totalorder %s41, 1
      %p416 = scmp.ne.s32.totalorder %s411, %s413
      %p417 = scmp.eq.s32.totalorder %s41, 0
      %p418 = por %p416, %p417
      %p419 = scmp.ne.s32.totalorder %s411, %s413
      %p420 = scmp.eq.s32.totalorder %s46, 1
      %p421 = por %p419, %p420
      %p422 = scmp.ne.s32.totalorder %s413, %s414
      %p423 = scmp.eq.s32.totalorder %s46, 0
      %p424 = por %p422, %p423
      %p425 = scmp.ne.s32.totalorder %s413, %s414
      %p426 = scmp.eq.s32.totalorder %s47, 1
      %p427 = por %p425, %p426
      %p429 = scmp.ne.s32.totalorder %s414, %s428
      %p430 = scmp.eq.s32.totalorder %s47, 0
      %p431 = por %p429, %p430
      %s433 = sadd.s32 %s432, 1
      %p436 = scmp.eq.s32.totalorder %s41, 1
      %p437 = scmp.ne.s32.totalorder %s432, %s434
      %p438 = scmp.eq.s32.totalorder %s41, 0
      %p439 = por %p437, %p438
      %p440 = scmp.ne.s32.totalorder %s432, %s434
      %p441 = scmp.eq.s32.totalorder %s46, 1
      %p442 = por %p440, %p441
      %p443 = scmp.ne.s32.totalorder %s434, %s435
      %p444 = scmp.eq.s32.totalorder %s46, 0
      %p445 = por %p443, %p444
      %p446 = scmp.ne.s32.totalorder %s434, %s435
      %p447 = scmp.eq.s32.totalorder %s47, 1
      %p448 = por %p446, %p447
      %p450 = scmp.ne.s32.totalorder %s435, %s449
      %p451 = scmp.eq.s32.totalorder %s47, 0
      %p452 = por %p450, %p451
      %s454 = sadd.s32 %s453, 1
      %p457 = scmp.eq.s32.totalorder %s41, 1
      %p458 = scmp.ne.s32.totalorder %s453, %s455
      %p459 = scmp.eq.s32.totalorder %s41, 0
      %p460 = por %p458, %p459
      %p461 = scmp.ne.s32.totalorder %s453, %s455
      %p462 = scmp.eq.s32.totalorder %s46, 1
      %p463 = por %p461, %p462
      %p464 = scmp.ne.s32.totalorder %s455, %s456
      %p465 = scmp.eq.s32.totalorder %s46, 0
      %p466 = por %p464, %p465
      %p467 = scmp.ne.s32.totalorder %s455, %s456
      %p468 = scmp.eq.s32.totalorder %s47, 1
      %p469 = por %p467, %p468
      %p471 = scmp.ne.s32.totalorder %s456, %s470
      %p472 = scmp.eq.s32.totalorder %s47, 0
      %p473 = por %p471, %p472
      %s475 = sadd.s32 %s474, 1
      %p478 = scmp.eq.s32.totalorder %s41, 1
      %p479 = scmp.ne.s32.totalorder %s474, %s476
      %p480 = scmp.eq.s32.totalorder %s41, 0
      %p481 = por %p479, %p480
      %p482 = scmp.ne.s32.totalorder %s474, %s476
      %p483 = scmp.eq.s32.totalorder %s46, 1
      %p484 = por %p482, %p483
      %p485 = scmp.ne.s32.totalorder %s476, %s477
      %p486 = scmp.eq.s32.totalorder %s46, 0
      %p487 = por %p485, %p486
      %p488 = scmp.ne.s32.totalorder %s476, %s477
      %p489 = scmp.eq.s32.totalorder %s47, 1
      %p490 = por %p488, %p489
      %p492 = scmp.ne.s32.totalorder %s477, %s491
      %p493 = scmp.eq.s32.totalorder %s47, 0
      %p494 = por %p492, %p493
      %s496 = sadd.s32 %s495, 1
      %p499 = scmp.eq.s32.totalorder %s41, 1
      %p500 = scmp.ne.s32.totalorder %s495, %s497
      %p501 = scmp.eq.s32.totalorder %s41, 0
      %p502 = por %p500, %p501
      %p503 = scmp.ne.s32.totalorder %s495, %s497
      %p504 = scmp.eq.s32.totalorder %s46, 1
      %p505 = por %p503, %p504
      %p506 = scmp.ne.s32.totalorder %s497, %s498
      %p507 = scmp.eq.s32.totalorder %s46, 0
      %p508 = por %p506, %p507
      %p509 = scmp.ne.s32.totalorder %s497, %s498
      %p510 = scmp.eq.s32.totalorder %s47, 1
      %p511 = por %p509, %p510
      %p513 = scmp.ne.s32.totalorder %s498, %s512
      %p514 = scmp.eq.s32.totalorder %s47, 0
      %p515 = por %p513, %p514
      %s517 = sadd.s32 %s516, 1
      %p520 = scmp.eq.s32.totalorder %s41, 1
      %p521 = scmp.ne.s32.totalorder %s516, %s518
      %p522 = scmp.eq.s32.totalorder %s41, 0
      %p523 = por %p521, %p522
      %p524 = scmp.ne.s32.totalorder %s516, %s518
      %p525 = scmp.eq.s32.totalorder %s46, 1
      %p526 = por %p524, %p525
      %p527 = scmp.ne.s32.totalorder %s518, %s519
      %p528 = scmp.eq.s32.totalorder %s46, 0
      %p529 = por %p527, %p528
      %p530 = scmp.ne.s32.totalorder %s518, %s519
      %p531 = scmp.eq.s32.totalorder %s47, 1
      %p532 = por %p530, %p531
      %p534 = scmp.ne.s32.totalorder %s519, %s533
      %p535 = scmp.eq.s32.totalorder %s47, 0
      %p536 = por %p534, %p535
      %s538 = sadd.s32 %s537, 1
      %p541 = scmp.eq.s32.totalorder %s41, 1
      %p542 = scmp.ne.s32.totalorder %s537, %s539
      %p543 = scmp.eq.s32.totalorder %s41, 0
      %p544 = por %p542, %p543
      %p545 = scmp.ne.s32.totalorder %s537, %s539
      %p546 = scmp.eq.s32.totalorder %s46, 1
      %p547 = por %p545, %p546
      %p548 = scmp.ne.s32.totalorder %s539, %s540
      %p549 = scmp.eq.s32.totalorder %s46, 0
      %p550 = por %p548, %p549
      %p551 = scmp.ne.s32.totalorder %s539, %s540
      %p552 = scmp.eq.s32.totalorder %s47, 1
      %p553 = por %p551, %p552
      %p555 = scmp.ne.s32.totalorder %s540, %s554
      %p556 = scmp.eq.s32.totalorder %s47, 0
      %p557 = por %p555, %p556
      %s558 = ssub.s32 %s41, %s48
      %p559 = scmp.eq.s32.totalorder %s558, 0
      %s561 = sadd.s32 %s560, 1
      %s562 = scalar_select %p559, %s560, %s561
      %p565 = pneg %p559
      %p566 = scmp.eq.s32.totalorder %s41, 1
      %p567 = por %p565, %p566
      %p568 = scmp.ne.s32.totalorder %s560, %s563
      %p569 = scmp.eq.s32.totalorder %s41, 0
      %p570 = por %p568, %p569
      %p571 = scmp.ne.s32.totalorder %s560, %s563
      %p572 = scmp.eq.s32.totalorder %s46, 1
      %p573 = por %p571, %p572
      %p574 = scmp.ne.s32.totalorder %s563, %s564
      %p575 = scmp.eq.s32.totalorder %s46, 0
      %p576 = por %p574, %p575
      %p577 = scmp.ne.s32.totalorder %s563, %s564
      %p578 = scmp.eq.s32.totalorder %s47, 1
      %p579 = por %p577, %p578
      %p581 = scmp.ne.s32.totalorder %s564, %s580
      %p582 = scmp.eq.s32.totalorder %s47, 0
      %p583 = por %p581, %p582
      %p584 = scmp.le.s32.totalorder 1, %s41
      %p585 = scmp.lt.s32.totalorder %s41, 3
      %p586 = pnand %p584, %p585
      %p587 = pneg %p586
      // Predicated region
      $region9: #{pointnet2_forward.1} parent=5 // pred_check
        _
      $region10: #{pointnet2_forward.1} parent=5 // pred_check_branch
        %589 = sbr.rel (%p586) target = $region12
      $region11: #{pointnet2_forward.1} parent=5 // pred_region
        %s590 = ssub.s32 %s41, 1
        // Predicated region
        $region13: #{pointnet2_forward.1} parent=11 // pred_check
          %p591 = pneg %p88
        $region14: #{pointnet2_forward.1} parent=11 // pred_check_branch
          %593 = sbr.rel (%p591) target = $region16
        $region15: #{pointnet2_forward.1} parent=11 // pred_region
          %s595 = ssub.s32 64, 64
          %596 = vsyncadd [#allocation7], %s595
          %s598 = sshll.u32 [#allocation6], 4
          %s599 = int_to_ptr.vmem [resolvable:$true] %s598
          %601 = dma.hbm_to_vmem [thread:$0]  %s1, 64, %s599, [#allocation7]
        $region16: #{pointnet2_forward.1} parent=11 // pred_fallthru
          _
        // Predicated region
        $region17: #{pointnet2_forward.1} parent=11 // pred_check
          %p602 = pneg %p109
        $region18: #{pointnet2_forward.1} parent=11 // pred_check_branch
          %604 = sbr.rel (%p602) target = $region20
        $region19: #{pointnet2_forward.1} parent=11 // pred_region
          %s606 = ssub.s32 16, 16
          %607 = vsyncadd [#allocation9], %s606
          %s609 = sshll.u32 [#allocation8], 4
          %s610 = int_to_ptr.vmem [resolvable:$true] %s609
          %612 = dma.hbm_to_vmem [thread:$0]  %s2, 16, %s610, [#allocation9]
        $region20: #{pointnet2_forward.1} parent=11 // pred_fallthru
          _
        // Predicated region
        $region21: #{pointnet2_forward.1} parent=11 // pred_check
          %p613 = pneg %p130
        $region22: #{pointnet2_forward.1} parent=11 // pred_check_branch
          %615 = sbr.rel (%p613) target = $region24
        $region23: #{pointnet2_forward.1} parent=11 // pred_region
          %s617 = ssub.s32 512, 512
          %618 = vsyncadd [#allocation9], %s617
          %s619 = sshll.u32 [#allocation10], 4
          %s620 = int_to_ptr.vmem [resolvable:$true] %s619
          %625 = dma.hbm_to_vmem [thread:$0]  %s3, 512, %s620, [#allocation9], 64, 64, 4
        $region24: #{pointnet2_forward.1} parent=11 // pred_fallthru
          _
        // Predicated region
        $region25: #{pointnet2_forward.1} parent=11 // pred_check
          %p626 = pneg %p151
        $region26: #{pointnet2_forward.1} parent=11 // pred_check_branch
          %628 = sbr.rel (%p626) target = $region28
        $region27: #{pointnet2_forward.1} parent=11 // pred_region
          %s630 = ssub.s32 16, 16
          %631 = vsyncadd [#allocation12], %s630
          %s633 = sshll.u32 [#allocation11], 4
          %s634 = int_to_ptr.vmem [resolvable:$true] %s633
          %636 = dma.hbm_to_vmem [thread:$0]  %s4, 16, %s634, [#allocation12]
        $region28: #{pointnet2_forward.1} parent=11 // pred_fallthru
          _
        // Predicated region
        $region29: #{pointnet2_forward.1} parent=11 // pred_check
          %p637 = pneg %p172
        $region30: #{pointnet2_forward.1} parent=11 // pred_check_branch
          %639 = sbr.rel (%p637) target = $region32
        $region31: #{pointnet2_forward.1} parent=11 // pred_region
          %s641 = ssub.s32 512, 512
          %642 = vsyncadd [#allocation12], %s641
          %s643 = sshll.u32 [#allocation13], 4
          %s644 = int_to_ptr.vmem [resolvable:$true] %s643
          %649 = dma.hbm_to_vmem [thread:$0]  %s5, 512, %s644, [#allocation12], 64, 64, 4
        $region32: #{pointnet2_forward.1} parent=11 // pred_fallthru
          _
        // Predicated region
        $region33: #{pointnet2_forward.1} parent=11 // pred_check
          %p650 = pneg %p193
        $region34: #{pointnet2_forward.1} parent=11 // pred_check_branch
          %652 = sbr.rel (%p650) target = $region36
        $region35: #{pointnet2_forward.1} parent=11 // pred_region
          %s654 = ssub.s32 16, 16
          %655 = vsyncadd [#allocation15], %s654
          %s657 = sshll.u32 [#allocation14], 4
          %s658 = int_to_ptr.vmem [resolvable:$true] %s657
          %660 = dma.hbm_to_vmem [thread:$0]  %s6, 16, %s658, [#allocation15]
        $region36: #{pointnet2_forward.1} parent=11 // pred_fallthru
          _
        // Predicated region
        $region37: #{pointnet2_forward.1} parent=11 // pred_check
          %p661 = pneg %p214
        $region38: #{pointnet2_forward.1} parent=11 // pred_check_branch
          %663 = sbr.rel (%p661) target = $region40
        $region39: #{pointnet2_forward.1} parent=11 // pred_region
          %s665 = ssub.s32 64, 64
          %666 = vsyncadd [#allocation15], %s665
          %s668 = sshll.u32 [#allocation16], 4
          %s669 = int_to_ptr.vmem [resolvable:$true] %s668
          %671 = dma.hbm_to_vmem [thread:$0]  %s7, 64, %s669, [#allocation15]
        $region40: #{pointnet2_forward.1} parent=11 // pred_fallthru
          _
        // Predicated region
        $region41: #{pointnet2_forward.1} parent=11 // pred_check
          %p672 = pneg %p235
        $region42: #{pointnet2_forward.1} parent=11 // pred_check_branch
          %674 = sbr.rel (%p672) target = $region44
        $region43: #{pointnet2_forward.1} parent=11 // pred_region
          _
        $region44: #{pointnet2_forward.1} parent=11 // pred_fallthru
          _
        // Predicated region
        $region45: #{pointnet2_forward.1} parent=11 // pred_check
          %p675 = pneg %p256
        $region46: #{pointnet2_forward.1} parent=11 // pred_check_branch
          %677 = sbr.rel (%p675) target = $region48
        $region47: #{pointnet2_forward.1} parent=11 // pred_region
          %s679 = ssub.s32 16, 16
          %680 = vsyncadd [#allocation18], %s679
          %s682 = sshll.u32 [#allocation17], 4
          %s683 = int_to_ptr.vmem [resolvable:$true] %s682
          %685 = dma.hbm_to_vmem [thread:$0]  %s9, 16, %s683, [#allocation18]
        $region48: #{pointnet2_forward.1} parent=11 // pred_fallthru
          _
        // Predicated region
        $region49: #{pointnet2_forward.1} parent=11 // pred_check
          %p686 = pneg %p277
        $region50: #{pointnet2_forward.1} parent=11 // pred_check_branch
          %688 = sbr.rel (%p686) target = $region52
        $region51: #{pointnet2_forward.1} parent=11 // pred_region
          %s690 = ssub.s32 1024, 1024
          %691 = vsyncadd [#allocation18], %s690
          %s692 = sshll.u32 [#allocation19], 4
          %s693 = int_to_ptr.vmem [resolvable:$true] %s692
          %698 = dma.hbm_to_vmem [thread:$0]  %s10, 1024, %s693, [#allocation18], 64, 64, 4
        $region52: #{pointnet2_forward.1} parent=11 // pred_fallthru
          _
        // Predicated region
        $region53: #{pointnet2_forward.1} parent=11 // pred_check
          %p699 = pneg %p298
        $region54: #{pointnet2_forward.1} parent=11 // pred_check_branch
          %701 = sbr.rel (%p699) target = $region56
        $region55: #{pointnet2_forward.1} parent=11 // pred_region
          %s703 = ssub.s32 16, 16
          %704 = vsyncadd [#allocation21], %s703
          %s706 = sshll.u32 [#allocation20], 4
          %s707 = int_to_ptr.vmem [resolvable:$true] %s706
          %709 = dma.hbm_to_vmem [thread:$0]  %s11, 16, %s707, [#allocation21]
        $region56: #{pointnet2_forward.1} parent=11 // pred_fallthru
          _
        // Predicated region
        $region57: #{pointnet2_forward.1} parent=11 // pred_check
          %p710 = pneg %p319
        $region58: #{pointnet2_forward.1} parent=11 // pred_check_branch
          %712 = sbr.rel (%p710) target = $region60
        $region59: #{pointnet2_forward.1} parent=11 // pred_region
          %s714 = ssub.s32 2048, 2048
          %715 = vsyncadd [#allocation21], %s714
          %s716 = sshll.u32 [#allocation22], 4
          %s717 = int_to_ptr.vmem [resolvable:$true] %s716
          %722 = dma.hbm_to_vmem [thread:$0]  %s12, 2048, %s717, [#allocation21], 128, 128, 8
        $region60: #{pointnet2_forward.1} parent=11 // pred_fallthru
          _
        // Predicated region
        $region61: #{pointnet2_forward.1} parent=11 // pred_check
          %p723 = pneg %p340
        $region62: #{pointnet2_forward.1} parent=11 // pred_check_branch
          %725 = sbr.rel (%p723) target = $region64
        $region63: #{pointnet2_forward.1} parent=11 // pred_region
          _
        $region64: #{pointnet2_forward.1} parent=11 // pred_fallthru
          _
        // Predicated region
        $region65: #{pointnet2_forward.1} parent=11 // pred_check
          %p726 = pneg %p361
        $region66: #{pointnet2_forward.1} parent=11 // pred_check_branch
          %728 = sbr.rel (%p726) target = $region68
        $region67: #{pointnet2_forward.1} parent=11 // pred_region
          _
        $region68: #{pointnet2_forward.1} parent=11 // pred_fallthru
          _
        // Predicated region
        $region69: #{pointnet2_forward.1} parent=11 // pred_check
          %p729 = pneg %p382
        $region70: #{pointnet2_forward.1} parent=11 // pred_check_branch
          %731 = sbr.rel (%p729) target = $region72
        $region71: #{pointnet2_forward.1} parent=11 // pred_region
          _
        $region72: #{pointnet2_forward.1} parent=11 // pred_fallthru
          _
        // Predicated region
        $region73: #{pointnet2_forward.1} parent=11 // pred_check
          %p732 = pneg %p403
        $region74: #{pointnet2_forward.1} parent=11 // pred_check_branch
          %734 = sbr.rel (%p732) target = $region76
        $region75: #{pointnet2_forward.1} parent=11 // pred_region
          %s736 = ssub.s32 32, 32
          %737 = vsyncadd [#allocation24], %s736
          %s739 = sshll.u32 [#allocation23], 4
          %s740 = int_to_ptr.vmem [resolvable:$true] %s739
          %742 = dma.hbm_to_vmem [thread:$0]  %s16, 32, %s740, [#allocation24]
        $region76: #{pointnet2_forward.1} parent=11 // pred_fallthru
          _
        // Predicated region
        $region77: #{pointnet2_forward.1} parent=11 // pred_check
          %p743 = pneg %p424
        $region78: #{pointnet2_forward.1} parent=11 // pred_check_branch
          %745 = sbr.rel (%p743) target = $region80
        $region79: #{pointnet2_forward.1} parent=11 // pred_region
          _
        $region80: #{pointnet2_forward.1} parent=11 // pred_fallthru
          _
        // Predicated region
        $region81: #{pointnet2_forward.1} parent=11 // pred_check
          %p746 = pneg %p445
        $region82: #{pointnet2_forward.1} parent=11 // pred_check_branch
          %748 = sbr.rel (%p746) target = $region84
        $region83: #{pointnet2_forward.1} parent=11 // pred_region
          %s750 = ssub.s32 128, 128
          %751 = vsyncadd [#allocation24], %s750
          %s753 = sshll.u32 [#allocation25], 4
          %s754 = int_to_ptr.vmem [resolvable:$true] %s753
          %756 = dma.hbm_to_vmem [thread:$0]  %s20, 128, %s754, [#allocation24]
        $region84: #{pointnet2_forward.1} parent=11 // pred_fallthru
          _
        // Predicated region
        $region85: #{pointnet2_forward.1} parent=11 // pred_check
          %p757 = pneg %p466
        $region86: #{pointnet2_forward.1} parent=11 // pred_check_branch
          %759 = sbr.rel (%p757) target = $region88
        $region87: #{pointnet2_forward.1} parent=11 // pred_region
          _
        $region88: #{pointnet2_forward.1} parent=11 // pred_fallthru
          _
        // Predicated region
        $region89: #{pointnet2_forward.1} parent=11 // pred_check
          %p760 = pneg %p487
        $region90: #{pointnet2_forward.1} parent=11 // pred_check_branch
          %762 = sbr.rel (%p760) target = $region92
        $region91: #{pointnet2_forward.1} parent=11 // pred_region
          %s764 = ssub.s32 8192, 8192
          %765 = vsyncadd [#allocation27], %s764
          %s766 = sshll.u32 [#allocation26], 4
          %s767 = int_to_ptr.vmem [resolvable:$true] %s766
          %772 = dma.hbm_to_vmem [thread:$0]  %s23, 8192, %s767, [#allocation27], 128, 128, 8
        $region92: #{pointnet2_forward.1} parent=11 // pred_fallthru
          _
        // Predicated region
        $region93: #{pointnet2_forward.1} parent=11 // pred_check
          %p773 = pneg %p508
        $region94: #{pointnet2_forward.1} parent=11 // pred_check_branch
          %775 = sbr.rel (%p773) target = $region96
        $region95: #{pointnet2_forward.1} parent=11 // pred_region
          _
        $region96: #{pointnet2_forward.1} parent=11 // pred_fallthru
          _
        // Predicated region
        $region97: #{pointnet2_forward.1} parent=11 // pred_check
          %p776 = pneg %p529
        $region98: #{pointnet2_forward.1} parent=11 // pred_check_branch
          %778 = sbr.rel (%p776) target = $region100
        $region99: #{pointnet2_forward.1} parent=11 // pred_region
          %s780 = ssub.s32 2048, 2048
          %781 = vsyncadd [#allocation27], %s780
          %s782 = sshll.u32 [#allocation28], 4
          %s783 = int_to_ptr.vmem [resolvable:$true] %s782
          %788 = dma.hbm_to_vmem [thread:$0]  %s25, 2048, %s783, [#allocation27], 64, 64, 4
        $region100: #{pointnet2_forward.1} parent=11 // pred_fallthru
          _
        // Predicated region
        $region101: #{pointnet2_forward.1} parent=11 // pred_check
          %p789 = pneg %p550
        $region102: #{pointnet2_forward.1} parent=11 // pred_check_branch
          %791 = sbr.rel (%p789) target = $region104
        $region103: #{pointnet2_forward.1} parent=11 // pred_region
          _
        $region104: #{pointnet2_forward.1} parent=11 // pred_fallthru
          _
      $region12: #{pointnet2_forward.1} parent=5 // pred_fallthru
        _
      %p792 = scmp.lt.s32.totalorder %s41, 2
      // Predicated region
      $region105: #{pointnet2_forward.1} parent=5 // pred_check
        %p793 = pneg %p792
      $region106: #{pointnet2_forward.1} parent=5 // pred_check_branch
        %795 = sbr.rel (%p793) target = $region108
      $region107: #{pointnet2_forward.1} parent=5 // pred_region
        // Predicated region
        $region109: #{pointnet2_forward.1} parent=107 // pred_check
          %p796 = pneg %p61
        $region110: #{pointnet2_forward.1} parent=107 // pred_check_branch
          %798 = sbr.rel (%p796) target = $region112
        $region111: #{pointnet2_forward.1} parent=107 // pred_region
          %s799 = smul.u32 16, %s41
          %p800 = scmp.lt.s32.totalorder %s799, 31
          %s801 = scalar_select %p800, %s799, 31
          %s802 = smul.addr %s801, 8
          %s803 = scalar_lea.vmem %s0, %s802
          %s804 = smul.u32 16, %s41
        $region112: #{pointnet2_forward.1} parent=107 // pred_fallthru
          _
      $region108: #{pointnet2_forward.1} parent=5 // pred_fallthru
        _
      %p805 = scmp.le.s32.totalorder 1, %s41
      %p806 = scmp.lt.s32.totalorder %s41, 3
      %p807 = pnand %p805, %p806
      %p808 = pneg %p807
      // Predicated region
      $region113: #{pointnet2_forward.1} parent=5 // pred_check
        _
      $region114: #{pointnet2_forward.1} parent=5 // pred_check_branch
        %810 = sbr.rel (%p807) target = $region116
      $region115: #{pointnet2_forward.1} parent=5 // pred_region
        #allocation31 [shape = 'u32[9]{0}', space=smem, size = 0x24, scoped, tag = 'DMA stride descriptor']
        #allocation33 [shape = 'u32[9]{0}', space=smem, size = 0x24, scoped, tag = 'DMA stride descriptor']
        %s811 = ssub.s32 %s41, 1
        // Predicated region
        $region117: #{pointnet2_forward.1} parent=115 // pred_check
          %p812 = pneg %p88
        $region118: #{pointnet2_forward.1} parent=115 // pred_check_branch
          %814 = sbr.rel (%p812) target = $region120
        $region119: #{pointnet2_forward.1} parent=115 // pred_region
          %815 = dma.done [#allocation7], 64
        $region120: #{pointnet2_forward.1} parent=115 // pred_fallthru
          _
        // Predicated region
        $region121: #{pointnet2_forward.1} parent=115 // pred_check
          %p816 = pneg %p109
        $region122: #{pointnet2_forward.1} parent=115 // pred_check_branch
          %818 = sbr.rel (%p816) target = $region124
        $region123: #{pointnet2_forward.1} parent=115 // pred_region
          %819 = dma.done [#allocation9], 16
        $region124: #{pointnet2_forward.1} parent=115 // pred_fallthru
          _
        // Predicated region
        $region125: #{pointnet2_forward.1} parent=115 // pred_check
          %p820 = pneg %p130
        $region126: #{pointnet2_forward.1} parent=115 // pred_check_branch
          %822 = sbr.rel (%p820) target = $region128
        $region127: #{pointnet2_forward.1} parent=115 // pred_region
          %823 = dma.done [#allocation9], 512
        $region128: #{pointnet2_forward.1} parent=115 // pred_fallthru
          _
        // Predicated region
        $region129: #{pointnet2_forward.1} parent=115 // pred_check
          %p824 = pneg %p151
        $region130: #{pointnet2_forward.1} parent=115 // pred_check_branch
          %826 = sbr.rel (%p824) target = $region132
        $region131: #{pointnet2_forward.1} parent=115 // pred_region
          %827 = dma.done [#allocation12], 16
        $region132: #{pointnet2_forward.1} parent=115 // pred_fallthru
          _
        // Predicated region
        $region133: #{pointnet2_forward.1} parent=115 // pred_check
          %p828 = pneg %p172
        $region134: #{pointnet2_forward.1} parent=115 // pred_check_branch
          %830 = sbr.rel (%p828) target = $region136
        $region135: #{pointnet2_forward.1} parent=115 // pred_region
          %831 = dma.done [#allocation12], 512
        $region136: #{pointnet2_forward.1} parent=115 // pred_fallthru
          _
        // Predicated region
        $region137: #{pointnet2_forward.1} parent=115 // pred_check
          %p832 = pneg %p193
        $region138: #{pointnet2_forward.1} parent=115 // pred_check_branch
          %834 = sbr.rel (%p832) target = $region140
        $region139: #{pointnet2_forward.1} parent=115 // pred_region
          %835 = dma.done [#allocation15], 16
        $region140: #{pointnet2_forward.1} parent=115 // pred_fallthru
          _
        // Predicated region
        $region141: #{pointnet2_forward.1} parent=115 // pred_check
          %p836 = pneg %p214
        $region142: #{pointnet2_forward.1} parent=115 // pred_check_branch
          %838 = sbr.rel (%p836) target = $region144
        $region143: #{pointnet2_forward.1} parent=115 // pred_region
          %839 = dma.done [#allocation15], 64
        $region144: #{pointnet2_forward.1} parent=115 // pred_fallthru
          _
        // Predicated region
        $region145: #{pointnet2_forward.1} parent=115 // pred_check
          %p840 = pneg %p256
        $region146: #{pointnet2_forward.1} parent=115 // pred_check_branch
          %842 = sbr.rel (%p840) target = $region148
        $region147: #{pointnet2_forward.1} parent=115 // pred_region
          %843 = dma.done [#allocation18], 16
        $region148: #{pointnet2_forward.1} parent=115 // pred_fallthru
          _
        // Predicated region
        $region149: #{pointnet2_forward.1} parent=115 // pred_check
          %p844 = pneg %p277
        $region150: #{pointnet2_forward.1} parent=115 // pred_check_branch
          %846 = sbr.rel (%p844) target = $region152
        $region151: #{pointnet2_forward.1} parent=115 // pred_region
          %847 = dma.done [#allocation18], 1024
        $region152: #{pointnet2_forward.1} parent=115 // pred_fallthru
          _
        // Predicated region
        $region153: #{pointnet2_forward.1} parent=115 // pred_check
          %p848 = pneg %p298
        $region154: #{pointnet2_forward.1} parent=115 // pred_check_branch
          %850 = sbr.rel (%p848) target = $region156
        $region155: #{pointnet2_forward.1} parent=115 // pred_region
          %851 = dma.done [#allocation21], 16
        $region156: #{pointnet2_forward.1} parent=115 // pred_fallthru
          _
        // Predicated region
        $region157: #{pointnet2_forward.1} parent=115 // pred_check
          %p852 = pneg %p319
        $region158: #{pointnet2_forward.1} parent=115 // pred_check_branch
          %854 = sbr.rel (%p852) target = $region160
        $region159: #{pointnet2_forward.1} parent=115 // pred_region
          %855 = dma.done [#allocation21], 2048
        $region160: #{pointnet2_forward.1} parent=115 // pred_fallthru
          _
        // Predicated region
        $region161: #{pointnet2_forward.1} parent=115 // pred_check
          %p856 = pneg %p403
        $region162: #{pointnet2_forward.1} parent=115 // pred_check_branch
          %858 = sbr.rel (%p856) target = $region164
        $region163: #{pointnet2_forward.1} parent=115 // pred_region
          %859 = dma.done [#allocation24], 32
        $region164: #{pointnet2_forward.1} parent=115 // pred_fallthru
          _
        // Predicated region
        $region165: #{pointnet2_forward.1} parent=115 // pred_check
          %p860 = pneg %p445
        $region166: #{pointnet2_forward.1} parent=115 // pred_check_branch
          %862 = sbr.rel (%p860) target = $region168
        $region167: #{pointnet2_forward.1} parent=115 // pred_region
          %863 = dma.done [#allocation24], 128
        $region168: #{pointnet2_forward.1} parent=115 // pred_fallthru
          _
        // Predicated region
        $region169: #{pointnet2_forward.1} parent=115 // pred_check
          %p864 = pneg %p487
        $region170: #{pointnet2_forward.1} parent=115 // pred_check_branch
          %866 = sbr.rel (%p864) target = $region172
        $region171: #{pointnet2_forward.1} parent=115 // pred_region
          %867 = dma.done [#allocation27], 8192
        $region172: #{pointnet2_forward.1} parent=115 // pred_fallthru
          _
        // Predicated region
        $region173: #{pointnet2_forward.1} parent=115 // pred_check
          %p868 = pneg %p529
        $region174: #{pointnet2_forward.1} parent=115 // pred_check_branch
          %870 = sbr.rel (%p868) target = $region176
        $region175: #{pointnet2_forward.1} parent=115 // pred_region
          %871 = dma.done [#allocation27], 2048
        $region176: #{pointnet2_forward.1} parent=115 // pred_fallthru
          _
        %s872 = smul.u32 16, %s46
        %p873 = scmp.lt.s32.totalorder %s872, 31
        %s874 = scalar_select %p873, %s872, 31
        %s875 = smul.addr %s874, 8
        %s876 = scalar_lea.vmem %s0, %s875
        %p877 = pneg %p67
        %p878 = pneg %p64
        %p879 = pneg %p88
        %p880 = pneg %p85
        %p881 = pneg %p109
        %p882 = pneg %p106
        %p883 = pneg %p130
        %p884 = pneg %p127
        %p885 = pneg %p151
        %p886 = pneg %p148
        %p887 = pneg %p172
        %p888 = pneg %p169
        %p889 = pneg %p193
        %p890 = pneg %p190
        %p891 = pneg %p214
        %p892 = pneg %p211
        %p893 = pneg %p235
        %p894 = pneg %p232
        %p895 = pneg %p256
        %p896 = pneg %p253
        %p897 = pneg %p277
        %p898 = pneg %p274
        %p899 = pneg %p298
        %p900 = pneg %p295
        %p901 = pneg %p319
        %p902 = pneg %p316
        %p903 = pneg %p340
        %p904 = pneg %p337
        %p905 = pneg %p361
        %p906 = pneg %p358
        %p907 = pneg %p382
        %p908 = pneg %p379
        %p909 = pneg %p403
        %p910 = pneg %p400
        %p911 = pneg %p424
        %p912 = pneg %p421
        %p913 = pneg %p445
        %p914 = pneg %p442
        %p915 = pneg %p466
        %p916 = pneg %p463
        %p917 = pneg %p487
        %p918 = pneg %p484
        %p919 = pneg %p508
        %p920 = pneg %p505
        %p921 = pneg %p529
        %p922 = pneg %p526
        %p923 = pneg %p550
        %p924 = pneg %p547
        %p925 = pneg %p576
        %p926 = pneg %p573
        %s927 = smul.u32 16, %s46
        %p928 = scmp.lt.s32.totalorder %s927, 31
        %s929 = scalar_select %p928, %s927, 31
        %s930 = smul.addr %s929, 8
        %s931 = scalar_lea.vmem %s27, %s930
        %s932 = smul.u32 16, %s46
        %p933 = scmp.lt.s32.totalorder %s932, 31
        %s934 = scalar_select %p933, %s932, 31
        %s935 = smul.addr %s934, 8
        %s936 = scalar_lea.vmem %s0, %s935
        %s937 = smul.u32 16, %s46
        %s938 = smul.u32 16, %s46
        %p939 = scmp.lt.s32.totalorder %s938, 31
        %s940 = scalar_select %p939, %s938, 31
        %s941 = smul.addr %s940, 8
        %s942 = scalar_lea.vmem %s27, %s941
        %s943 = smul.u32 16, %s46
        %p946 = scmp.lt.u32.totalorder 4, 8
        %p947 = pneg %p946
        // Predicated region
        $region177: #{pointnet2_forward.1} parent=115 // pred_check
          _
        $region178: #{pointnet2_forward.1} parent=115 // pred_check_branch
          %949 = sbr.rel (%p946) target = $region180
        $region179: #{pointnet2_forward.1} parent=115 // pred_region
          %s1218 = sand.u32 4, 7
          %p1219 = scmp.eq.s32.totalorder %s1218, 0
          %p1220 = pneg %p1219
          // Predicated region
          $region192: #{pointnet2_forward.1} parent=179 // pred_check
            _
          $region193: #{pointnet2_forward.1} parent=179 // pred_check_branch
            %1222 = sbr.rel (%p1219) target = $region195
          $region194: #{pointnet2_forward.1} parent=179 // pred_region
            %s1223 = sand.u32 4, 7
            %s1224 = ssub.s32 4, %s1223
            %s1225 = scalar_lea.vmem %s17, %s1224
            %s1226 = ssub.s32 4, %s1223
            %s1227 = scalar_lea.vmem [#allocation2], %s1226
            loop: start=0, step=1, limit=1
            $region196: #{pointnet2_forward.1} parent=194 // loop_pre_header
              _
            $region197: #{pointnet2_forward.1} parent=194 // loop_header
              %s1229 = sphi 0, %s1233
              %p1230 = scmp.ge.s32.totalorder %s1229, 1
              %s1234 = sphi %s17, %s17
              %s1235 = sphi [#allocation2], [#allocation2]
            $region198: #{pointnet2_forward.1} parent=194 // loop_header_branch
              %1232 = sbr.rel (%p1230) target = $region202
            $region199: #{pointnet2_forward.1} parent=194 // loop_body
              _
            $region200: #{pointnet2_forward.1} parent=194 // loop_footer
              %s1233 = sadd.s32 1, %s1229
            $region201: #{pointnet2_forward.1} parent=194 // loop_footer_branch
              %1228 = sbr.rel target = $region197
            $region202: #{pointnet2_forward.1} parent=194 // loop_exit
              _
            %s1236 = sshllo.u32 0, %s1223
            loop: start=0, step=1, limit=1
            $region203: #{pointnet2_forward.1} parent=194 // loop_pre_header
              _
            $region204: #{pointnet2_forward.1} parent=194 // loop_header
              %s1238 = sphi 0, %s1242
              %p1239 = scmp.ge.s32.totalorder %s1238, 1
              %s1243 = sphi %s1225, %s1225
              %s1244 = sphi %s1227, %s1227
            $region205: #{pointnet2_forward.1} parent=194 // loop_header_branch
              %1241 = sbr.rel (%p1239) target = $region209
            $region206: #{pointnet2_forward.1} parent=194 // loop_body
              %v1245 = vld [vmem:[%s1243] sm:%s1236]
              %1246 = vst [vmem:[%s1244] sm:%s1236] %v1245
              %v1247 = vld [vmem:[%s1243 + $0x10] sm:%s1236]
              %1248 = vst [vmem:[%s1244 + $0x4] sm:%s1236] %v1247
              %v1249 = vld [vmem:[%s1243 + $0x4] sm:%s1236]
              %1250 = vst [vmem:[%s1244 + $0x8] sm:%s1236] %v1249
              %v1251 = vld [vmem:[%s1243 + $0x14] sm:%s1236]
              %1252 = vst [vmem:[%s1244 + $0xc] sm:%s1236] %v1251
              %v1253 = vld [vmem:[%s1243 + $0x8] sm:%s1236]
              %1254 = vst [vmem:[%s1244 + $0x10] sm:%s1236] %v1253
              %v1255 = vld [vmem:[%s1243 + $0x18] sm:%s1236]
              %1256 = vst [vmem:[%s1244 + $0x14] sm:%s1236] %v1255
              %v1257 = vld [vmem:[%s1243 + $0xc] sm:%s1236]
              %1258 = vst [vmem:[%s1244 + $0x18] sm:%s1236] %v1257
              %v1259 = vld [vmem:[%s1243 + $0x1c] sm:%s1236]
              %1260 = vst [vmem:[%s1244 + $0x1c] sm:%s1236] %v1259
              %v1261 = vld [vmem:[%s1243 + $0x20] sm:%s1236]
              %1262 = vst [vmem:[%s1244 + $0x20] sm:%s1236] %v1261
              %v1263 = vld [vmem:[%s1243 + $0x30] sm:%s1236]
              %1264 = vst [vmem:[%s1244 + $0x24] sm:%s1236] %v1263
              %v1265 = vld [vmem:[%s1243 + $0x24] sm:%s1236]
              %1266 = vst [vmem:[%s1244 + $0x28] sm:%s1236] %v1265
              %v1267 = vld [vmem:[%s1243 + $0x34] sm:%s1236]
              %1268 = vst [vmem:[%s1244 + $0x2c] sm:%s1236] %v1267
              %v1269 = vld [vmem:[%s1243 + $0x28] sm:%s1236]
              %1270 = vst [vmem:[%s1244 + $0x30] sm:%s1236] %v1269
              %v1271 = vld [vmem:[%s1243 + $0x38] sm:%s1236]
              %1272 = vst [vmem:[%s1244 + $0x34] sm:%s1236] %v1271
              %v1273 = vld [vmem:[%s1243 + $0x2c] sm:%s1236]
              %1274 = vst [vmem:[%s1244 + $0x38] sm:%s1236] %v1273
              %v1275 = vld [vmem:[%s1243 + $0x3c] sm:%s1236]
              %1276 = vst [vmem:[%s1244 + $0x3c] sm:%s1236] %v1275
              %v1277 = vld [vmem:[%s1243 + $0x40] sm:%s1236]
              %1278 = vst [vmem:[%s1244 + $0x40] sm:%s1236] %v1277
              %v1279 = vld [vmem:[%s1243 + $0x50] sm:%s1236]
              %1280 = vst [vmem:[%s1244 + $0x44] sm:%s1236] %v1279
              %v1281 = vld [vmem:[%s1243 + $0x44] sm:%s1236]
              %1282 = vst [vmem:[%s1244 + $0x48] sm:%s1236] %v1281
              %v1283 = vld [vmem:[%s1243 + $0x54] sm:%s1236]
              %1284 = vst [vmem:[%s1244 + $0x4c] sm:%s1236] %v1283
              %v1285 = vld [vmem:[%s1243 + $0x48] sm:%s1236]
              %1286 = vst [vmem:[%s1244 + $0x50] sm:%s1236] %v1285
              %v1287 = vld [vmem:[%s1243 + $0x58] sm:%s1236]
              %1288 = vst [vmem:[%s1244 + $0x54] sm:%s1236] %v1287
              %v1289 = vld [vmem:[%s1243 + $0x4c] sm:%s1236]
              %1290 = vst [vmem:[%s1244 + $0x58] sm:%s1236] %v1289
              %v1291 = vld [vmem:[%s1243 + $0x5c] sm:%s1236]
              %1292 = vst [vmem:[%s1244 + $0x5c] sm:%s1236] %v1291
              %v1293 = vld [vmem:[%s1243 + $0x60] sm:%s1236]
              %1294 = vst [vmem:[%s1244 + $0x60] sm:%s1236] %v1293
              %v1295 = vld [vmem:[%s1243 + $0x70] sm:%s1236]
              %1296 = vst [vmem:[%s1244 + $0x64] sm:%s1236] %v1295
              %v1297 = vld [vmem:[%s1243 + $0x64] sm:%s1236]
              %1298 = vst [vmem:[%s1244 + $0x68] sm:%s1236] %v1297
              %v1299 = vld [vmem:[%s1243 + $0x74] sm:%s1236]
              %1300 = vst [vmem:[%s1244 + $0x6c] sm:%s1236] %v1299
              %v1301 = vld [vmem:[%s1243 + $0x68] sm:%s1236]
              %1302 = vst [vmem:[%s1244 + $0x70] sm:%s1236] %v1301
              %v1303 = vld [vmem:[%s1243 + $0x78] sm:%s1236]
              %1304 = vst [vmem:[%s1244 + $0x74] sm:%s1236] %v1303
              %v1305 = vld [vmem:[%s1243 + $0x6c] sm:%s1236]
              %1306 = vst [vmem:[%s1244 + $0x78] sm:%s1236] %v1305
              %v1307 = vld [vmem:[%s1243 + $0x7c] sm:%s1236]
              %1308 = vst [vmem:[%s1244 + $0x7c] sm:%s1236] %v1307
              %v1309 = vld [vmem:[%s1243 + $0x80] sm:%s1236]
              %1310 = vst [vmem:[%s1244 + $0x80] sm:%s1236] %v1309
              %v1311 = vld [vmem:[%s1243 + $0x90] sm:%s1236]
              %1312 = vst [vmem:[%s1244 + $0x84] sm:%s1236] %v1311
              %v1313 = vld [vmem:[%s1243 + $0x84] sm:%s1236]
              %1314 = vst [vmem:[%s1244 + $0x88] sm:%s1236] %v1313
              %v1315 = vld [vmem:[%s1243 + $0x94] sm:%s1236]
              %1316 = vst [vmem:[%s1244 + $0x8c] sm:%s1236] %v1315
              %v1317 = vld [vmem:[%s1243 + $0x88] sm:%s1236]
              %1318 = vst [vmem:[%s1244 + $0x90] sm:%s1236] %v1317
              %v1319 = vld [vmem:[%s1243 + $0x98] sm:%s1236]
              %1320 = vst [vmem:[%s1244 + $0x94] sm:%s1236] %v1319
              %v1321 = vld [vmem:[%s1243 + $0x8c] sm:%s1236]
              %1322 = vst [vmem:[%s1244 + $0x98] sm:%s1236] %v1321
              %v1323 = vld [vmem:[%s1243 + $0x9c] sm:%s1236]
              %1324 = vst [vmem:[%s1244 + $0x9c] sm:%s1236] %v1323
              %v1325 = vld [vmem:[%s1243 + $0xa0] sm:%s1236]
              %1326 = vst [vmem:[%s1244 + $0xa0] sm:%s1236] %v1325
              %v1327 = vld [vmem:[%s1243 + $0xb0] sm:%s1236]
              %1328 = vst [vmem:[%s1244 + $0xa4] sm:%s1236] %v1327
              %v1329 = vld [vmem:[%s1243 + $0xa4] sm:%s1236]
              %1330 = vst [vmem:[%s1244 + $0xa8] sm:%s1236] %v1329
              %v1331 = vld [vmem:[%s1243 + $0xb4] sm:%s1236]
              %1332 = vst [vmem:[%s1244 + $0xac] sm:%s1236] %v1331
              %v1333 = vld [vmem:[%s1243 + $0xa8] sm:%s1236]
              %1334 = vst [vmem:[%s1244 + $0xb0] sm:%s1236] %v1333
              %v1335 = vld [vmem:[%s1243 + $0xb8] sm:%s1236]
              %1336 = vst [vmem:[%s1244 + $0xb4] sm:%s1236] %v1335
              %v1337 = vld [vmem:[%s1243 + $0xac] sm:%s1236]
              %1338 = vst [vmem:[%s1244 + $0xb8] sm:%s1236] %v1337
              %v1339 = vld [vmem:[%s1243 + $0xbc] sm:%s1236]
              %1340 = vst [vmem:[%s1244 + $0xbc] sm:%s1236] %v1339
              %v1341 = vld [vmem:[%s1243 + $0xc0] sm:%s1236]
              %1342 = vst [vmem:[%s1244 + $0xc0] sm:%s1236] %v1341
              %v1343 = vld [vmem:[%s1243 + $0xd0] sm:%s1236]
              %1344 = vst [vmem:[%s1244 + $0xc4] sm:%s1236] %v1343
              %v1345 = vld [vmem:[%s1243 + $0xc4] sm:%s1236]
              %1346 = vst [vmem:[%s1244 + $0xc8] sm:%s1236] %v1345
              %v1347 = vld [vmem:[%s1243 + $0xd4] sm:%s1236]
              %1348 = vst [vmem:[%s1244 + $0xcc] sm:%s1236] %v1347
              %v1349 = vld [vmem:[%s1243 + $0xc8] sm:%s1236]
              %1350 = vst [vmem:[%s1244 + $0xd0] sm:%s1236] %v1349
              %v1351 = vld [vmem:[%s1243 + $0xd8] sm:%s1236]
              %1352 = vst [vmem:[%s1244 + $0xd4] sm:%s1236] %v1351
              %v1353 = vld [vmem:[%s1243 + $0xcc] sm:%s1236]
              %1354 = vst [vmem:[%s1244 + $0xd8] sm:%s1236] %v1353
              %v1355 = vld [vmem:[%s1243 + $0xdc] sm:%s1236]
              %1356 = vst [vmem:[%s1244 + $0xdc] sm:%s1236] %v1355
              %v1357 = vld [vmem:[%s1243 + $0xe0] sm:%s1236]
              %1358 = vst [vmem:[%s1244 + $0xe0] sm:%s1236] %v1357
              %v1359 = vld [vmem:[%s1243 + $0xf0] sm:%s1236]
              %1360 = vst [vmem:[%s1244 + $0xe4] sm:%s1236] %v1359
              %v1361 = vld [vmem:[%s1243 + $0xe4] sm:%s1236]
              %1362 = vst [vmem:[%s1244 + $0xe8] sm:%s1236] %v1361
              %v1363 = vld [vmem:[%s1243 + $0xf4] sm:%s1236]
              %1364 = vst [vmem:[%s1244 + $0xec] sm:%s1236] %v1363
              %v1365 = vld [vmem:[%s1243 + $0xe8] sm:%s1236]
              %1366 = vst [vmem:[%s1244 + $0xf0] sm:%s1236] %v1365
              %v1367 = vld [vmem:[%s1243 + $0xf8] sm:%s1236]
              %1368 = vst [vmem:[%s1244 + $0xf4] sm:%s1236] %v1367
              %v1369 = vld [vmem:[%s1243 + $0xec] sm:%s1236]
              %1370 = vst [vmem:[%s1244 + $0xf8] sm:%s1236] %v1369
              %v1371 = vld [vmem:[%s1243 + $0xfc] sm:%s1236]
              %1372 = vst [vmem:[%s1244 + $0xfc] sm:%s1236] %v1371
              %v1373 = vld [vmem:[%s1243 + $0x100] sm:%s1236]
              %1374 = vst [vmem:[%s1244 + $0x100] sm:%s1236] %v1373
              %v1375 = vld [vmem:[%s1243 + $0x110] sm:%s1236]
              %1376 = vst [vmem:[%s1244 + $0x104] sm:%s1236] %v1375
              %v1377 = vld [vmem:[%s1243 + $0x104] sm:%s1236]
              %1378 = vst [vmem:[%s1244 + $0x108] sm:%s1236] %v1377
              %v1379 = vld [vmem:[%s1243 + $0x114] sm:%s1236]
              %1380 = vst [vmem:[%s1244 + $0x10c] sm:%s1236] %v1379
              %v1381 = vld [vmem:[%s1243 + $0x108] sm:%s1236]
              %1382 = vst [vmem:[%s1244 + $0x110] sm:%s1236] %v1381
              %v1383 = vld [vmem:[%s1243 + $0x118] sm:%s1236]
              %1384 = vst [vmem:[%s1244 + $0x114] sm:%s1236] %v1383
              %v1385 = vld [vmem:[%s1243 + $0x10c] sm:%s1236]
              %1386 = vst [vmem:[%s1244 + $0x118] sm:%s1236] %v1385
              %v1387 = vld [vmem:[%s1243 + $0x11c] sm:%s1236]
              %1388 = vst [vmem:[%s1244 + $0x11c] sm:%s1236] %v1387
              %v1389 = vld [vmem:[%s1243 + $0x120] sm:%s1236]
              %1390 = vst [vmem:[%s1244 + $0x120] sm:%s1236] %v1389
              %v1391 = vld [vmem:[%s1243 + $0x130] sm:%s1236]
              %1392 = vst [vmem:[%s1244 + $0x124] sm:%s1236] %v1391
              %v1393 = vld [vmem:[%s1243 + $0x124] sm:%s1236]
              %1394 = vst [vmem:[%s1244 + $0x128] sm:%s1236] %v1393
              %v1395 = vld [vmem:[%s1243 + $0x134] sm:%s1236]
              %1396 = vst [vmem:[%s1244 + $0x12c] sm:%s1236] %v1395
              %v1397 = vld [vmem:[%s1243 + $0x128] sm:%s1236]
              %1398 = vst [vmem:[%s1244 + $0x130] sm:%s1236] %v1397
              %v1399 = vld [vmem:[%s1243 + $0x138] sm:%s1236]
              %1400 = vst [vmem:[%s1244 + $0x134] sm:%s1236] %v1399
              %v1401 = vld [vmem:[%s1243 + $0x12c] sm:%s1236]
              %1402 = vst [vmem:[%s1244 + $0x138] sm:%s1236] %v1401
              %v1403 = vld [vmem:[%s1243 + $0x13c] sm:%s1236]
              %1404 = vst [vmem:[%s1244 + $0x13c] sm:%s1236] %v1403
              %v1405 = vld [vmem:[%s1243 + $0x140] sm:%s1236]
              %1406 = vst [vmem:[%s1244 + $0x140] sm:%s1236] %v1405
              %v1407 = vld [vmem:[%s1243 + $0x150] sm:%s1236]
              %1408 = vst [vmem:[%s1244 + $0x144] sm:%s1236] %v1407
              %v1409 = vld [vmem:[%s1243 + $0x144] sm:%s1236]
              %1410 = vst [vmem:[%s1244 + $0x148] sm:%s1236] %v1409
              %v1411 = vld [vmem:[%s1243 + $0x154] sm:%s1236]
              %1412 = vst [vmem:[%s1244 + $0x14c] sm:%s1236] %v1411
              %v1413 = vld [vmem:[%s1243 + $0x148] sm:%s1236]
              %1414 = vst [vmem:[%s1244 + $0x150] sm:%s1236] %v1413
              %v1415 = vld [vmem:[%s1243 + $0x158] sm:%s1236]
              %1416 = vst [vmem:[%s1244 + $0x154] sm:%s1236] %v1415
              %v1417 = vld [vmem:[%s1243 + $0x14c] sm:%s1236]
              %1418 = vst [vmem:[%s1244 + $0x158] sm:%s1236] %v1417
              %v1419 = vld [vmem:[%s1243 + $0x15c] sm:%s1236]
              %1420 = vst [vmem:[%s1244 + $0x15c] sm:%s1236] %v1419
              %v1421 = vld [vmem:[%s1243 + $0x160] sm:%s1236]
              %1422 = vst [vmem:[%s1244 + $0x160] sm:%s1236] %v1421
              %v1423 = vld [vmem:[%s1243 + $0x170] sm:%s1236]
              %1424 = vst [vmem:[%s1244 + $0x164] sm:%s1236] %v1423
              %v1425 = vld [vmem:[%s1243 + $0x164] sm:%s1236]
              %1426 = vst [vmem:[%s1244 + $0x168] sm:%s1236] %v1425
              %v1427 = vld [vmem:[%s1243 + $0x174] sm:%s1236]
              %1428 = vst [vmem:[%s1244 + $0x16c] sm:%s1236] %v1427
              %v1429 = vld [vmem:[%s1243 + $0x168] sm:%s1236]
              %1430 = vst [vmem:[%s1244 + $0x170] sm:%s1236] %v1429
              %v1431 = vld [vmem:[%s1243 + $0x178] sm:%s1236]
              %1432 = vst [vmem:[%s1244 + $0x174] sm:%s1236] %v1431
              %v1433 = vld [vmem:[%s1243 + $0x16c] sm:%s1236]
              %1434 = vst [vmem:[%s1244 + $0x178] sm:%s1236] %v1433
              %v1435 = vld [vmem:[%s1243 + $0x17c] sm:%s1236]
              %1436 = vst [vmem:[%s1244 + $0x17c] sm:%s1236] %v1435
              %v1437 = vld [vmem:[%s1243 + $0x180] sm:%s1236]
              %1438 = vst [vmem:[%s1244 + $0x180] sm:%s1236] %v1437
              %v1439 = vld [vmem:[%s1243 + $0x190] sm:%s1236]
              %1440 = vst [vmem:[%s1244 + $0x184] sm:%s1236] %v1439
              %v1441 = vld [vmem:[%s1243 + $0x184] sm:%s1236]
              %1442 = vst [vmem:[%s1244 + $0x188] sm:%s1236] %v1441
              %v1443 = vld [vmem:[%s1243 + $0x194] sm:%s1236]
              %1444 = vst [vmem:[%s1244 + $0x18c] sm:%s1236] %v1443
              %v1445 = vld [vmem:[%s1243 + $0x188] sm:%s1236]
              %1446 = vst [vmem:[%s1244 + $0x190] sm:%s1236] %v1445
              %v1447 = vld [vmem:[%s1243 + $0x198] sm:%s1236]
              %1448 = vst [vmem:[%s1244 + $0x194] sm:%s1236] %v1447
              %v1449 = vld [vmem:[%s1243 + $0x18c] sm:%s1236]
              %1450 = vst [vmem:[%s1244 + $0x198] sm:%s1236] %v1449
              %v1451 = vld [vmem:[%s1243 + $0x19c] sm:%s1236]
              %1452 = vst [vmem:[%s1244 + $0x19c] sm:%s1236] %v1451
              %v1453 = vld [vmem:[%s1243 + $0x1a0] sm:%s1236]
              %1454 = vst [vmem:[%s1244 + $0x1a0] sm:%s1236] %v1453
              %v1455 = vld [vmem:[%s1243 + $0x1b0] sm:%s1236]
              %1456 = vst [vmem:[%s1244 + $0x1a4] sm:%s1236] %v1455
              %v1457 = vld [vmem:[%s1243 + $0x1a4] sm:%s1236]
              %1458 = vst [vmem:[%s1244 + $0x1a8] sm:%s1236] %v1457
              %v1459 = vld [vmem:[%s1243 + $0x1b4] sm:%s1236]
              %1460 = vst [vmem:[%s1244 + $0x1ac] sm:%s1236] %v1459
              %v1461 = vld [vmem:[%s1243 + $0x1a8] sm:%s1236]
              %1462 = vst [vmem:[%s1244 + $0x1b0] sm:%s1236] %v1461
              %v1463 = vld [vmem:[%s1243 + $0x1b8] sm:%s1236]
              %1464 = vst [vmem:[%s1244 + $0x1b4] sm:%s1236] %v1463
              %v1465 = vld [vmem:[%s1243 + $0x1ac] sm:%s1236]
              %1466 = vst [vmem:[%s1244 + $0x1b8] sm:%s1236] %v1465
              %v1467 = vld [vmem:[%s1243 + $0x1bc] sm:%s1236]
              %1468 = vst [vmem:[%s1244 + $0x1bc] sm:%s1236] %v1467
              %v1469 = vld [vmem:[%s1243 + $0x1c0] sm:%s1236]
              %1470 = vst [vmem:[%s1244 + $0x1c0] sm:%s1236] %v1469
              %v1471 = vld [vmem:[%s1243 + $0x1d0] sm:%s1236]
              %1472 = vst [vmem:[%s1244 + $0x1c4] sm:%s1236] %v1471
              %v1473 = vld [vmem:[%s1243 + $0x1c4] sm:%s1236]
              %1474 = vst [vmem:[%s1244 + $0x1c8] sm:%s1236] %v1473
              %v1475 = vld [vmem:[%s1243 + $0x1d4] sm:%s1236]
              %1476 = vst [vmem:[%s1244 + $0x1cc] sm:%s1236] %v1475
              %v1477 = vld [vmem:[%s1243 + $0x1c8] sm:%s1236]
              %1478 = vst [vmem:[%s1244 + $0x1d0] sm:%s1236] %v1477
              %v1479 = vld [vmem:[%s1243 + $0x1d8] sm:%s1236]
              %1480 = vst [vmem:[%s1244 + $0x1d4] sm:%s1236] %v1479
              %v1481 = vld [vmem:[%s1243 + $0x1cc] sm:%s1236]
              %1482 = vst [vmem:[%s1244 + $0x1d8] sm:%s1236] %v1481
              %v1483 = vld [vmem:[%s1243 + $0x1dc] sm:%s1236]
              %1484 = vst [vmem:[%s1244 + $0x1dc] sm:%s1236] %v1483
              %v1485 = vld [vmem:[%s1243 + $0x1e0] sm:%s1236]
              %1486 = vst [vmem:[%s1244 + $0x1e0] sm:%s1236] %v1485
              %v1487 = vld [vmem:[%s1243 + $0x1f0] sm:%s1236]
              %1488 = vst [vmem:[%s1244 + $0x1e4] sm:%s1236] %v1487
              %v1489 = vld [vmem:[%s1243 + $0x1e4] sm:%s1236]
              %1490 = vst [vmem:[%s1244 + $0x1e8] sm:%s1236] %v1489
              %v1491 = vld [vmem:[%s1243 + $0x1f4] sm:%s1236]
              %1492 = vst [vmem:[%s1244 + $0x1ec] sm:%s1236] %v1491
              %v1493 = vld [vmem:[%s1243 + $0x1e8] sm:%s1236]
              %1494 = vst [vmem:[%s1244 + $0x1f0] sm:%s1236] %v1493
              %v1495 = vld [vmem:[%s1243 + $0x1f8] sm:%s1236]
              %1496 = vst [vmem:[%s1244 + $0x1f4] sm:%s1236] %v1495
              %v1497 = vld [vmem:[%s1243 + $0x1ec] sm:%s1236]
              %1498 = vst [vmem:[%s1244 + $0x1f8] sm:%s1236] %v1497
              %v1499 = vld [vmem:[%s1243 + $0x1fc] sm:%s1236]
              %1500 = vst [vmem:[%s1244 + $0x1fc] sm:%s1236] %v1499
            $region207: #{pointnet2_forward.1} parent=194 // loop_footer
              %s1242 = sadd.s32 1, %s1238
            $region208: #{pointnet2_forward.1} parent=194 // loop_footer_branch
              %1237 = sbr.rel target = $region204
            $region209: #{pointnet2_forward.1} parent=194 // loop_exit
              _
          $region195: #{pointnet2_forward.1} parent=179 // pred_fallthru
            _
        $region180: #{pointnet2_forward.1} parent=115 // pred_fallthru
          _
        // Predicated region
        $region181: #{pointnet2_forward.1} parent=115 // pred_check
          %p950 = pneg %p946
        $region182: #{pointnet2_forward.1} parent=115 // pred_check_branch
          %952 = sbr.rel (%p950) target = $region184
        $region183: #{pointnet2_forward.1} parent=115 // pred_region
          %s953 = sshllo.u32 0, 4
          loop: start=0, step=1, limit=1
          $region185: #{pointnet2_forward.1} parent=183 // loop_pre_header
            _
          $region186: #{pointnet2_forward.1} parent=183 // loop_header
            %s955 = sphi 0, %s959
            %p956 = scmp.ge.s32.totalorder %s955, 1
            %s960 = sphi %s17, %s17
            %s961 = sphi [#allocation2], [#allocation2]
          $region187: #{pointnet2_forward.1} parent=183 // loop_header_branch
            %958 = sbr.rel (%p956) target = $region191
          $region188: #{pointnet2_forward.1} parent=183 // loop_body
            %v962 = vld [vmem:[%s960] sm:%s953]
            %963 = vst [vmem:[%s961] sm:%s953] %v962
            %v964 = vld [vmem:[%s960 + $0x10] sm:%s953]
            %965 = vst [vmem:[%s961 + $0x4] sm:%s953] %v964
            %v966 = vld [vmem:[%s960 + $0x4] sm:%s953]
            %967 = vst [vmem:[%s961 + $0x8] sm:%s953] %v966
            %v968 = vld [vmem:[%s960 + $0x14] sm:%s953]
            %969 = vst [vmem:[%s961 + $0xc] sm:%s953] %v968
            %v970 = vld [vmem:[%s960 + $0x8] sm:%s953]
            %971 = vst [vmem:[%s961 + $0x10] sm:%s953] %v970
            %v972 = vld [vmem:[%s960 + $0x18] sm:%s953]
            %973 = vst [vmem:[%s961 + $0x14] sm:%s953] %v972
            %v974 = vld [vmem:[%s960 + $0xc] sm:%s953]
            %975 = vst [vmem:[%s961 + $0x18] sm:%s953] %v974
            %v976 = vld [vmem:[%s960 + $0x1c] sm:%s953]
            %977 = vst [vmem:[%s961 + $0x1c] sm:%s953] %v976
            %v978 = vld [vmem:[%s960 + $0x20] sm:%s953]
            %979 = vst [vmem:[%s961 + $0x20] sm:%s953] %v978
            %v980 = vld [vmem:[%s960 + $0x30] sm:%s953]
            %981 = vst [vmem:[%s961 + $0x24] sm:%s953] %v980
            %v982 = vld [vmem:[%s960 + $0x24] sm:%s953]
            %983 = vst [vmem:[%s961 + $0x28] sm:%s953] %v982
            %v984 = vld [vmem:[%s960 + $0x34] sm:%s953]
            %985 = vst [vmem:[%s961 + $0x2c] sm:%s953] %v984
            %v986 = vld [vmem:[%s960 + $0x28] sm:%s953]
            %987 = vst [vmem:[%s961 + $0x30] sm:%s953] %v986
            %v988 = vld [vmem:[%s960 + $0x38] sm:%s953]
            %989 = vst [vmem:[%s961 + $0x34] sm:%s953] %v988
            %v990 = vld [vmem:[%s960 + $0x2c] sm:%s953]
            %991 = vst [vmem:[%s961 + $0x38] sm:%s953] %v990
            %v992 = vld [vmem:[%s960 + $0x3c] sm:%s953]
            %993 = vst [vmem:[%s961 + $0x3c] sm:%s953] %v992
            %v994 = vld [vmem:[%s960 + $0x40] sm:%s953]
            %995 = vst [vmem:[%s961 + $0x40] sm:%s953] %v994
            %v996 = vld [vmem:[%s960 + $0x50] sm:%s953]
            %997 = vst [vmem:[%s961 + $0x44] sm:%s953] %v996
            %v998 = vld [vmem:[%s960 + $0x44] sm:%s953]
            %999 = vst [vmem:[%s961 + $0x48] sm:%s953] %v998
            %v1000 = vld [vmem:[%s960 + $0x54] sm:%s953]
            %1001 = vst [vmem:[%s961 + $0x4c] sm:%s953] %v1000
            %v1002 = vld [vmem:[%s960 + $0x48] sm:%s953]
            %1003 = vst [vmem:[%s961 + $0x50] sm:%s953] %v1002
            %v1004 = vld [vmem:[%s960 + $0x58] sm:%s953]
            %1005 = vst [vmem:[%s961 + $0x54] sm:%s953] %v1004
            %v1006 = vld [vmem:[%s960 + $0x4c] sm:%s953]
            %1007 = vst [vmem:[%s961 + $0x58] sm:%s953] %v1006
            %v1008 = vld [vmem:[%s960 + $0x5c] sm:%s953]
            %1009 = vst [vmem:[%s961 + $0x5c] sm:%s953] %v1008
            %v1010 = vld [vmem:[%s960 + $0x60] sm:%s953]
            %1011 = vst [vmem:[%s961 + $0x60] sm:%s953] %v1010
            %v1012 = vld [vmem:[%s960 + $0x70] sm:%s953]
            %1013 = vst [vmem:[%s961 + $0x64] sm:%s953] %v1012
            %v1014 = vld [vmem:[%s960 + $0x64] sm:%s953]
            %1015 = vst [vmem:[%s961 + $0x68] sm:%s953] %v1014
            %v1016 = vld [vmem:[%s960 + $0x74] sm:%s953]
            %1017 = vst [vmem:[%s961 + $0x6c] sm:%s953] %v1016
            %v1018 = vld [vmem:[%s960 + $0x68] sm:%s953]
            %1019 = vst [vmem:[%s961 + $0x70] sm:%s953] %v1018
            %v1020 = vld [vmem:[%s960 + $0x78] sm:%s953]
            %1021 = vst [vmem:[%s961 + $0x74] sm:%s953] %v1020
            %v1022 = vld [vmem:[%s960 + $0x6c] sm:%s953]
            %1023 = vst [vmem:[%s961 + $0x78] sm:%s953] %v1022
            %v1024 = vld [vmem:[%s960 + $0x7c] sm:%s953]
            %1025 = vst [vmem:[%s961 + $0x7c] sm:%s953] %v1024
            %v1026 = vld [vmem:[%s960 + $0x80] sm:%s953]
            %1027 = vst [vmem:[%s961 + $0x80] sm:%s953] %v1026
            %v1028 = vld [vmem:[%s960 + $0x90] sm:%s953]
            %1029 = vst [vmem:[%s961 + $0x84] sm:%s953] %v1028
            %v1030 = vld [vmem:[%s960 + $0x84] sm:%s953]
            %1031 = vst [vmem:[%s961 + $0x88] sm:%s953] %v1030
            %v1032 = vld [vmem:[%s960 + $0x94] sm:%s953]
            %1033 = vst [vmem:[%s961 + $0x8c] sm:%s953] %v1032
            %v1034 = vld [vmem:[%s960 + $0x88] sm:%s953]
            %1035 = vst [vmem:[%s961 + $0x90] sm:%s953] %v1034
            %v1036 = vld [vmem:[%s960 + $0x98] sm:%s953]
            %1037 = vst [vmem:[%s961 + $0x94] sm:%s953] %v1036
            %v1038 = vld [vmem:[%s960 + $0x8c] sm:%s953]
            %1039 = vst [vmem:[%s961 + $0x98] sm:%s953] %v1038
            %v1040 = vld [vmem:[%s960 + $0x9c] sm:%s953]
            %1041 = vst [vmem:[%s961 + $0x9c] sm:%s953] %v1040
            %v1042 = vld [vmem:[%s960 + $0xa0] sm:%s953]
            %1043 = vst [vmem:[%s961 + $0xa0] sm:%s953] %v1042
            %v1044 = vld [vmem:[%s960 + $0xb0] sm:%s953]
            %1045 = vst [vmem:[%s961 + $0xa4] sm:%s953] %v1044
            %v1046 = vld [vmem:[%s960 + $0xa4] sm:%s953]
            %1047 = vst [vmem:[%s961 + $0xa8] sm:%s953] %v1046
            %v1048 = vld [vmem:[%s960 + $0xb4] sm:%s953]
            %1049 = vst [vmem:[%s961 + $0xac] sm:%s953] %v1048
            %v1050 = vld [vmem:[%s960 + $0xa8] sm:%s953]
            %1051 = vst [vmem:[%s961 + $0xb0] sm:%s953] %v1050
            %v1052 = vld [vmem:[%s960 + $0xb8] sm:%s953]
            %1053 = vst [vmem:[%s961 + $0xb4] sm:%s953] %v1052
            %v1054 = vld [vmem:[%s960 + $0xac] sm:%s953]
            %1055 = vst [vmem:[%s961 + $0xb8] sm:%s953] %v1054
            %v1056 = vld [vmem:[%s960 + $0xbc] sm:%s953]
            %1057 = vst [vmem:[%s961 + $0xbc] sm:%s953] %v1056
            %v1058 = vld [vmem:[%s960 + $0xc0] sm:%s953]
            %1059 = vst [vmem:[%s961 + $0xc0] sm:%s953] %v1058
            %v1060 = vld [vmem:[%s960 + $0xd0] sm:%s953]
            %1061 = vst [vmem:[%s961 + $0xc4] sm:%s953] %v1060
            %v1062 = vld [vmem:[%s960 + $0xc4] sm:%s953]
            %1063 = vst [vmem:[%s961 + $0xc8] sm:%s953] %v1062
            %v1064 = vld [vmem:[%s960 + $0xd4] sm:%s953]
            %1065 = vst [vmem:[%s961 + $0xcc] sm:%s953] %v1064
            %v1066 = vld [vmem:[%s960 + $0xc8] sm:%s953]
            %1067 = vst [vmem:[%s961 + $0xd0] sm:%s953] %v1066
            %v1068 = vld [vmem:[%s960 + $0xd8] sm:%s953]
            %1069 = vst [vmem:[%s961 + $0xd4] sm:%s953] %v1068
            %v1070 = vld [vmem:[%s960 + $0xcc] sm:%s953]
            %1071 = vst [vmem:[%s961 + $0xd8] sm:%s953] %v1070
            %v1072 = vld [vmem:[%s960 + $0xdc] sm:%s953]
            %1073 = vst [vmem:[%s961 + $0xdc] sm:%s953] %v1072
            %v1074 = vld [vmem:[%s960 + $0xe0] sm:%s953]
            %1075 = vst [vmem:[%s961 + $0xe0] sm:%s953] %v1074
            %v1076 = vld [vmem:[%s960 + $0xf0] sm:%s953]
            %1077 = vst [vmem:[%s961 + $0xe4] sm:%s953] %v1076
            %v1078 = vld [vmem:[%s960 + $0xe4] sm:%s953]
            %1079 = vst [vmem:[%s961 + $0xe8] sm:%s953] %v1078
            %v1080 = vld [vmem:[%s960 + $0xf4] sm:%s953]
            %1081 = vst [vmem:[%s961 + $0xec] sm:%s953] %v1080
            %v1082 = vld [vmem:[%s960 + $0xe8] sm:%s953]
            %1083 = vst [vmem:[%s961 + $0xf0] sm:%s953] %v1082
            %v1084 = vld [vmem:[%s960 + $0xf8] sm:%s953]
            %1085 = vst [vmem:[%s961 + $0xf4] sm:%s953] %v1084
            %v1086 = vld [vmem:[%s960 + $0xec] sm:%s953]
            %1087 = vst [vmem:[%s961 + $0xf8] sm:%s953] %v1086
            %v1088 = vld [vmem:[%s960 + $0xfc] sm:%s953]
            %1089 = vst [vmem:[%s961 + $0xfc] sm:%s953] %v1088
            %v1090 = vld [vmem:[%s960 + $0x100] sm:%s953]
            %1091 = vst [vmem:[%s961 + $0x100] sm:%s953] %v1090
            %v1092 = vld [vmem:[%s960 + $0x110] sm:%s953]
            %1093 = vst [vmem:[%s961 + $0x104] sm:%s953] %v1092
            %v1094 = vld [vmem:[%s960 + $0x104] sm:%s953]
            %1095 = vst [vmem:[%s961 + $0x108] sm:%s953] %v1094
            %v1096 = vld [vmem:[%s960 + $0x114] sm:%s953]
            %1097 = vst [vmem:[%s961 + $0x10c] sm:%s953] %v1096
            %v1098 = vld [vmem:[%s960 + $0x108] sm:%s953]
            %1099 = vst [vmem:[%s961 + $0x110] sm:%s953] %v1098
            %v1100 = vld [vmem:[%s960 + $0x118] sm:%s953]
            %1101 = vst [vmem:[%s961 + $0x114] sm:%s953] %v1100
            %v1102 = vld [vmem:[%s960 + $0x10c] sm:%s953]
            %1103 = vst [vmem:[%s961 + $0x118] sm:%s953] %v1102
            %v1104 = vld [vmem:[%s960 + $0x11c] sm:%s953]
            %1105 = vst [vmem:[%s961 + $0x11c] sm:%s953] %v1104
            %v1106 = vld [vmem:[%s960 + $0x120] sm:%s953]
            %1107 = vst [vmem:[%s961 + $0x120] sm:%s953] %v1106
            %v1108 = vld [vmem:[%s960 + $0x130] sm:%s953]
            %1109 = vst [vmem:[%s961 + $0x124] sm:%s953] %v1108
            %v1110 = vld [vmem:[%s960 + $0x124] sm:%s953]
            %1111 = vst [vmem:[%s961 + $0x128] sm:%s953] %v1110
            %v1112 = vld [vmem:[%s960 + $0x134] sm:%s953]
            %1113 = vst [vmem:[%s961 + $0x12c] sm:%s953] %v1112
            %v1114 = vld [vmem:[%s960 + $0x128] sm:%s953]
            %1115 = vst [vmem:[%s961 + $0x130] sm:%s953] %v1114
            %v1116 = vld [vmem:[%s960 + $0x138] sm:%s953]
            %1117 = vst [vmem:[%s961 + $0x134] sm:%s953] %v1116
            %v1118 = vld [vmem:[%s960 + $0x12c] sm:%s953]
            %1119 = vst [vmem:[%s961 + $0x138] sm:%s953] %v1118
            %v1120 = vld [vmem:[%s960 + $0x13c] sm:%s953]
            %1121 = vst [vmem:[%s961 + $0x13c] sm:%s953] %v1120
            %v1122 = vld [vmem:[%s960 + $0x140] sm:%s953]
            %1123 = vst [vmem:[%s961 + $0x140] sm:%s953] %v1122
            %v1124 = vld [vmem:[%s960 + $0x150] sm:%s953]
            %1125 = vst [vmem:[%s961 + $0x144] sm:%s953] %v1124
            %v1126 = vld [vmem:[%s960 + $0x144] sm:%s953]
            %1127 = vst [vmem:[%s961 + $0x148] sm:%s953] %v1126
            %v1128 = vld [vmem:[%s960 + $0x154] sm:%s953]
            %1129 = vst [vmem:[%s961 + $0x14c] sm:%s953] %v1128
            %v1130 = vld [vmem:[%s960 + $0x148] sm:%s953]
            %1131 = vst [vmem:[%s961 + $0x150] sm:%s953] %v1130
            %v1132 = vld [vmem:[%s960 + $0x158] sm:%s953]
            %1133 = vst [vmem:[%s961 + $0x154] sm:%s953] %v1132
            %v1134 = vld [vmem:[%s960 + $0x14c] sm:%s953]
            %1135 = vst [vmem:[%s961 + $0x158] sm:%s953] %v1134
            %v1136 = vld [vmem:[%s960 + $0x15c] sm:%s953]
            %1137 = vst [vmem:[%s961 + $0x15c] sm:%s953] %v1136
            %v1138 = vld [vmem:[%s960 + $0x160] sm:%s953]
            %1139 = vst [vmem:[%s961 + $0x160] sm:%s953] %v1138
            %v1140 = vld [vmem:[%s960 + $0x170] sm:%s953]
            %1141 = vst [vmem:[%s961 + $0x164] sm:%s953] %v1140
            %v1142 = vld [vmem:[%s960 + $0x164] sm:%s953]
            %1143 = vst [vmem:[%s961 + $0x168] sm:%s953] %v1142
            %v1144 = vld [vmem:[%s960 + $0x174] sm:%s953]
            %1145 = vst [vmem:[%s961 + $0x16c] sm:%s953] %v1144
            %v1146 = vld [vmem:[%s960 + $0x168] sm:%s953]
            %1147 = vst [vmem:[%s961 + $0x170] sm:%s953] %v1146
            %v1148 = vld [vmem:[%s960 + $0x178] sm:%s953]
            %1149 = vst [vmem:[%s961 + $0x174] sm:%s953] %v1148
            %v1150 = vld [vmem:[%s960 + $0x16c] sm:%s953]
            %1151 = vst [vmem:[%s961 + $0x178] sm:%s953] %v1150
            %v1152 = vld [vmem:[%s960 + $0x17c] sm:%s953]
            %1153 = vst [vmem:[%s961 + $0x17c] sm:%s953] %v1152
            %v1154 = vld [vmem:[%s960 + $0x180] sm:%s953]
            %1155 = vst [vmem:[%s961 + $0x180] sm:%s953] %v1154
            %v1156 = vld [vmem:[%s960 + $0x190] sm:%s953]
            %1157 = vst [vmem:[%s961 + $0x184] sm:%s953] %v1156
            %v1158 = vld [vmem:[%s960 + $0x184] sm:%s953]
            %1159 = vst [vmem:[%s961 + $0x188] sm:%s953] %v1158
            %v1160 = vld [vmem:[%s960 + $0x194] sm:%s953]
            %1161 = vst [vmem:[%s961 + $0x18c] sm:%s953] %v1160
            %v1162 = vld [vmem:[%s960 + $0x188] sm:%s953]
            %1163 = vst [vmem:[%s961 + $0x190] sm:%s953] %v1162
            %v1164 = vld [vmem:[%s960 + $0x198] sm:%s953]
            %1165 = vst [vmem:[%s961 + $0x194] sm:%s953] %v1164
            %v1166 = vld [vmem:[%s960 + $0x18c] sm:%s953]
            %1167 = vst [vmem:[%s961 + $0x198] sm:%s953] %v1166
            %v1168 = vld [vmem:[%s960 + $0x19c] sm:%s953]
            %1169 = vst [vmem:[%s961 + $0x19c] sm:%s953] %v1168
            %v1170 = vld [vmem:[%s960 + $0x1a0] sm:%s953]
            %1171 = vst [vmem:[%s961 + $0x1a0] sm:%s953] %v1170
            %v1172 = vld [vmem:[%s960 + $0x1b0] sm:%s953]
            %1173 = vst [vmem:[%s961 + $0x1a4] sm:%s953] %v1172
            %v1174 = vld [vmem:[%s960 + $0x1a4] sm:%s953]
            %1175 = vst [vmem:[%s961 + $0x1a8] sm:%s953] %v1174
            %v1176 = vld [vmem:[%s960 + $0x1b4] sm:%s953]
            %1177 = vst [vmem:[%s961 + $0x1ac] sm:%s953] %v1176
            %v1178 = vld [vmem:[%s960 + $0x1a8] sm:%s953]
            %1179 = vst [vmem:[%s961 + $0x1b0] sm:%s953] %v1178
            %v1180 = vld [vmem:[%s960 + $0x1b8] sm:%s953]
            %1181 = vst [vmem:[%s961 + $0x1b4] sm:%s953] %v1180
            %v1182 = vld [vmem:[%s960 + $0x1ac] sm:%s953]
            %1183 = vst [vmem:[%s961 + $0x1b8] sm:%s953] %v1182
            %v1184 = vld [vmem:[%s960 + $0x1bc] sm:%s953]
            %1185 = vst [vmem:[%s961 + $0x1bc] sm:%s953] %v1184
            %v1186 = vld [vmem:[%s960 + $0x1c0] sm:%s953]
            %1187 = vst [vmem:[%s961 + $0x1c0] sm:%s953] %v1186
            %v1188 = vld [vmem:[%s960 + $0x1d0] sm:%s953]
            %1189 = vst [vmem:[%s961 + $0x1c4] sm:%s953] %v1188
            %v1190 = vld [vmem:[%s960 + $0x1c4] sm:%s953]
            %1191 = vst [vmem:[%s961 + $0x1c8] sm:%s953] %v1190
            %v1192 = vld [vmem:[%s960 + $0x1d4] sm:%s953]
            %1193 = vst [vmem:[%s961 + $0x1cc] sm:%s953] %v1192
            %v1194 = vld [vmem:[%s960 + $0x1c8] sm:%s953]
            %1195 = vst [vmem:[%s961 + $0x1d0] sm:%s953] %v1194
            %v1196 = vld [vmem:[%s960 + $0x1d8] sm:%s953]
            %1197 = vst [vmem:[%s961 + $0x1d4] sm:%s953] %v1196
            %v1198 = vld [vmem:[%s960 + $0x1cc] sm:%s953]
            %1199 = vst [vmem:[%s961 + $0x1d8] sm:%s953] %v1198
            %v1200 = vld [vmem:[%s960 + $0x1dc] sm:%s953]
            %1201 = vst [vmem:[%s961 + $0x1dc] sm:%s953] %v1200
            %v1202 = vld [vmem:[%s960 + $0x1e0] sm:%s953]
            %1203 = vst [vmem:[%s961 + $0x1e0] sm:%s953] %v1202
            %v1204 = vld [vmem:[%s960 + $0x1f0] sm:%s953]
            %1205 = vst [vmem:[%s961 + $0x1e4] sm:%s953] %v1204
            %v1206 = vld [vmem:[%s960 + $0x1e4] sm:%s953]
            %1207 = vst [vmem:[%s961 + $0x1e8] sm:%s953] %v1206
            %v1208 = vld [vmem:[%s960 + $0x1f4] sm:%s953]
            %1209 = vst [vmem:[%s961 + $0x1ec] sm:%s953] %v1208
            %v1210 = vld [vmem:[%s960 + $0x1e8] sm:%s953]
            %1211 = vst [vmem:[%s961 + $0x1f0] sm:%s953] %v1210
            %v1212 = vld [vmem:[%s960 + $0x1f8] sm:%s953]
            %1213 = vst [vmem:[%s961 + $0x1f4] sm:%s953] %v1212
            %v1214 = vld [vmem:[%s960 + $0x1ec] sm:%s953]
            %1215 = vst [vmem:[%s961 + $0x1f8] sm:%s953] %v1214
            %v1216 = vld [vmem:[%s960 + $0x1fc] sm:%s953]
            %1217 = vst [vmem:[%s961 + $0x1fc] sm:%s953] %v1216
          $region189: #{pointnet2_forward.1} parent=183 // loop_footer
            %s959 = sadd.s32 1, %s955
          $region190: #{pointnet2_forward.1} parent=183 // loop_footer_branch
            %954 = sbr.rel target = $region186
          $region191: #{pointnet2_forward.1} parent=183 // loop_exit
            _
        $region184: #{pointnet2_forward.1} parent=115 // pred_fallthru
          _
        // Predicated region
        $region210: #{pointnet2_forward.1} parent=115 // pred_check
          _
        $region211: #{pointnet2_forward.1} parent=115 // pred_check_branch
          %1503 = sbr.rel (0) target = $region213
        $region212: #{pointnet2_forward.1} parent=115 // pred_region
          %1504 = vsyncadd [#allocation5], 8192
        $region213: #{pointnet2_forward.1} parent=115 // pred_fallthru
          _
        %s1505 = scalar_lea.sflag [#allocation5], 1
        %s1507 = sshll.u32 1, 14
        %s1508 = sxor.u32 4294967295, %s1507
        %s1510 = sld [smem:[#allocation0]]
        %s1511 = sadd.s32 2, %s1510
        %s1513 = sshll.u32 7, 26
        %s1514 = sxor.u32 4294967295, %s1513
        %s1515 = sand.u32 0, %s1514
        %s1516 = sshll.u32 %s1511, 26
        %s1517 = sor.u32 %s1515, %s1516
        %s1518 = sshll.u32 [#allocation3], 4
        %s1519 = int_to_ptr.vmem [resolvable:$true] %s1518
        %1522 = sst [smem:[#allocation31]] 1024
        %s1523 = scalar_lea.smem [#allocation31], 1
        %1524 = sst [smem:[%s1523]] 1024
        %s1525 = scalar_lea.smem [#allocation31], 2
        %1526 = sst [smem:[%s1525]] 8
        %s1527 = scalar_lea.smem [#allocation31], 3
        %1528 = sst [smem:[%s1527]] 64
        %s1529 = scalar_lea.smem [#allocation31], 4
        %1530 = sst [smem:[%s1529]] 128
        %s1531 = scalar_lea.smem [#allocation31], 5
        %1532 = sst [smem:[%s1531]] 2
        %s1533 = scalar_lea.smem [#allocation31], 6
        %1534 = sst [smem:[%s1533]] 512
        %s1535 = scalar_lea.smem [#allocation31], 7
        %1536 = sst [smem:[%s1535]] 64
        %s1537 = scalar_lea.smem [#allocation31], 8
        %1538 = sst [smem:[%s1537]] 4
        %1540 = dma.general %s19, 32768, %s1519, %s1505, [#allocation30], [#allocation31], %s1517, 0
        %s1541 = scalar_lea.sflag [#allocation5], 2
        %s1543 = sshll.u32 1, 14
        %s1544 = sxor.u32 4294967295, %s1543
        %s1546 = sadd.s32 2, %s1510
        %s1548 = sshll.u32 7, 26
        %s1549 = sxor.u32 4294967295, %s1548
        %s1550 = sand.u32 0, %s1549
        %s1551 = sshll.u32 %s1546, 26
        %s1552 = sor.u32 %s1550, %s1551
        %s1553 = sshll.u32 [#allocation4], 4
        %s1554 = int_to_ptr.vmem [resolvable:$true] %s1553
        %1557 = sst [smem:[#allocation33]] 512
        %s1558 = scalar_lea.smem [#allocation33], 1
        %1559 = sst [smem:[%s1558]] 512
        %s1560 = scalar_lea.smem [#allocation33], 2
        %1561 = sst [smem:[%s1560]] 4
        %s1562 = scalar_lea.smem [#allocation33], 3
        %1563 = sst [smem:[%s1562]] 64
        %s1564 = scalar_lea.smem [#allocation33], 4
        %1565 = sst [smem:[%s1564]] 128
        %s1566 = scalar_lea.smem [#allocation33], 5
        %1567 = sst [smem:[%s1566]] 2
        %s1568 = scalar_lea.smem [#allocation33], 6
        %1569 = sst [smem:[%s1568]] 256
        %s1570 = scalar_lea.smem [#allocation33], 7
        %1571 = sst [smem:[%s1570]] 64
        %s1572 = scalar_lea.smem [#allocation33], 8
        %1573 = sst [smem:[%s1572]] 4
        %1575 = dma.general %s21, 32768, %s1554, %s1541, [#allocation32], [#allocation33], %s1552, 0
        %v1576 = vld [vmem:[%s936] sm:$0xff]
        %v1577 = vld [vmem:[%s936 + $0x8] sm:$0xff]
        %v1578 = vld [vmem:[%s936 + $0x10] sm:$0xff]
        %v1579 = vld [vmem:[%s936 + $0x18] sm:$0xff]
        %v1580 = vld [vmem:[%s936 + $0x20] sm:$0xff]
        %v1581 = vld [vmem:[%s936 + $0x28] sm:$0xff]
        %v1582 = vld [vmem:[%s936 + $0x30] sm:$0xff]
        %v1583 = vld [vmem:[%s936 + $0x38] sm:$0xff]
        %v1584 = vld [vmem:[%s936 + $0x40] sm:$0xff]
        %v1585 = vld [vmem:[%s936 + $0x48] sm:$0xff]
        %v1586 = vld [vmem:[%s936 + $0x50] sm:$0xff]
        %v1587 = vld [vmem:[%s936 + $0x58] sm:$0xff]
        %v1588 = vld [vmem:[%s936 + $0x60] sm:$0xff]
        %v1589 = vld [vmem:[%s936 + $0x68] sm:$0xff]
        %v1590 = vld [vmem:[%s936 + $0x70] sm:$0xff]
        %v1591 = vld [vmem:[%s936 + $0x78] sm:$0xff]
        %v1592 = vpack.c.bf16 %v1577, %v1576
        %v1593 = vpack.c.bf16 %v1579, %v1578
        %v1594 = vpack.c.bf16 %v1581, %v1580
        %v1595 = vpack.c.bf16 %v1583, %v1582
        %v1596 = vpack.c.bf16 %v1585, %v1584
        %v1597 = vpack.c.bf16 %v1587, %v1586
        %v1598 = vpack.c.bf16 %v1589, %v1588
        %v1599 = vpack.c.bf16 %v1591, %v1590
        %v1600 = vld [vmem:[#allocation6] sm:$0xf]
        %v1601 = vld [vmem:[#allocation8] sm:$0x1]
        %v1603 = vlaneseq
        %v1604 = vshrl.u32 %v1603, 7
        %v1605 = vsub.s32 0, %v1604
        %v1606 = vrot.slane %v1601, %v1605
        %vm1608 = vcmask 64512
        %v1610 = vsel %vm1608, %v1592, 0
        %v1613 = vsel %vm1608, %v1593, 0
        %v1616 = vsel %vm1608, %v1594, 0
        %v1619 = vsel %vm1608, %v1595, 0
        %v1622 = vsel %vm1608, %v1596, 0
        %v1625 = vsel %vm1608, %v1597, 0
        %v1628 = vsel %vm1608, %v1598, 0
        %v1631 = vsel %vm1608, %v1599, 0
        %vm1633 = vcmask 1043456
        %v1635 = vsel %vm1633, %v1600, 0
        %1637 = vmatprep.subr.bf16.mxu0 0
        %1638 = vmatpush1.bf16.msra.mxu0 %v1635
        %1639 = vmatprep.subr.bf16.mxu0 0
        %1640 = vmatpush1.bf16.msra.mxu0 0
        %1641 = vmatprep.subr.bf16.mxu0 0
        %1642 = vmatpush1.bf16.msra.mxu0 0
        %1643 = vmatprep.subr.bf16.mxu0 0
        %1644 = vmatpush1.bf16.msra.mxu0 0
        %1645 = vmatprep.subr.bf16.mxu0 0
        %1646 = vmatpush1.bf16.msra.mxu0 0
        %1647 = vmatprep.subr.bf16.mxu0 0
        %1648 = vmatpush1.bf16.msra.mxu0 0
        %1649 = vmatprep.subr.bf16.mxu0 0
        %1650 = vmatpush1.bf16.msra.mxu0 0
        %1651 = vmatprep.subr.bf16.mxu0 0
        %1652 = vmatpush1.bf16.msra.mxu0 0
        %1653 = vmatprep.subr.bf16.mxu0 0
        %1654 = vmatpush1.bf16.msra.mxu0 0
        %1655 = vmatprep.subr.bf16.mxu0 0
        %1656 = vmatpush1.bf16.msra.mxu0 0
        %1657 = vmatprep.subr.bf16.mxu0 0
        %1658 = vmatpush1.bf16.msra.mxu0 0
        %1659 = vmatprep.subr.bf16.mxu0 0
        %1660 = vmatpush1.bf16.msra.mxu0 0
        %1661 = vmatprep.subr.bf16.mxu0 0
        %1662 = vmatpush1.bf16.msra.mxu0 0
        %1663 = vmatprep.subr.bf16.mxu0 0
        %1664 = vmatpush1.bf16.msra.mxu0 0
        %1665 = vmatprep.subr.bf16.mxu0 0
        %1666 = vmatpush1.bf16.msra.mxu0 0
        %1667 = vmatprep.subr.bf16.mxu0 0
        %1668 = vmatpush1.bf16.msra.mxu0 0
        %1669 = vmatprep.mubr.bf16.mxu0 0
        %1670 = vmatmul.mubr.bf16.gmra.mrb[0].mxu0 %v1610
        %v1671 = vpop.f32.mrb[0].mxu0
        %v1672 = vadd.f32 %v1606, %v1671
        %v1673 = vpop.f32.mrb[0].mxu0
        %v1674 = vpop.f32.mrb[0].mxu0
        %v1675 = vadd.f32 %v1606, %v1674
        %v1676 = vpop.f32.mrb[0].mxu0
        %1677 = vmatprep.mubr.bf16.mxu0 0
        %1678 = vmatmul.mubr.bf16.gmra.mrb[0].mxu0 %v1613
        %v1679 = vpop.f32.mrb[0].mxu0
        %v1680 = vadd.f32 %v1606, %v1679
        %v1681 = vpop.f32.mrb[0].mxu0
        %v1682 = vpop.f32.mrb[0].mxu0
        %v1683 = vadd.f32 %v1606, %v1682
        %v1684 = vpop.f32.mrb[0].mxu0
        %1685 = vmatprep.mubr.bf16.mxu0 0
        %1686 = vmatmul.mubr.bf16.gmra.mrb[0].mxu0 %v1616
        %v1687 = vpop.f32.mrb[0].mxu0
        %v1688 = vadd.f32 %v1606, %v1687
        %v1689 = vpop.f32.mrb[0].mxu0
        %v1690 = vpop.f32.mrb[0].mxu0
        %v1691 = vadd.f32 %v1606, %v1690
        %v1692 = vpop.f32.mrb[0].mxu0
        %1693 = vmatprep.mubr.bf16.mxu0 0
        %1694 = vmatmul.mubr.bf16.gmra.mrb[0].mxu0 %v1619
        %v1695 = vpop.f32.mrb[0].mxu0
        %v1696 = vadd.f32 %v1606, %v1695
        %v1697 = vpop.f32.mrb[0].mxu0
        %v1698 = vpop.f32.mrb[0].mxu0
        %v1699 = vadd.f32 %v1606, %v1698
        %v1700 = vpop.f32.mrb[0].mxu0
        %1701 = vmatprep.mubr.bf16.mxu0 0
        %1702 = vmatmul.mubr.bf16.gmra.mrb[0].mxu0 %v1622
        %v1703 = vpop.f32.mrb[0].mxu0
        %v1704 = vadd.f32 %v1606, %v1703
        %v1705 = vpop.f32.mrb[0].mxu0
        %v1706 = vpop.f32.mrb[0].mxu0
        %v1707 = vadd.f32 %v1606, %v1706
        %v1708 = vpop.f32.mrb[0].mxu0
        %1709 = vmatprep.mubr.bf16.mxu0 0
        %1710 = vmatmul.mubr.bf16.gmra.mrb[0].mxu0 %v1625
        %v1711 = vpop.f32.mrb[0].mxu0
        %v1712 = vadd.f32 %v1606, %v1711
        %v1713 = vpop.f32.mrb[0].mxu0
        %v1714 = vpop.f32.mrb[0].mxu0
        %v1715 = vadd.f32 %v1606, %v1714
        %v1716 = vpop.f32.mrb[0].mxu0
        %1717 = vmatprep.mubr.bf16.mxu0 0
        %1718 = vmatmul.mubr.bf16.gmra.mrb[0].mxu0 %v1628
        %v1719 = vpop.f32.mrb[0].mxu0
        %v1720 = vadd.f32 %v1606, %v1719
        %v1721 = vpop.f32.mrb[0].mxu0
        %v1722 = vpop.f32.mrb[0].mxu0
        %v1723 = vadd.f32 %v1606, %v1722
        %v1724 = vpop.f32.mrb[0].mxu0
        %1725 = vmatprep.mubr.bf16.mxu0 0
        %1726 = vmatmul.mubr.bf16.gmra.mrb[0].mxu0 %v1631
        %v1727 = vpop.f32.mrb[0].mxu0
        %v1728 = vadd.f32 %v1606, %v1727
        %v1729 = vpop.f32.mrb[0].mxu0
        %v1730 = vpop.f32.mrb[0].mxu0
        %v1731 = vadd.f32 %v1606, %v1730
        %v1732 = vpop.f32.mrb[0].mxu0
        %1733 = vdwg.mxu0
        %v1734 = vmax.f32 %v1672, 0.0
        %v1735 = vmax.f32 %v1675, 0.0
        %v1736 = vmax.f32 %v1680, 0.0
        %v1737 = vmax.f32 %v1683, 0.0
        %v1738 = vmax.f32 %v1688, 0.0
        %v1739 = vmax.f32 %v1691, 0.0
        %v1740 = vmax.f32 %v1696, 0.0
        %v1741 = vmax.f32 %v1699, 0.0
        %v1742 = vmax.f32 %v1704, 0.0
        %v1743 = vmax.f32 %v1707, 0.0
        %v1744 = vmax.f32 %v1712, 0.0
        %v1745 = vmax.f32 %v1715, 0.0
        %v1746 = vmax.f32 %v1720, 0.0
        %v1747 = vmax.f32 %v1723, 0.0
        %v1748 = vmax.f32 %v1728, 0.0
        %v1749 = vmax.f32 %v1731, 0.0
        %v1750 = vpack.c.bf16 %v1735, %v1734
        %v1751 = vpack.c.bf16 %v1737, %v1736
        %v1752 = vpack.c.bf16 %v1739, %v1738
        %v1753 = vpack.c.bf16 %v1741, %v1740
        %v1754 = vpack.c.bf16 %v1743, %v1742
        %v1755 = vpack.c.bf16 %v1745, %v1744
        %v1756 = vpack.c.bf16 %v1747, %v1746
        %v1757 = vpack.c.bf16 %v1749, %v1748
        %v1758 = vld [vmem:[#allocation10] sm:$0xf]
        %v1759 = vld [vmem:[#allocation10 + $0x4] sm:$0xf]
        %v1760 = vld [vmem:[#allocation10 + $0x8] sm:$0xf]
        %v1761 = vld [vmem:[#allocation10 + $0xc] sm:$0xf]
        %v1762 = vld [vmem:[#allocation10 + $0x10] sm:$0xf]
        %v1763 = vld [vmem:[#allocation10 + $0x14] sm:$0xf]
        %v1764 = vld [vmem:[#allocation10 + $0x18] sm:$0xf]
        %v1765 = vld [vmem:[#allocation10 + $0x1c] sm:$0xf]
        %v1766 = vld [vmem:[#allocation11] sm:$0x1]
        %v1768 = vlaneseq
        %v1769 = vshrl.u32 %v1768, 7
        %v1770 = vsub.s32 0, %v1769
        %v1771 = vrot.slane %v1766, %v1770
        %v1781 = vunpack.c.l.b16 %v1758
        %v1782 = vunpack.c.l.b16 %v1759
        %v1783 = vunpack.c.l.b16 %v1760
        %v1784 = vunpack.c.l.b16 %v1761
        %v1785 = vunpack.c.l.b16 %v1762
        %v1786 = vunpack.c.l.b16 %v1763
        %v1787 = vunpack.c.l.b16 %v1764
        %v1788 = vunpack.c.l.b16 %v1765
        %v1789 = vpack.c.b16 %v1782, %v1781
        %v1790 = vpack.c.b16 %v1784, %v1783
        %v1791 = vpack.c.b16 %v1786, %v1785
        %v1792 = vpack.c.b16 %v1788, %v1787
        %vm1797 = vcmask 523264
        %v1799 = vsel %vm1797, %v1750, 0
        %v1802 = vsel %vm1797, %v1751, 0
        %v1805 = vsel %vm1797, %v1752, 0
        %v1808 = vsel %vm1797, %v1753, 0
        %v1811 = vsel %vm1797, %v1754, 0
        %v1814 = vsel %vm1797, %v1755, 0
        %v1817 = vsel %vm1797, %v1756, 0
        %v1820 = vsel %vm1797, %v1757, 0
        %1822 = vmatprep.subr.bf16.mxu0 0
        %1823 = vmatpush1.bf16.msra.mxu0 %v1789
        %1824 = vmatprep.subr.bf16.mxu0 0
        %1825 = vmatpush1.bf16.msra.mxu0 %v1790
        %1826 = vmatprep.subr.bf16.mxu0 0
        %1827 = vmatpush1.bf16.msra.mxu0 %v1791
        %1828 = vmatprep.subr.bf16.mxu0 0
        %1829 = vmatpush1.bf16.msra.mxu0 %v1792
        %1830 = vmatprep.subr.bf16.mxu0 0
        %1831 = vmatpush1.bf16.msra.mxu0 0
        %1832 = vmatprep.subr.bf16.mxu0 0
        %1833 = vmatpush1.bf16.msra.mxu0 0
        %1834 = vmatprep.subr.bf16.mxu0 0
        %1835 = vmatpush1.bf16.msra.mxu0 0
        %1836 = vmatprep.subr.bf16.mxu0 0
        %1837 = vmatpush1.bf16.msra.mxu0 0
        %1838 = vmatprep.subr.bf16.mxu0 0
        %1839 = vmatpush1.bf16.msra.mxu0 0
        %1840 = vmatprep.subr.bf16.mxu0 0
        %1841 = vmatpush1.bf16.msra.mxu0 0
        %1842 = vmatprep.subr.bf16.mxu0 0
        %1843 = vmatpush1.bf16.msra.mxu0 0
        %1844 = vmatprep.subr.bf16.mxu0 0
        %1845 = vmatpush1.bf16.msra.mxu0 0
        %1846 = vmatprep.subr.bf16.mxu0 0
        %1847 = vmatpush1.bf16.msra.mxu0 0
        %1848 = vmatprep.subr.bf16.mxu0 0
        %1849 = vmatpush1.bf16.msra.mxu0 0
        %1850 = vmatprep.subr.bf16.mxu0 0
        %1851 = vmatpush1.bf16.msra.mxu0 0
        %1852 = vmatprep.subr.bf16.mxu0 0
        %1853 = vmatpush1.bf16.msra.mxu0 0
        %1854 = vmatprep.mubr.bf16.mxu0 0
        %1855 = vmatmul.mubr.bf16.gmra.mrb[0].mxu0 %v1799
        %v1856 = vpop.f32.mrb[0].mxu0
        %v1857 = vadd.f32 %v1771, %v1856
        %v1858 = vpop.f32.mrb[0].mxu0
        %v1859 = vpop.f32.mrb[0].mxu0
        %v1860 = vadd.f32 %v1771, %v1859
        %v1861 = vpop.f32.mrb[0].mxu0
        %1862 = vmatprep.mubr.bf16.mxu0 0
        %1863 = vmatmul.mubr.bf16.gmra.mrb[0].mxu0 %v1802
        %v1864 = vpop.f32.mrb[0].mxu0
        %v1865 = vadd.f32 %v1771, %v1864
        %v1866 = vpop.f32.mrb[0].mxu0
        %v1867 = vpop.f32.mrb[0].mxu0
        %v1868 = vadd.f32 %v1771, %v1867
        %v1869 = vpop.f32.mrb[0].mxu0
        %1870 = vmatprep.mubr.bf16.mxu0 0
        %1871 = vmatmul.mubr.bf16.gmra.mrb[0].mxu0 %v1805
        %v1872 = vpop.f32.mrb[0].mxu0
        %v1873 = vadd.f32 %v1771, %v1872
        %v1874 = vpop.f32.mrb[0].mxu0
        %v1875 = vpop.f32.mrb[0].mxu0
        %v1876 = vadd.f32 %v1771, %v1875
        %v1877 = vpop.f32.mrb[0].mxu0
        %1878 = vmatprep.mubr.bf16.mxu0 0
        %1879 = vmatmul.mubr.bf16.gmra.mrb[0].mxu0 %v1808
        %v1880 = vpop.f32.mrb[0].mxu0
        %v1881 = vadd.f32 %v1771, %v1880
        %v1882 = vpop.f32.mrb[0].mxu0
        %v1883 = vpop.f32.mrb[0].mxu0
        %v1884 = vadd.f32 %v1771, %v1883
        %v1885 = vpop.f32.mrb[0].mxu0
        %1886 = vmatprep.mubr.bf16.mxu0 0
        %1887 = vmatmul.mubr.bf16.gmra.mrb[0].mxu0 %v1811
        %v1888 = vpop.f32.mrb[0].mxu0
        %v1889 = vadd.f32 %v1771, %v1888
        %v1890 = vpop.f32.mrb[0].mxu0
        %v1891 = vpop.f32.mrb[0].mxu0
        %v1892 = vadd.f32 %v1771, %v1891
        %v1893 = vpop.f32.mrb[0].mxu0
        %1894 = vmatprep.mubr.bf16.mxu0 0
        %1895 = vmatmul.mubr.bf16.gmra.mrb[0].mxu0 %v1814
        %v1896 = vpop.f32.mrb[0].mxu0
        %v1897 = vadd.f32 %v1771, %v1896
        %v1898 = vpop.f32.mrb[0].mxu0
        %v1899 = vpop.f32.mrb[0].mxu0
        %v1900 = vadd.f32 %v1771, %v1899
        %v1901 = vpop.f32.mrb[0].mxu0
        %1902 = vmatprep.mubr.bf16.mxu0 0
        %1903 = vmatmul.mubr.bf16.gmra.mrb[0].mxu0 %v1817
        %v1904 = vpop.f32.mrb[0].mxu0
        %v1905 = vadd.f32 %v1771, %v1904
        %v1906 = vpop.f32.mrb[0].mxu0
        %v1907 = vpop.f32.mrb[0].mxu0
        %v1908 = vadd.f32 %v1771, %v1907
        %v1909 = vpop.f32.mrb[0].mxu0
        %1910 = vmatprep.mubr.bf16.mxu0 0
        %1911 = vmatmul.mubr.bf16.gmra.mrb[0].mxu0 %v1820
        %v1912 = vpop.f32.mrb[0].mxu0
        %v1913 = vadd.f32 %v1771, %v1912
        %v1914 = vpop.f32.mrb[0].mxu0
        %v1915 = vpop.f32.mrb[0].mxu0
        %v1916 = vadd.f32 %v1771, %v1915
        %v1917 = vpop.f32.mrb[0].mxu0
        %1918 = vdwg.mxu0
        %v1919 = vmax.f32 %v1857, 0.0
        %v1920 = vmax.f32 %v1860, 0.0
        %v1921 = vmax.f32 %v1865, 0.0
        %v1922 = vmax.f32 %v1868, 0.0
        %v1923 = vmax.f32 %v1873, 0.0
        %v1924 = vmax.f32 %v1876, 0.0
        %v1925 = vmax.f32 %v1881, 0.0
        %v1926 = vmax.f32 %v1884, 0.0
        %v1927 = vmax.f32 %v1889, 0.0
        %v1928 = vmax.f32 %v1892, 0.0
        %v1929 = vmax.f32 %v1897, 0.0
        %v1930 = vmax.f32 %v1900, 0.0
        %v1931 = vmax.f32 %v1905, 0.0
        %v1932 = vmax.f32 %v1908, 0.0
        %v1933 = vmax.f32 %v1913, 0.0
        %v1934 = vmax.f32 %v1916, 0.0
        %v1935 = vpack.c.bf16 %v1920, %v1919
        %v1936 = vpack.c.bf16 %v1922, %v1921
        %v1937 = vpack.c.bf16 %v1924, %v1923
        %v1938 = vpack.c.bf16 %v1926, %v1925
        %v1939 = vpack.c.bf16 %v1928, %v1927
        %v1940 = vpack.c.bf16 %v1930, %v1929
        %v1941 = vpack.c.bf16 %v1932, %v1931
        %v1942 = vpack.c.bf16 %v1934, %v1933
        %v1943 = vld [vmem:[#allocation13] sm:$0xf]
        %v1944 = vld [vmem:[#allocation13 + $0x4] sm:$0xf]
        %v1945 = vld [vmem:[#allocation13 + $0x8] sm:$0xf]
        %v1946 = vld [vmem:[#allocation13 + $0xc] sm:$0xf]
        %v1947 = vld [vmem:[#allocation13 + $0x10] sm:$0xf]
        %v1948 = vld [vmem:[#allocation13 + $0x14] sm:$0xf]
        %v1949 = vld [vmem:[#allocation13 + $0x18] sm:$0xf]
        %v1950 = vld [vmem:[#allocation13 + $0x1c] sm:$0xf]
        %v1951 = vld [vmem:[#allocation14] sm:$0x1]
        %v1953 = vlaneseq
        %v1954 = vshrl.u32 %v1953, 7
        %v1955 = vsub.s32 0, %v1954
        %v1956 = vrot.slane %v1951, %v1955
        %v1966 = vunpack.c.l.b16 %v1943
        %v1967 = vunpack.c.l.b16 %v1944
        %v1968 = vunpack.c.l.b16 %v1945
        %v1969 = vunpack.c.l.b16 %v1946
        %v1970 = vunpack.c.l.b16 %v1947
        %v1971 = vunpack.c.l.b16 %v1948
        %v1972 = vunpack.c.l.b16 %v1949
        %v1973 = vunpack.c.l.b16 %v1950
        %v1974 = vpack.c.b16 %v1967, %v1966
        %v1975 = vpack.c.b16 %v1969, %v1968
        %v1976 = vpack.c.b16 %v1971, %v1970
        %v1977 = vpack.c.b16 %v1973, %v1972
        %v1983 = vsel %vm1797, %v1935, 0
        %v1986 = vsel %vm1797, %v1936, 0
        %v1989 = vsel %vm1797, %v1937, 0
        %v1992 = vsel %vm1797, %v1938, 0
        %v1995 = vsel %vm1797, %v1939, 0
        %v1998 = vsel %vm1797, %v1940, 0
        %v2001 = vsel %vm1797, %v1941, 0
        %v2004 = vsel %vm1797, %v1942, 0
        %2006 = vmatprep.subr.bf16.mxu0 0
        %2007 = vmatpush1.bf16.msra.mxu0 %v1974
        %2008 = vmatprep.subr.bf16.mxu0 0
        %2009 = vmatpush1.bf16.msra.mxu0 %v1975
        %2010 = vmatprep.subr.bf16.mxu0 0
        %2011 = vmatpush1.bf16.msra.mxu0 %v1976
        %2012 = vmatprep.subr.bf16.mxu0 0
        %2013 = vmatpush1.bf16.msra.mxu0 %v1977
        %2014 = vmatprep.subr.bf16.mxu0 0
        %2015 = vmatpush1.bf16.msra.mxu0 0
        %2016 = vmatprep.subr.bf16.mxu0 0
        %2017 = vmatpush1.bf16.msra.mxu0 0
        %2018 = vmatprep.subr.bf16.mxu0 0
        %2019 = vmatpush1.bf16.msra.mxu0 0
        %2020 = vmatprep.subr.bf16.mxu0 0
        %2021 = vmatpush1.bf16.msra.mxu0 0
        %2022 = vmatprep.subr.bf16.mxu0 0
        %2023 = vmatpush1.bf16.msra.mxu0 0
        %2024 = vmatprep.subr.bf16.mxu0 0
        %2025 = vmatpush1.bf16.msra.mxu0 0
        %2026 = vmatprep.subr.bf16.mxu0 0
        %2027 = vmatpush1.bf16.msra.mxu0 0
        %2028 = vmatprep.subr.bf16.mxu0 0
        %2029 = vmatpush1.bf16.msra.mxu0 0
        %2030 = vmatprep.subr.bf16.mxu0 0
        %2031 = vmatpush1.bf16.msra.mxu0 0
        %2032 = vmatprep.subr.bf16.mxu0 0
        %2033 = vmatpush1.bf16.msra.mxu0 0
        %2034 = vmatprep.subr.bf16.mxu0 0
        %2035 = vmatpush1.bf16.msra.mxu0 0
        %2036 = vmatprep.subr.bf16.mxu0 0
        %2037 = vmatpush1.bf16.msra.mxu0 0
        %2038 = vmatprep.mubr.bf16.mxu0 0
        %2039 = vmatmul.mubr.bf16.gmra.mrb[0].mxu0 %v1983
        %v2040 = vpop.f32.mrb[0].mxu0
        %v2041 = vadd.f32 %v1956, %v2040
        %v2042 = vpop.f32.mrb[0].mxu0
        %v2043 = vpop.f32.mrb[0].mxu0
        %v2044 = vadd.f32 %v1956, %v2043
        %v2045 = vpop.f32.mrb[0].mxu0
        %2046 = vmatprep.mubr.bf16.mxu0 0
        %2047 = vmatmul.mubr.bf16.gmra.mrb[0].mxu0 %v1986
        %v2048 = vpop.f32.mrb[0].mxu0
        %v2049 = vadd.f32 %v1956, %v2048
        %v2050 = vpop.f32.mrb[0].mxu0
        %v2051 = vpop.f32.mrb[0].mxu0
        %v2052 = vadd.f32 %v1956, %v2051
        %v2053 = vpop.f32.mrb[0].mxu0
        %2054 = vmatprep.mubr.bf16.mxu0 0
        %2055 = vmatmul.mubr.bf16.gmra.mrb[0].mxu0 %v1989
        %v2056 = vpop.f32.mrb[0].mxu0
        %v2057 = vadd.f32 %v1956, %v2056
        %v2058 = vpop.f32.mrb[0].mxu0
        %v2059 = vpop.f32.mrb[0].mxu0
        %v2060 = vadd.f32 %v1956, %v2059
        %v2061 = vpop.f32.mrb[0].mxu0
        %2062 = vmatprep.mubr.bf16.mxu0 0
        %2063 = vmatmul.mubr.bf16.gmra.mrb[0].mxu0 %v1992
        %v2064 = vpop.f32.mrb[0].mxu0
        %v2065 = vadd.f32 %v1956, %v2064
        %v2066 = vpop.f32.mrb[0].mxu0
        %v2067 = vpop.f32.mrb[0].mxu0
        %v2068 = vadd.f32 %v1956, %v2067
        %v2069 = vpop.f32.mrb[0].mxu0
        %2070 = vmatprep.mubr.bf16.mxu0 0
        %2071 = vmatmul.mubr.bf16.gmra.mrb[0].mxu0 %v1995
        %v2072 = vpop.f32.mrb[0].mxu0
        %v2073 = vadd.f32 %v1956, %v2072
        %v2074 = vpop.f32.mrb[0].mxu0
        %v2075 = vpop.f32.mrb[0].mxu0
        %v2076 = vadd.f32 %v1956, %v2075
        %v2077 = vpop.f32.mrb[0].mxu0
        %2078 = vmatprep.mubr.bf16.mxu0 0
        %2079 = vmatmul.mubr.bf16.gmra.mrb[0].mxu0 %v1998
        %v2080 = vpop.f32.mrb[0].mxu0
        %v2081 = vadd.f32 %v1956, %v2080
        %v2082 = vpop.f32.mrb[0].mxu0
        %v2083 = vpop.f32.mrb[0].mxu0
        %v2084 = vadd.f32 %v1956, %v2083
        %v2085 = vpop.f32.mrb[0].mxu0
        %2086 = vmatprep.mubr.bf16.mxu0 0
        %2087 = vmatmul.mubr.bf16.gmra.mrb[0].mxu0 %v2001
        %v2088 = vpop.f32.mrb[0].mxu0
        %v2089 = vadd.f32 %v1956, %v2088
        %v2090 = vpop.f32.mrb[0].mxu0
        %v2091 = vpop.f32.mrb[0].mxu0
        %v2092 = vadd.f32 %v1956, %v2091
        %v2093 = vpop.f32.mrb[0].mxu0
        %2094 = vmatprep.mubr.bf16.mxu0 0
        %2095 = vmatmul.mubr.bf16.gmra.mrb[0].mxu0 %v2004
        %v2096 = vpop.f32.mrb[0].mxu0
        %v2097 = vadd.f32 %v1956, %v2096
        %v2098 = vpop.f32.mrb[0].mxu0
        %v2099 = vpop.f32.mrb[0].mxu0
        %v2100 = vadd.f32 %v1956, %v2099
        %v2101 = vpop.f32.mrb[0].mxu0
        %2102 = vdwg.mxu0
        %v2103 = vmax.f32 %v2041, 0.0
        %v2104 = vmax.f32 %v2044, 0.0
        %v2105 = vmax.f32 %v2049, 0.0
        %v2106 = vmax.f32 %v2052, 0.0
        %v2107 = vmax.f32 %v2057, 0.0
        %v2108 = vmax.f32 %v2060, 0.0
        %v2109 = vmax.f32 %v2065, 0.0
        %v2110 = vmax.f32 %v2068, 0.0
        %v2111 = vmax.f32 %v2073, 0.0
        %v2112 = vmax.f32 %v2076, 0.0
        %v2113 = vmax.f32 %v2081, 0.0
        %v2114 = vmax.f32 %v2084, 0.0
        %v2115 = vmax.f32 %v2089, 0.0
        %v2116 = vmax.f32 %v2092, 0.0
        %v2117 = vmax.f32 %v2097, 0.0
        %v2118 = vmax.f32 %v2100, 0.0
        %v2119 = vpack.c.bf16 %v2104, %v2103
        %v2120 = vpack.c.bf16 %v2106, %v2105
        %v2121 = vpack.c.bf16 %v2108, %v2107
        %v2122 = vpack.c.bf16 %v2110, %v2109
        %v2123 = vpack.c.bf16 %v2112, %v2111
        %v2124 = vpack.c.bf16 %v2114, %v2113
        %v2125 = vpack.c.bf16 %v2116, %v2115
        %v2126 = vpack.c.bf16 %v2118, %v2117
        %v2127 = vld [vmem:[#allocation16] sm:$0xf]
        %v2128 = vld [vmem:[%s8] sm:$0xf]
        %v2129 = vld [vmem:[%s8 + $0x4] sm:$0xf]
        %v2130 = vld [vmem:[%s8 + $0x8] sm:$0xf]
        %v2131 = vld [vmem:[%s8 + $0xc] sm:$0xf]
        %v2132 = vld [vmem:[%s8 + $0x10] sm:$0xf]
        %v2133 = vld [vmem:[%s8 + $0x14] sm:$0xf]
        %v2134 = vld [vmem:[%s8 + $0x18] sm:$0xf]
        %v2135 = vld [vmem:[%s8 + $0x1c] sm:$0xf]
        %v2136 = vld [vmem:[%s8 + $0x20] sm:$0xf]
        %v2137 = vld [vmem:[%s8 + $0x24] sm:$0xf]
        %v2138 = vld [vmem:[%s8 + $0x28] sm:$0xf]
        %v2139 = vld [vmem:[%s8 + $0x2c] sm:$0xf]
        %v2140 = vld [vmem:[%s8 + $0x30] sm:$0xf]
        %v2141 = vld [vmem:[%s8 + $0x34] sm:$0xf]
        %v2142 = vld [vmem:[%s8 + $0x38] sm:$0xf]
        %v2143 = vld [vmem:[%s8 + $0x3c] sm:$0xf]
        %v2160 = vunpack.c.l.b16 %v2128
        %v2161 = vunpack.c.l.b16 %v2129
        %v2162 = vunpack.c.l.b16 %v2130
        %v2163 = vunpack.c.l.b16 %v2131
        %v2164 = vunpack.c.l.b16 %v2132
        %v2165 = vunpack.c.l.b16 %v2133
        %v2166 = vunpack.c.l.b16 %v2134
        %v2167 = vunpack.c.l.b16 %v2135
        %v2168 = vunpack.c.l.b16 %v2136
        %v2169 = vunpack.c.l.b16 %v2137
        %v2170 = vunpack.c.l.b16 %v2138
        %v2171 = vunpack.c.l.b16 %v2139
        %v2172 = vunpack.c.l.b16 %v2140
        %v2173 = vunpack.c.l.b16 %v2141
        %v2174 = vunpack.c.l.b16 %v2142
        %v2175 = vunpack.c.l.b16 %v2143
        %v2176 = vpack.c.b16 %v2161, %v2160
        %v2177 = vpack.c.b16 %v2163, %v2162
        %v2178 = vpack.c.b16 %v2165, %v2164
        %v2179 = vpack.c.b16 %v2167, %v2166
        %v2180 = vpack.c.b16 %v2169, %v2168
        %v2181 = vpack.c.b16 %v2171, %v2170
        %v2182 = vpack.c.b16 %v2173, %v2172
        %v2183 = vpack.c.b16 %v2175, %v2174
        %2192 = vmatprep.subr.bf16.mxu0 0
        %2193 = vmatpush1.bf16.msra.mxu0 %v2176
        %2194 = vmatprep.subr.bf16.mxu0 0
        %2195 = vmatpush1.bf16.msra.mxu0 %v2177
        %2196 = vmatprep.subr.bf16.mxu0 0
        %2197 = vmatpush1.bf16.msra.mxu0 %v2178
        %2198 = vmatprep.subr.bf16.mxu0 0
        %2199 = vmatpush1.bf16.msra.mxu0 %v2179
        %2200 = vmatprep.subr.bf16.mxu0 0
        %2201 = vmatpush1.bf16.msra.mxu0 %v2180
        %2202 = vmatprep.subr.bf16.mxu0 0
        %2203 = vmatpush1.bf16.msra.mxu0 %v2181
        %2204 = vmatprep.subr.bf16.mxu0 0
        %2205 = vmatpush1.bf16.msra.mxu0 %v2182
        %2206 = vmatprep.subr.bf16.mxu0 0
        %2207 = vmatpush1.bf16.msra.mxu0 %v2183
        %2208 = vmatprep.subr.bf16.mxu0 0
        %2209 = vmatpush1.bf16.msra.mxu0 0
        %2210 = vmatprep.subr.bf16.mxu0 0
        %2211 = vmatpush1.bf16.msra.mxu0 0
        %2212 = vmatprep.subr.bf16.mxu0 0
        %2213 = vmatpush1.bf16.msra.mxu0 0
        %2214 = vmatprep.subr.bf16.mxu0 0
        %2215 = vmatpush1.bf16.msra.mxu0 0
        %2216 = vmatprep.subr.bf16.mxu0 0
        %2217 = vmatpush1.bf16.msra.mxu0 0
        %2218 = vmatprep.subr.bf16.mxu0 0
        %2219 = vmatpush1.bf16.msra.mxu0 0
        %2220 = vmatprep.subr.bf16.mxu0 0
        %2221 = vmatpush1.bf16.msra.mxu0 0
        %2222 = vmatprep.subr.bf16.mxu0 0
        %2223 = vmatpush1.bf16.msra.mxu0 0
        %2224 = vmatprep.mubr.bf16.mxu0 0
        %2225 = vmatmul.mubr.bf16.gmra.mrb[0].mxu0 %v2119
        %v2226 = vpop.f32.mrb[0].mxu0
        %v2227 = vadd.f32 0.0, %v2226
        %v2228 = vpop.f32.mrb[0].mxu0
        %v2229 = vpop.f32.mrb[0].mxu0
        %v2230 = vadd.f32 0.0, %v2229
        %v2231 = vpop.f32.mrb[0].mxu0
        %2232 = vmatprep.mubr.bf16.mxu0 0
        %2233 = vmatmul.mubr.bf16.gmra.mrb[0].mxu0 %v2120
        %v2234 = vpop.f32.mrb[0].mxu0
        %v2235 = vadd.f32 0.0, %v2234
        %v2236 = vpop.f32.mrb[0].mxu0
        %v2237 = vpop.f32.mrb[0].mxu0
        %v2238 = vadd.f32 0.0, %v2237
        %v2239 = vpop.f32.mrb[0].mxu0
        %2240 = vmatprep.mubr.bf16.mxu0 0
        %2241 = vmatmul.mubr.bf16.gmra.mrb[0].mxu0 %v2121
        %v2242 = vpop.f32.mrb[0].mxu0
        %v2243 = vadd.f32 0.0, %v2242
        %v2244 = vpop.f32.mrb[0].mxu0
        %v2245 = vpop.f32.mrb[0].mxu0
        %v2246 = vadd.f32 0.0, %v2245
        %v2247 = vpop.f32.mrb[0].mxu0
        %2248 = vmatprep.mubr.bf16.mxu0 0
        %2249 = vmatmul.mubr.bf16.gmra.mrb[0].mxu0 %v2122
        %v2250 = vpop.f32.mrb[0].mxu0
        %v2251 = vadd.f32 0.0, %v2250
        %v2252 = vpop.f32.mrb[0].mxu0
        %v2253 = vpop.f32.mrb[0].mxu0
        %v2254 = vadd.f32 0.0, %v2253
        %v2255 = vpop.f32.mrb[0].mxu0
        %2256 = vmatprep.mubr.bf16.mxu0 0
        %2257 = vmatmul.mubr.bf16.gmra.mrb[0].mxu0 %v2123
        %v2258 = vpop.f32.mrb[0].mxu0
        %v2259 = vadd.f32 0.0, %v2258
        %v2260 = vpop.f32.mrb[0].mxu0
        %v2261 = vpop.f32.mrb[0].mxu0
        %v2262 = vadd.f32 0.0, %v2261
        %v2263 = vpop.f32.mrb[0].mxu0
        %2264 = vmatprep.mubr.bf16.mxu0 0
        %2265 = vmatmul.mubr.bf16.gmra.mrb[0].mxu0 %v2124
        %v2266 = vpop.f32.mrb[0].mxu0
        %v2267 = vadd.f32 0.0, %v2266
        %v2268 = vpop.f32.mrb[0].mxu0
        %v2269 = vpop.f32.mrb[0].mxu0
        %v2270 = vadd.f32 0.0, %v2269
        %v2271 = vpop.f32.mrb[0].mxu0
        %2272 = vmatprep.mubr.bf16.mxu0 0
        %2273 = vmatmul.mubr.bf16.gmra.mrb[0].mxu0 %v2125
        %v2274 = vpop.f32.mrb[0].mxu0
        %v2275 = vadd.f32 0.0, %v2274
        %v2276 = vpop.f32.mrb[0].mxu0
        %v2277 = vpop.f32.mrb[0].mxu0
        %v2278 = vadd.f32 0.0, %v2277
        %v2279 = vpop.f32.mrb[0].mxu0
        %2280 = vmatprep.mubr.bf16.mxu0 0
        %2281 = vmatmul.mubr.bf16.gmra.mrb[0].mxu0 %v2126
        %v2282 = vpop.f32.mrb[0].mxu0
        %v2283 = vadd.f32 0.0, %v2282
        %v2284 = vpop.f32.mrb[0].mxu0
        %v2285 = vpop.f32.mrb[0].mxu0
        %v2286 = vadd.f32 0.0, %v2285
        %v2287 = vpop.f32.mrb[0].mxu0
        %2288 = vdwg.mxu0
        %v2290 = vsel %vm1633, %v2127, 0
        %2292 = vmatprep.subr.bf16.mxu0 0
        %2293 = vmatpush1.bf16.msra.mxu0 %v2290
        %2294 = vmatprep.subr.bf16.mxu0 0
        %2295 = vmatpush1.bf16.msra.mxu0 0
        %2296 = vmatprep.subr.bf16.mxu0 0
        %2297 = vmatpush1.bf16.msra.mxu0 0
        %2298 = vmatprep.subr.bf16.mxu0 0
        %2299 = vmatpush1.bf16.msra.mxu0 0
        %2300 = vmatprep.subr.bf16.mxu0 0
        %2301 = vmatpush1.bf16.msra.mxu0 0
        %2302 = vmatprep.subr.bf16.mxu0 0
        %2303 = vmatpush1.bf16.msra.mxu0 0
        %2304 = vmatprep.subr.bf16.mxu0 0
        %2305 = vmatpush1.bf16.msra.mxu0 0
        %2306 = vmatprep.subr.bf16.mxu0 0
        %2307 = vmatpush1.bf16.msra.mxu0 0
        %2308 = vmatprep.subr.bf16.mxu0 0
        %2309 = vmatpush1.bf16.msra.mxu0 0
        %2310 = vmatprep.subr.bf16.mxu0 0
        %2311 = vmatpush1.bf16.msra.mxu0 0
        %2312 = vmatprep.subr.bf16.mxu0 0
        %2313 = vmatpush1.bf16.msra.mxu0 0
        %2314 = vmatprep.subr.bf16.mxu0 0
        %2315 = vmatpush1.bf16.msra.mxu0 0
        %2316 = vmatprep.subr.bf16.mxu0 0
        %2317 = vmatpush1.bf16.msra.mxu0 0
        %2318 = vmatprep.subr.bf16.mxu0 0
        %2319 = vmatpush1.bf16.msra.mxu0 0
        %2320 = vmatprep.subr.bf16.mxu0 0
        %2321 = vmatpush1.bf16.msra.mxu0 0
        %2322 = vmatprep.subr.bf16.mxu0 0
        %2323 = vmatpush1.bf16.msra.mxu0 0
        %2324 = vmatprep.mubr.bf16.mxu0 0
        %2325 = vmatmul.mubr.bf16.gmra.mrb[0].mxu0 %v1610
        %v2326 = vpop.f32.mrb[0].mxu0
        %v2327 = vadd.f32 %v2227, %v2326
        %v2328 = vpop.f32.mrb[0].mxu0
        %v2329 = vpop.f32.mrb[0].mxu0
        %v2330 = vadd.f32 %v2230, %v2329
        %v2331 = vpop.f32.mrb[0].mxu0
        %2332 = vmatprep.mubr.bf16.mxu0 0
        %2333 = vmatmul.mubr.bf16.gmra.mrb[0].mxu0 %v1613
        %v2334 = vpop.f32.mrb[0].mxu0
        %v2335 = vadd.f32 %v2235, %v2334
        %v2336 = vpop.f32.mrb[0].mxu0
        %v2337 = vpop.f32.mrb[0].mxu0
        %v2338 = vadd.f32 %v2238, %v2337
        %v2339 = vpop.f32.mrb[0].mxu0
        %2340 = vmatprep.mubr.bf16.mxu0 0
        %2341 = vmatmul.mubr.bf16.gmra.mrb[0].mxu0 %v1616
        %v2342 = vpop.f32.mrb[0].mxu0
        %v2343 = vadd.f32 %v2243, %v2342
        %v2344 = vpop.f32.mrb[0].mxu0
        %v2345 = vpop.f32.mrb[0].mxu0
        %v2346 = vadd.f32 %v2246, %v2345
        %v2347 = vpop.f32.mrb[0].mxu0
        %2348 = vmatprep.mubr.bf16.mxu0 0
        %2349 = vmatmul.mubr.bf16.gmra.mrb[0].mxu0 %v1619
        %v2350 = vpop.f32.mrb[0].mxu0
        %v2351 = vadd.f32 %v2251, %v2350
        %v2352 = vpop.f32.mrb[0].mxu0
        %v2353 = vpop.f32.mrb[0].mxu0
        %v2354 = vadd.f32 %v2254, %v2353
        %v2355 = vpop.f32.mrb[0].mxu0
        %2356 = vmatprep.mubr.bf16.mxu0 0
        %2357 = vmatmul.mubr.bf16.gmra.mrb[0].mxu0 %v1622
        %v2358 = vpop.f32.mrb[0].mxu0
        %v2359 = vadd.f32 %v2259, %v2358
        %v2360 = vpop.f32.mrb[0].mxu0
        %v2361 = vpop.f32.mrb[0].mxu0
        %v2362 = vadd.f32 %v2262, %v2361
        %v2363 = vpop.f32.mrb[0].mxu0
        %2364 = vmatprep.mubr.bf16.mxu0 0
        %2365 = vmatmul.mubr.bf16.gmra.mrb[0].mxu0 %v1625
        %v2366 = vpop.f32.mrb[0].mxu0
        %v2367 = vadd.f32 %v2267, %v2366
        %v2368 = vpop.f32.mrb[0].mxu0
        %v2369 = vpop.f32.mrb[0].mxu0
        %v2370 = vadd.f32 %v2270, %v2369
        %v2371 = vpop.f32.mrb[0].mxu0
        %2372 = vmatprep.mubr.bf16.mxu0 0
        %2373 = vmatmul.mubr.bf16.gmra.mrb[0].mxu0 %v1628
        %v2374 = vpop.f32.mrb[0].mxu0
        %v2375 = vadd.f32 %v2275, %v2374
        %v2376 = vpop.f32.mrb[0].mxu0
        %v2377 = vpop.f32.mrb[0].mxu0
        %v2378 = vadd.f32 %v2278, %v2377
        %v2379 = vpop.f32.mrb[0].mxu0
        %2380 = vmatprep.mubr.bf16.mxu0 0
        %2381 = vmatmul.mubr.bf16.gmra.mrb[0].mxu0 %v1631
        %v2382 = vpop.f32.mrb[0].mxu0
        %v2383 = vadd.f32 %v2283, %v2382
        %v2384 = vpop.f32.mrb[0].mxu0
        %v2385 = vpop.f32.mrb[0].mxu0
        %v2386 = vadd.f32 %v2286, %v2385
        %v2387 = vpop.f32.mrb[0].mxu0
        %2388 = vdwg.mxu0
        %v2389 = vld [vmem:[#allocation17] sm:$0x1]
        %v2391 = vlaneseq
        %v2392 = vshrl.u32 %v2391, 7
        %v2393 = vsub.s32 0, %v2392
        %v2394 = vrot.slane %v2389, %v2393
        %v2396 = vadd.f32 %v2327, %v2394
        %v2397 = vadd.f32 %v2330, %v2394
        %v2398 = vadd.f32 %v2335, %v2394
        %v2399 = vadd.f32 %v2338, %v2394
        %v2400 = vadd.f32 %v2343, %v2394
        %v2401 = vadd.f32 %v2346, %v2394
        %v2402 = vadd.f32 %v2351, %v2394
        %v2403 = vadd.f32 %v2354, %v2394
        %v2404 = vadd.f32 %v2359, %v2394
        %v2405 = vadd.f32 %v2362, %v2394
        %v2406 = vadd.f32 %v2367, %v2394
        %v2407 = vadd.f32 %v2370, %v2394
        %v2408 = vadd.f32 %v2375, %v2394
        %v2409 = vadd.f32 %v2378, %v2394
        %v2410 = vadd.f32 %v2383, %v2394
        %v2411 = vadd.f32 %v2386, %v2394
        %v2412 = vmax.f32 %v2396, 0.0
        %v2413 = vmax.f32 %v2397, 0.0
        %v2414 = vmax.f32 %v2398, 0.0
        %v2415 = vmax.f32 %v2399, 0.0
        %v2416 = vmax.f32 %v2400, 0.0
        %v2417 = vmax.f32 %v2401, 0.0
        %v2418 = vmax.f32 %v2402, 0.0
        %v2419 = vmax.f32 %v2403, 0.0
        %v2420 = vmax.f32 %v2404, 0.0
        %v2421 = vmax.f32 %v2405, 0.0
        %v2422 = vmax.f32 %v2406, 0.0
        %v2423 = vmax.f32 %v2407, 0.0
        %v2424 = vmax.f32 %v2408, 0.0
        %v2425 = vmax.f32 %v2409, 0.0
        %v2426 = vmax.f32 %v2410, 0.0
        %v2427 = vmax.f32 %v2411, 0.0
        %v2428 = vpack.c.bf16 %v2413, %v2412
        %v2429 = vpack.c.bf16 %v2415, %v2414
        %v2430 = vpack.c.bf16 %v2417, %v2416
        %v2431 = vpack.c.bf16 %v2419, %v2418
        %v2432 = vpack.c.bf16 %v2421, %v2420
        %v2433 = vpack.c.bf16 %v2423, %v2422
        %v2434 = vpack.c.bf16 %v2425, %v2424
        %v2435 = vpack.c.bf16 %v2427, %v2426
        %v2436 = vld [vmem:[#allocation19] sm:$0xf]
        %v2437 = vld [vmem:[#allocation19 + $0x4] sm:$0xf]
        %v2438 = vld [vmem:[#allocation19 + $0x8] sm:$0xf]
        %v2439 = vld [vmem:[#allocation19 + $0xc] sm:$0xf]
        %v2440 = vld [vmem:[#allocation19 + $0x10] sm:$0xf]
        %v2441 = vld [vmem:[#allocation19 + $0x14] sm:$0xf]
        %v2442 = vld [vmem:[#allocation19 + $0x18] sm:$0xf]
        %v2443 = vld [vmem:[#allocation19 + $0x1c] sm:$0xf]
        %v2444 = vld [vmem:[#allocation19 + $0x20] sm:$0xf]
        %v2445 = vld [vmem:[#allocation19 + $0x24] sm:$0xf]
        %v2446 = vld [vmem:[#allocation19 + $0x28] sm:$0xf]
        %v2447 = vld [vmem:[#allocation19 + $0x2c] sm:$0xf]
        %v2448 = vld [vmem:[#allocation19 + $0x30] sm:$0xf]
        %v2449 = vld [vmem:[#allocation19 + $0x34] sm:$0xf]
        %v2450 = vld [vmem:[#allocation19 + $0x38] sm:$0xf]
        %v2451 = vld [vmem:[#allocation19 + $0x3c] sm:$0xf]
        %v2452 = vld [vmem:[#allocation20] sm:$0x1]
        %v2454 = vlaneseq
        %v2455 = vshrl.u32 %v2454, 7
        %v2456 = vsub.s32 0, %v2455
        %v2457 = vrot.slane %v2452, %v2456
        %v2475 = vunpack.c.l.b16 %v2436
        %v2476 = vunpack.c.l.b16 %v2437
        %v2477 = vunpack.c.l.b16 %v2438
        %v2478 = vunpack.c.l.b16 %v2439
        %v2479 = vunpack.c.l.b16 %v2440
        %v2480 = vunpack.c.l.b16 %v2441
        %v2481 = vunpack.c.l.b16 %v2442
        %v2482 = vunpack.c.l.b16 %v2443
        %v2483 = vunpack.c.l.b16 %v2444
        %v2484 = vunpack.c.l.b16 %v2445
        %v2485 = vunpack.c.l.b16 %v2446
        %v2486 = vunpack.c.l.b16 %v2447
        %v2487 = vunpack.c.l.b16 %v2448
        %v2488 = vunpack.c.l.b16 %v2449
        %v2489 = vunpack.c.l.b16 %v2450
        %v2490 = vunpack.c.l.b16 %v2451
        %v2491 = vpack.c.b16 %v2476, %v2475
        %v2492 = vpack.c.b16 %v2478, %v2477
        %v2493 = vpack.c.b16 %v2480, %v2479
        %v2494 = vpack.c.b16 %v2482, %v2481
        %v2495 = vpack.c.b16 %v2484, %v2483
        %v2496 = vpack.c.b16 %v2486, %v2485
        %v2497 = vpack.c.b16 %v2488, %v2487
        %v2498 = vpack.c.b16 %v2490, %v2489
        %2507 = vmatprep.subr.bf16.mxu0 0
        %2508 = vmatpush1.bf16.msra.mxu0 %v2491
        %2509 = vmatprep.subr.bf16.mxu0 0
        %2510 = vmatpush1.bf16.msra.mxu0 %v2492
        %2511 = vmatprep.subr.bf16.mxu0 0
        %2512 = vmatpush1.bf16.msra.mxu0 %v2493
        %2513 = vmatprep.subr.bf16.mxu0 0
        %2514 = vmatpush1.bf16.msra.mxu0 %v2494
        %2515 = vmatprep.subr.bf16.mxu0 0
        %2516 = vmatpush1.bf16.msra.mxu0 %v2495
        %2517 = vmatprep.subr.bf16.mxu0 0
        %2518 = vmatpush1.bf16.msra.mxu0 %v2496
        %2519 = vmatprep.subr.bf16.mxu0 0
        %2520 = vmatpush1.bf16.msra.mxu0 %v2497
        %2521 = vmatprep.subr.bf16.mxu0 0
        %2522 = vmatpush1.bf16.msra.mxu0 %v2498
        %2523 = vmatprep.subr.bf16.mxu0 0
        %2524 = vmatpush1.bf16.msra.mxu0 0
        %2525 = vmatprep.subr.bf16.mxu0 0
        %2526 = vmatpush1.bf16.msra.mxu0 0
        %2527 = vmatprep.subr.bf16.mxu0 0
        %2528 = vmatpush1.bf16.msra.mxu0 0
        %2529 = vmatprep.subr.bf16.mxu0 0
        %2530 = vmatpush1.bf16.msra.mxu0 0
        %2531 = vmatprep.subr.bf16.mxu0 0
        %2532 = vmatpush1.bf16.msra.mxu0 0
        %2533 = vmatprep.subr.bf16.mxu0 0
        %2534 = vmatpush1.bf16.msra.mxu0 0
        %2535 = vmatprep.subr.bf16.mxu0 0
        %2536 = vmatpush1.bf16.msra.mxu0 0
        %2537 = vmatprep.subr.bf16.mxu0 0
        %2538 = vmatpush1.bf16.msra.mxu0 0
        %2539 = vmatprep.mubr.bf16.mxu0 0
        %2540 = vmatmul.mubr.bf16.gmra.mrb[0].mxu0 %v2428
        %v2541 = vpop.f32.mrb[0].mxu0
        %v2542 = vadd.f32 %v2457, %v2541
        %v2543 = vpop.f32.mrb[0].mxu0
        %v2544 = vpop.f32.mrb[0].mxu0
        %v2545 = vadd.f32 %v2457, %v2544
        %v2546 = vpop.f32.mrb[0].mxu0
        %2547 = vmatprep.mubr.bf16.mxu0 0
        %2548 = vmatmul.mubr.bf16.gmra.mrb[0].mxu0 %v2429
        %v2549 = vpop.f32.mrb[0].mxu0
        %v2550 = vadd.f32 %v2457, %v2549
        %v2551 = vpop.f32.mrb[0].mxu0
        %v2552 = vpop.f32.mrb[0].mxu0
        %v2553 = vadd.f32 %v2457, %v2552
        %v2554 = vpop.f32.mrb[0].mxu0
        %2555 = vmatprep.mubr.bf16.mxu0 0
        %2556 = vmatmul.mubr.bf16.gmra.mrb[0].mxu0 %v2430
        %v2557 = vpop.f32.mrb[0].mxu0
        %v2558 = vadd.f32 %v2457, %v2557
        %v2559 = vpop.f32.mrb[0].mxu0
        %v2560 = vpop.f32.mrb[0].mxu0
        %v2561 = vadd.f32 %v2457, %v2560
        %v2562 = vpop.f32.mrb[0].mxu0
        %2563 = vmatprep.mubr.bf16.mxu0 0
        %2564 = vmatmul.mubr.bf16.gmra.mrb[0].mxu0 %v2431
        %v2565 = vpop.f32.mrb[0].mxu0
        %v2566 = vadd.f32 %v2457, %v2565
        %v2567 = vpop.f32.mrb[0].mxu0
        %v2568 = vpop.f32.mrb[0].mxu0
        %v2569 = vadd.f32 %v2457, %v2568
        %v2570 = vpop.f32.mrb[0].mxu0
        %2571 = vmatprep.mubr.bf16.mxu0 0
        %2572 = vmatmul.mubr.bf16.gmra.mrb[0].mxu0 %v2432
        %v2573 = vpop.f32.mrb[0].mxu0
        %v2574 = vadd.f32 %v2457, %v2573
        %v2575 = vpop.f32.mrb[0].mxu0
        %v2576 = vpop.f32.mrb[0].mxu0
        %v2577 = vadd.f32 %v2457, %v2576
        %v2578 = vpop.f32.mrb[0].mxu0
        %2579 = vmatprep.mubr.bf16.mxu0 0
        %2580 = vmatmul.mubr.bf16.gmra.mrb[0].mxu0 %v2433
        %v2581 = vpop.f32.mrb[0].mxu0
        %v2582 = vadd.f32 %v2457, %v2581
        %v2583 = vpop.f32.mrb[0].mxu0
        %v2584 = vpop.f32.mrb[0].mxu0
        %v2585 = vadd.f32 %v2457, %v2584
        %v2586 = vpop.f32.mrb[0].mxu0
        %2587 = vmatprep.mubr.bf16.mxu0 0
        %2588 = vmatmul.mubr.bf16.gmra.mrb[0].mxu0 %v2434
        %v2589 = vpop.f32.mrb[0].mxu0
        %v2590 = vadd.f32 %v2457, %v2589
        %v2591 = vpop.f32.mrb[0].mxu0
        %v2592 = vpop.f32.mrb[0].mxu0
        %v2593 = vadd.f32 %v2457, %v2592
        %v2594 = vpop.f32.mrb[0].mxu0
        %2595 = vmatprep.mubr.bf16.mxu0 0
        %2596 = vmatmul.mubr.bf16.gmra.mrb[0].mxu0 %v2435
        %v2597 = vpop.f32.mrb[0].mxu0
        %v2598 = vadd.f32 %v2457, %v2597
        %v2599 = vpop.f32.mrb[0].mxu0
        %v2600 = vpop.f32.mrb[0].mxu0
        %v2601 = vadd.f32 %v2457, %v2600
        %v2602 = vpop.f32.mrb[0].mxu0
        %2603 = vdwg.mxu0
        %v2604 = vmax.f32 %v2542, 0.0
        %v2605 = vmax.f32 %v2545, 0.0
        %v2606 = vmax.f32 %v2550, 0.0
        %v2607 = vmax.f32 %v2553, 0.0
        %v2608 = vmax.f32 %v2558, 0.0
        %v2609 = vmax.f32 %v2561, 0.0
        %v2610 = vmax.f32 %v2566, 0.0
        %v2611 = vmax.f32 %v2569, 0.0
        %v2612 = vmax.f32 %v2574, 0.0
        %v2613 = vmax.f32 %v2577, 0.0
        %v2614 = vmax.f32 %v2582, 0.0
        %v2615 = vmax.f32 %v2585, 0.0
        %v2616 = vmax.f32 %v2590, 0.0
        %v2617 = vmax.f32 %v2593, 0.0
        %v2618 = vmax.f32 %v2598, 0.0
        %v2619 = vmax.f32 %v2601, 0.0
        %v2620 = vpack.c.bf16 %v2605, %v2604
        %v2621 = vpack.c.bf16 %v2607, %v2606
        %v2622 = vpack.c.bf16 %v2609, %v2608
        %v2623 = vpack.c.bf16 %v2611, %v2610
        %v2624 = vpack.c.bf16 %v2613, %v2612
        %v2625 = vpack.c.bf16 %v2615, %v2614
        %v2626 = vpack.c.bf16 %v2617, %v2616
        %v2627 = vpack.c.bf16 %v2619, %v2618
        %v2628 = vld [vmem:[#allocation22] sm:$0xff]
        %v2629 = vld [vmem:[#allocation22 + $0x8] sm:$0xff]
        %v2630 = vld [vmem:[#allocation22 + $0x10] sm:$0xff]
        %v2631 = vld [vmem:[#allocation22 + $0x18] sm:$0xff]
        %v2632 = vld [vmem:[#allocation22 + $0x20] sm:$0xff]
        %v2633 = vld [vmem:[#allocation22 + $0x28] sm:$0xff]
        %v2634 = vld [vmem:[#allocation22 + $0x30] sm:$0xff]
        %v2635 = vld [vmem:[#allocation22 + $0x38] sm:$0xff]
        %v2636 = vld [vmem:[#allocation22 + $0x40] sm:$0xff]
        %v2637 = vld [vmem:[#allocation22 + $0x48] sm:$0xff]
        %v2638 = vld [vmem:[#allocation22 + $0x50] sm:$0xff]
        %v2639 = vld [vmem:[#allocation22 + $0x58] sm:$0xff]
        %v2640 = vld [vmem:[#allocation22 + $0x60] sm:$0xff]
        %v2641 = vld [vmem:[#allocation22 + $0x68] sm:$0xff]
        %v2642 = vld [vmem:[#allocation22 + $0x70] sm:$0xff]
        %v2643 = vld [vmem:[#allocation22 + $0x78] sm:$0xff]
        %v2644 = vld [vmem:[%s13] sm:$0x3]
        %v2646 = vlaneseq
        %v2647 = vshrl.u32 %v2646, 7
        %v2648 = vsub.s32 0, %v2647
        %v2649 = vrot.slane %v2644, %v2648
        %v2650 = vlaneseq
        %v2651 = vshrl.u32 %v2650, 7
        %v2652 = vsub.s32 1, %v2651
        %v2653 = vrot.slane %v2644, %v2652
        %v2672 = vunpack.c.l.b16 %v2628
        %v2673 = vunpack.c.h.b16 %v2628
        %v2674 = vunpack.c.l.b16 %v2629
        %v2675 = vunpack.c.h.b16 %v2629
        %v2676 = vunpack.c.l.b16 %v2630
        %v2677 = vunpack.c.h.b16 %v2630
        %v2678 = vunpack.c.l.b16 %v2631
        %v2679 = vunpack.c.h.b16 %v2631
        %v2680 = vunpack.c.l.b16 %v2632
        %v2681 = vunpack.c.h.b16 %v2632
        %v2682 = vunpack.c.l.b16 %v2633
        %v2683 = vunpack.c.h.b16 %v2633
        %v2684 = vunpack.c.l.b16 %v2634
        %v2685 = vunpack.c.h.b16 %v2634
        %v2686 = vunpack.c.l.b16 %v2635
        %v2687 = vunpack.c.h.b16 %v2635
        %v2688 = vunpack.c.l.b16 %v2636
        %v2689 = vunpack.c.h.b16 %v2636
        %v2690 = vunpack.c.l.b16 %v2637
        %v2691 = vunpack.c.h.b16 %v2637
        %v2692 = vunpack.c.l.b16 %v2638
        %v2693 = vunpack.c.h.b16 %v2638
        %v2694 = vunpack.c.l.b16 %v2639
        %v2695 = vunpack.c.h.b16 %v2639
        %v2696 = vunpack.c.l.b16 %v2640
        %v2697 = vunpack.c.h.b16 %v2640
        %v2698 = vunpack.c.l.b16 %v2641
        %v2699 = vunpack.c.h.b16 %v2641
        %v2700 = vunpack.c.l.b16 %v2642
        %v2701 = vunpack.c.h.b16 %v2642
        %v2702 = vunpack.c.l.b16 %v2643
        %v2703 = vunpack.c.h.b16 %v2643
        %v2704 = vpack.c.b16 %v2674, %v2672
        %v2705 = vpack.c.b16 %v2675, %v2673
        %v2706 = vpack.c.b16 %v2678, %v2676
        %v2707 = vpack.c.b16 %v2679, %v2677
        %v2708 = vpack.c.b16 %v2682, %v2680
        %v2709 = vpack.c.b16 %v2683, %v2681
        %v2710 = vpack.c.b16 %v2686, %v2684
        %v2711 = vpack.c.b16 %v2687, %v2685
        %v2712 = vpack.c.b16 %v2690, %v2688
        %v2713 = vpack.c.b16 %v2691, %v2689
        %v2714 = vpack.c.b16 %v2694, %v2692
        %v2715 = vpack.c.b16 %v2695, %v2693
        %v2716 = vpack.c.b16 %v2698, %v2696
        %v2717 = vpack.c.b16 %v2699, %v2697
        %v2718 = vpack.c.b16 %v2702, %v2700
        %v2719 = vpack.c.b16 %v2703, %v2701
        %2736 = vmatprep.subr.bf16.mxu0 %v2705
        %2737 = vmatpush1.bf16.msra.mxu0 %v2704
        %2738 = vmatprep.subr.bf16.mxu0 %v2707
        %2739 = vmatpush1.bf16.msra.mxu0 %v2706
        %2740 = vmatprep.subr.bf16.mxu0 %v2709
        %2741 = vmatpush1.bf16.msra.mxu0 %v2708
        %2742 = vmatprep.subr.bf16.mxu0 %v2711
        %2743 = vmatpush1.bf16.msra.mxu0 %v2710
        %2744 = vmatprep.subr.bf16.mxu0 %v2713
        %2745 = vmatpush1.bf16.msra.mxu0 %v2712
        %2746 = vmatprep.subr.bf16.mxu0 %v2715
        %2747 = vmatpush1.bf16.msra.mxu0 %v2714
        %2748 = vmatprep.subr.bf16.mxu0 %v2717
        %2749 = vmatpush1.bf16.msra.mxu0 %v2716
        %2750 = vmatprep.subr.bf16.mxu0 %v2719
        %2751 = vmatpush1.bf16.msra.mxu0 %v2718
        %2752 = vmatprep.subr.bf16.mxu0 0
        %2753 = vmatpush1.bf16.msra.mxu0 0
        %2754 = vmatprep.subr.bf16.mxu0 0
        %2755 = vmatpush1.bf16.msra.mxu0 0
        %2756 = vmatprep.subr.bf16.mxu0 0
        %2757 = vmatpush1.bf16.msra.mxu0 0
        %2758 = vmatprep.subr.bf16.mxu0 0
        %2759 = vmatpush1.bf16.msra.mxu0 0
        %2760 = vmatprep.subr.bf16.mxu0 0
        %2761 = vmatpush1.bf16.msra.mxu0 0
        %2762 = vmatprep.subr.bf16.mxu0 0
        %2763 = vmatpush1.bf16.msra.mxu0 0
        %2764 = vmatprep.subr.bf16.mxu0 0
        %2765 = vmatpush1.bf16.msra.mxu0 0
        %2766 = vmatprep.subr.bf16.mxu0 0
        %2767 = vmatpush1.bf16.msra.mxu0 0
        %2768 = vmatprep.mubr.bf16.mxu0 0
        %2769 = vmatmul.mubr.bf16.gmra.mrb[0].mxu0 %v2620
        %v2770 = vpop.f32.mrb[0].mxu0
        %v2771 = vadd.f32 %v2649, %v2770
        %v2772 = vpop.f32.mrb[0].mxu0
        %v2773 = vadd.f32 %v2653, %v2772
        %v2774 = vpop.f32.mrb[0].mxu0
        %v2775 = vadd.f32 %v2649, %v2774
        %v2776 = vpop.f32.mrb[0].mxu0
        %v2777 = vadd.f32 %v2653, %v2776
        %2778 = vmatprep.mubr.bf16.mxu0 0
        %2779 = vmatmul.mubr.bf16.gmra.mrb[0].mxu0 %v2621
        %v2780 = vpop.f32.mrb[0].mxu0
        %v2781 = vadd.f32 %v2649, %v2780
        %v2782 = vpop.f32.mrb[0].mxu0
        %v2783 = vadd.f32 %v2653, %v2782
        %v2784 = vpop.f32.mrb[0].mxu0
        %v2785 = vadd.f32 %v2649, %v2784
        %v2786 = vpop.f32.mrb[0].mxu0
        %v2787 = vadd.f32 %v2653, %v2786
        %2788 = vmatprep.mubr.bf16.mxu0 0
        %2789 = vmatmul.mubr.bf16.gmra.mrb[0].mxu0 %v2622
        %v2790 = vpop.f32.mrb[0].mxu0
        %v2791 = vadd.f32 %v2649, %v2790
        %v2792 = vpop.f32.mrb[0].mxu0
        %v2793 = vadd.f32 %v2653, %v2792
        %v2794 = vpop.f32.mrb[0].mxu0
        %v2795 = vadd.f32 %v2649, %v2794
        %v2796 = vpop.f32.mrb[0].mxu0
        %v2797 = vadd.f32 %v2653, %v2796
        %2798 = vmatprep.mubr.bf16.mxu0 0
        %2799 = vmatmul.mubr.bf16.gmra.mrb[0].mxu0 %v2623
        %v2800 = vpop.f32.mrb[0].mxu0
        %v2801 = vadd.f32 %v2649, %v2800
        %v2802 = vpop.f32.mrb[0].mxu0
        %v2803 = vadd.f32 %v2653, %v2802
        %v2804 = vpop.f32.mrb[0].mxu0
        %v2805 = vadd.f32 %v2649, %v2804
        %v2806 = vpop.f32.mrb[0].mxu0
        %v2807 = vadd.f32 %v2653, %v2806
        %2808 = vmatprep.mubr.bf16.mxu0 0
        %2809 = vmatmul.mubr.bf16.gmra.mrb[0].mxu0 %v2624
        %v2810 = vpop.f32.mrb[0].mxu0
        %v2811 = vadd.f32 %v2649, %v2810
        %v2812 = vpop.f32.mrb[0].mxu0
        %v2813 = vadd.f32 %v2653, %v2812
        %v2814 = vpop.f32.mrb[0].mxu0
        %v2815 = vadd.f32 %v2649, %v2814
        %v2816 = vpop.f32.mrb[0].mxu0
        %v2817 = vadd.f32 %v2653, %v2816
        %2818 = vmatprep.mubr.bf16.mxu0 0
        %2819 = vmatmul.mubr.bf16.gmra.mrb[0].mxu0 %v2625
        %v2820 = vpop.f32.mrb[0].mxu0
        %v2821 = vadd.f32 %v2649, %v2820
        %v2822 = vpop.f32.mrb[0].mxu0
        %v2823 = vadd.f32 %v2653, %v2822
        %v2824 = vpop.f32.mrb[0].mxu0
        %v2825 = vadd.f32 %v2649, %v2824
        %v2826 = vpop.f32.mrb[0].mxu0
        %v2827 = vadd.f32 %v2653, %v2826
        %2828 = vmatprep.mubr.bf16.mxu0 0
        %2829 = vmatmul.mubr.bf16.gmra.mrb[0].mxu0 %v2626
        %v2830 = vpop.f32.mrb[0].mxu0
        %v2831 = vadd.f32 %v2649, %v2830
        %v2832 = vpop.f32.mrb[0].mxu0
        %v2833 = vadd.f32 %v2653, %v2832
        %v2834 = vpop.f32.mrb[0].mxu0
        %v2835 = vadd.f32 %v2649, %v2834
        %v2836 = vpop.f32.mrb[0].mxu0
        %v2837 = vadd.f32 %v2653, %v2836
        %2838 = vmatprep.mubr.bf16.mxu0 0
        %2839 = vmatmul.mubr.bf16.gmra.mrb[0].mxu0 %v2627
        %v2840 = vpop.f32.mrb[0].mxu0
        %v2841 = vadd.f32 %v2649, %v2840
        %v2842 = vpop.f32.mrb[0].mxu0
        %v2843 = vadd.f32 %v2653, %v2842
        %v2844 = vpop.f32.mrb[0].mxu0
        %v2845 = vadd.f32 %v2649, %v2844
        %v2846 = vpop.f32.mrb[0].mxu0
        %v2847 = vadd.f32 %v2653, %v2846
        %2848 = vdwg.mxu0
        %v2849 = vmax.f32 %v2771, 0.0
        %v2850 = vmax.f32 %v2773, 0.0
        %v2851 = vmax.f32 %v2775, 0.0
        %v2852 = vmax.f32 %v2777, 0.0
        %v2853 = vmax.f32 %v2781, 0.0
        %v2854 = vmax.f32 %v2783, 0.0
        %v2855 = vmax.f32 %v2785, 0.0
        %v2856 = vmax.f32 %v2787, 0.0
        %v2857 = vmax.f32 %v2791, 0.0
        %v2858 = vmax.f32 %v2793, 0.0
        %v2859 = vmax.f32 %v2795, 0.0
        %v2860 = vmax.f32 %v2797, 0.0
        %v2861 = vmax.f32 %v2801, 0.0
        %v2862 = vmax.f32 %v2803, 0.0
        %v2863 = vmax.f32 %v2805, 0.0
        %v2864 = vmax.f32 %v2807, 0.0
        %v2865 = vmax.f32 %v2811, 0.0
        %v2866 = vmax.f32 %v2813, 0.0
        %v2867 = vmax.f32 %v2815, 0.0
        %v2868 = vmax.f32 %v2817, 0.0
        %v2869 = vmax.f32 %v2821, 0.0
        %v2870 = vmax.f32 %v2823, 0.0
        %v2871 = vmax.f32 %v2825, 0.0
        %v2872 = vmax.f32 %v2827, 0.0
        %v2873 = vmax.f32 %v2831, 0.0
        %v2874 = vmax.f32 %v2833, 0.0
        %v2875 = vmax.f32 %v2835, 0.0
        %v2876 = vmax.f32 %v2837, 0.0
        %v2877 = vmax.f32 %v2841, 0.0
        %v2878 = vmax.f32 %v2843, 0.0
        %v2879 = vmax.f32 %v2845, 0.0
        %v2880 = vmax.f32 %v2847, 0.0
        %v2881 = vpack.c.bf16 %v2851, %v2849
        %v2882 = vpack.c.bf16 %v2852, %v2850
        %v2883 = vpack.c.bf16 %v2855, %v2853
        %v2884 = vpack.c.bf16 %v2856, %v2854
        %v2885 = vpack.c.bf16 %v2859, %v2857
        %v2886 = vpack.c.bf16 %v2860, %v2858
        %v2887 = vpack.c.bf16 %v2863, %v2861
        %v2888 = vpack.c.bf16 %v2864, %v2862
        %v2889 = vpack.c.bf16 %v2867, %v2865
        %v2890 = vpack.c.bf16 %v2868, %v2866
        %v2891 = vpack.c.bf16 %v2871, %v2869
        %v2892 = vpack.c.bf16 %v2872, %v2870
        %v2893 = vpack.c.bf16 %v2875, %v2873
        %v2894 = vpack.c.bf16 %v2876, %v2874
        %v2895 = vpack.c.bf16 %v2879, %v2877
        %v2896 = vpack.c.bf16 %v2880, %v2878
        %v2897 = vld [vmem:[%s14] sm:$0xff]
        %v2898 = vld [vmem:[%s15] sm:$0xff]
        %v2899 = vld [vmem:[%s15 + $0x8] sm:$0xff]
        %v2900 = vld [vmem:[%s15 + $0x10] sm:$0xff]
        %v2901 = vld [vmem:[%s15 + $0x18] sm:$0xff]
        %v2902 = vld [vmem:[%s15 + $0x20] sm:$0xff]
        %v2903 = vld [vmem:[%s15 + $0x28] sm:$0xff]
        %v2904 = vld [vmem:[%s15 + $0x30] sm:$0xff]
        %v2905 = vld [vmem:[%s15 + $0x38] sm:$0xff]
        %v2906 = vld [vmem:[%s15 + $0x40] sm:$0xff]
        %v2907 = vld [vmem:[%s15 + $0x48] sm:$0xff]
        %v2908 = vld [vmem:[%s15 + $0x50] sm:$0xff]
        %v2909 = vld [vmem:[%s15 + $0x58] sm:$0xff]
        %v2910 = vld [vmem:[%s15 + $0x60] sm:$0xff]
        %v2911 = vld [vmem:[%s15 + $0x68] sm:$0xff]
        %v2912 = vld [vmem:[%s15 + $0x70] sm:$0xff]
        %v2913 = vld [vmem:[%s15 + $0x78] sm:$0xff]
        %v2914 = vld [vmem:[%s15 + $0x80] sm:$0xff]
        %v2915 = vld [vmem:[%s15 + $0x88] sm:$0xff]
        %v2916 = vld [vmem:[%s15 + $0x90] sm:$0xff]
        %v2917 = vld [vmem:[%s15 + $0x98] sm:$0xff]
        %v2918 = vld [vmem:[%s15 + $0xa0] sm:$0xff]
        %v2919 = vld [vmem:[%s15 + $0xa8] sm:$0xff]
        %v2920 = vld [vmem:[%s15 + $0xb0] sm:$0xff]
        %v2921 = vld [vmem:[%s15 + $0xb8] sm:$0xff]
        %v2922 = vld [vmem:[%s15 + $0xc0] sm:$0xff]
        %v2923 = vld [vmem:[%s15 + $0xc8] sm:$0xff]
        %v2924 = vld [vmem:[%s15 + $0xd0] sm:$0xff]
        %v2925 = vld [vmem:[%s15 + $0xd8] sm:$0xff]
        %v2926 = vld [vmem:[%s15 + $0xe0] sm:$0xff]
        %v2927 = vld [vmem:[%s15 + $0xe8] sm:$0xff]
        %v2928 = vld [vmem:[%s15 + $0xf0] sm:$0xff]
        %v2929 = vld [vmem:[%s15 + $0xf8] sm:$0xff]
        %v2962 = vunpack.c.l.b16 %v2898
        %v2963 = vunpack.c.h.b16 %v2898
        %v2964 = vunpack.c.l.b16 %v2899
        %v2965 = vunpack.c.h.b16 %v2899
        %v2966 = vunpack.c.l.b16 %v2900
        %v2967 = vunpack.c.h.b16 %v2900
        %v2968 = vunpack.c.l.b16 %v2901
        %v2969 = vunpack.c.h.b16 %v2901
        %v2970 = vunpack.c.l.b16 %v2902
        %v2971 = vunpack.c.h.b16 %v2902
        %v2972 = vunpack.c.l.b16 %v2903
        %v2973 = vunpack.c.h.b16 %v2903
        %v2974 = vunpack.c.l.b16 %v2904
        %v2975 = vunpack.c.h.b16 %v2904
        %v2976 = vunpack.c.l.b16 %v2905
        %v2977 = vunpack.c.h.b16 %v2905
        %v2978 = vunpack.c.l.b16 %v2906
        %v2979 = vunpack.c.h.b16 %v2906
        %v2980 = vunpack.c.l.b16 %v2907
        %v2981 = vunpack.c.h.b16 %v2907
        %v2982 = vunpack.c.l.b16 %v2908
        %v2983 = vunpack.c.h.b16 %v2908
        %v2984 = vunpack.c.l.b16 %v2909
        %v2985 = vunpack.c.h.b16 %v2909
        %v2986 = vunpack.c.l.b16 %v2910
        %v2987 = vunpack.c.h.b16 %v2910
        %v2988 = vunpack.c.l.b16 %v2911
        %v2989 = vunpack.c.h.b16 %v2911
        %v2990 = vunpack.c.l.b16 %v2912
        %v2991 = vunpack.c.h.b16 %v2912
        %v2992 = vunpack.c.l.b16 %v2913
        %v2993 = vunpack.c.h.b16 %v2913
        %v2994 = vunpack.c.l.b16 %v2914
        %v2995 = vunpack.c.h.b16 %v2914
        %v2996 = vunpack.c.l.b16 %v2915
        %v2997 = vunpack.c.h.b16 %v2915
        %v2998 = vunpack.c.l.b16 %v2916
        %v2999 = vunpack.c.h.b16 %v2916
        %v3000 = vunpack.c.l.b16 %v2917
        %v3001 = vunpack.c.h.b16 %v2917
        %v3002 = vunpack.c.l.b16 %v2918
        %v3003 = vunpack.c.h.b16 %v2918
        %v3004 = vunpack.c.l.b16 %v2919
        %v3005 = vunpack.c.h.b16 %v2919
        %v3006 = vunpack.c.l.b16 %v2920
        %v3007 = vunpack.c.h.b16 %v2920
        %v3008 = vunpack.c.l.b16 %v2921
        %v3009 = vunpack.c.h.b16 %v2921
        %v3010 = vunpack.c.l.b16 %v2922
        %v3011 = vunpack.c.h.b16 %v2922
        %v3012 = vunpack.c.l.b16 %v2923
        %v3013 = vunpack.c.h.b16 %v2923
        %v3014 = vunpack.c.l.b16 %v2924
        %v3015 = vunpack.c.h.b16 %v2924
        %v3016 = vunpack.c.l.b16 %v2925
        %v3017 = vunpack.c.h.b16 %v2925
        %v3018 = vunpack.c.l.b16 %v2926
        %v3019 = vunpack.c.h.b16 %v2926
        %v3020 = vunpack.c.l.b16 %v2927
        %v3021 = vunpack.c.h.b16 %v2927
        %v3022 = vunpack.c.l.b16 %v2928
        %v3023 = vunpack.c.h.b16 %v2928
        %v3024 = vunpack.c.l.b16 %v2929
        %v3025 = vunpack.c.h.b16 %v2929
        %v3026 = vpack.c.b16 %v2964, %v2962
        %v3027 = vpack.c.b16 %v2965, %v2963
        %v3028 = vpack.c.b16 %v2968, %v2966
        %v3029 = vpack.c.b16 %v2969, %v2967
        %v3030 = vpack.c.b16 %v2972, %v2970
        %v3031 = vpack.c.b16 %v2973, %v2971
        %v3032 = vpack.c.b16 %v2976, %v2974
        %v3033 = vpack.c.b16 %v2977, %v2975
        %v3034 = vpack.c.b16 %v2980, %v2978
        %v3035 = vpack.c.b16 %v2981, %v2979
        %v3036 = vpack.c.b16 %v2984, %v2982
        %v3037 = vpack.c.b16 %v2985, %v2983
        %v3038 = vpack.c.b16 %v2988, %v2986
        %v3039 = vpack.c.b16 %v2989, %v2987
        %v3040 = vpack.c.b16 %v2992, %v2990
        %v3041 = vpack.c.b16 %v2993, %v2991
        %v3042 = vpack.c.b16 %v2996, %v2994
        %v3043 = vpack.c.b16 %v2997, %v2995
        %v3044 = vpack.c.b16 %v3000, %v2998
        %v3045 = vpack.c.b16 %v3001, %v2999
        %v3046 = vpack.c.b16 %v3004, %v3002
        %v3047 = vpack.c.b16 %v3005, %v3003
        %v3048 = vpack.c.b16 %v3008, %v3006
        %v3049 = vpack.c.b16 %v3009, %v3007
        %v3050 = vpack.c.b16 %v3012, %v3010
        %v3051 = vpack.c.b16 %v3013, %v3011
        %v3052 = vpack.c.b16 %v3016, %v3014
        %v3053 = vpack.c.b16 %v3017, %v3015
        %v3054 = vpack.c.b16 %v3020, %v3018
        %v3055 = vpack.c.b16 %v3021, %v3019
        %v3056 = vpack.c.b16 %v3024, %v3022
        %v3057 = vpack.c.b16 %v3025, %v3023
        %3090 = vmatprep.subr.bf16.mxu0 %v3027
        %3091 = vmatpush1.bf16.msra.mxu0 %v3026
        %3092 = vmatprep.subr.bf16.mxu0 %v3029
        %3093 = vmatpush1.bf16.msra.mxu0 %v3028
        %3094 = vmatprep.subr.bf16.mxu0 %v3031
        %3095 = vmatpush1.bf16.msra.mxu0 %v3030
        %3096 = vmatprep.subr.bf16.mxu0 %v3033
        %3097 = vmatpush1.bf16.msra.mxu0 %v3032
        %3098 = vmatprep.subr.bf16.mxu0 %v3035
        %3099 = vmatpush1.bf16.msra.mxu0 %v3034
        %3100 = vmatprep.subr.bf16.mxu0 %v3037
        %3101 = vmatpush1.bf16.msra.mxu0 %v3036
        %3102 = vmatprep.subr.bf16.mxu0 %v3039
        %3103 = vmatpush1.bf16.msra.mxu0 %v3038
        %3104 = vmatprep.subr.bf16.mxu0 %v3041
        %3105 = vmatpush1.bf16.msra.mxu0 %v3040
        %3106 = vmatprep.subr.bf16.mxu0 %v3043
        %3107 = vmatpush1.bf16.msra.mxu0 %v3042
        %3108 = vmatprep.subr.bf16.mxu0 %v3045
        %3109 = vmatpush1.bf16.msra.mxu0 %v3044
        %3110 = vmatprep.subr.bf16.mxu0 %v3047
        %3111 = vmatpush1.bf16.msra.mxu0 %v3046
        %3112 = vmatprep.subr.bf16.mxu0 %v3049
        %3113 = vmatpush1.bf16.msra.mxu0 %v3048
        %3114 = vmatprep.subr.bf16.mxu0 %v3051
        %3115 = vmatpush1.bf16.msra.mxu0 %v3050
        %3116 = vmatprep.subr.bf16.mxu0 %v3053
        %3117 = vmatpush1.bf16.msra.mxu0 %v3052
        %3118 = vmatprep.subr.bf16.mxu0 %v3055
        %3119 = vmatpush1.bf16.msra.mxu0 %v3054
        %3120 = vmatprep.subr.bf16.mxu0 %v3057
        %3121 = vmatpush1.bf16.msra.mxu0 %v3056
        %3122 = vmatprep.mubr.bf16.mxu0 %v2882
        %3123 = vmatmul.mubr.bf16.gmra.mrb[0].mxu0 %v2881
        %v3124 = vpop.f32.mrb[0].mxu0
        %v3125 = vadd.f32 0.0, %v3124
        %v3126 = vpop.f32.mrb[0].mxu0
        %v3127 = vadd.f32 0.0, %v3126
        %v3128 = vpop.f32.mrb[0].mxu0
        %v3129 = vadd.f32 0.0, %v3128
        %v3130 = vpop.f32.mrb[0].mxu0
        %v3131 = vadd.f32 0.0, %v3130
        %3132 = vmatprep.mubr.bf16.mxu0 %v2884
        %3133 = vmatmul.mubr.bf16.gmra.mrb[0].mxu0 %v2883
        %v3134 = vpop.f32.mrb[0].mxu0
        %v3135 = vadd.f32 0.0, %v3134
        %v3136 = vpop.f32.mrb[0].mxu0
        %v3137 = vadd.f32 0.0, %v3136
        %v3138 = vpop.f32.mrb[0].mxu0
        %v3139 = vadd.f32 0.0, %v3138
        %v3140 = vpop.f32.mrb[0].mxu0
        %v3141 = vadd.f32 0.0, %v3140
        %3142 = vmatprep.mubr.bf16.mxu0 %v2886
        %3143 = vmatmul.mubr.bf16.gmra.mrb[0].mxu0 %v2885
        %v3144 = vpop.f32.mrb[0].mxu0
        %v3145 = vadd.f32 0.0, %v3144
        %v3146 = vpop.f32.mrb[0].mxu0
        %v3147 = vadd.f32 0.0, %v3146
        %v3148 = vpop.f32.mrb[0].mxu0
        %v3149 = vadd.f32 0.0, %v3148
        %v3150 = vpop.f32.mrb[0].mxu0
        %v3151 = vadd.f32 0.0, %v3150
        %3152 = vmatprep.mubr.bf16.mxu0 %v2888
        %3153 = vmatmul.mubr.bf16.gmra.mrb[0].mxu0 %v2887
        %v3154 = vpop.f32.mrb[0].mxu0
        %v3155 = vadd.f32 0.0, %v3154
        %v3156 = vpop.f32.mrb[0].mxu0
        %v3157 = vadd.f32 0.0, %v3156
        %v3158 = vpop.f32.mrb[0].mxu0
        %v3159 = vadd.f32 0.0, %v3158
        %v3160 = vpop.f32.mrb[0].mxu0
        %v3161 = vadd.f32 0.0, %v3160
        %3162 = vmatprep.mubr.bf16.mxu0 %v2890
        %3163 = vmatmul.mubr.bf16.gmra.mrb[0].mxu0 %v2889
        %v3164 = vpop.f32.mrb[0].mxu0
        %v3165 = vadd.f32 0.0, %v3164
        %v3166 = vpop.f32.mrb[0].mxu0
        %v3167 = vadd.f32 0.0, %v3166
        %v3168 = vpop.f32.mrb[0].mxu0
        %v3169 = vadd.f32 0.0, %v3168
        %v3170 = vpop.f32.mrb[0].mxu0
        %v3171 = vadd.f32 0.0, %v3170
        %3172 = vmatprep.mubr.bf16.mxu0 %v2892
        %3173 = vmatmul.mubr.bf16.gmra.mrb[0].mxu0 %v2891
        %v3174 = vpop.f32.mrb[0].mxu0
        %v3175 = vadd.f32 0.0, %v3174
        %v3176 = vpop.f32.mrb[0].mxu0
        %v3177 = vadd.f32 0.0, %v3176
        %v3178 = vpop.f32.mrb[0].mxu0
        %v3179 = vadd.f32 0.0, %v3178
        %v3180 = vpop.f32.mrb[0].mxu0
        %v3181 = vadd.f32 0.0, %v3180
        %3182 = vmatprep.mubr.bf16.mxu0 %v2894
        %3183 = vmatmul.mubr.bf16.gmra.mrb[0].mxu0 %v2893
        %v3184 = vpop.f32.mrb[0].mxu0
        %v3185 = vadd.f32 0.0, %v3184
        %v3186 = vpop.f32.mrb[0].mxu0
        %v3187 = vadd.f32 0.0, %v3186
        %v3188 = vpop.f32.mrb[0].mxu0
        %v3189 = vadd.f32 0.0, %v3188
        %v3190 = vpop.f32.mrb[0].mxu0
        %v3191 = vadd.f32 0.0, %v3190
        %3192 = vmatprep.mubr.bf16.mxu0 %v2896
        %3193 = vmatmul.mubr.bf16.gmra.mrb[0].mxu0 %v2895
        %v3194 = vpop.f32.mrb[0].mxu0
        %v3195 = vadd.f32 0.0, %v3194
        %v3196 = vpop.f32.mrb[0].mxu0
        %v3197 = vadd.f32 0.0, %v3196
        %v3198 = vpop.f32.mrb[0].mxu0
        %v3199 = vadd.f32 0.0, %v3198
        %v3200 = vpop.f32.mrb[0].mxu0
        %v3201 = vadd.f32 0.0, %v3200
        %3202 = vdwg.mxu0
        %v3204 = vunpack.c.l.b16 %v2897
        %v3205 = vunpack.c.h.b16 %v2897
        %v3206 = vpack.c.b16 %v3204, %v3204
        %v3207 = vpack.c.b16 %v3205, %v3205
        %v3209 = vsel %vm1633, %v3206, 0
        %v3212 = vsel %vm1633, %v3207, 0
        %3214 = vmatprep.subr.bf16.mxu0 %v3212
        %3215 = vmatpush1.bf16.msra.mxu0 %v3209
        %3216 = vmatprep.subr.bf16.mxu0 0
        %3217 = vmatpush1.bf16.msra.mxu0 0
        %3218 = vmatprep.subr.bf16.mxu0 0
        %3219 = vmatpush1.bf16.msra.mxu0 0
        %3220 = vmatprep.subr.bf16.mxu0 0
        %3221 = vmatpush1.bf16.msra.mxu0 0
        %3222 = vmatprep.subr.bf16.mxu0 0
        %3223 = vmatpush1.bf16.msra.mxu0 0
        %3224 = vmatprep.subr.bf16.mxu0 0
        %3225 = vmatpush1.bf16.msra.mxu0 0
        %3226 = vmatprep.subr.bf16.mxu0 0
        %3227 = vmatpush1.bf16.msra.mxu0 0
        %3228 = vmatprep.subr.bf16.mxu0 0
        %3229 = vmatpush1.bf16.msra.mxu0 0
        %3230 = vmatprep.subr.bf16.mxu0 0
        %3231 = vmatpush1.bf16.msra.mxu0 0
        %3232 = vmatprep.subr.bf16.mxu0 0
        %3233 = vmatpush1.bf16.msra.mxu0 0
        %3234 = vmatprep.subr.bf16.mxu0 0
        %3235 = vmatpush1.bf16.msra.mxu0 0
        %3236 = vmatprep.subr.bf16.mxu0 0
        %3237 = vmatpush1.bf16.msra.mxu0 0
        %3238 = vmatprep.subr.bf16.mxu0 0
        %3239 = vmatpush1.bf16.msra.mxu0 0
        %3240 = vmatprep.subr.bf16.mxu0 0
        %3241 = vmatpush1.bf16.msra.mxu0 0
        %3242 = vmatprep.subr.bf16.mxu0 0
        %3243 = vmatpush1.bf16.msra.mxu0 0
        %3244 = vmatprep.subr.bf16.mxu0 0
        %3245 = vmatpush1.bf16.msra.mxu0 0
        %3246 = vmatprep.mubr.bf16.mxu0 0
        %3247 = vmatmul.mubr.bf16.gmra.mrb[0].mxu0 %v1610
        %v3248 = vpop.f32.mrb[0].mxu0
        %v3249 = vadd.f32 %v3125, %v3248
        %v3250 = vpop.f32.mrb[0].mxu0
        %v3251 = vadd.f32 %v3127, %v3250
        %v3252 = vpop.f32.mrb[0].mxu0
        %v3253 = vadd.f32 %v3129, %v3252
        %v3254 = vpop.f32.mrb[0].mxu0
        %v3255 = vadd.f32 %v3131, %v3254
        %3256 = vmatprep.mubr.bf16.mxu0 0
        %3257 = vmatmul.mubr.bf16.gmra.mrb[0].mxu0 %v1613
        %v3258 = vpop.f32.mrb[0].mxu0
        %v3259 = vadd.f32 %v3135, %v3258
        %v3260 = vpop.f32.mrb[0].mxu0
        %v3261 = vadd.f32 %v3137, %v3260
        %v3262 = vpop.f32.mrb[0].mxu0
        %v3263 = vadd.f32 %v3139, %v3262
        %v3264 = vpop.f32.mrb[0].mxu0
        %v3265 = vadd.f32 %v3141, %v3264
        %3266 = vmatprep.mubr.bf16.mxu0 0
        %3267 = vmatmul.mubr.bf16.gmra.mrb[0].mxu0 %v1616
        %v3268 = vpop.f32.mrb[0].mxu0
        %v3269 = vadd.f32 %v3145, %v3268
        %v3270 = vpop.f32.mrb[0].mxu0
        %v3271 = vadd.f32 %v3147, %v3270
        %v3272 = vpop.f32.mrb[0].mxu0
        %v3273 = vadd.f32 %v3149, %v3272
        %v3274 = vpop.f32.mrb[0].mxu0
        %v3275 = vadd.f32 %v3151, %v3274
        %3276 = vmatprep.mubr.bf16.mxu0 0
        %3277 = vmatmul.mubr.bf16.gmra.mrb[0].mxu0 %v1619
        %v3278 = vpop.f32.mrb[0].mxu0
        %v3279 = vadd.f32 %v3155, %v3278
        %v3280 = vpop.f32.mrb[0].mxu0
        %v3281 = vadd.f32 %v3157, %v3280
        %v3282 = vpop.f32.mrb[0].mxu0
        %v3283 = vadd.f32 %v3159, %v3282
        %v3284 = vpop.f32.mrb[0].mxu0
        %v3285 = vadd.f32 %v3161, %v3284
        %3286 = vmatprep.mubr.bf16.mxu0 0
        %3287 = vmatmul.mubr.bf16.gmra.mrb[0].mxu0 %v1622
        %v3288 = vpop.f32.mrb[0].mxu0
        %v3289 = vadd.f32 %v3165, %v3288
        %v3290 = vpop.f32.mrb[0].mxu0
        %v3291 = vadd.f32 %v3167, %v3290
        %v3292 = vpop.f32.mrb[0].mxu0
        %v3293 = vadd.f32 %v3169, %v3292
        %v3294 = vpop.f32.mrb[0].mxu0
        %v3295 = vadd.f32 %v3171, %v3294
        %3296 = vmatprep.mubr.bf16.mxu0 0
        %3297 = vmatmul.mubr.bf16.gmra.mrb[0].mxu0 %v1625
        %v3298 = vpop.f32.mrb[0].mxu0
        %v3299 = vadd.f32 %v3175, %v3298
        %v3300 = vpop.f32.mrb[0].mxu0
        %v3301 = vadd.f32 %v3177, %v3300
        %v3302 = vpop.f32.mrb[0].mxu0
        %v3303 = vadd.f32 %v3179, %v3302
        %v3304 = vpop.f32.mrb[0].mxu0
        %v3305 = vadd.f32 %v3181, %v3304
        %3306 = vmatprep.mubr.bf16.mxu0 0
        %3307 = vmatmul.mubr.bf16.gmra.mrb[0].mxu0 %v1628
        %v3308 = vpop.f32.mrb[0].mxu0
        %v3309 = vadd.f32 %v3185, %v3308
        %v3310 = vpop.f32.mrb[0].mxu0
        %v3311 = vadd.f32 %v3187, %v3310
        %v3312 = vpop.f32.mrb[0].mxu0
        %v3313 = vadd.f32 %v3189, %v3312
        %v3314 = vpop.f32.mrb[0].mxu0
        %v3315 = vadd.f32 %v3191, %v3314
        %3316 = vmatprep.mubr.bf16.mxu0 0
        %3317 = vmatmul.mubr.bf16.gmra.mrb[0].mxu0 %v1631
        %v3318 = vpop.f32.mrb[0].mxu0
        %v3319 = vadd.f32 %v3195, %v3318
        %v3320 = vpop.f32.mrb[0].mxu0
        %v3321 = vadd.f32 %v3197, %v3320
        %v3322 = vpop.f32.mrb[0].mxu0
        %v3323 = vadd.f32 %v3199, %v3322
        %v3324 = vpop.f32.mrb[0].mxu0
        %v3325 = vadd.f32 %v3201, %v3324
        %3326 = vdwg.mxu0
        %v3327 = vld [vmem:[#allocation23] sm:$0x3]
        %v3329 = vlaneseq
        %v3330 = vshrl.u32 %v3329, 7
        %v3331 = vsub.s32 0, %v3330
        %v3332 = vrot.slane %v3327, %v3331
        %v3333 = vlaneseq
        %v3334 = vshrl.u32 %v3333, 7
        %v3335 = vsub.s32 1, %v3334
        %v3336 = vrot.slane %v3327, %v3335
        %v3339 = vadd.f32 %v3249, %v3332
        %v3340 = vadd.f32 %v3251, %v3336
        %v3341 = vadd.f32 %v3253, %v3332
        %v3342 = vadd.f32 %v3255, %v3336
        %v3343 = vadd.f32 %v3259, %v3332
        %v3344 = vadd.f32 %v3261, %v3336
        %v3345 = vadd.f32 %v3263, %v3332
        %v3346 = vadd.f32 %v3265, %v3336
        %v3347 = vadd.f32 %v3269, %v3332
        %v3348 = vadd.f32 %v3271, %v3336
        %v3349 = vadd.f32 %v3273, %v3332
        %v3350 = vadd.f32 %v3275, %v3336
        %v3351 = vadd.f32 %v3279, %v3332
        %v3352 = vadd.f32 %v3281, %v3336
        %v3353 = vadd.f32 %v3283, %v3332
        %v3354 = vadd.f32 %v3285, %v3336
        %v3355 = vadd.f32 %v3289, %v3332
        %v3356 = vadd.f32 %v3291, %v3336
        %v3357 = vadd.f32 %v3293, %v3332
        %v3358 = vadd.f32 %v3295, %v3336
        %v3359 = vadd.f32 %v3299, %v3332
        %v3360 = vadd.f32 %v3301, %v3336
        %v3361 = vadd.f32 %v3303, %v3332
        %v3362 = vadd.f32 %v3305, %v3336
        %v3363 = vadd.f32 %v3309, %v3332
        %v3364 = vadd.f32 %v3311, %v3336
        %v3365 = vadd.f32 %v3313, %v3332
        %v3366 = vadd.f32 %v3315, %v3336
        %v3367 = vadd.f32 %v3319, %v3332
        %v3368 = vadd.f32 %v3321, %v3336
        %v3369 = vadd.f32 %v3323, %v3332
        %v3370 = vadd.f32 %v3325, %v3336
        %v3371 = vmax.f32 %v3339, 0.0
        %v3372 = vmax.f32 %v3340, 0.0
        %v3373 = vmax.f32 %v3341, 0.0
        %v3374 = vmax.f32 %v3342, 0.0
        %v3375 = vmax.f32 %v3343, 0.0
        %v3376 = vmax.f32 %v3344, 0.0
        %v3377 = vmax.f32 %v3345, 0.0
        %v3378 = vmax.f32 %v3346, 0.0
        %v3379 = vmax.f32 %v3347, 0.0
        %v3380 = vmax.f32 %v3348, 0.0
        %v3381 = vmax.f32 %v3349, 0.0
        %v3382 = vmax.f32 %v3350, 0.0
        %v3383 = vmax.f32 %v3351, 0.0
        %v3384 = vmax.f32 %v3352, 0.0
        %v3385 = vmax.f32 %v3353, 0.0
        %v3386 = vmax.f32 %v3354, 0.0
        %v3387 = vmax.f32 %v3355, 0.0
        %v3388 = vmax.f32 %v3356, 0.0
        %v3389 = vmax.f32 %v3357, 0.0
        %v3390 = vmax.f32 %v3358, 0.0
        %v3391 = vmax.f32 %v3359, 0.0
        %v3392 = vmax.f32 %v3360, 0.0
        %v3393 = vmax.f32 %v3361, 0.0
        %v3394 = vmax.f32 %v3362, 0.0
        %v3395 = vmax.f32 %v3363, 0.0
        %v3396 = vmax.f32 %v3364, 0.0
        %v3397 = vmax.f32 %v3365, 0.0
        %v3398 = vmax.f32 %v3366, 0.0
        %v3399 = vmax.f32 %v3367, 0.0
        %v3400 = vmax.f32 %v3368, 0.0
        %v3401 = vmax.f32 %v3369, 0.0
        %v3402 = vmax.f32 %v3370, 0.0
        %v3403 = vpack.c.bf16 %v3373, %v3371
        %v3404 = vpack.c.bf16 %v3374, %v3372
        %v3405 = vpack.c.bf16 %v3377, %v3375
        %v3406 = vpack.c.bf16 %v3378, %v3376
        %v3407 = vpack.c.bf16 %v3381, %v3379
        %v3408 = vpack.c.bf16 %v3382, %v3380
        %v3409 = vpack.c.bf16 %v3385, %v3383
        %v3410 = vpack.c.bf16 %v3386, %v3384
        %v3411 = vpack.c.bf16 %v3389, %v3387
        %v3412 = vpack.c.bf16 %v3390, %v3388
        %v3413 = vpack.c.bf16 %v3393, %v3391
        %v3414 = vpack.c.bf16 %v3394, %v3392
        %v3415 = vpack.c.bf16 %v3397, %v3395
        %v3416 = vpack.c.bf16 %v3398, %v3396
        %v3417 = vpack.c.bf16 %v3401, %v3399
        %v3418 = vpack.c.bf16 %v3402, %v3400
        %s3419 = smul.u32 4, 32
        %s3420 = smul.u32 %s3419, 4
        %s3421 = sshll.u32 %s3420, 4
        %3422 = dma.done [#allocation5], %s3421
        %v3423 = vld [vmem:[#allocation2] sm:$0xff]
        %v3424 = vld [vmem:[#allocation2 + $0x8] sm:$0xff]
        %v3425 = vld [vmem:[#allocation2 + $0x10] sm:$0xff]
        %v3426 = vld [vmem:[#allocation2 + $0x18] sm:$0xff]
        %v3427 = vld [vmem:[#allocation2 + $0x20] sm:$0xff]
        %v3428 = vld [vmem:[#allocation2 + $0x28] sm:$0xff]
        %v3429 = vld [vmem:[#allocation2 + $0x30] sm:$0xff]
        %v3430 = vld [vmem:[#allocation2 + $0x38] sm:$0xff]
        %v3431 = vld [vmem:[#allocation2 + $0x40] sm:$0xff]
        %v3432 = vld [vmem:[#allocation2 + $0x48] sm:$0xff]
        %v3433 = vld [vmem:[#allocation2 + $0x50] sm:$0xff]
        %v3434 = vld [vmem:[#allocation2 + $0x58] sm:$0xff]
        %v3435 = vld [vmem:[#allocation2 + $0x60] sm:$0xff]
        %v3436 = vld [vmem:[#allocation2 + $0x68] sm:$0xff]
        %v3437 = vld [vmem:[#allocation2 + $0x70] sm:$0xff]
        %v3438 = vld [vmem:[#allocation2 + $0x78] sm:$0xff]
        %v3439 = vld [vmem:[#allocation2 + $0x80] sm:$0xff]
        %v3440 = vld [vmem:[#allocation2 + $0x88] sm:$0xff]
        %v3441 = vld [vmem:[#allocation2 + $0x90] sm:$0xff]
        %v3442 = vld [vmem:[#allocation2 + $0x98] sm:$0xff]
        %v3443 = vld [vmem:[#allocation2 + $0xa0] sm:$0xff]
        %v3444 = vld [vmem:[#allocation2 + $0xa8] sm:$0xff]
        %v3445 = vld [vmem:[#allocation2 + $0xb0] sm:$0xff]
        %v3446 = vld [vmem:[#allocation2 + $0xb8] sm:$0xff]
        %v3447 = vld [vmem:[#allocation2 + $0xc0] sm:$0xff]
        %v3448 = vld [vmem:[#allocation2 + $0xc8] sm:$0xff]
        %v3449 = vld [vmem:[#allocation2 + $0xd0] sm:$0xff]
        %v3450 = vld [vmem:[#allocation2 + $0xd8] sm:$0xff]
        %v3451 = vld [vmem:[#allocation2 + $0xe0] sm:$0xff]
        %v3452 = vld [vmem:[#allocation2 + $0xe8] sm:$0xff]
        %v3453 = vld [vmem:[#allocation2 + $0xf0] sm:$0xff]
        %v3454 = vld [vmem:[#allocation2 + $0xf8] sm:$0xff]
        %v3455 = vld [vmem:[#allocation2 + $0x100] sm:$0xff]
        %v3456 = vld [vmem:[#allocation2 + $0x108] sm:$0xff]
        %v3457 = vld [vmem:[#allocation2 + $0x110] sm:$0xff]
        %v3458 = vld [vmem:[#allocation2 + $0x118] sm:$0xff]
        %v3459 = vld [vmem:[#allocation2 + $0x120] sm:$0xff]
        %v3460 = vld [vmem:[#allocation2 + $0x128] sm:$0xff]
        %v3461 = vld [vmem:[#allocation2 + $0x130] sm:$0xff]
        %v3462 = vld [vmem:[#allocation2 + $0x138] sm:$0xff]
        %v3463 = vld [vmem:[#allocation2 + $0x140] sm:$0xff]
        %v3464 = vld [vmem:[#allocation2 + $0x148] sm:$0xff]
        %v3465 = vld [vmem:[#allocation2 + $0x150] sm:$0xff]
        %v3466 = vld [vmem:[#allocation2 + $0x158] sm:$0xff]
        %v3467 = vld [vmem:[#allocation2 + $0x160] sm:$0xff]
        %v3468 = vld [vmem:[#allocation2 + $0x168] sm:$0xff]
        %v3469 = vld [vmem:[#allocation2 + $0x170] sm:$0xff]
        %v3470 = vld [vmem:[#allocation2 + $0x178] sm:$0xff]
        %v3471 = vld [vmem:[#allocation2 + $0x180] sm:$0xff]
        %v3472 = vld [vmem:[#allocation2 + $0x188] sm:$0xff]
        %v3473 = vld [vmem:[#allocation2 + $0x190] sm:$0xff]
        %v3474 = vld [vmem:[#allocation2 + $0x198] sm:$0xff]
        %v3475 = vld [vmem:[#allocation2 + $0x1a0] sm:$0xff]
        %v3476 = vld [vmem:[#allocation2 + $0x1a8] sm:$0xff]
        %v3477 = vld [vmem:[#allocation2 + $0x1b0] sm:$0xff]
        %v3478 = vld [vmem:[#allocation2 + $0x1b8] sm:$0xff]
        %v3479 = vld [vmem:[#allocation2 + $0x1c0] sm:$0xff]
        %v3480 = vld [vmem:[#allocation2 + $0x1c8] sm:$0xff]
        %v3481 = vld [vmem:[#allocation2 + $0x1d0] sm:$0xff]
        %v3482 = vld [vmem:[#allocation2 + $0x1d8] sm:$0xff]
        %v3483 = vld [vmem:[#allocation2 + $0x1e0] sm:$0xff]
        %v3484 = vld [vmem:[#allocation2 + $0x1e8] sm:$0xff]
        %v3485 = vld [vmem:[#allocation2 + $0x1f0] sm:$0xff]
        %v3486 = vld [vmem:[#allocation2 + $0x1f8] sm:$0xff]
        %v3487 = vld [vmem:[%s18] sm:$0xf]
        %v3489 = vlaneseq
        %v3490 = vshrl.u32 %v3489, 7
        %v3491 = vsub.s32 0, %v3490
        %v3492 = vrot.slane %v3487, %v3491
        %v3493 = vlaneseq
        %v3494 = vshrl.u32 %v3493, 7
        %v3495 = vsub.s32 1, %v3494
        %v3496 = vrot.slane %v3487, %v3495
        %v3497 = vlaneseq
        %v3498 = vshrl.u32 %v3497, 7
        %v3499 = vsub.s32 2, %v3498
        %v3500 = vrot.slane %v3487, %v3499
        %v3501 = vlaneseq
        %v3502 = vshrl.u32 %v3501, 7
        %v3503 = vsub.s32 3, %v3502
        %v3504 = vrot.slane %v3487, %v3503
        %3509 = vmatprep.subr.bf16.mxu0 %v3424
        %3510 = vmatpush1.bf16.msra.mxu0 %v3423
        %3511 = vmatprep.subr.bf16.mxu0 %v3428
        %3512 = vmatpush1.bf16.msra.mxu0 %v3427
        %3513 = vmatprep.subr.bf16.mxu0 %v3432
        %3514 = vmatpush1.bf16.msra.mxu0 %v3431
        %3515 = vmatprep.subr.bf16.mxu0 %v3436
        %3516 = vmatpush1.bf16.msra.mxu0 %v3435
        %3517 = vmatprep.subr.bf16.mxu0 %v3440
        %3518 = vmatpush1.bf16.msra.mxu0 %v3439
        %3519 = vmatprep.subr.bf16.mxu0 %v3444
        %3520 = vmatpush1.bf16.msra.mxu0 %v3443
        %3521 = vmatprep.subr.bf16.mxu0 %v3448
        %3522 = vmatpush1.bf16.msra.mxu0 %v3447
        %3523 = vmatprep.subr.bf16.mxu0 %v3452
        %3524 = vmatpush1.bf16.msra.mxu0 %v3451
        %3525 = vmatprep.subr.bf16.mxu0 %v3456
        %3526 = vmatpush1.bf16.msra.mxu0 %v3455
        %3527 = vmatprep.subr.bf16.mxu0 %v3460
        %3528 = vmatpush1.bf16.msra.mxu0 %v3459
        %3529 = vmatprep.subr.bf16.mxu0 %v3464
        %3530 = vmatpush1.bf16.msra.mxu0 %v3463
        %3531 = vmatprep.subr.bf16.mxu0 %v3468
        %3532 = vmatpush1.bf16.msra.mxu0 %v3467
        %3533 = vmatprep.subr.bf16.mxu0 %v3472
        %3534 = vmatpush1.bf16.msra.mxu0 %v3471
        %3535 = vmatprep.subr.bf16.mxu0 %v3476
        %3536 = vmatpush1.bf16.msra.mxu0 %v3475
        %3537 = vmatprep.subr.bf16.mxu0 %v3480
        %3538 = vmatpush1.bf16.msra.mxu0 %v3479
        %3539 = vmatprep.subr.bf16.mxu0 %v3484
        %3540 = vmatpush1.bf16.msra.mxu0 %v3483
        %3541 = vmatprep.mubr.bf16.mxu0 %v3404
        %3542 = vmatmul.mubr.bf16.gmra.mrb[0].mxu0 %v3403
        %v3543 = vpop.f32.mrb[0].mxu0
        %v3544 = vadd.f32 %v3492, %v3543
        %v3545 = vpop.f32.mrb[0].mxu0
        %v3546 = vadd.f32 %v3496, %v3545
        %v3547 = vpop.f32.mrb[0].mxu0
        %v3548 = vadd.f32 %v3492, %v3547
        %v3549 = vpop.f32.mrb[0].mxu0
        %v3550 = vadd.f32 %v3496, %v3549
        %3551 = vmatprep.mubr.bf16.mxu0 %v3406
        %3552 = vmatmul.mubr.bf16.gmra.mrb[0].mxu0 %v3405
        %v3553 = vpop.f32.mrb[0].mxu0
        %v3554 = vadd.f32 %v3492, %v3553
        %v3555 = vpop.f32.mrb[0].mxu0
        %v3556 = vadd.f32 %v3496, %v3555
        %v3557 = vpop.f32.mrb[0].mxu0
        %v3558 = vadd.f32 %v3492, %v3557
        %v3559 = vpop.f32.mrb[0].mxu0
        %v3560 = vadd.f32 %v3496, %v3559
        %3561 = vmatprep.mubr.bf16.mxu0 %v3408
        %3562 = vmatmul.mubr.bf16.gmra.mrb[0].mxu0 %v3407
        %v3563 = vpop.f32.mrb[0].mxu0
        %v3564 = vadd.f32 %v3492, %v3563
        %v3565 = vpop.f32.mrb[0].mxu0
        %v3566 = vadd.f32 %v3496, %v3565
        %v3567 = vpop.f32.mrb[0].mxu0
        %v3568 = vadd.f32 %v3492, %v3567
        %v3569 = vpop.f32.mrb[0].mxu0
        %v3570 = vadd.f32 %v3496, %v3569
        %3571 = vmatprep.mubr.bf16.mxu0 %v3410
        %3572 = vmatmul.mubr.bf16.gmra.mrb[0].mxu0 %v3409
        %v3573 = vpop.f32.mrb[0].mxu0
        %v3574 = vadd.f32 %v3492, %v3573
        %v3575 = vpop.f32.mrb[0].mxu0
        %v3576 = vadd.f32 %v3496, %v3575
        %v3577 = vpop.f32.mrb[0].mxu0
        %v3578 = vadd.f32 %v3492, %v3577
        %v3579 = vpop.f32.mrb[0].mxu0
        %v3580 = vadd.f32 %v3496, %v3579
        %3581 = vmatprep.mubr.bf16.mxu0 %v3412
        %3582 = vmatmul.mubr.bf16.gmra.mrb[0].mxu0 %v3411
        %v3583 = vpop.f32.mrb[0].mxu0
        %v3584 = vadd.f32 %v3492, %v3583
        %v3585 = vpop.f32.mrb[0].mxu0
        %v3586 = vadd.f32 %v3496, %v3585
        %v3587 = vpop.f32.mrb[0].mxu0
        %v3588 = vadd.f32 %v3492, %v3587
        %v3589 = vpop.f32.mrb[0].mxu0
        %v3590 = vadd.f32 %v3496, %v3589
        %3591 = vmatprep.mubr.bf16.mxu0 %v3414
        %3592 = vmatmul.mubr.bf16.gmra.mrb[0].mxu0 %v3413
        %v3593 = vpop.f32.mrb[0].mxu0
        %v3594 = vadd.f32 %v3492, %v3593
        %v3595 = vpop.f32.mrb[0].mxu0
        %v3596 = vadd.f32 %v3496, %v3595
        %v3597 = vpop.f32.mrb[0].mxu0
        %v3598 = vadd.f32 %v3492, %v3597
        %v3599 = vpop.f32.mrb[0].mxu0
        %v3600 = vadd.f32 %v3496, %v3599
        %3601 = vmatprep.mubr.bf16.mxu0 %v3416
        %3602 = vmatmul.mubr.bf16.gmra.mrb[0].mxu0 %v3415
        %v3603 = vpop.f32.mrb[0].mxu0
        %v3604 = vadd.f32 %v3492, %v3603
        %v3605 = vpop.f32.mrb[0].mxu0
        %v3606 = vadd.f32 %v3496, %v3605
        %v3607 = vpop.f32.mrb[0].mxu0
        %v3608 = vadd.f32 %v3492, %v3607
        %v3609 = vpop.f32.mrb[0].mxu0
        %v3610 = vadd.f32 %v3496, %v3609
        %3611 = vmatprep.mubr.bf16.mxu0 %v3418
        %3612 = vmatmul.mubr.bf16.gmra.mrb[0].mxu0 %v3417
        %v3613 = vpop.f32.mrb[0].mxu0
        %v3614 = vadd.f32 %v3492, %v3613
        %v3615 = vpop.f32.mrb[0].mxu0
        %v3616 = vadd.f32 %v3496, %v3615
        %v3617 = vpop.f32.mrb[0].mxu0
        %v3618 = vadd.f32 %v3492, %v3617
        %v3619 = vpop.f32.mrb[0].mxu0
        %v3620 = vadd.f32 %v3496, %v3619
        %3621 = vdwg.mxu0
        %3622 = vmatprep.subr.bf16.mxu0 %v3426
        %3623 = vmatpush1.bf16.msra.mxu0 %v3425
        %3624 = vmatprep.subr.bf16.mxu0 %v3430
        %3625 = vmatpush1.bf16.msra.mxu0 %v3429
        %3626 = vmatprep.subr.bf16.mxu0 %v3434
        %3627 = vmatpush1.bf16.msra.mxu0 %v3433
        %3628 = vmatprep.subr.bf16.mxu0 %v3438
        %3629 = vmatpush1.bf16.msra.mxu0 %v3437
        %3630 = vmatprep.subr.bf16.mxu0 %v3442
        %3631 = vmatpush1.bf16.msra.mxu0 %v3441
        %3632 = vmatprep.subr.bf16.mxu0 %v3446
        %3633 = vmatpush1.bf16.msra.mxu0 %v3445
        %3634 = vmatprep.subr.bf16.mxu0 %v3450
        %3635 = vmatpush1.bf16.msra.mxu0 %v3449
        %3636 = vmatprep.subr.bf16.mxu0 %v3454
        %3637 = vmatpush1.bf16.msra.mxu0 %v3453
        %3638 = vmatprep.subr.bf16.mxu0 %v3458
        %3639 = vmatpush1.bf16.msra.mxu0 %v3457
        %3640 = vmatprep.subr.bf16.mxu0 %v3462
        %3641 = vmatpush1.bf16.msra.mxu0 %v3461
        %3642 = vmatprep.subr.bf16.mxu0 %v3466
        %3643 = vmatpush1.bf16.msra.mxu0 %v3465
        %3644 = vmatprep.subr.bf16.mxu0 %v3470
        %3645 = vmatpush1.bf16.msra.mxu0 %v3469
        %3646 = vmatprep.subr.bf16.mxu0 %v3474
        %3647 = vmatpush1.bf16.msra.mxu0 %v3473
        %3648 = vmatprep.subr.bf16.mxu0 %v3478
        %3649 = vmatpush1.bf16.msra.mxu0 %v3477
        %3650 = vmatprep.subr.bf16.mxu0 %v3482
        %3651 = vmatpush1.bf16.msra.mxu0 %v3481
        %3652 = vmatprep.subr.bf16.mxu0 %v3486
        %3653 = vmatpush1.bf16.msra.mxu0 %v3485
        %3654 = vmatprep.mubr.bf16.mxu0 %v3404
        %3655 = vmatmul.mubr.bf16.gmra.mrb[0].mxu0 %v3403
        %v3656 = vpop.f32.mrb[0].mxu0
        %v3657 = vadd.f32 %v3500, %v3656
        %v3658 = vpop.f32.mrb[0].mxu0
        %v3659 = vadd.f32 %v3504, %v3658
        %v3660 = vpop.f32.mrb[0].mxu0
        %v3661 = vadd.f32 %v3500, %v3660
        %v3662 = vpop.f32.mrb[0].mxu0
        %v3663 = vadd.f32 %v3504, %v3662
        %3664 = vmatprep.mubr.bf16.mxu0 %v3406
        %3665 = vmatmul.mubr.bf16.gmra.mrb[0].mxu0 %v3405
        %v3666 = vpop.f32.mrb[0].mxu0
        %v3667 = vadd.f32 %v3500, %v3666
        %v3668 = vpop.f32.mrb[0].mxu0
        %v3669 = vadd.f32 %v3504, %v3668
        %v3670 = vpop.f32.mrb[0].mxu0
        %v3671 = vadd.f32 %v3500, %v3670
        %v3672 = vpop.f32.mrb[0].mxu0
        %v3673 = vadd.f32 %v3504, %v3672
        %3674 = vmatprep.mubr.bf16.mxu0 %v3408
        %3675 = vmatmul.mubr.bf16.gmra.mrb[0].mxu0 %v3407
        %v3676 = vpop.f32.mrb[0].mxu0
        %v3677 = vadd.f32 %v3500, %v3676
        %v3678 = vpop.f32.mrb[0].mxu0
        %v3679 = vadd.f32 %v3504, %v3678
        %v3680 = vpop.f32.mrb[0].mxu0
        %v3681 = vadd.f32 %v3500, %v3680
        %v3682 = vpop.f32.mrb[0].mxu0
        %v3683 = vadd.f32 %v3504, %v3682
        %3684 = vmatprep.mubr.bf16.mxu0 %v3410
        %3685 = vmatmul.mubr.bf16.gmra.mrb[0].mxu0 %v3409
        %v3686 = vpop.f32.mrb[0].mxu0
        %v3687 = vadd.f32 %v3500, %v3686
        %v3688 = vpop.f32.mrb[0].mxu0
        %v3689 = vadd.f32 %v3504, %v3688
        %v3690 = vpop.f32.mrb[0].mxu0
        %v3691 = vadd.f32 %v3500, %v3690
        %v3692 = vpop.f32.mrb[0].mxu0
        %v3693 = vadd.f32 %v3504, %v3692
        %3694 = vmatprep.mubr.bf16.mxu0 %v3412
        %3695 = vmatmul.mubr.bf16.gmra.mrb[0].mxu0 %v3411
        %v3696 = vpop.f32.mrb[0].mxu0
        %v3697 = vadd.f32 %v3500, %v3696
        %v3698 = vpop.f32.mrb[0].mxu0
        %v3699 = vadd.f32 %v3504, %v3698
        %v3700 = vpop.f32.mrb[0].mxu0
        %v3701 = vadd.f32 %v3500, %v3700
        %v3702 = vpop.f32.mrb[0].mxu0
        %v3703 = vadd.f32 %v3504, %v3702
        %3704 = vmatprep.mubr.bf16.mxu0 %v3414
        %3705 = vmatmul.mubr.bf16.gmra.mrb[0].mxu0 %v3413
        %v3706 = vpop.f32.mrb[0].mxu0
        %v3707 = vadd.f32 %v3500, %v3706
        %v3708 = vpop.f32.mrb[0].mxu0
        %v3709 = vadd.f32 %v3504, %v3708
        %v3710 = vpop.f32.mrb[0].mxu0
        %v3711 = vadd.f32 %v3500, %v3710
        %v3712 = vpop.f32.mrb[0].mxu0
        %v3713 = vadd.f32 %v3504, %v3712
        %3714 = vmatprep.mubr.bf16.mxu0 %v3416
        %3715 = vmatmul.mubr.bf16.gmra.mrb[0].mxu0 %v3415
        %v3716 = vpop.f32.mrb[0].mxu0
        %v3717 = vadd.f32 %v3500, %v3716
        %v3718 = vpop.f32.mrb[0].mxu0
        %v3719 = vadd.f32 %v3504, %v3718
        %v3720 = vpop.f32.mrb[0].mxu0
        %v3721 = vadd.f32 %v3500, %v3720
        %v3722 = vpop.f32.mrb[0].mxu0
        %v3723 = vadd.f32 %v3504, %v3722
        %3724 = vmatprep.mubr.bf16.mxu0 %v3418
        %3725 = vmatmul.mubr.bf16.gmra.mrb[0].mxu0 %v3417
        %v3726 = vpop.f32.mrb[0].mxu0
        %v3727 = vadd.f32 %v3500, %v3726
        %v3728 = vpop.f32.mrb[0].mxu0
        %v3729 = vadd.f32 %v3504, %v3728
        %v3730 = vpop.f32.mrb[0].mxu0
        %v3731 = vadd.f32 %v3500, %v3730
        %v3732 = vpop.f32.mrb[0].mxu0
        %v3733 = vadd.f32 %v3504, %v3732
        %3734 = vdwg.mxu0
        %v3735 = vmax.f32 %v3544, 0.0
        %v3736 = vmax.f32 %v3546, 0.0
        %v3737 = vmax.f32 %v3657, 0.0
        %v3738 = vmax.f32 %v3659, 0.0
        %v3739 = vmax.f32 %v3548, 0.0
        %v3740 = vmax.f32 %v3550, 0.0
        %v3741 = vmax.f32 %v3661, 0.0
        %v3742 = vmax.f32 %v3663, 0.0
        %v3743 = vmax.f32 %v3554, 0.0
        %v3744 = vmax.f32 %v3556, 0.0
        %v3745 = vmax.f32 %v3667, 0.0
        %v3746 = vmax.f32 %v3669, 0.0
        %v3747 = vmax.f32 %v3558, 0.0
        %v3748 = vmax.f32 %v3560, 0.0
        %v3749 = vmax.f32 %v3671, 0.0
        %v3750 = vmax.f32 %v3673, 0.0
        %v3751 = vmax.f32 %v3564, 0.0
        %v3752 = vmax.f32 %v3566, 0.0
        %v3753 = vmax.f32 %v3677, 0.0
        %v3754 = vmax.f32 %v3679, 0.0
        %v3755 = vmax.f32 %v3568, 0.0
        %v3756 = vmax.f32 %v3570, 0.0
        %v3757 = vmax.f32 %v3681, 0.0
        %v3758 = vmax.f32 %v3683, 0.0
        %v3759 = vmax.f32 %v3574, 0.0
        %v3760 = vmax.f32 %v3576, 0.0
        %v3761 = vmax.f32 %v3687, 0.0
        %v3762 = vmax.f32 %v3689, 0.0
        %v3763 = vmax.f32 %v3578, 0.0
        %v3764 = vmax.f32 %v3580, 0.0
        %v3765 = vmax.f32 %v3691, 0.0
        %v3766 = vmax.f32 %v3693, 0.0
        %v3767 = vmax.f32 %v3584, 0.0
        %v3768 = vmax.f32 %v3586, 0.0
        %v3769 = vmax.f32 %v3697, 0.0
        %v3770 = vmax.f32 %v3699, 0.0
        %v3771 = vmax.f32 %v3588, 0.0
        %v3772 = vmax.f32 %v3590, 0.0
        %v3773 = vmax.f32 %v3701, 0.0
        %v3774 = vmax.f32 %v3703, 0.0
        %v3775 = vmax.f32 %v3594, 0.0
        %v3776 = vmax.f32 %v3596, 0.0
        %v3777 = vmax.f32 %v3707, 0.0
        %v3778 = vmax.f32 %v3709, 0.0
        %v3779 = vmax.f32 %v3598, 0.0
        %v3780 = vmax.f32 %v3600, 0.0
        %v3781 = vmax.f32 %v3711, 0.0
        %v3782 = vmax.f32 %v3713, 0.0
        %v3783 = vmax.f32 %v3604, 0.0
        %v3784 = vmax.f32 %v3606, 0.0
        %v3785 = vmax.f32 %v3717, 0.0
        %v3786 = vmax.f32 %v3719, 0.0
        %v3787 = vmax.f32 %v3608, 0.0
        %v3788 = vmax.f32 %v3610, 0.0
        %v3789 = vmax.f32 %v3721, 0.0
        %v3790 = vmax.f32 %v3723, 0.0
        %v3791 = vmax.f32 %v3614, 0.0
        %v3792 = vmax.f32 %v3616, 0.0
        %v3793 = vmax.f32 %v3727, 0.0
        %v3794 = vmax.f32 %v3729, 0.0
        %v3795 = vmax.f32 %v3618, 0.0
        %v3796 = vmax.f32 %v3620, 0.0
        %v3797 = vmax.f32 %v3731, 0.0
        %v3798 = vmax.f32 %v3733, 0.0
        %v3799 = vpack.c.bf16 %v3739, %v3735
        %v3800 = vpack.c.bf16 %v3740, %v3736
        %v3801 = vpack.c.bf16 %v3741, %v3737
        %v3802 = vpack.c.bf16 %v3742, %v3738
        %v3803 = vpack.c.bf16 %v3747, %v3743
        %v3804 = vpack.c.bf16 %v3748, %v3744
        %v3805 = vpack.c.bf16 %v3749, %v3745
        %v3806 = vpack.c.bf16 %v3750, %v3746
        %v3807 = vpack.c.bf16 %v3755, %v3751
        %v3808 = vpack.c.bf16 %v3756, %v3752
        %v3809 = vpack.c.bf16 %v3757, %v3753
        %v3810 = vpack.c.bf16 %v3758, %v3754
        %v3811 = vpack.c.bf16 %v3763, %v3759
        %v3812 = vpack.c.bf16 %v3764, %v3760
        %v3813 = vpack.c.bf16 %v3765, %v3761
        %v3814 = vpack.c.bf16 %v3766, %v3762
        %v3815 = vpack.c.bf16 %v3771, %v3767
        %v3816 = vpack.c.bf16 %v3772, %v3768
        %v3817 = vpack.c.bf16 %v3773, %v3769
        %v3818 = vpack.c.bf16 %v3774, %v3770
        %v3819 = vpack.c.bf16 %v3779, %v3775
        %v3820 = vpack.c.bf16 %v3780, %v3776
        %v3821 = vpack.c.bf16 %v3781, %v3777
        %v3822 = vpack.c.bf16 %v3782, %v3778
        %v3823 = vpack.c.bf16 %v3787, %v3783
        %v3824 = vpack.c.bf16 %v3788, %v3784
        %v3825 = vpack.c.bf16 %v3789, %v3785
        %v3826 = vpack.c.bf16 %v3790, %v3786
        %v3827 = vpack.c.bf16 %v3795, %v3791
        %v3828 = vpack.c.bf16 %v3796, %v3792
        %v3829 = vpack.c.bf16 %v3797, %v3793
        %v3830 = vpack.c.bf16 %v3798, %v3794
        %s3831 = smul.u32 4, 64
        %s3832 = smul.u32 %s3831, 8
        %s3833 = sshll.u32 %s3832, 4
        %3834 = dma.done %s1505, %s3833
        %v3835 = vld [vmem:[#allocation3] sm:$0xff]
        %v3836 = vld [vmem:[#allocation3 + $0x8] sm:$0xff]
        %v3837 = vld [vmem:[#allocation3 + $0x10] sm:$0xff]
        %v3838 = vld [vmem:[#allocation3 + $0x18] sm:$0xff]
        %v3839 = vld [vmem:[#allocation3 + $0x20] sm:$0xff]
        %v3840 = vld [vmem:[#allocation3 + $0x28] sm:$0xff]
        %v3841 = vld [vmem:[#allocation3 + $0x30] sm:$0xff]
        %v3842 = vld [vmem:[#allocation3 + $0x38] sm:$0xff]
        %v3843 = vld [vmem:[#allocation3 + $0x40] sm:$0xff]
        %v3844 = vld [vmem:[#allocation3 + $0x48] sm:$0xff]
        %v3845 = vld [vmem:[#allocation3 + $0x50] sm:$0xff]
        %v3846 = vld [vmem:[#allocation3 + $0x58] sm:$0xff]
        %v3847 = vld [vmem:[#allocation3 + $0x60] sm:$0xff]
        %v3848 = vld [vmem:[#allocation3 + $0x68] sm:$0xff]
        %v3849 = vld [vmem:[#allocation3 + $0x70] sm:$0xff]
        %v3850 = vld [vmem:[#allocation3 + $0x78] sm:$0xff]
        %v3851 = vld [vmem:[#allocation3 + $0x80] sm:$0xff]
        %v3852 = vld [vmem:[#allocation3 + $0x88] sm:$0xff]
        %v3853 = vld [vmem:[#allocation3 + $0x90] sm:$0xff]
        %v3854 = vld [vmem:[#allocation3 + $0x98] sm:$0xff]
        %v3855 = vld [vmem:[#allocation3 + $0xa0] sm:$0xff]
        %v3856 = vld [vmem:[#allocation3 + $0xa8] sm:$0xff]
        %v3857 = vld [vmem:[#allocation3 + $0xb0] sm:$0xff]
        %v3858 = vld [vmem:[#allocation3 + $0xb8] sm:$0xff]
        %v3859 = vld [vmem:[#allocation3 + $0xc0] sm:$0xff]
        %v3860 = vld [vmem:[#allocation3 + $0xc8] sm:$0xff]
        %v3861 = vld [vmem:[#allocation3 + $0xd0] sm:$0xff]
        %v3862 = vld [vmem:[#allocation3 + $0xd8] sm:$0xff]
        %v3863 = vld [vmem:[#allocation3 + $0xe0] sm:$0xff]
        %v3864 = vld [vmem:[#allocation3 + $0xe8] sm:$0xff]
        %v3865 = vld [vmem:[#allocation3 + $0xf0] sm:$0xff]
        %v3866 = vld [vmem:[#allocation3 + $0xf8] sm:$0xff]
        %v3867 = vld [vmem:[#allocation3 + $0x100] sm:$0xff]
        %v3868 = vld [vmem:[#allocation3 + $0x108] sm:$0xff]
        %v3869 = vld [vmem:[#allocation3 + $0x110] sm:$0xff]
        %v3870 = vld [vmem:[#allocation3 + $0x118] sm:$0xff]
        %v3871 = vld [vmem:[#allocation3 + $0x120] sm:$0xff]
        %v3872 = vld [vmem:[#allocation3 + $0x128] sm:$0xff]
        %v3873 = vld [vmem:[#allocation3 + $0x130] sm:$0xff]
        %v3874 = vld [vmem:[#allocation3 + $0x138] sm:$0xff]
        %v3875 = vld [vmem:[#allocation3 + $0x140] sm:$0xff]
        %v3876 = vld [vmem:[#allocation3 + $0x148] sm:$0xff]
        %v3877 = vld [vmem:[#allocation3 + $0x150] sm:$0xff]
        %v3878 = vld [vmem:[#allocation3 + $0x158] sm:$0xff]
        %v3879 = vld [vmem:[#allocation3 + $0x160] sm:$0xff]
        %v3880 = vld [vmem:[#allocation3 + $0x168] sm:$0xff]
        %v3881 = vld [vmem:[#allocation3 + $0x170] sm:$0xff]
        %v3882 = vld [vmem:[#allocation3 + $0x178] sm:$0xff]
        %v3883 = vld [vmem:[#allocation3 + $0x180] sm:$0xff]
        %v3884 = vld [vmem:[#allocation3 + $0x188] sm:$0xff]
        %v3885 = vld [vmem:[#allocation3 + $0x190] sm:$0xff]
        %v3886 = vld [vmem:[#allocation3 + $0x198] sm:$0xff]
        %v3887 = vld [vmem:[#allocation3 + $0x1a0] sm:$0xff]
        %v3888 = vld [vmem:[#allocation3 + $0x1a8] sm:$0xff]
        %v3889 = vld [vmem:[#allocation3 + $0x1b0] sm:$0xff]
        %v3890 = vld [vmem:[#allocation3 + $0x1b8] sm:$0xff]
        %v3891 = vld [vmem:[#allocation3 + $0x1c0] sm:$0xff]
        %v3892 = vld [vmem:[#allocation3 + $0x1c8] sm:$0xff]
        %v3893 = vld [vmem:[#allocation3 + $0x1d0] sm:$0xff]
        %v3894 = vld [vmem:[#allocation3 + $0x1d8] sm:$0xff]
        %v3895 = vld [vmem:[#allocation3 + $0x1e0] sm:$0xff]
        %v3896 = vld [vmem:[#allocation3 + $0x1e8] sm:$0xff]
        %v3897 = vld [vmem:[#allocation3 + $0x1f0] sm:$0xff]
        %v3898 = vld [vmem:[#allocation3 + $0x1f8] sm:$0xff]
        %v3899 = vld [vmem:[#allocation3 + $0x200] sm:$0xff]
        %v3900 = vld [vmem:[#allocation3 + $0x208] sm:$0xff]
        %v3901 = vld [vmem:[#allocation3 + $0x210] sm:$0xff]
        %v3902 = vld [vmem:[#allocation3 + $0x218] sm:$0xff]
        %v3903 = vld [vmem:[#allocation3 + $0x220] sm:$0xff]
        %v3904 = vld [vmem:[#allocation3 + $0x228] sm:$0xff]
        %v3905 = vld [vmem:[#allocation3 + $0x230] sm:$0xff]
        %v3906 = vld [vmem:[#allocation3 + $0x238] sm:$0xff]
        %v3907 = vld [vmem:[#allocation3 + $0x240] sm:$0xff]
        %v3908 = vld [vmem:[#allocation3 + $0x248] sm:$0xff]
        %v3909 = vld [vmem:[#allocation3 + $0x250] sm:$0xff]
        %v3910 = vld [vmem:[#allocation3 + $0x258] sm:$0xff]
        %v3911 = vld [vmem:[#allocation3 + $0x260] sm:$0xff]
        %v3912 = vld [vmem:[#allocation3 + $0x268] sm:$0xff]
        %v3913 = vld [vmem:[#allocation3 + $0x270] sm:$0xff]
        %v3914 = vld [vmem:[#allocation3 + $0x278] sm:$0xff]
        %v3915 = vld [vmem:[#allocation3 + $0x280] sm:$0xff]
        %v3916 = vld [vmem:[#allocation3 + $0x288] sm:$0xff]
        %v3917 = vld [vmem:[#allocation3 + $0x290] sm:$0xff]
        %v3918 = vld [vmem:[#allocation3 + $0x298] sm:$0xff]
        %v3919 = vld [vmem:[#allocation3 + $0x2a0] sm:$0xff]
        %v3920 = vld [vmem:[#allocation3 + $0x2a8] sm:$0xff]
        %v3921 = vld [vmem:[#allocation3 + $0x2b0] sm:$0xff]
        %v3922 = vld [vmem:[#allocation3 + $0x2b8] sm:$0xff]
        %v3923 = vld [vmem:[#allocation3 + $0x2c0] sm:$0xff]
        %v3924 = vld [vmem:[#allocation3 + $0x2c8] sm:$0xff]
        %v3925 = vld [vmem:[#allocation3 + $0x2d0] sm:$0xff]
        %v3926 = vld [vmem:[#allocation3 + $0x2d8] sm:$0xff]
        %v3927 = vld [vmem:[#allocation3 + $0x2e0] sm:$0xff]
        %v3928 = vld [vmem:[#allocation3 + $0x2e8] sm:$0xff]
        %v3929 = vld [vmem:[#allocation3 + $0x2f0] sm:$0xff]
        %v3930 = vld [vmem:[#allocation3 + $0x2f8] sm:$0xff]
        %v3931 = vld [vmem:[#allocation3 + $0x300] sm:$0xff]
        %v3932 = vld [vmem:[#allocation3 + $0x308] sm:$0xff]
        %v3933 = vld [vmem:[#allocation3 + $0x310] sm:$0xff]
        %v3934 = vld [vmem:[#allocation3 + $0x318] sm:$0xff]
        %v3935 = vld [vmem:[#allocation3 + $0x320] sm:$0xff]
        %v3936 = vld [vmem:[#allocation3 + $0x328] sm:$0xff]
        %v3937 = vld [vmem:[#allocation3 + $0x330] sm:$0xff]
        %v3938 = vld [vmem:[#allocation3 + $0x338] sm:$0xff]
        %v3939 = vld [vmem:[#allocation3 + $0x340] sm:$0xff]
        %v3940 = vld [vmem:[#allocation3 + $0x348] sm:$0xff]
        %v3941 = vld [vmem:[#allocation3 + $0x350] sm:$0xff]
        %v3942 = vld [vmem:[#allocation3 + $0x358] sm:$0xff]
        %v3943 = vld [vmem:[#allocation3 + $0x360] sm:$0xff]
        %v3944 = vld [vmem:[#allocation3 + $0x368] sm:$0xff]
        %v3945 = vld [vmem:[#allocation3 + $0x370] sm:$0xff]
        %v3946 = vld [vmem:[#allocation3 + $0x378] sm:$0xff]
        %v3947 = vld [vmem:[#allocation3 + $0x380] sm:$0xff]
        %v3948 = vld [vmem:[#allocation3 + $0x388] sm:$0xff]
        %v3949 = vld [vmem:[#allocation3 + $0x390] sm:$0xff]
        %v3950 = vld [vmem:[#allocation3 + $0x398] sm:$0xff]
        %v3951 = vld [vmem:[#allocation3 + $0x3a0] sm:$0xff]
        %v3952 = vld [vmem:[#allocation3 + $0x3a8] sm:$0xff]
        %v3953 = vld [vmem:[#allocation3 + $0x3b0] sm:$0xff]
        %v3954 = vld [vmem:[#allocation3 + $0x3b8] sm:$0xff]
        %v3955 = vld [vmem:[#allocation3 + $0x3c0] sm:$0xff]
        %v3956 = vld [vmem:[#allocation3 + $0x3c8] sm:$0xff]
        %v3957 = vld [vmem:[#allocation3 + $0x3d0] sm:$0xff]
        %v3958 = vld [vmem:[#allocation3 + $0x3d8] sm:$0xff]
        %v3959 = vld [vmem:[#allocation3 + $0x3e0] sm:$0xff]
        %v3960 = vld [vmem:[#allocation3 + $0x3e8] sm:$0xff]
        %v3961 = vld [vmem:[#allocation3 + $0x3f0] sm:$0xff]
        %v3962 = vld [vmem:[#allocation3 + $0x3f8] sm:$0xff]
        %v3963 = vld [vmem:[#allocation3 + $0x400] sm:$0xff]
        %v3964 = vld [vmem:[#allocation3 + $0x408] sm:$0xff]
        %v3965 = vld [vmem:[#allocation3 + $0x410] sm:$0xff]
        %v3966 = vld [vmem:[#allocation3 + $0x418] sm:$0xff]
        %v3967 = vld [vmem:[#allocation3 + $0x420] sm:$0xff]
        %v3968 = vld [vmem:[#allocation3 + $0x428] sm:$0xff]
        %v3969 = vld [vmem:[#allocation3 + $0x430] sm:$0xff]
        %v3970 = vld [vmem:[#allocation3 + $0x438] sm:$0xff]
        %v3971 = vld [vmem:[#allocation3 + $0x440] sm:$0xff]
        %v3972 = vld [vmem:[#allocation3 + $0x448] sm:$0xff]
        %v3973 = vld [vmem:[#allocation3 + $0x450] sm:$0xff]
        %v3974 = vld [vmem:[#allocation3 + $0x458] sm:$0xff]
        %v3975 = vld [vmem:[#allocation3 + $0x460] sm:$0xff]
        %v3976 = vld [vmem:[#allocation3 + $0x468] sm:$0xff]
        %v3977 = vld [vmem:[#allocation3 + $0x470] sm:$0xff]
        %v3978 = vld [vmem:[#allocation3 + $0x478] sm:$0xff]
        %v3979 = vld [vmem:[#allocation3 + $0x480] sm:$0xff]
        %v3980 = vld [vmem:[#allocation3 + $0x488] sm:$0xff]
        %v3981 = vld [vmem:[#allocation3 + $0x490] sm:$0xff]
        %v3982 = vld [vmem:[#allocation3 + $0x498] sm:$0xff]
        %v3983 = vld [vmem:[#allocation3 + $0x4a0] sm:$0xff]
        %v3984 = vld [vmem:[#allocation3 + $0x4a8] sm:$0xff]
        %v3985 = vld [vmem:[#allocation3 + $0x4b0] sm:$0xff]
        %v3986 = vld [vmem:[#allocation3 + $0x4b8] sm:$0xff]
        %v3987 = vld [vmem:[#allocation3 + $0x4c0] sm:$0xff]
        %v3988 = vld [vmem:[#allocation3 + $0x4c8] sm:$0xff]
        %v3989 = vld [vmem:[#allocation3 + $0x4d0] sm:$0xff]
        %v3990 = vld [vmem:[#allocation3 + $0x4d8] sm:$0xff]
        %v3991 = vld [vmem:[#allocation3 + $0x4e0] sm:$0xff]
        %v3992 = vld [vmem:[#allocation3 + $0x4e8] sm:$0xff]
        %v3993 = vld [vmem:[#allocation3 + $0x4f0] sm:$0xff]
        %v3994 = vld [vmem:[#allocation3 + $0x4f8] sm:$0xff]
        %v3995 = vld [vmem:[#allocation3 + $0x500] sm:$0xff]
        %v3996 = vld [vmem:[#allocation3 + $0x508] sm:$0xff]
        %v3997 = vld [vmem:[#allocation3 + $0x510] sm:$0xff]
        %v3998 = vld [vmem:[#allocation3 + $0x518] sm:$0xff]
        %v3999 = vld [vmem:[#allocation3 + $0x520] sm:$0xff]
        %v4000 = vld [vmem:[#allocation3 + $0x528] sm:$0xff]
        %v4001 = vld [vmem:[#allocation3 + $0x530] sm:$0xff]
        %v4002 = vld [vmem:[#allocation3 + $0x538] sm:$0xff]
        %v4003 = vld [vmem:[#allocation3 + $0x540] sm:$0xff]
        %v4004 = vld [vmem:[#allocation3 + $0x548] sm:$0xff]
        %v4005 = vld [vmem:[#allocation3 + $0x550] sm:$0xff]
        %v4006 = vld [vmem:[#allocation3 + $0x558] sm:$0xff]
        %v4007 = vld [vmem:[#allocation3 + $0x560] sm:$0xff]
        %v4008 = vld [vmem:[#allocation3 + $0x568] sm:$0xff]
        %v4009 = vld [vmem:[#allocation3 + $0x570] sm:$0xff]
        %v4010 = vld [vmem:[#allocation3 + $0x578] sm:$0xff]
        %v4011 = vld [vmem:[#allocation3 + $0x580] sm:$0xff]
        %v4012 = vld [vmem:[#allocation3 + $0x588] sm:$0xff]
        %v4013 = vld [vmem:[#allocation3 + $0x590] sm:$0xff]
        %v4014 = vld [vmem:[#allocation3 + $0x598] sm:$0xff]
        %v4015 = vld [vmem:[#allocation3 + $0x5a0] sm:$0xff]
        %v4016 = vld [vmem:[#allocation3 + $0x5a8] sm:$0xff]
        %v4017 = vld [vmem:[#allocation3 + $0x5b0] sm:$0xff]
        %v4018 = vld [vmem:[#allocation3 + $0x5b8] sm:$0xff]
        %v4019 = vld [vmem:[#allocation3 + $0x5c0] sm:$0xff]
        %v4020 = vld [vmem:[#allocation3 + $0x5c8] sm:$0xff]
        %v4021 = vld [vmem:[#allocation3 + $0x5d0] sm:$0xff]
        %v4022 = vld [vmem:[#allocation3 + $0x5d8] sm:$0xff]
        %v4023 = vld [vmem:[#allocation3 + $0x5e0] sm:$0xff]
        %v4024 = vld [vmem:[#allocation3 + $0x5e8] sm:$0xff]
        %v4025 = vld [vmem:[#allocation3 + $0x5f0] sm:$0xff]
        %v4026 = vld [vmem:[#allocation3 + $0x5f8] sm:$0xff]
        %v4027 = vld [vmem:[#allocation3 + $0x600] sm:$0xff]
        %v4028 = vld [vmem:[#allocation3 + $0x608] sm:$0xff]
        %v4029 = vld [vmem:[#allocation3 + $0x610] sm:$0xff]
        %v4030 = vld [vmem:[#allocation3 + $0x618] sm:$0xff]
        %v4031 = vld [vmem:[#allocation3 + $0x620] sm:$0xff]
        %v4032 = vld [vmem:[#allocation3 + $0x628] sm:$0xff]
        %v4033 = vld [vmem:[#allocation3 + $0x630] sm:$0xff]
        %v4034 = vld [vmem:[#allocation3 + $0x638] sm:$0xff]
        %v4035 = vld [vmem:[#allocation3 + $0x640] sm:$0xff]
        %v4036 = vld [vmem:[#allocation3 + $0x648] sm:$0xff]
        %v4037 = vld [vmem:[#allocation3 + $0x650] sm:$0xff]
        %v4038 = vld [vmem:[#allocation3 + $0x658] sm:$0xff]
        %v4039 = vld [vmem:[#allocation3 + $0x660] sm:$0xff]
        %v4040 = vld [vmem:[#allocation3 + $0x668] sm:$0xff]
        %v4041 = vld [vmem:[#allocation3 + $0x670] sm:$0xff]
        %v4042 = vld [vmem:[#allocation3 + $0x678] sm:$0xff]
        %v4043 = vld [vmem:[#allocation3 + $0x680] sm:$0xff]
        %v4044 = vld [vmem:[#allocation3 + $0x688] sm:$0xff]
        %v4045 = vld [vmem:[#allocation3 + $0x690] sm:$0xff]
        %v4046 = vld [vmem:[#allocation3 + $0x698] sm:$0xff]
        %v4047 = vld [vmem:[#allocation3 + $0x6a0] sm:$0xff]
        %v4048 = vld [vmem:[#allocation3 + $0x6a8] sm:$0xff]
        %v4049 = vld [vmem:[#allocation3 + $0x6b0] sm:$0xff]
        %v4050 = vld [vmem:[#allocation3 + $0x6b8] sm:$0xff]
        %v4051 = vld [vmem:[#allocation3 + $0x6c0] sm:$0xff]
        %v4052 = vld [vmem:[#allocation3 + $0x6c8] sm:$0xff]
        %v4053 = vld [vmem:[#allocation3 + $0x6d0] sm:$0xff]
        %v4054 = vld [vmem:[#allocation3 + $0x6d8] sm:$0xff]
        %v4055 = vld [vmem:[#allocation3 + $0x6e0] sm:$0xff]
        %v4056 = vld [vmem:[#allocation3 + $0x6e8] sm:$0xff]
        %v4057 = vld [vmem:[#allocation3 + $0x6f0] sm:$0xff]
        %v4058 = vld [vmem:[#allocation3 + $0x6f8] sm:$0xff]
        %v4059 = vld [vmem:[#allocation3 + $0x700] sm:$0xff]
        %v4060 = vld [vmem:[#allocation3 + $0x708] sm:$0xff]
        %v4061 = vld [vmem:[#allocation3 + $0x710] sm:$0xff]
        %v4062 = vld [vmem:[#allocation3 + $0x718] sm:$0xff]
        %v4063 = vld [vmem:[#allocation3 + $0x720] sm:$0xff]
        %v4064 = vld [vmem:[#allocation3 + $0x728] sm:$0xff]
        %v4065 = vld [vmem:[#allocation3 + $0x730] sm:$0xff]
        %v4066 = vld [vmem:[#allocation3 + $0x738] sm:$0xff]
        %v4067 = vld [vmem:[#allocation3 + $0x740] sm:$0xff]
        %v4068 = vld [vmem:[#allocation3 + $0x748] sm:$0xff]
        %v4069 = vld [vmem:[#allocation3 + $0x750] sm:$0xff]
        %v4070 = vld [vmem:[#allocation3 + $0x758] sm:$0xff]
        %v4071 = vld [vmem:[#allocation3 + $0x760] sm:$0xff]
        %v4072 = vld [vmem:[#allocation3 + $0x768] sm:$0xff]
        %v4073 = vld [vmem:[#allocation3 + $0x770] sm:$0xff]
        %v4074 = vld [vmem:[#allocation3 + $0x778] sm:$0xff]
        %v4075 = vld [vmem:[#allocation3 + $0x780] sm:$0xff]
        %v4076 = vld [vmem:[#allocation3 + $0x788] sm:$0xff]
        %v4077 = vld [vmem:[#allocation3 + $0x790] sm:$0xff]
        %v4078 = vld [vmem:[#allocation3 + $0x798] sm:$0xff]
        %v4079 = vld [vmem:[#allocation3 + $0x7a0] sm:$0xff]
        %v4080 = vld [vmem:[#allocation3 + $0x7a8] sm:$0xff]
        %v4081 = vld [vmem:[#allocation3 + $0x7b0] sm:$0xff]
        %v4082 = vld [vmem:[#allocation3 + $0x7b8] sm:$0xff]
        %v4083 = vld [vmem:[#allocation3 + $0x7c0] sm:$0xff]
        %v4084 = vld [vmem:[#allocation3 + $0x7c8] sm:$0xff]
        %v4085 = vld [vmem:[#allocation3 + $0x7d0] sm:$0xff]
        %v4086 = vld [vmem:[#allocation3 + $0x7d8] sm:$0xff]
        %v4087 = vld [vmem:[#allocation3 + $0x7e0] sm:$0xff]
        %v4088 = vld [vmem:[#allocation3 + $0x7e8] sm:$0xff]
        %v4089 = vld [vmem:[#allocation3 + $0x7f0] sm:$0xff]
        %v4090 = vld [vmem:[#allocation3 + $0x7f8] sm:$0xff]
        %v4091 = vld [vmem:[#allocation25] sm:$0xff]
        %v4093 = vlaneseq
        %v4094 = vshrl.u32 %v4093, 7
        %v4095 = vsub.s32 0, %v4094
        %v4096 = vrot.slane %v4091, %v4095
        %v4097 = vlaneseq
        %v4098 = vshrl.u32 %v4097, 7
        %v4099 = vsub.s32 1, %v4098
        %v4100 = vrot.slane %v4091, %v4099
        %v4101 = vlaneseq
        %v4102 = vshrl.u32 %v4101, 7
        %v4103 = vsub.s32 2, %v4102
        %v4104 = vrot.slane %v4091, %v4103
        %v4105 = vlaneseq
        %v4106 = vshrl.u32 %v4105, 7
        %v4107 = vsub.s32 3, %v4106
        %v4108 = vrot.slane %v4091, %v4107
        %v4109 = vlaneseq
        %v4110 = vshrl.u32 %v4109, 7
        %v4111 = vsub.s32 4, %v4110
        %v4112 = vrot.slane %v4091, %v4111
        %v4113 = vlaneseq
        %v4114 = vshrl.u32 %v4113, 7
        %v4115 = vsub.s32 5, %v4114
        %v4116 = vrot.slane %v4091, %v4115
        %v4117 = vlaneseq
        %v4118 = vshrl.u32 %v4117, 7
        %v4119 = vsub.s32 6, %v4118
        %v4120 = vrot.slane %v4091, %v4119
        %v4121 = vlaneseq
        %v4122 = vshrl.u32 %v4121, 7
        %v4123 = vsub.s32 7, %v4122
        %v4124 = vrot.slane %v4091, %v4123
        %4133 = vmatprep.subr.bf16.mxu0 %v3836
        %4134 = vmatpush1.bf16.msra.mxu0 %v3835
        %4135 = vmatprep.subr.bf16.mxu0 %v3844
        %4136 = vmatpush1.bf16.msra.mxu0 %v3843
        %4137 = vmatprep.subr.bf16.mxu0 %v3852
        %4138 = vmatpush1.bf16.msra.mxu0 %v3851
        %4139 = vmatprep.subr.bf16.mxu0 %v3860
        %4140 = vmatpush1.bf16.msra.mxu0 %v3859
        %4141 = vmatprep.subr.bf16.mxu0 %v3868
        %4142 = vmatpush1.bf16.msra.mxu0 %v3867
        %4143 = vmatprep.subr.bf16.mxu0 %v3876
        %4144 = vmatpush1.bf16.msra.mxu0 %v3875
        %4145 = vmatprep.subr.bf16.mxu0 %v3884
        %4146 = vmatpush1.bf16.msra.mxu0 %v3883
        %4147 = vmatprep.subr.bf16.mxu0 %v3892
        %4148 = vmatpush1.bf16.msra.mxu0 %v3891
        %4149 = vmatprep.subr.bf16.mxu0 %v3900
        %4150 = vmatpush1.bf16.msra.mxu0 %v3899
        %4151 = vmatprep.subr.bf16.mxu0 %v3908
        %4152 = vmatpush1.bf16.msra.mxu0 %v3907
        %4153 = vmatprep.subr.bf16.mxu0 %v3916
        %4154 = vmatpush1.bf16.msra.mxu0 %v3915
        %4155 = vmatprep.subr.bf16.mxu0 %v3924
        %4156 = vmatpush1.bf16.msra.mxu0 %v3923
        %4157 = vmatprep.subr.bf16.mxu0 %v3932
        %4158 = vmatpush1.bf16.msra.mxu0 %v3931
        %4159 = vmatprep.subr.bf16.mxu0 %v3940
        %4160 = vmatpush1.bf16.msra.mxu0 %v3939
        %4161 = vmatprep.subr.bf16.mxu0 %v3948
        %4162 = vmatpush1.bf16.msra.mxu0 %v3947
        %4163 = vmatprep.subr.bf16.mxu0 %v3956
        %4164 = vmatpush1.bf16.msra.mxu0 %v3955
        %4165 = vmatprep.mubr.bf16.mxu0 %v3800
        %4166 = vmatmul.mubr.bf16.gmra.mrb[0].mxu0 %v3799
        %v4167 = vpop.f32.mrb[0].mxu0
        %v4168 = vadd.f32 %v4096, %v4167
        %v4169 = vpop.f32.mrb[0].mxu0
        %v4170 = vadd.f32 %v4100, %v4169
        %v4171 = vpop.f32.mrb[0].mxu0
        %v4172 = vadd.f32 %v4096, %v4171
        %v4173 = vpop.f32.mrb[0].mxu0
        %v4174 = vadd.f32 %v4100, %v4173
        %4175 = vmatprep.mubr.bf16.mxu0 %v3804
        %4176 = vmatmul.mubr.bf16.gmra.mrb[0].mxu0 %v3803
        %v4177 = vpop.f32.mrb[0].mxu0
        %v4178 = vadd.f32 %v4096, %v4177
        %v4179 = vpop.f32.mrb[0].mxu0
        %v4180 = vadd.f32 %v4100, %v4179
        %v4181 = vpop.f32.mrb[0].mxu0
        %v4182 = vadd.f32 %v4096, %v4181
        %v4183 = vpop.f32.mrb[0].mxu0
        %v4184 = vadd.f32 %v4100, %v4183
        %4185 = vmatprep.mubr.bf16.mxu0 %v3808
        %4186 = vmatmul.mubr.bf16.gmra.mrb[0].mxu0 %v3807
        %v4187 = vpop.f32.mrb[0].mxu0
        %v4188 = vadd.f32 %v4096, %v4187
        %v4189 = vpop.f32.mrb[0].mxu0
        %v4190 = vadd.f32 %v4100, %v4189
        %v4191 = vpop.f32.mrb[0].mxu0
        %v4192 = vadd.f32 %v4096, %v4191
        %v4193 = vpop.f32.mrb[0].mxu0
        %v4194 = vadd.f32 %v4100, %v4193
        %4195 = vmatprep.mubr.bf16.mxu0 %v3812
        %4196 = vmatmul.mubr.bf16.gmra.mrb[0].mxu0 %v3811
        %v4197 = vpop.f32.mrb[0].mxu0
        %v4198 = vadd.f32 %v4096, %v4197
        %v4199 = vpop.f32.mrb[0].mxu0
        %v4200 = vadd.f32 %v4100, %v4199
        %v4201 = vpop.f32.mrb[0].mxu0
        %v4202 = vadd.f32 %v4096, %v4201
        %v4203 = vpop.f32.mrb[0].mxu0
        %v4204 = vadd.f32 %v4100, %v4203
        %4205 = vmatprep.mubr.bf16.mxu0 %v3816
        %4206 = vmatmul.mubr.bf16.gmra.mrb[0].mxu0 %v3815
        %v4207 = vpop.f32.mrb[0].mxu0
        %v4208 = vadd.f32 %v4096, %v4207
        %v4209 = vpop.f32.mrb[0].mxu0
        %v4210 = vadd.f32 %v4100, %v4209
        %v4211 = vpop.f32.mrb[0].mxu0
        %v4212 = vadd.f32 %v4096, %v4211
        %v4213 = vpop.f32.mrb[0].mxu0
        %v4214 = vadd.f32 %v4100, %v4213
        %4215 = vmatprep.mubr.bf16.mxu0 %v3820
        %4216 = vmatmul.mubr.bf16.gmra.mrb[0].mxu0 %v3819
        %v4217 = vpop.f32.mrb[0].mxu0
        %v4218 = vadd.f32 %v4096, %v4217
        %v4219 = vpop.f32.mrb[0].mxu0
        %v4220 = vadd.f32 %v4100, %v4219
        %v4221 = vpop.f32.mrb[0].mxu0
        %v4222 = vadd.f32 %v4096, %v4221
        %v4223 = vpop.f32.mrb[0].mxu0
        %v4224 = vadd.f32 %v4100, %v4223
        %4225 = vmatprep.mubr.bf16.mxu0 %v3824
        %4226 = vmatmul.mubr.bf16.gmra.mrb[0].mxu0 %v3823
        %v4227 = vpop.f32.mrb[0].mxu0
        %v4228 = vadd.f32 %v4096, %v4227
        %v4229 = vpop.f32.mrb[0].mxu0
        %v4230 = vadd.f32 %v4100, %v4229
        %v4231 = vpop.f32.mrb[0].mxu0
        %v4232 = vadd.f32 %v4096, %v4231
        %v4233 = vpop.f32.mrb[0].mxu0
        %v4234 = vadd.f32 %v4100, %v4233
        %4235 = vmatprep.mubr.bf16.mxu0 %v3828
        %4236 = vmatmul.mubr.bf16.gmra.mrb[0].mxu0 %v3827
        %v4237 = vpop.f32.mrb[0].mxu0
        %v4238 = vadd.f32 %v4096, %v4237
        %v4239 = vpop.f32.mrb[0].mxu0
        %v4240 = vadd.f32 %v4100, %v4239
        %v4241 = vpop.f32.mrb[0].mxu0
        %v4242 = vadd.f32 %v4096, %v4241
        %v4243 = vpop.f32.mrb[0].mxu0
        %v4244 = vadd.f32 %v4100, %v4243
        %4245 = vdwg.mxu0
        %4246 = vmatprep.subr.bf16.mxu0 %v3964
        %4247 = vmatpush1.bf16.msra.mxu0 %v3963
        %4248 = vmatprep.subr.bf16.mxu0 %v3972
        %4249 = vmatpush1.bf16.msra.mxu0 %v3971
        %4250 = vmatprep.subr.bf16.mxu0 %v3980
        %4251 = vmatpush1.bf16.msra.mxu0 %v3979
        %4252 = vmatprep.subr.bf16.mxu0 %v3988
        %4253 = vmatpush1.bf16.msra.mxu0 %v3987
        %4254 = vmatprep.subr.bf16.mxu0 %v3996
        %4255 = vmatpush1.bf16.msra.mxu0 %v3995
        %4256 = vmatprep.subr.bf16.mxu0 %v4004
        %4257 = vmatpush1.bf16.msra.mxu0 %v4003
        %4258 = vmatprep.subr.bf16.mxu0 %v4012
        %4259 = vmatpush1.bf16.msra.mxu0 %v4011
        %4260 = vmatprep.subr.bf16.mxu0 %v4020
        %4261 = vmatpush1.bf16.msra.mxu0 %v4019
        %4262 = vmatprep.subr.bf16.mxu0 %v4028
        %4263 = vmatpush1.bf16.msra.mxu0 %v4027
        %4264 = vmatprep.subr.bf16.mxu0 %v4036
        %4265 = vmatpush1.bf16.msra.mxu0 %v4035
        %4266 = vmatprep.subr.bf16.mxu0 %v4044
        %4267 = vmatpush1.bf16.msra.mxu0 %v4043
        %4268 = vmatprep.subr.bf16.mxu0 %v4052
        %4269 = vmatpush1.bf16.msra.mxu0 %v4051
        %4270 = vmatprep.subr.bf16.mxu0 %v4060
        %4271 = vmatpush1.bf16.msra.mxu0 %v4059
        %4272 = vmatprep.subr.bf16.mxu0 %v4068
        %4273 = vmatpush1.bf16.msra.mxu0 %v4067
        %4274 = vmatprep.subr.bf16.mxu0 %v4076
        %4275 = vmatpush1.bf16.msra.mxu0 %v4075
        %4276 = vmatprep.subr.bf16.mxu0 %v4084
        %4277 = vmatpush1.bf16.msra.mxu0 %v4083
        %4278 = vmatprep.mubr.bf16.mxu0 %v3802
        %4279 = vmatmul.mubr.bf16.gmra.mrb[0].mxu0 %v3801
        %v4280 = vpop.f32.mrb[0].mxu0
        %v4281 = vadd.f32 %v4168, %v4280
        %v4282 = vpop.f32.mrb[0].mxu0
        %v4283 = vadd.f32 %v4170, %v4282
        %v4284 = vpop.f32.mrb[0].mxu0
        %v4285 = vadd.f32 %v4172, %v4284
        %v4286 = vpop.f32.mrb[0].mxu0
        %v4287 = vadd.f32 %v4174, %v4286
        %4288 = vmatprep.mubr.bf16.mxu0 %v3806
        %4289 = vmatmul.mubr.bf16.gmra.mrb[0].mxu0 %v3805
        %v4290 = vpop.f32.mrb[0].mxu0
        %v4291 = vadd.f32 %v4178, %v4290
        %v4292 = vpop.f32.mrb[0].mxu0
        %v4293 = vadd.f32 %v4180, %v4292
        %v4294 = vpop.f32.mrb[0].mxu0
        %v4295 = vadd.f32 %v4182, %v4294
        %v4296 = vpop.f32.mrb[0].mxu0
        %v4297 = vadd.f32 %v4184, %v4296
        %4298 = vmatprep.mubr.bf16.mxu0 %v3810
        %4299 = vmatmul.mubr.bf16.gmra.mrb[0].mxu0 %v3809
        %v4300 = vpop.f32.mrb[0].mxu0
        %v4301 = vadd.f32 %v4188, %v4300
        %v4302 = vpop.f32.mrb[0].mxu0
        %v4303 = vadd.f32 %v4190, %v4302
        %v4304 = vpop.f32.mrb[0].mxu0
        %v4305 = vadd.f32 %v4192, %v4304
        %v4306 = vpop.f32.mrb[0].mxu0
        %v4307 = vadd.f32 %v4194, %v4306
        %4308 = vmatprep.mubr.bf16.mxu0 %v3814
        %4309 = vmatmul.mubr.bf16.gmra.mrb[0].mxu0 %v3813
        %v4310 = vpop.f32.mrb[0].mxu0
        %v4311 = vadd.f32 %v4198, %v4310
        %v4312 = vpop.f32.mrb[0].mxu0
        %v4313 = vadd.f32 %v4200, %v4312
        %v4314 = vpop.f32.mrb[0].mxu0
        %v4315 = vadd.f32 %v4202, %v4314
        %v4316 = vpop.f32.mrb[0].mxu0
        %v4317 = vadd.f32 %v4204, %v4316
        %4318 = vmatprep.mubr.bf16.mxu0 %v3818
        %4319 = vmatmul.mubr.bf16.gmra.mrb[0].mxu0 %v3817
        %v4320 = vpop.f32.mrb[0].mxu0
        %v4321 = vadd.f32 %v4208, %v4320
        %v4322 = vpop.f32.mrb[0].mxu0
        %v4323 = vadd.f32 %v4210, %v4322
        %v4324 = vpop.f32.mrb[0].mxu0
        %v4325 = vadd.f32 %v4212, %v4324
        %v4326 = vpop.f32.mrb[0].mxu0
        %v4327 = vadd.f32 %v4214, %v4326
        %4328 = vmatprep.mubr.bf16.mxu0 %v3822
        %4329 = vmatmul.mubr.bf16.gmra.mrb[0].mxu0 %v3821
        %v4330 = vpop.f32.mrb[0].mxu0
        %v4331 = vadd.f32 %v4218, %v4330
        %v4332 = vpop.f32.mrb[0].mxu0
        %v4333 = vadd.f32 %v4220, %v4332
        %v4334 = vpop.f32.mrb[0].mxu0
        %v4335 = vadd.f32 %v4222, %v4334
        %v4336 = vpop.f32.mrb[0].mxu0
        %v4337 = vadd.f32 %v4224, %v4336
        %4338 = vmatprep.mubr.bf16.mxu0 %v3826
        %4339 = vmatmul.mubr.bf16.gmra.mrb[0].mxu0 %v3825
        %v4340 = vpop.f32.mrb[0].mxu0
        %v4341 = vadd.f32 %v4228, %v4340
        %v4342 = vpop.f32.mrb[0].mxu0
        %v4343 = vadd.f32 %v4230, %v4342
        %v4344 = vpop.f32.mrb[0].mxu0
        %v4345 = vadd.f32 %v4232, %v4344
        %v4346 = vpop.f32.mrb[0].mxu0
        %v4347 = vadd.f32 %v4234, %v4346
        %4348 = vmatprep.mubr.bf16.mxu0 %v3830
        %4349 = vmatmul.mubr.bf16.gmra.mrb[0].mxu0 %v3829
        %v4350 = vpop.f32.mrb[0].mxu0
        %v4351 = vadd.f32 %v4238, %v4350
        %v4352 = vpop.f32.mrb[0].mxu0
        %v4353 = vadd.f32 %v4240, %v4352
        %v4354 = vpop.f32.mrb[0].mxu0
        %v4355 = vadd.f32 %v4242, %v4354
        %v4356 = vpop.f32.mrb[0].mxu0
        %v4357 = vadd.f32 %v4244, %v4356
        %4358 = vdwg.mxu0
        %4359 = vmatprep.subr.bf16.mxu0 %v3838
        %4360 = vmatpush1.bf16.msra.mxu0 %v3837
        %4361 = vmatprep.subr.bf16.mxu0 %v3846
        %4362 = vmatpush1.bf16.msra.mxu0 %v3845
        %4363 = vmatprep.subr.bf16.mxu0 %v3854
        %4364 = vmatpush1.bf16.msra.mxu0 %v3853
        %4365 = vmatprep.subr.bf16.mxu0 %v3862
        %4366 = vmatpush1.bf16.msra.mxu0 %v3861
        %4367 = vmatprep.subr.bf16.mxu0 %v3870
        %4368 = vmatpush1.bf16.msra.mxu0 %v3869
        %4369 = vmatprep.subr.bf16.mxu0 %v3878
        %4370 = vmatpush1.bf16.msra.mxu0 %v3877
        %4371 = vmatprep.subr.bf16.mxu0 %v3886
        %4372 = vmatpush1.bf16.msra.mxu0 %v3885
        %4373 = vmatprep.subr.bf16.mxu0 %v3894
        %4374 = vmatpush1.bf16.msra.mxu0 %v3893
        %4375 = vmatprep.subr.bf16.mxu0 %v3902
        %4376 = vmatpush1.bf16.msra.mxu0 %v3901
        %4377 = vmatprep.subr.bf16.mxu0 %v3910
        %4378 = vmatpush1.bf16.msra.mxu0 %v3909
        %4379 = vmatprep.subr.bf16.mxu0 %v3918
        %4380 = vmatpush1.bf16.msra.mxu0 %v3917
        %4381 = vmatprep.subr.bf16.mxu0 %v3926
        %4382 = vmatpush1.bf16.msra.mxu0 %v3925
        %4383 = vmatprep.subr.bf16.mxu0 %v3934
        %4384 = vmatpush1.bf16.msra.mxu0 %v3933
        %4385 = vmatprep.subr.bf16.mxu0 %v3942
        %4386 = vmatpush1.bf16.msra.mxu0 %v3941
        %4387 = vmatprep.subr.bf16.mxu0 %v3950
        %4388 = vmatpush1.bf16.msra.mxu0 %v3949
        %4389 = vmatprep.subr.bf16.mxu0 %v3958
        %4390 = vmatpush1.bf16.msra.mxu0 %v3957
        %4391 = vmatprep.mubr.bf16.mxu0 %v3800
        %4392 = vmatmul.mubr.bf16.gmra.mrb[0].mxu0 %v3799
        %v4393 = vpop.f32.mrb[0].mxu0
        %v4394 = vadd.f32 %v4104, %v4393
        %v4395 = vpop.f32.mrb[0].mxu0
        %v4396 = vadd.f32 %v4108, %v4395
        %v4397 = vpop.f32.mrb[0].mxu0
        %v4398 = vadd.f32 %v4104, %v4397
        %v4399 = vpop.f32.mrb[0].mxu0
        %v4400 = vadd.f32 %v4108, %v4399
        %4401 = vmatprep.mubr.bf16.mxu0 %v3804
        %4402 = vmatmul.mubr.bf16.gmra.mrb[0].mxu0 %v3803
        %v4403 = vpop.f32.mrb[0].mxu0
        %v4404 = vadd.f32 %v4104, %v4403
        %v4405 = vpop.f32.mrb[0].mxu0
        %v4406 = vadd.f32 %v4108, %v4405
        %v4407 = vpop.f32.mrb[0].mxu0
        %v4408 = vadd.f32 %v4104, %v4407
        %v4409 = vpop.f32.mrb[0].mxu0
        %v4410 = vadd.f32 %v4108, %v4409
        %4411 = vmatprep.mubr.bf16.mxu0 %v3808
        %4412 = vmatmul.mubr.bf16.gmra.mrb[0].mxu0 %v3807
        %v4413 = vpop.f32.mrb[0].mxu0
        %v4414 = vadd.f32 %v4104, %v4413
        %v4415 = vpop.f32.mrb[0].mxu0
        %v4416 = vadd.f32 %v4108, %v4415
        %v4417 = vpop.f32.mrb[0].mxu0
        %v4418 = vadd.f32 %v4104, %v4417
        %v4419 = vpop.f32.mrb[0].mxu0
        %v4420 = vadd.f32 %v4108, %v4419
        %4421 = vmatprep.mubr.bf16.mxu0 %v3812
        %4422 = vmatmul.mubr.bf16.gmra.mrb[0].mxu0 %v3811
        %v4423 = vpop.f32.mrb[0].mxu0
        %v4424 = vadd.f32 %v4104, %v4423
        %v4425 = vpop.f32.mrb[0].mxu0
        %v4426 = vadd.f32 %v4108, %v4425
        %v4427 = vpop.f32.mrb[0].mxu0
        %v4428 = vadd.f32 %v4104, %v4427
        %v4429 = vpop.f32.mrb[0].mxu0
        %v4430 = vadd.f32 %v4108, %v4429
        %4431 = vmatprep.mubr.bf16.mxu0 %v3816
        %4432 = vmatmul.mubr.bf16.gmra.mrb[0].mxu0 %v3815
        %v4433 = vpop.f32.mrb[0].mxu0
        %v4434 = vadd.f32 %v4104, %v4433
        %v4435 = vpop.f32.mrb[0].mxu0
        %v4436 = vadd.f32 %v4108, %v4435
        %v4437 = vpop.f32.mrb[0].mxu0
        %v4438 = vadd.f32 %v4104, %v4437
        %v4439 = vpop.f32.mrb[0].mxu0
        %v4440 = vadd.f32 %v4108, %v4439
        %4441 = vmatprep.mubr.bf16.mxu0 %v3820
        %4442 = vmatmul.mubr.bf16.gmra.mrb[0].mxu0 %v3819
        %v4443 = vpop.f32.mrb[0].mxu0
        %v4444 = vadd.f32 %v4104, %v4443
        %v4445 = vpop.f32.mrb[0].mxu0
        %v4446 = vadd.f32 %v4108, %v4445
        %v4447 = vpop.f32.mrb[0].mxu0
        %v4448 = vadd.f32 %v4104, %v4447
        %v4449 = vpop.f32.mrb[0].mxu0
        %v4450 = vadd.f32 %v4108, %v4449
        %4451 = vmatprep.mubr.bf16.mxu0 %v3824
        %4452 = vmatmul.mubr.bf16.gmra.mrb[0].mxu0 %v3823
        %v4453 = vpop.f32.mrb[0].mxu0
        %v4454 = vadd.f32 %v4104, %v4453
        %v4455 = vpop.f32.mrb[0].mxu0
        %v4456 = vadd.f32 %v4108, %v4455
        %v4457 = vpop.f32.mrb[0].mxu0
        %v4458 = vadd.f32 %v4104, %v4457
        %v4459 = vpop.f32.mrb[0].mxu0
        %v4460 = vadd.f32 %v4108, %v4459
        %4461 = vmatprep.mubr.bf16.mxu0 %v3828
        %4462 = vmatmul.mubr.bf16.gmra.mrb[0].mxu0 %v3827
        %v4463 = vpop.f32.mrb[0].mxu0
        %v4464 = vadd.f32 %v4104, %v4463
        %v4465 = vpop.f32.mrb[0].mxu0
        %v4466 = vadd.f32 %v4108, %v4465
        %v4467 = vpop.f32.mrb[0].mxu0
        %v4468 = vadd.f32 %v4104, %v4467
        %v4469 = vpop.f32.mrb[0].mxu0
        %v4470 = vadd.f32 %v4108, %v4469
        %4471 = vdwg.mxu0
        %4472 = vmatprep.subr.bf16.mxu0 %v3966
        %4473 = vmatpush1.bf16.msra.mxu0 %v3965
        %4474 = vmatprep.subr.bf16.mxu0 %v3974
        %4475 = vmatpush1.bf16.msra.mxu0 %v3973
        %4476 = vmatprep.subr.bf16.mxu0 %v3982
        %4477 = vmatpush1.bf16.msra.mxu0 %v3981
        %4478 = vmatprep.subr.bf16.mxu0 %v3990
        %4479 = vmatpush1.bf16.msra.mxu0 %v3989
        %4480 = vmatprep.subr.bf16.mxu0 %v3998
        %4481 = vmatpush1.bf16.msra.mxu0 %v3997
        %4482 = vmatprep.subr.bf16.mxu0 %v4006
        %4483 = vmatpush1.bf16.msra.mxu0 %v4005
        %4484 = vmatprep.subr.bf16.mxu0 %v4014
        %4485 = vmatpush1.bf16.msra.mxu0 %v4013
        %4486 = vmatprep.subr.bf16.mxu0 %v4022
        %4487 = vmatpush1.bf16.msra.mxu0 %v4021
        %4488 = vmatprep.subr.bf16.mxu0 %v4030
        %4489 = vmatpush1.bf16.msra.mxu0 %v4029
        %4490 = vmatprep.subr.bf16.mxu0 %v4038
        %4491 = vmatpush1.bf16.msra.mxu0 %v4037
        %4492 = vmatprep.subr.bf16.mxu0 %v4046
        %4493 = vmatpush1.bf16.msra.mxu0 %v4045
        %4494 = vmatprep.subr.bf16.mxu0 %v4054
        %4495 = vmatpush1.bf16.msra.mxu0 %v4053
        %4496 = vmatprep.subr.bf16.mxu0 %v4062
        %4497 = vmatpush1.bf16.msra.mxu0 %v4061
        %4498 = vmatprep.subr.bf16.mxu0 %v4070
        %4499 = vmatpush1.bf16.msra.mxu0 %v4069
        %4500 = vmatprep.subr.bf16.mxu0 %v4078
        %4501 = vmatpush1.bf16.msra.mxu0 %v4077
        %4502 = vmatprep.subr.bf16.mxu0 %v4086
        %4503 = vmatpush1.bf16.msra.mxu0 %v4085
        %4504 = vmatprep.mubr.bf16.mxu0 %v3802
        %4505 = vmatmul.mubr.bf16.gmra.mrb[0].mxu0 %v3801
        %v4506 = vpop.f32.mrb[0].mxu0
        %v4507 = vadd.f32 %v4394, %v4506
        %v4508 = vpop.f32.mrb[0].mxu0
        %v4509 = vadd.f32 %v4396, %v4508
        %v4510 = vpop.f32.mrb[0].mxu0
        %v4511 = vadd.f32 %v4398, %v4510
        %v4512 = vpop.f32.mrb[0].mxu0
        %v4513 = vadd.f32 %v4400, %v4512
        %4514 = vmatprep.mubr.bf16.mxu0 %v3806
        %4515 = vmatmul.mubr.bf16.gmra.mrb[0].mxu0 %v3805
        %v4516 = vpop.f32.mrb[0].mxu0
        %v4517 = vadd.f32 %v4404, %v4516
        %v4518 = vpop.f32.mrb[0].mxu0
        %v4519 = vadd.f32 %v4406, %v4518
        %v4520 = vpop.f32.mrb[0].mxu0
        %v4521 = vadd.f32 %v4408, %v4520
        %v4522 = vpop.f32.mrb[0].mxu0
        %v4523 = vadd.f32 %v4410, %v4522
        %4524 = vmatprep.mubr.bf16.mxu0 %v3810
        %4525 = vmatmul.mubr.bf16.gmra.mrb[0].mxu0 %v3809
        %v4526 = vpop.f32.mrb[0].mxu0
        %v4527 = vadd.f32 %v4414, %v4526
        %v4528 = vpop.f32.mrb[0].mxu0
        %v4529 = vadd.f32 %v4416, %v4528
        %v4530 = vpop.f32.mrb[0].mxu0
        %v4531 = vadd.f32 %v4418, %v4530
        %v4532 = vpop.f32.mrb[0].mxu0
        %v4533 = vadd.f32 %v4420, %v4532
        %4534 = vmatprep.mubr.bf16.mxu0 %v3814
        %4535 = vmatmul.mubr.bf16.gmra.mrb[0].mxu0 %v3813
        %v4536 = vpop.f32.mrb[0].mxu0
        %v4537 = vadd.f32 %v4424, %v4536
        %v4538 = vpop.f32.mrb[0].mxu0
        %v4539 = vadd.f32 %v4426, %v4538
        %v4540 = vpop.f32.mrb[0].mxu0
        %v4541 = vadd.f32 %v4428, %v4540
        %v4542 = vpop.f32.mrb[0].mxu0
        %v4543 = vadd.f32 %v4430, %v4542
        %4544 = vmatprep.mubr.bf16.mxu0 %v3818
        %4545 = vmatmul.mubr.bf16.gmra.mrb[0].mxu0 %v3817
        %v4546 = vpop.f32.mrb[0].mxu0
        %v4547 = vadd.f32 %v4434, %v4546
        %v4548 = vpop.f32.mrb[0].mxu0
        %v4549 = vadd.f32 %v4436, %v4548
        %v4550 = vpop.f32.mrb[0].mxu0
        %v4551 = vadd.f32 %v4438, %v4550
        %v4552 = vpop.f32.mrb[0].mxu0
        %v4553 = vadd.f32 %v4440, %v4552
        %4554 = vmatprep.mubr.bf16.mxu0 %v3822
        %4555 = vmatmul.mubr.bf16.gmra.mrb[0].mxu0 %v3821
        %v4556 = vpop.f32.mrb[0].mxu0
        %v4557 = vadd.f32 %v4444, %v4556
        %v4558 = vpop.f32.mrb[0].mxu0
        %v4559 = vadd.f32 %v4446, %v4558
        %v4560 = vpop.f32.mrb[0].mxu0
        %v4561 = vadd.f32 %v4448, %v4560
        %v4562 = vpop.f32.mrb[0].mxu0
        %v4563 = vadd.f32 %v4450, %v4562
        %4564 = vmatprep.mubr.bf16.mxu0 %v3826
        %4565 = vmatmul.mubr.bf16.gmra.mrb[0].mxu0 %v3825
        %v4566 = vpop.f32.mrb[0].mxu0
        %v4567 = vadd.f32 %v4454, %v4566
        %v4568 = vpop.f32.mrb[0].mxu0
        %v4569 = vadd.f32 %v4456, %v4568
        %v4570 = vpop.f32.mrb[0].mxu0
        %v4571 = vadd.f32 %v4458, %v4570
        %v4572 = vpop.f32.mrb[0].mxu0
        %v4573 = vadd.f32 %v4460, %v4572
        %4574 = vmatprep.mubr.bf16.mxu0 %v3830
        %4575 = vmatmul.mubr.bf16.gmra.mrb[0].mxu0 %v3829
        %v4576 = vpop.f32.mrb[0].mxu0
        %v4577 = vadd.f32 %v4464, %v4576
        %v4578 = vpop.f32.mrb[0].mxu0
        %v4579 = vadd.f32 %v4466, %v4578
        %v4580 = vpop.f32.mrb[0].mxu0
        %v4581 = vadd.f32 %v4468, %v4580
        %v4582 = vpop.f32.mrb[0].mxu0
        %v4583 = vadd.f32 %v4470, %v4582
        %4584 = vdwg.mxu0
        %4585 = vmatprep.subr.bf16.mxu0 %v3840
        %4586 = vmatpush1.bf16.msra.mxu0 %v3839
        %4587 = vmatprep.subr.bf16.mxu0 %v3848
        %4588 = vmatpush1.bf16.msra.mxu0 %v3847
        %4589 = vmatprep.subr.bf16.mxu0 %v3856
        %4590 = vmatpush1.bf16.msra.mxu0 %v3855
        %4591 = vmatprep.subr.bf16.mxu0 %v3864
        %4592 = vmatpush1.bf16.msra.mxu0 %v3863
        %4593 = vmatprep.subr.bf16.mxu0 %v3872
        %4594 = vmatpush1.bf16.msra.mxu0 %v3871
        %4595 = vmatprep.subr.bf16.mxu0 %v3880
        %4596 = vmatpush1.bf16.msra.mxu0 %v3879
        %4597 = vmatprep.subr.bf16.mxu0 %v3888
        %4598 = vmatpush1.bf16.msra.mxu0 %v3887
        %4599 = vmatprep.subr.bf16.mxu0 %v3896
        %4600 = vmatpush1.bf16.msra.mxu0 %v3895
        %4601 = vmatprep.subr.bf16.mxu0 %v3904
        %4602 = vmatpush1.bf16.msra.mxu0 %v3903
        %4603 = vmatprep.subr.bf16.mxu0 %v3912
        %4604 = vmatpush1.bf16.msra.mxu0 %v3911
        %4605 = vmatprep.subr.bf16.mxu0 %v3920
        %4606 = vmatpush1.bf16.msra.mxu0 %v3919
        %4607 = vmatprep.subr.bf16.mxu0 %v3928
        %4608 = vmatpush1.bf16.msra.mxu0 %v3927
        %4609 = vmatprep.subr.bf16.mxu0 %v3936
        %4610 = vmatpush1.bf16.msra.mxu0 %v3935
        %4611 = vmatprep.subr.bf16.mxu0 %v3944
        %4612 = vmatpush1.bf16.msra.mxu0 %v3943
        %4613 = vmatprep.subr.bf16.mxu0 %v3952
        %4614 = vmatpush1.bf16.msra.mxu0 %v3951
        %4615 = vmatprep.subr.bf16.mxu0 %v3960
        %4616 = vmatpush1.bf16.msra.mxu0 %v3959
        %4617 = vmatprep.mubr.bf16.mxu0 %v3800
        %4618 = vmatmul.mubr.bf16.gmra.mrb[0].mxu0 %v3799
        %v4619 = vpop.f32.mrb[0].mxu0
        %v4620 = vadd.f32 %v4112, %v4619
        %v4621 = vpop.f32.mrb[0].mxu0
        %v4622 = vadd.f32 %v4116, %v4621
        %v4623 = vpop.f32.mrb[0].mxu0
        %v4624 = vadd.f32 %v4112, %v4623
        %v4625 = vpop.f32.mrb[0].mxu0
        %v4626 = vadd.f32 %v4116, %v4625
        %4627 = vmatprep.mubr.bf16.mxu0 %v3804
        %4628 = vmatmul.mubr.bf16.gmra.mrb[0].mxu0 %v3803
        %v4629 = vpop.f32.mrb[0].mxu0
        %v4630 = vadd.f32 %v4112, %v4629
        %v4631 = vpop.f32.mrb[0].mxu0
        %v4632 = vadd.f32 %v4116, %v4631
        %v4633 = vpop.f32.mrb[0].mxu0
        %v4634 = vadd.f32 %v4112, %v4633
        %v4635 = vpop.f32.mrb[0].mxu0
        %v4636 = vadd.f32 %v4116, %v4635
        %4637 = vmatprep.mubr.bf16.mxu0 %v3808
        %4638 = vmatmul.mubr.bf16.gmra.mrb[0].mxu0 %v3807
        %v4639 = vpop.f32.mrb[0].mxu0
        %v4640 = vadd.f32 %v4112, %v4639
        %v4641 = vpop.f32.mrb[0].mxu0
        %v4642 = vadd.f32 %v4116, %v4641
        %v4643 = vpop.f32.mrb[0].mxu0
        %v4644 = vadd.f32 %v4112, %v4643
        %v4645 = vpop.f32.mrb[0].mxu0
        %v4646 = vadd.f32 %v4116, %v4645
        %4647 = vmatprep.mubr.bf16.mxu0 %v3812
        %4648 = vmatmul.mubr.bf16.gmra.mrb[0].mxu0 %v3811
        %v4649 = vpop.f32.mrb[0].mxu0
        %v4650 = vadd.f32 %v4112, %v4649
        %v4651 = vpop.f32.mrb[0].mxu0
        %v4652 = vadd.f32 %v4116, %v4651
        %v4653 = vpop.f32.mrb[0].mxu0
        %v4654 = vadd.f32 %v4112, %v4653
        %v4655 = vpop.f32.mrb[0].mxu0
        %v4656 = vadd.f32 %v4116, %v4655
        %4657 = vmatprep.mubr.bf16.mxu0 %v3816
        %4658 = vmatmul.mubr.bf16.gmra.mrb[0].mxu0 %v3815
        %v4659 = vpop.f32.mrb[0].mxu0
        %v4660 = vadd.f32 %v4112, %v4659
        %v4661 = vpop.f32.mrb[0].mxu0
        %v4662 = vadd.f32 %v4116, %v4661
        %v4663 = vpop.f32.mrb[0].mxu0
        %v4664 = vadd.f32 %v4112, %v4663
        %v4665 = vpop.f32.mrb[0].mxu0
        %v4666 = vadd.f32 %v4116, %v4665
        %4667 = vmatprep.mubr.bf16.mxu0 %v3820
        %4668 = vmatmul.mubr.bf16.gmra.mrb[0].mxu0 %v3819
        %v4669 = vpop.f32.mrb[0].mxu0
        %v4670 = vadd.f32 %v4112, %v4669
        %v4671 = vpop.f32.mrb[0].mxu0
        %v4672 = vadd.f32 %v4116, %v4671
        %v4673 = vpop.f32.mrb[0].mxu0
        %v4674 = vadd.f32 %v4112, %v4673
        %v4675 = vpop.f32.mrb[0].mxu0
        %v4676 = vadd.f32 %v4116, %v4675
        %4677 = vmatprep.mubr.bf16.mxu0 %v3824
        %4678 = vmatmul.mubr.bf16.gmra.mrb[0].mxu0 %v3823
        %v4679 = vpop.f32.mrb[0].mxu0
        %v4680 = vadd.f32 %v4112, %v4679
        %v4681 = vpop.f32.mrb[0].mxu0
        %v4682 = vadd.f32 %v4116, %v4681
        %v4683 = vpop.f32.mrb[0].mxu0
        %v4684 = vadd.f32 %v4112, %v4683
        %v4685 = vpop.f32.mrb[0].mxu0
        %v4686 = vadd.f32 %v4116, %v4685
        %4687 = vmatprep.mubr.bf16.mxu0 %v3828
        %4688 = vmatmul.mubr.bf16.gmra.mrb[0].mxu0 %v3827
        %v4689 = vpop.f32.mrb[0].mxu0
        %v4690 = vadd.f32 %v4112, %v4689
        %v4691 = vpop.f32.mrb[0].mxu0
        %v4692 = vadd.f32 %v4116, %v4691
        %v4693 = vpop.f32.mrb[0].mxu0
        %v4694 = vadd.f32 %v4112, %v4693
        %v4695 = vpop.f32.mrb[0].mxu0
        %v4696 = vadd.f32 %v4116, %v4695
        %4697 = vdwg.mxu0
        %4698 = vmatprep.subr.bf16.mxu0 %v3968
        %4699 = vmatpush1.bf16.msra.mxu0 %v3967
        %4700 = vmatprep.subr.bf16.mxu0 %v3976
        %4701 = vmatpush1.bf16.msra.mxu0 %v3975
        %4702 = vmatprep.subr.bf16.mxu0 %v3984
        %4703 = vmatpush1.bf16.msra.mxu0 %v3983
        %4704 = vmatprep.subr.bf16.mxu0 %v3992
        %4705 = vmatpush1.bf16.msra.mxu0 %v3991
        %4706 = vmatprep.subr.bf16.mxu0 %v4000
        %4707 = vmatpush1.bf16.msra.mxu0 %v3999
        %4708 = vmatprep.subr.bf16.mxu0 %v4008
        %4709 = vmatpush1.bf16.msra.mxu0 %v4007
        %4710 = vmatprep.subr.bf16.mxu0 %v4016
        %4711 = vmatpush1.bf16.msra.mxu0 %v4015
        %4712 = vmatprep.subr.bf16.mxu0 %v4024
        %4713 = vmatpush1.bf16.msra.mxu0 %v4023
        %4714 = vmatprep.subr.bf16.mxu0 %v4032
        %4715 = vmatpush1.bf16.msra.mxu0 %v4031
        %4716 = vmatprep.subr.bf16.mxu0 %v4040
        %4717 = vmatpush1.bf16.msra.mxu0 %v4039
        %4718 = vmatprep.subr.bf16.mxu0 %v4048
        %4719 = vmatpush1.bf16.msra.mxu0 %v4047
        %4720 = vmatprep.subr.bf16.mxu0 %v4056
        %4721 = vmatpush1.bf16.msra.mxu0 %v4055
        %4722 = vmatprep.subr.bf16.mxu0 %v4064
        %4723 = vmatpush1.bf16.msra.mxu0 %v4063
        %4724 = vmatprep.subr.bf16.mxu0 %v4072
        %4725 = vmatpush1.bf16.msra.mxu0 %v4071
        %4726 = vmatprep.subr.bf16.mxu0 %v4080
        %4727 = vmatpush1.bf16.msra.mxu0 %v4079
        %4728 = vmatprep.subr.bf16.mxu0 %v4088
        %4729 = vmatpush1.bf16.msra.mxu0 %v4087
        %4730 = vmatprep.mubr.bf16.mxu0 %v3802
        %4731 = vmatmul.mubr.bf16.gmra.mrb[0].mxu0 %v3801
        %v4732 = vpop.f32.mrb[0].mxu0
        %v4733 = vadd.f32 %v4620, %v4732
        %v4734 = vpop.f32.mrb[0].mxu0
        %v4735 = vadd.f32 %v4622, %v4734
        %v4736 = vpop.f32.mrb[0].mxu0
        %v4737 = vadd.f32 %v4624, %v4736
        %v4738 = vpop.f32.mrb[0].mxu0
        %v4739 = vadd.f32 %v4626, %v4738
        %4740 = vmatprep.mubr.bf16.mxu0 %v3806
        %4741 = vmatmul.mubr.bf16.gmra.mrb[0].mxu0 %v3805
        %v4742 = vpop.f32.mrb[0].mxu0
        %v4743 = vadd.f32 %v4630, %v4742
        %v4744 = vpop.f32.mrb[0].mxu0
        %v4745 = vadd.f32 %v4632, %v4744
        %v4746 = vpop.f32.mrb[0].mxu0
        %v4747 = vadd.f32 %v4634, %v4746
        %v4748 = vpop.f32.mrb[0].mxu0
        %v4749 = vadd.f32 %v4636, %v4748
        %4750 = vmatprep.mubr.bf16.mxu0 %v3810
        %4751 = vmatmul.mubr.bf16.gmra.mrb[0].mxu0 %v3809
        %v4752 = vpop.f32.mrb[0].mxu0
        %v4753 = vadd.f32 %v4640, %v4752
        %v4754 = vpop.f32.mrb[0].mxu0
        %v4755 = vadd.f32 %v4642, %v4754
        %v4756 = vpop.f32.mrb[0].mxu0
        %v4757 = vadd.f32 %v4644, %v4756
        %v4758 = vpop.f32.mrb[0].mxu0
        %v4759 = vadd.f32 %v4646, %v4758
        %4760 = vmatprep.mubr.bf16.mxu0 %v3814
        %4761 = vmatmul.mubr.bf16.gmra.mrb[0].mxu0 %v3813
        %v4762 = vpop.f32.mrb[0].mxu0
        %v4763 = vadd.f32 %v4650, %v4762
        %v4764 = vpop.f32.mrb[0].mxu0
        %v4765 = vadd.f32 %v4652, %v4764
        %v4766 = vpop.f32.mrb[0].mxu0
        %v4767 = vadd.f32 %v4654, %v4766
        %v4768 = vpop.f32.mrb[0].mxu0
        %v4769 = vadd.f32 %v4656, %v4768
        %4770 = vmatprep.mubr.bf16.mxu0 %v3818
        %4771 = vmatmul.mubr.bf16.gmra.mrb[0].mxu0 %v3817
        %v4772 = vpop.f32.mrb[0].mxu0
        %v4773 = vadd.f32 %v4660, %v4772
        %v4774 = vpop.f32.mrb[0].mxu0
        %v4775 = vadd.f32 %v4662, %v4774
        %v4776 = vpop.f32.mrb[0].mxu0
        %v4777 = vadd.f32 %v4664, %v4776
        %v4778 = vpop.f32.mrb[0].mxu0
        %v4779 = vadd.f32 %v4666, %v4778
        %4780 = vmatprep.mubr.bf16.mxu0 %v3822
        %4781 = vmatmul.mubr.bf16.gmra.mrb[0].mxu0 %v3821
        %v4782 = vpop.f32.mrb[0].mxu0
        %v4783 = vadd.f32 %v4670, %v4782
        %v4784 = vpop.f32.mrb[0].mxu0
        %v4785 = vadd.f32 %v4672, %v4784
        %v4786 = vpop.f32.mrb[0].mxu0
        %v4787 = vadd.f32 %v4674, %v4786
        %v4788 = vpop.f32.mrb[0].mxu0
        %v4789 = vadd.f32 %v4676, %v4788
        %4790 = vmatprep.mubr.bf16.mxu0 %v3826
        %4791 = vmatmul.mubr.bf16.gmra.mrb[0].mxu0 %v3825
        %v4792 = vpop.f32.mrb[0].mxu0
        %v4793 = vadd.f32 %v4680, %v4792
        %v4794 = vpop.f32.mrb[0].mxu0
        %v4795 = vadd.f32 %v4682, %v4794
        %v4796 = vpop.f32.mrb[0].mxu0
        %v4797 = vadd.f32 %v4684, %v4796
        %v4798 = vpop.f32.mrb[0].mxu0
        %v4799 = vadd.f32 %v4686, %v4798
        %4800 = vmatprep.mubr.bf16.mxu0 %v3830
        %4801 = vmatmul.mubr.bf16.gmra.mrb[0].mxu0 %v3829
        %v4802 = vpop.f32.mrb[0].mxu0
        %v4803 = vadd.f32 %v4690, %v4802
        %v4804 = vpop.f32.mrb[0].mxu0
        %v4805 = vadd.f32 %v4692, %v4804
        %v4806 = vpop.f32.mrb[0].mxu0
        %v4807 = vadd.f32 %v4694, %v4806
        %v4808 = vpop.f32.mrb[0].mxu0
        %v4809 = vadd.f32 %v4696, %v4808
        %4810 = vdwg.mxu0
        %4811 = vmatprep.subr.bf16.mxu0 %v3842
        %4812 = vmatpush1.bf16.msra.mxu0 %v3841
        %4813 = vmatprep.subr.bf16.mxu0 %v3850
        %4814 = vmatpush1.bf16.msra.mxu0 %v3849
        %4815 = vmatprep.subr.bf16.mxu0 %v3858
        %4816 = vmatpush1.bf16.msra.mxu0 %v3857
        %4817 = vmatprep.subr.bf16.mxu0 %v3866
        %4818 = vmatpush1.bf16.msra.mxu0 %v3865
        %4819 = vmatprep.subr.bf16.mxu0 %v3874
        %4820 = vmatpush1.bf16.msra.mxu0 %v3873
        %4821 = vmatprep.subr.bf16.mxu0 %v3882
        %4822 = vmatpush1.bf16.msra.mxu0 %v3881
        %4823 = vmatprep.subr.bf16.mxu0 %v3890
        %4824 = vmatpush1.bf16.msra.mxu0 %v3889
        %4825 = vmatprep.subr.bf16.mxu0 %v3898
        %4826 = vmatpush1.bf16.msra.mxu0 %v3897
        %4827 = vmatprep.subr.bf16.mxu0 %v3906
        %4828 = vmatpush1.bf16.msra.mxu0 %v3905
        %4829 = vmatprep.subr.bf16.mxu0 %v3914
        %4830 = vmatpush1.bf16.msra.mxu0 %v3913
        %4831 = vmatprep.subr.bf16.mxu0 %v3922
        %4832 = vmatpush1.bf16.msra.mxu0 %v3921
        %4833 = vmatprep.subr.bf16.mxu0 %v3930
        %4834 = vmatpush1.bf16.msra.mxu0 %v3929
        %4835 = vmatprep.subr.bf16.mxu0 %v3938
        %4836 = vmatpush1.bf16.msra.mxu0 %v3937
        %4837 = vmatprep.subr.bf16.mxu0 %v3946
        %4838 = vmatpush1.bf16.msra.mxu0 %v3945
        %4839 = vmatprep.subr.bf16.mxu0 %v3954
        %4840 = vmatpush1.bf16.msra.mxu0 %v3953
        %4841 = vmatprep.subr.bf16.mxu0 %v3962
        %4842 = vmatpush1.bf16.msra.mxu0 %v3961
        %4843 = vmatprep.mubr.bf16.mxu0 %v3800
        %4844 = vmatmul.mubr.bf16.gmra.mrb[0].mxu0 %v3799
        %v4845 = vpop.f32.mrb[0].mxu0
        %v4846 = vadd.f32 %v4120, %v4845
        %v4847 = vpop.f32.mrb[0].mxu0
        %v4848 = vadd.f32 %v4124, %v4847
        %v4849 = vpop.f32.mrb[0].mxu0
        %v4850 = vadd.f32 %v4120, %v4849
        %v4851 = vpop.f32.mrb[0].mxu0
        %v4852 = vadd.f32 %v4124, %v4851
        %4853 = vmatprep.mubr.bf16.mxu0 %v3804
        %4854 = vmatmul.mubr.bf16.gmra.mrb[0].mxu0 %v3803
        %v4855 = vpop.f32.mrb[0].mxu0
        %v4856 = vadd.f32 %v4120, %v4855
        %v4857 = vpop.f32.mrb[0].mxu0
        %v4858 = vadd.f32 %v4124, %v4857
        %v4859 = vpop.f32.mrb[0].mxu0
        %v4860 = vadd.f32 %v4120, %v4859
        %v4861 = vpop.f32.mrb[0].mxu0
        %v4862 = vadd.f32 %v4124, %v4861
        %4863 = vmatprep.mubr.bf16.mxu0 %v3808
        %4864 = vmatmul.mubr.bf16.gmra.mrb[0].mxu0 %v3807
        %v4865 = vpop.f32.mrb[0].mxu0
        %v4866 = vadd.f32 %v4120, %v4865
        %v4867 = vpop.f32.mrb[0].mxu0
        %v4868 = vadd.f32 %v4124, %v4867
        %v4869 = vpop.f32.mrb[0].mxu0
        %v4870 = vadd.f32 %v4120, %v4869
        %v4871 = vpop.f32.mrb[0].mxu0
        %v4872 = vadd.f32 %v4124, %v4871
        %4873 = vmatprep.mubr.bf16.mxu0 %v3812
        %4874 = vmatmul.mubr.bf16.gmra.mrb[0].mxu0 %v3811
        %v4875 = vpop.f32.mrb[0].mxu0
        %v4876 = vadd.f32 %v4120, %v4875
        %v4877 = vpop.f32.mrb[0].mxu0
        %v4878 = vadd.f32 %v4124, %v4877
        %v4879 = vpop.f32.mrb[0].mxu0
        %v4880 = vadd.f32 %v4120, %v4879
        %v4881 = vpop.f32.mrb[0].mxu0
        %v4882 = vadd.f32 %v4124, %v4881
        %4883 = vmatprep.mubr.bf16.mxu0 %v3816
        %4884 = vmatmul.mubr.bf16.gmra.mrb[0].mxu0 %v3815
        %v4885 = vpop.f32.mrb[0].mxu0
        %v4886 = vadd.f32 %v4120, %v4885
        %v4887 = vpop.f32.mrb[0].mxu0
        %v4888 = vadd.f32 %v4124, %v4887
        %v4889 = vpop.f32.mrb[0].mxu0
        %v4890 = vadd.f32 %v4120, %v4889
        %v4891 = vpop.f32.mrb[0].mxu0
        %v4892 = vadd.f32 %v4124, %v4891
        %4893 = vmatprep.mubr.bf16.mxu0 %v3820
        %4894 = vmatmul.mubr.bf16.gmra.mrb[0].mxu0 %v3819
        %v4895 = vpop.f32.mrb[0].mxu0
        %v4896 = vadd.f32 %v4120, %v4895
        %v4897 = vpop.f32.mrb[0].mxu0
        %v4898 = vadd.f32 %v4124, %v4897
        %v4899 = vpop.f32.mrb[0].mxu0
        %v4900 = vadd.f32 %v4120, %v4899
        %v4901 = vpop.f32.mrb[0].mxu0
        %v4902 = vadd.f32 %v4124, %v4901
        %4903 = vmatprep.mubr.bf16.mxu0 %v3824
        %4904 = vmatmul.mubr.bf16.gmra.mrb[0].mxu0 %v3823
        %v4905 = vpop.f32.mrb[0].mxu0
        %v4906 = vadd.f32 %v4120, %v4905
        %v4907 = vpop.f32.mrb[0].mxu0
        %v4908 = vadd.f32 %v4124, %v4907
        %v4909 = vpop.f32.mrb[0].mxu0
        %v4910 = vadd.f32 %v4120, %v4909
        %v4911 = vpop.f32.mrb[0].mxu0
        %v4912 = vadd.f32 %v4124, %v4911
        %4913 = vmatprep.mubr.bf16.mxu0 %v3828
        %4914 = vmatmul.mubr.bf16.gmra.mrb[0].mxu0 %v3827
        %v4915 = vpop.f32.mrb[0].mxu0
        %v4916 = vadd.f32 %v4120, %v4915
        %v4917 = vpop.f32.mrb[0].mxu0
        %v4918 = vadd.f32 %v4124, %v4917
        %v4919 = vpop.f32.mrb[0].mxu0
        %v4920 = vadd.f32 %v4120, %v4919
        %v4921 = vpop.f32.mrb[0].mxu0
        %v4922 = vadd.f32 %v4124, %v4921
        %4923 = vdwg.mxu0
        %4924 = vmatprep.subr.bf16.mxu0 %v3970
        %4925 = vmatpush1.bf16.msra.mxu0 %v3969
        %4926 = vmatprep.subr.bf16.mxu0 %v3978
        %4927 = vmatpush1.bf16.msra.mxu0 %v3977
        %4928 = vmatprep.subr.bf16.mxu0 %v3986
        %4929 = vmatpush1.bf16.msra.mxu0 %v3985
        %4930 = vmatprep.subr.bf16.mxu0 %v3994
        %4931 = vmatpush1.bf16.msra.mxu0 %v3993
        %4932 = vmatprep.subr.bf16.mxu0 %v4002
        %4933 = vmatpush1.bf16.msra.mxu0 %v4001
        %4934 = vmatprep.subr.bf16.mxu0 %v4010
        %4935 = vmatpush1.bf16.msra.mxu0 %v4009
        %4936 = vmatprep.subr.bf16.mxu0 %v4018
        %4937 = vmatpush1.bf16.msra.mxu0 %v4017
        %4938 = vmatprep.subr.bf16.mxu0 %v4026
        %4939 = vmatpush1.bf16.msra.mxu0 %v4025
        %4940 = vmatprep.subr.bf16.mxu0 %v4034
        %4941 = vmatpush1.bf16.msra.mxu0 %v4033
        %4942 = vmatprep.subr.bf16.mxu0 %v4042
        %4943 = vmatpush1.bf16.msra.mxu0 %v4041
        %4944 = vmatprep.subr.bf16.mxu0 %v4050
        %4945 = vmatpush1.bf16.msra.mxu0 %v4049
        %4946 = vmatprep.subr.bf16.mxu0 %v4058
        %4947 = vmatpush1.bf16.msra.mxu0 %v4057
        %4948 = vmatprep.subr.bf16.mxu0 %v4066
        %4949 = vmatpush1.bf16.msra.mxu0 %v4065
        %4950 = vmatprep.subr.bf16.mxu0 %v4074
        %4951 = vmatpush1.bf16.msra.mxu0 %v4073
        %4952 = vmatprep.subr.bf16.mxu0 %v4082
        %4953 = vmatpush1.bf16.msra.mxu0 %v4081
        %4954 = vmatprep.subr.bf16.mxu0 %v4090
        %4955 = vmatpush1.bf16.msra.mxu0 %v4089
        %4956 = vmatprep.mubr.bf16.mxu0 %v3802
        %4957 = vmatmul.mubr.bf16.gmra.mrb[0].mxu0 %v3801
        %v4958 = vpop.f32.mrb[0].mxu0
        %v4959 = vadd.f32 %v4846, %v4958
        %v4960 = vpop.f32.mrb[0].mxu0
        %v4961 = vadd.f32 %v4848, %v4960
        %v4962 = vpop.f32.mrb[0].mxu0
        %v4963 = vadd.f32 %v4850, %v4962
        %v4964 = vpop.f32.mrb[0].mxu0
        %v4965 = vadd.f32 %v4852, %v4964
        %4966 = vmatprep.mubr.bf16.mxu0 %v3806
        %4967 = vmatmul.mubr.bf16.gmra.mrb[0].mxu0 %v3805
        %v4968 = vpop.f32.mrb[0].mxu0
        %v4969 = vadd.f32 %v4856, %v4968
        %v4970 = vpop.f32.mrb[0].mxu0
        %v4971 = vadd.f32 %v4858, %v4970
        %v4972 = vpop.f32.mrb[0].mxu0
        %v4973 = vadd.f32 %v4860, %v4972
        %v4974 = vpop.f32.mrb[0].mxu0
        %v4975 = vadd.f32 %v4862, %v4974
        %4976 = vmatprep.mubr.bf16.mxu0 %v3810
        %4977 = vmatmul.mubr.bf16.gmra.mrb[0].mxu0 %v3809
        %v4978 = vpop.f32.mrb[0].mxu0
        %v4979 = vadd.f32 %v4866, %v4978
        %v4980 = vpop.f32.mrb[0].mxu0
        %v4981 = vadd.f32 %v4868, %v4980
        %v4982 = vpop.f32.mrb[0].mxu0
        %v4983 = vadd.f32 %v4870, %v4982
        %v4984 = vpop.f32.mrb[0].mxu0
        %v4985 = vadd.f32 %v4872, %v4984
        %4986 = vmatprep.mubr.bf16.mxu0 %v3814
        %4987 = vmatmul.mubr.bf16.gmra.mrb[0].mxu0 %v3813
        %v4988 = vpop.f32.mrb[0].mxu0
        %v4989 = vadd.f32 %v4876, %v4988
        %v4990 = vpop.f32.mrb[0].mxu0
        %v4991 = vadd.f32 %v4878, %v4990
        %v4992 = vpop.f32.mrb[0].mxu0
        %v4993 = vadd.f32 %v4880, %v4992
        %v4994 = vpop.f32.mrb[0].mxu0
        %v4995 = vadd.f32 %v4882, %v4994
        %4996 = vmatprep.mubr.bf16.mxu0 %v3818
        %4997 = vmatmul.mubr.bf16.gmra.mrb[0].mxu0 %v3817
        %v4998 = vpop.f32.mrb[0].mxu0
        %v4999 = vadd.f32 %v4886, %v4998
        %v5000 = vpop.f32.mrb[0].mxu0
        %v5001 = vadd.f32 %v4888, %v5000
        %v5002 = vpop.f32.mrb[0].mxu0
        %v5003 = vadd.f32 %v4890, %v5002
        %v5004 = vpop.f32.mrb[0].mxu0
        %v5005 = vadd.f32 %v4892, %v5004
        %5006 = vmatprep.mubr.bf16.mxu0 %v3822
        %5007 = vmatmul.mubr.bf16.gmra.mrb[0].mxu0 %v3821
        %v5008 = vpop.f32.mrb[0].mxu0
        %v5009 = vadd.f32 %v4896, %v5008
        %v5010 = vpop.f32.mrb[0].mxu0
        %v5011 = vadd.f32 %v4898, %v5010
        %v5012 = vpop.f32.mrb[0].mxu0
        %v5013 = vadd.f32 %v4900, %v5012
        %v5014 = vpop.f32.mrb[0].mxu0
        %v5015 = vadd.f32 %v4902, %v5014
        %5016 = vmatprep.mubr.bf16.mxu0 %v3826
        %5017 = vmatmul.mubr.bf16.gmra.mrb[0].mxu0 %v3825
        %v5018 = vpop.f32.mrb[0].mxu0
        %v5019 = vadd.f32 %v4906, %v5018
        %v5020 = vpop.f32.mrb[0].mxu0
        %v5021 = vadd.f32 %v4908, %v5020
        %v5022 = vpop.f32.mrb[0].mxu0
        %v5023 = vadd.f32 %v4910, %v5022
        %v5024 = vpop.f32.mrb[0].mxu0
        %v5025 = vadd.f32 %v4912, %v5024
        %5026 = vmatprep.mubr.bf16.mxu0 %v3830
        %5027 = vmatmul.mubr.bf16.gmra.mrb[0].mxu0 %v3829
        %v5028 = vpop.f32.mrb[0].mxu0
        %v5029 = vadd.f32 %v4916, %v5028
        %v5030 = vpop.f32.mrb[0].mxu0
        %v5031 = vadd.f32 %v4918, %v5030
        %v5032 = vpop.f32.mrb[0].mxu0
        %v5033 = vadd.f32 %v4920, %v5032
        %v5034 = vpop.f32.mrb[0].mxu0
        %v5035 = vadd.f32 %v4922, %v5034
        %5036 = vdwg.mxu0
        %v5037 = vmax.f32 %v4281, 0.0
        %v5038 = vmax.f32 %v4283, 0.0
        %v5039 = vmax.f32 %v4507, 0.0
        %v5040 = vmax.f32 %v4509, 0.0
        %v5041 = vmax.f32 %v4733, 0.0
        %v5042 = vmax.f32 %v4735, 0.0
        %v5043 = vmax.f32 %v4959, 0.0
        %v5044 = vmax.f32 %v4961, 0.0
        %v5045 = vmax.f32 %v4285, 0.0
        %v5046 = vmax.f32 %v4287, 0.0
        %v5047 = vmax.f32 %v4511, 0.0
        %v5048 = vmax.f32 %v4513, 0.0
        %v5049 = vmax.f32 %v4737, 0.0
        %v5050 = vmax.f32 %v4739, 0.0
        %v5051 = vmax.f32 %v4963, 0.0
        %v5052 = vmax.f32 %v4965, 0.0
        %v5053 = vmax.f32 %v4291, 0.0
        %v5054 = vmax.f32 %v4293, 0.0
        %v5055 = vmax.f32 %v4517, 0.0
        %v5056 = vmax.f32 %v4519, 0.0
        %v5057 = vmax.f32 %v4743, 0.0
        %v5058 = vmax.f32 %v4745, 0.0
        %v5059 = vmax.f32 %v4969, 0.0
        %v5060 = vmax.f32 %v4971, 0.0
        %v5061 = vmax.f32 %v4295, 0.0
        %v5062 = vmax.f32 %v4297, 0.0
        %v5063 = vmax.f32 %v4521, 0.0
        %v5064 = vmax.f32 %v4523, 0.0
        %v5065 = vmax.f32 %v4747, 0.0
        %v5066 = vmax.f32 %v4749, 0.0
        %v5067 = vmax.f32 %v4973, 0.0
        %v5068 = vmax.f32 %v4975, 0.0
        %v5069 = vmax.f32 %v4301, 0.0
        %v5070 = vmax.f32 %v4303, 0.0
        %v5071 = vmax.f32 %v4527, 0.0
        %v5072 = vmax.f32 %v4529, 0.0
        %v5073 = vmax.f32 %v4753, 0.0
        %v5074 = vmax.f32 %v4755, 0.0
        %v5075 = vmax.f32 %v4979, 0.0
        %v5076 = vmax.f32 %v4981, 0.0
        %v5077 = vmax.f32 %v4305, 0.0
        %v5078 = vmax.f32 %v4307, 0.0
        %v5079 = vmax.f32 %v4531, 0.0
        %v5080 = vmax.f32 %v4533, 0.0
        %v5081 = vmax.f32 %v4757, 0.0
        %v5082 = vmax.f32 %v4759, 0.0
        %v5083 = vmax.f32 %v4983, 0.0
        %v5084 = vmax.f32 %v4985, 0.0
        %v5085 = vmax.f32 %v4311, 0.0
        %v5086 = vmax.f32 %v4313, 0.0
        %v5087 = vmax.f32 %v4537, 0.0
        %v5088 = vmax.f32 %v4539, 0.0
        %v5089 = vmax.f32 %v4763, 0.0
        %v5090 = vmax.f32 %v4765, 0.0
        %v5091 = vmax.f32 %v4989, 0.0
        %v5092 = vmax.f32 %v4991, 0.0
        %v5093 = vmax.f32 %v4315, 0.0
        %v5094 = vmax.f32 %v4317, 0.0
        %v5095 = vmax.f32 %v4541, 0.0
        %v5096 = vmax.f32 %v4543, 0.0
        %v5097 = vmax.f32 %v4767, 0.0
        %v5098 = vmax.f32 %v4769, 0.0
        %v5099 = vmax.f32 %v4993, 0.0
        %v5100 = vmax.f32 %v4995, 0.0
        %v5101 = vmax.f32 %v4321, 0.0
        %v5102 = vmax.f32 %v4323, 0.0
        %v5103 = vmax.f32 %v4547, 0.0
        %v5104 = vmax.f32 %v4549, 0.0
        %v5105 = vmax.f32 %v4773, 0.0
        %v5106 = vmax.f32 %v4775, 0.0
        %v5107 = vmax.f32 %v4999, 0.0
        %v5108 = vmax.f32 %v5001, 0.0
        %v5109 = vmax.f32 %v4325, 0.0
        %v5110 = vmax.f32 %v4327, 0.0
        %v5111 = vmax.f32 %v4551, 0.0
        %v5112 = vmax.f32 %v4553, 0.0
        %v5113 = vmax.f32 %v4777, 0.0
        %v5114 = vmax.f32 %v4779, 0.0
        %v5115 = vmax.f32 %v5003, 0.0
        %v5116 = vmax.f32 %v5005, 0.0
        %v5117 = vmax.f32 %v4331, 0.0
        %v5118 = vmax.f32 %v4333, 0.0
        %v5119 = vmax.f32 %v4557, 0.0
        %v5120 = vmax.f32 %v4559, 0.0
        %v5121 = vmax.f32 %v4783, 0.0
        %v5122 = vmax.f32 %v4785, 0.0
        %v5123 = vmax.f32 %v5009, 0.0
        %v5124 = vmax.f32 %v5011, 0.0
        %v5125 = vmax.f32 %v4335, 0.0
        %v5126 = vmax.f32 %v4337, 0.0
        %v5127 = vmax.f32 %v4561, 0.0
        %v5128 = vmax.f32 %v4563, 0.0
        %v5129 = vmax.f32 %v4787, 0.0
        %v5130 = vmax.f32 %v4789, 0.0
        %v5131 = vmax.f32 %v5013, 0.0
        %v5132 = vmax.f32 %v5015, 0.0
        %v5133 = vmax.f32 %v4341, 0.0
        %v5134 = vmax.f32 %v4343, 0.0
        %v5135 = vmax.f32 %v4567, 0.0
        %v5136 = vmax.f32 %v4569, 0.0
        %v5137 = vmax.f32 %v4793, 0.0
        %v5138 = vmax.f32 %v4795, 0.0
        %v5139 = vmax.f32 %v5019, 0.0
        %v5140 = vmax.f32 %v5021, 0.0
        %v5141 = vmax.f32 %v4345, 0.0
        %v5142 = vmax.f32 %v4347, 0.0
        %v5143 = vmax.f32 %v4571, 0.0
        %v5144 = vmax.f32 %v4573, 0.0
        %v5145 = vmax.f32 %v4797, 0.0
        %v5146 = vmax.f32 %v4799, 0.0
        %v5147 = vmax.f32 %v5023, 0.0
        %v5148 = vmax.f32 %v5025, 0.0
        %v5149 = vmax.f32 %v4351, 0.0
        %v5150 = vmax.f32 %v4353, 0.0
        %v5151 = vmax.f32 %v4577, 0.0
        %v5152 = vmax.f32 %v4579, 0.0
        %v5153 = vmax.f32 %v4803, 0.0
        %v5154 = vmax.f32 %v4805, 0.0
        %v5155 = vmax.f32 %v5029, 0.0
        %v5156 = vmax.f32 %v5031, 0.0
        %v5157 = vmax.f32 %v4355, 0.0
        %v5158 = vmax.f32 %v4357, 0.0
        %v5159 = vmax.f32 %v4581, 0.0
        %v5160 = vmax.f32 %v4583, 0.0
        %v5161 = vmax.f32 %v4807, 0.0
        %v5162 = vmax.f32 %v4809, 0.0
        %v5163 = vmax.f32 %v5033, 0.0
        %v5164 = vmax.f32 %v5035, 0.0
        %v5165 = vpack.c.bf16 %v5045, %v5037
        %v5166 = vpack.c.bf16 %v5046, %v5038
        %v5167 = vpack.c.bf16 %v5047, %v5039
        %v5168 = vpack.c.bf16 %v5048, %v5040
        %v5169 = vpack.c.bf16 %v5049, %v5041
        %v5170 = vpack.c.bf16 %v5050, %v5042
        %v5171 = vpack.c.bf16 %v5051, %v5043
        %v5172 = vpack.c.bf16 %v5052, %v5044
        %v5173 = vpack.c.bf16 %v5061, %v5053
        %v5174 = vpack.c.bf16 %v5062, %v5054
        %v5175 = vpack.c.bf16 %v5063, %v5055
        %v5176 = vpack.c.bf16 %v5064, %v5056
        %v5177 = vpack.c.bf16 %v5065, %v5057
        %v5178 = vpack.c.bf16 %v5066, %v5058
        %v5179 = vpack.c.bf16 %v5067, %v5059
        %v5180 = vpack.c.bf16 %v5068, %v5060
        %v5181 = vpack.c.bf16 %v5077, %v5069
        %v5182 = vpack.c.bf16 %v5078, %v5070
        %v5183 = vpack.c.bf16 %v5079, %v5071
        %v5184 = vpack.c.bf16 %v5080, %v5072
        %v5185 = vpack.c.bf16 %v5081, %v5073
        %v5186 = vpack.c.bf16 %v5082, %v5074
        %v5187 = vpack.c.bf16 %v5083, %v5075
        %v5188 = vpack.c.bf16 %v5084, %v5076
        %v5189 = vpack.c.bf16 %v5093, %v5085
        %v5190 = vpack.c.bf16 %v5094, %v5086
        %v5191 = vpack.c.bf16 %v5095, %v5087
        %v5192 = vpack.c.bf16 %v5096, %v5088
        %v5193 = vpack.c.bf16 %v5097, %v5089
        %v5194 = vpack.c.bf16 %v5098, %v5090
        %v5195 = vpack.c.bf16 %v5099, %v5091
        %v5196 = vpack.c.bf16 %v5100, %v5092
        %v5197 = vpack.c.bf16 %v5109, %v5101
        %v5198 = vpack.c.bf16 %v5110, %v5102
        %v5199 = vpack.c.bf16 %v5111, %v5103
        %v5200 = vpack.c.bf16 %v5112, %v5104
        %v5201 = vpack.c.bf16 %v5113, %v5105
        %v5202 = vpack.c.bf16 %v5114, %v5106
        %v5203 = vpack.c.bf16 %v5115, %v5107
        %v5204 = vpack.c.bf16 %v5116, %v5108
        %v5205 = vpack.c.bf16 %v5125, %v5117
        %v5206 = vpack.c.bf16 %v5126, %v5118
        %v5207 = vpack.c.bf16 %v5127, %v5119
        %v5208 = vpack.c.bf16 %v5128, %v5120
        %v5209 = vpack.c.bf16 %v5129, %v5121
        %v5210 = vpack.c.bf16 %v5130, %v5122
        %v5211 = vpack.c.bf16 %v5131, %v5123
        %v5212 = vpack.c.bf16 %v5132, %v5124
        %v5213 = vpack.c.bf16 %v5141, %v5133
        %v5214 = vpack.c.bf16 %v5142, %v5134
        %v5215 = vpack.c.bf16 %v5143, %v5135
        %v5216 = vpack.c.bf16 %v5144, %v5136
        %v5217 = vpack.c.bf16 %v5145, %v5137
        %v5218 = vpack.c.bf16 %v5146, %v5138
        %v5219 = vpack.c.bf16 %v5147, %v5139
        %v5220 = vpack.c.bf16 %v5148, %v5140
        %v5221 = vpack.c.bf16 %v5157, %v5149
        %v5222 = vpack.c.bf16 %v5158, %v5150
        %v5223 = vpack.c.bf16 %v5159, %v5151
        %v5224 = vpack.c.bf16 %v5160, %v5152
        %v5225 = vpack.c.bf16 %v5161, %v5153
        %v5226 = vpack.c.bf16 %v5162, %v5154
        %v5227 = vpack.c.bf16 %v5163, %v5155
        %v5228 = vpack.c.bf16 %v5164, %v5156
        %s5229 = smul.u32 4, 128
        %s5230 = smul.u32 %s5229, 4
        %s5231 = sshll.u32 %s5230, 4
        %5232 = dma.done %s1541, %s5231
        %v5233 = vld [vmem:[#allocation4] sm:$0xff]
        %v5234 = vld [vmem:[#allocation4 + $0x8] sm:$0xff]
        %v5235 = vld [vmem:[#allocation4 + $0x10] sm:$0xff]
        %v5236 = vld [vmem:[#allocation4 + $0x18] sm:$0xff]
        %v5237 = vld [vmem:[#allocation4 + $0x20] sm:$0xff]
        %v5238 = vld [vmem:[#allocation4 + $0x28] sm:$0xff]
        %v5239 = vld [vmem:[#allocation4 + $0x30] sm:$0xff]
        %v5240 = vld [vmem:[#allocation4 + $0x38] sm:$0xff]
        %v5241 = vld [vmem:[#allocation4 + $0x40] sm:$0xff]
        %v5242 = vld [vmem:[#allocation4 + $0x48] sm:$0xff]
        %v5243 = vld [vmem:[#allocation4 + $0x50] sm:$0xff]
        %v5244 = vld [vmem:[#allocation4 + $0x58] sm:$0xff]
        %v5245 = vld [vmem:[#allocation4 + $0x60] sm:$0xff]
        %v5246 = vld [vmem:[#allocation4 + $0x68] sm:$0xff]
        %v5247 = vld [vmem:[#allocation4 + $0x70] sm:$0xff]
        %v5248 = vld [vmem:[#allocation4 + $0x78] sm:$0xff]
        %v5249 = vld [vmem:[#allocation4 + $0x80] sm:$0xff]
        %v5250 = vld [vmem:[#allocation4 + $0x88] sm:$0xff]
        %v5251 = vld [vmem:[#allocation4 + $0x90] sm:$0xff]
        %v5252 = vld [vmem:[#allocation4 + $0x98] sm:$0xff]
        %v5253 = vld [vmem:[#allocation4 + $0xa0] sm:$0xff]
        %v5254 = vld [vmem:[#allocation4 + $0xa8] sm:$0xff]
        %v5255 = vld [vmem:[#allocation4 + $0xb0] sm:$0xff]
        %v5256 = vld [vmem:[#allocation4 + $0xb8] sm:$0xff]
        %v5257 = vld [vmem:[#allocation4 + $0xc0] sm:$0xff]
        %v5258 = vld [vmem:[#allocation4 + $0xc8] sm:$0xff]
        %v5259 = vld [vmem:[#allocation4 + $0xd0] sm:$0xff]
        %v5260 = vld [vmem:[#allocation4 + $0xd8] sm:$0xff]
        %v5261 = vld [vmem:[#allocation4 + $0xe0] sm:$0xff]
        %v5262 = vld [vmem:[#allocation4 + $0xe8] sm:$0xff]
        %v5263 = vld [vmem:[#allocation4 + $0xf0] sm:$0xff]
        %v5264 = vld [vmem:[#allocation4 + $0xf8] sm:$0xff]
        %v5265 = vld [vmem:[#allocation4 + $0x100] sm:$0xff]
        %v5266 = vld [vmem:[#allocation4 + $0x108] sm:$0xff]
        %v5267 = vld [vmem:[#allocation4 + $0x110] sm:$0xff]
        %v5268 = vld [vmem:[#allocation4 + $0x118] sm:$0xff]
        %v5269 = vld [vmem:[#allocation4 + $0x120] sm:$0xff]
        %v5270 = vld [vmem:[#allocation4 + $0x128] sm:$0xff]
        %v5271 = vld [vmem:[#allocation4 + $0x130] sm:$0xff]
        %v5272 = vld [vmem:[#allocation4 + $0x138] sm:$0xff]
        %v5273 = vld [vmem:[#allocation4 + $0x140] sm:$0xff]
        %v5274 = vld [vmem:[#allocation4 + $0x148] sm:$0xff]
        %v5275 = vld [vmem:[#allocation4 + $0x150] sm:$0xff]
        %v5276 = vld [vmem:[#allocation4 + $0x158] sm:$0xff]
        %v5277 = vld [vmem:[#allocation4 + $0x160] sm:$0xff]
        %v5278 = vld [vmem:[#allocation4 + $0x168] sm:$0xff]
        %v5279 = vld [vmem:[#allocation4 + $0x170] sm:$0xff]
        %v5280 = vld [vmem:[#allocation4 + $0x178] sm:$0xff]
        %v5281 = vld [vmem:[#allocation4 + $0x180] sm:$0xff]
        %v5282 = vld [vmem:[#allocation4 + $0x188] sm:$0xff]
        %v5283 = vld [vmem:[#allocation4 + $0x190] sm:$0xff]
        %v5284 = vld [vmem:[#allocation4 + $0x198] sm:$0xff]
        %v5285 = vld [vmem:[#allocation4 + $0x1a0] sm:$0xff]
        %v5286 = vld [vmem:[#allocation4 + $0x1a8] sm:$0xff]
        %v5287 = vld [vmem:[#allocation4 + $0x1b0] sm:$0xff]
        %v5288 = vld [vmem:[#allocation4 + $0x1b8] sm:$0xff]
        %v5289 = vld [vmem:[#allocation4 + $0x1c0] sm:$0xff]
        %v5290 = vld [vmem:[#allocation4 + $0x1c8] sm:$0xff]
        %v5291 = vld [vmem:[#allocation4 + $0x1d0] sm:$0xff]
        %v5292 = vld [vmem:[#allocation4 + $0x1d8] sm:$0xff]
        %v5293 = vld [vmem:[#allocation4 + $0x1e0] sm:$0xff]
        %v5294 = vld [vmem:[#allocation4 + $0x1e8] sm:$0xff]
        %v5295 = vld [vmem:[#allocation4 + $0x1f0] sm:$0xff]
        %v5296 = vld [vmem:[#allocation4 + $0x1f8] sm:$0xff]
        %v5297 = vld [vmem:[#allocation4 + $0x200] sm:$0xff]
        %v5298 = vld [vmem:[#allocation4 + $0x208] sm:$0xff]
        %v5299 = vld [vmem:[#allocation4 + $0x210] sm:$0xff]
        %v5300 = vld [vmem:[#allocation4 + $0x218] sm:$0xff]
        %v5301 = vld [vmem:[#allocation4 + $0x220] sm:$0xff]
        %v5302 = vld [vmem:[#allocation4 + $0x228] sm:$0xff]
        %v5303 = vld [vmem:[#allocation4 + $0x230] sm:$0xff]
        %v5304 = vld [vmem:[#allocation4 + $0x238] sm:$0xff]
        %v5305 = vld [vmem:[#allocation4 + $0x240] sm:$0xff]
        %v5306 = vld [vmem:[#allocation4 + $0x248] sm:$0xff]
        %v5307 = vld [vmem:[#allocation4 + $0x250] sm:$0xff]
        %v5308 = vld [vmem:[#allocation4 + $0x258] sm:$0xff]
        %v5309 = vld [vmem:[#allocation4 + $0x260] sm:$0xff]
        %v5310 = vld [vmem:[#allocation4 + $0x268] sm:$0xff]
        %v5311 = vld [vmem:[#allocation4 + $0x270] sm:$0xff]
        %v5312 = vld [vmem:[#allocation4 + $0x278] sm:$0xff]
        %v5313 = vld [vmem:[#allocation4 + $0x280] sm:$0xff]
        %v5314 = vld [vmem:[#allocation4 + $0x288] sm:$0xff]
        %v5315 = vld [vmem:[#allocation4 + $0x290] sm:$0xff]
        %v5316 = vld [vmem:[#allocation4 + $0x298] sm:$0xff]
        %v5317 = vld [vmem:[#allocation4 + $0x2a0] sm:$0xff]
        %v5318 = vld [vmem:[#allocation4 + $0x2a8] sm:$0xff]
        %v5319 = vld [vmem:[#allocation4 + $0x2b0] sm:$0xff]
        %v5320 = vld [vmem:[#allocation4 + $0x2b8] sm:$0xff]
        %v5321 = vld [vmem:[#allocation4 + $0x2c0] sm:$0xff]
        %v5322 = vld [vmem:[#allocation4 + $0x2c8] sm:$0xff]
        %v5323 = vld [vmem:[#allocation4 + $0x2d0] sm:$0xff]
        %v5324 = vld [vmem:[#allocation4 + $0x2d8] sm:$0xff]
        %v5325 = vld [vmem:[#allocation4 + $0x2e0] sm:$0xff]
        %v5326 = vld [vmem:[#allocation4 + $0x2e8] sm:$0xff]
        %v5327 = vld [vmem:[#allocation4 + $0x2f0] sm:$0xff]
        %v5328 = vld [vmem:[#allocation4 + $0x2f8] sm:$0xff]
        %v5329 = vld [vmem:[#allocation4 + $0x300] sm:$0xff]
        %v5330 = vld [vmem:[#allocation4 + $0x308] sm:$0xff]
        %v5331 = vld [vmem:[#allocation4 + $0x310] sm:$0xff]
        %v5332 = vld [vmem:[#allocation4 + $0x318] sm:$0xff]
        %v5333 = vld [vmem:[#allocation4 + $0x320] sm:$0xff]
        %v5334 = vld [vmem:[#allocation4 + $0x328] sm:$0xff]
        %v5335 = vld [vmem:[#allocation4 + $0x330] sm:$0xff]
        %v5336 = vld [vmem:[#allocation4 + $0x338] sm:$0xff]
        %v5337 = vld [vmem:[#allocation4 + $0x340] sm:$0xff]
        %v5338 = vld [vmem:[#allocation4 + $0x348] sm:$0xff]
        %v5339 = vld [vmem:[#allocation4 + $0x350] sm:$0xff]
        %v5340 = vld [vmem:[#allocation4 + $0x358] sm:$0xff]
        %v5341 = vld [vmem:[#allocation4 + $0x360] sm:$0xff]
        %v5342 = vld [vmem:[#allocation4 + $0x368] sm:$0xff]
        %v5343 = vld [vmem:[#allocation4 + $0x370] sm:$0xff]
        %v5344 = vld [vmem:[#allocation4 + $0x378] sm:$0xff]
        %v5345 = vld [vmem:[#allocation4 + $0x380] sm:$0xff]
        %v5346 = vld [vmem:[#allocation4 + $0x388] sm:$0xff]
        %v5347 = vld [vmem:[#allocation4 + $0x390] sm:$0xff]
        %v5348 = vld [vmem:[#allocation4 + $0x398] sm:$0xff]
        %v5349 = vld [vmem:[#allocation4 + $0x3a0] sm:$0xff]
        %v5350 = vld [vmem:[#allocation4 + $0x3a8] sm:$0xff]
        %v5351 = vld [vmem:[#allocation4 + $0x3b0] sm:$0xff]
        %v5352 = vld [vmem:[#allocation4 + $0x3b8] sm:$0xff]
        %v5353 = vld [vmem:[#allocation4 + $0x3c0] sm:$0xff]
        %v5354 = vld [vmem:[#allocation4 + $0x3c8] sm:$0xff]
        %v5355 = vld [vmem:[#allocation4 + $0x3d0] sm:$0xff]
        %v5356 = vld [vmem:[#allocation4 + $0x3d8] sm:$0xff]
        %v5357 = vld [vmem:[#allocation4 + $0x3e0] sm:$0xff]
        %v5358 = vld [vmem:[#allocation4 + $0x3e8] sm:$0xff]
        %v5359 = vld [vmem:[#allocation4 + $0x3f0] sm:$0xff]
        %v5360 = vld [vmem:[#allocation4 + $0x3f8] sm:$0xff]
        %v5361 = vld [vmem:[#allocation4 + $0x400] sm:$0xff]
        %v5362 = vld [vmem:[#allocation4 + $0x408] sm:$0xff]
        %v5363 = vld [vmem:[#allocation4 + $0x410] sm:$0xff]
        %v5364 = vld [vmem:[#allocation4 + $0x418] sm:$0xff]
        %v5365 = vld [vmem:[#allocation4 + $0x420] sm:$0xff]
        %v5366 = vld [vmem:[#allocation4 + $0x428] sm:$0xff]
        %v5367 = vld [vmem:[#allocation4 + $0x430] sm:$0xff]
        %v5368 = vld [vmem:[#allocation4 + $0x438] sm:$0xff]
        %v5369 = vld [vmem:[#allocation4 + $0x440] sm:$0xff]
        %v5370 = vld [vmem:[#allocation4 + $0x448] sm:$0xff]
        %v5371 = vld [vmem:[#allocation4 + $0x450] sm:$0xff]
        %v5372 = vld [vmem:[#allocation4 + $0x458] sm:$0xff]
        %v5373 = vld [vmem:[#allocation4 + $0x460] sm:$0xff]
        %v5374 = vld [vmem:[#allocation4 + $0x468] sm:$0xff]
        %v5375 = vld [vmem:[#allocation4 + $0x470] sm:$0xff]
        %v5376 = vld [vmem:[#allocation4 + $0x478] sm:$0xff]
        %v5377 = vld [vmem:[#allocation4 + $0x480] sm:$0xff]
        %v5378 = vld [vmem:[#allocation4 + $0x488] sm:$0xff]
        %v5379 = vld [vmem:[#allocation4 + $0x490] sm:$0xff]
        %v5380 = vld [vmem:[#allocation4 + $0x498] sm:$0xff]
        %v5381 = vld [vmem:[#allocation4 + $0x4a0] sm:$0xff]
        %v5382 = vld [vmem:[#allocation4 + $0x4a8] sm:$0xff]
        %v5383 = vld [vmem:[#allocation4 + $0x4b0] sm:$0xff]
        %v5384 = vld [vmem:[#allocation4 + $0x4b8] sm:$0xff]
        %v5385 = vld [vmem:[#allocation4 + $0x4c0] sm:$0xff]
        %v5386 = vld [vmem:[#allocation4 + $0x4c8] sm:$0xff]
        %v5387 = vld [vmem:[#allocation4 + $0x4d0] sm:$0xff]
        %v5388 = vld [vmem:[#allocation4 + $0x4d8] sm:$0xff]
        %v5389 = vld [vmem:[#allocation4 + $0x4e0] sm:$0xff]
        %v5390 = vld [vmem:[#allocation4 + $0x4e8] sm:$0xff]
        %v5391 = vld [vmem:[#allocation4 + $0x4f0] sm:$0xff]
        %v5392 = vld [vmem:[#allocation4 + $0x4f8] sm:$0xff]
        %v5393 = vld [vmem:[#allocation4 + $0x500] sm:$0xff]
        %v5394 = vld [vmem:[#allocation4 + $0x508] sm:$0xff]
        %v5395 = vld [vmem:[#allocation4 + $0x510] sm:$0xff]
        %v5396 = vld [vmem:[#allocation4 + $0x518] sm:$0xff]
        %v5397 = vld [vmem:[#allocation4 + $0x520] sm:$0xff]
        %v5398 = vld [vmem:[#allocation4 + $0x528] sm:$0xff]
        %v5399 = vld [vmem:[#allocation4 + $0x530] sm:$0xff]
        %v5400 = vld [vmem:[#allocation4 + $0x538] sm:$0xff]
        %v5401 = vld [vmem:[#allocation4 + $0x540] sm:$0xff]
        %v5402 = vld [vmem:[#allocation4 + $0x548] sm:$0xff]
        %v5403 = vld [vmem:[#allocation4 + $0x550] sm:$0xff]
        %v5404 = vld [vmem:[#allocation4 + $0x558] sm:$0xff]
        %v5405 = vld [vmem:[#allocation4 + $0x560] sm:$0xff]
        %v5406 = vld [vmem:[#allocation4 + $0x568] sm:$0xff]
        %v5407 = vld [vmem:[#allocation4 + $0x570] sm:$0xff]
        %v5408 = vld [vmem:[#allocation4 + $0x578] sm:$0xff]
        %v5409 = vld [vmem:[#allocation4 + $0x580] sm:$0xff]
        %v5410 = vld [vmem:[#allocation4 + $0x588] sm:$0xff]
        %v5411 = vld [vmem:[#allocation4 + $0x590] sm:$0xff]
        %v5412 = vld [vmem:[#allocation4 + $0x598] sm:$0xff]
        %v5413 = vld [vmem:[#allocation4 + $0x5a0] sm:$0xff]
        %v5414 = vld [vmem:[#allocation4 + $0x5a8] sm:$0xff]
        %v5415 = vld [vmem:[#allocation4 + $0x5b0] sm:$0xff]
        %v5416 = vld [vmem:[#allocation4 + $0x5b8] sm:$0xff]
        %v5417 = vld [vmem:[#allocation4 + $0x5c0] sm:$0xff]
        %v5418 = vld [vmem:[#allocation4 + $0x5c8] sm:$0xff]
        %v5419 = vld [vmem:[#allocation4 + $0x5d0] sm:$0xff]
        %v5420 = vld [vmem:[#allocation4 + $0x5d8] sm:$0xff]
        %v5421 = vld [vmem:[#allocation4 + $0x5e0] sm:$0xff]
        %v5422 = vld [vmem:[#allocation4 + $0x5e8] sm:$0xff]
        %v5423 = vld [vmem:[#allocation4 + $0x5f0] sm:$0xff]
        %v5424 = vld [vmem:[#allocation4 + $0x5f8] sm:$0xff]
        %v5425 = vld [vmem:[#allocation4 + $0x600] sm:$0xff]
        %v5426 = vld [vmem:[#allocation4 + $0x608] sm:$0xff]
        %v5427 = vld [vmem:[#allocation4 + $0x610] sm:$0xff]
        %v5428 = vld [vmem:[#allocation4 + $0x618] sm:$0xff]
        %v5429 = vld [vmem:[#allocation4 + $0x620] sm:$0xff]
        %v5430 = vld [vmem:[#allocation4 + $0x628] sm:$0xff]
        %v5431 = vld [vmem:[#allocation4 + $0x630] sm:$0xff]
        %v5432 = vld [vmem:[#allocation4 + $0x638] sm:$0xff]
        %v5433 = vld [vmem:[#allocation4 + $0x640] sm:$0xff]
        %v5434 = vld [vmem:[#allocation4 + $0x648] sm:$0xff]
        %v5435 = vld [vmem:[#allocation4 + $0x650] sm:$0xff]
        %v5436 = vld [vmem:[#allocation4 + $0x658] sm:$0xff]
        %v5437 = vld [vmem:[#allocation4 + $0x660] sm:$0xff]
        %v5438 = vld [vmem:[#allocation4 + $0x668] sm:$0xff]
        %v5439 = vld [vmem:[#allocation4 + $0x670] sm:$0xff]
        %v5440 = vld [vmem:[#allocation4 + $0x678] sm:$0xff]
        %v5441 = vld [vmem:[#allocation4 + $0x680] sm:$0xff]
        %v5442 = vld [vmem:[#allocation4 + $0x688] sm:$0xff]
        %v5443 = vld [vmem:[#allocation4 + $0x690] sm:$0xff]
        %v5444 = vld [vmem:[#allocation4 + $0x698] sm:$0xff]
        %v5445 = vld [vmem:[#allocation4 + $0x6a0] sm:$0xff]
        %v5446 = vld [vmem:[#allocation4 + $0x6a8] sm:$0xff]
        %v5447 = vld [vmem:[#allocation4 + $0x6b0] sm:$0xff]
        %v5448 = vld [vmem:[#allocation4 + $0x6b8] sm:$0xff]
        %v5449 = vld [vmem:[#allocation4 + $0x6c0] sm:$0xff]
        %v5450 = vld [vmem:[#allocation4 + $0x6c8] sm:$0xff]
        %v5451 = vld [vmem:[#allocation4 + $0x6d0] sm:$0xff]
        %v5452 = vld [vmem:[#allocation4 + $0x6d8] sm:$0xff]
        %v5453 = vld [vmem:[#allocation4 + $0x6e0] sm:$0xff]
        %v5454 = vld [vmem:[#allocation4 + $0x6e8] sm:$0xff]
        %v5455 = vld [vmem:[#allocation4 + $0x6f0] sm:$0xff]
        %v5456 = vld [vmem:[#allocation4 + $0x6f8] sm:$0xff]
        %v5457 = vld [vmem:[#allocation4 + $0x700] sm:$0xff]
        %v5458 = vld [vmem:[#allocation4 + $0x708] sm:$0xff]
        %v5459 = vld [vmem:[#allocation4 + $0x710] sm:$0xff]
        %v5460 = vld [vmem:[#allocation4 + $0x718] sm:$0xff]
        %v5461 = vld [vmem:[#allocation4 + $0x720] sm:$0xff]
        %v5462 = vld [vmem:[#allocation4 + $0x728] sm:$0xff]
        %v5463 = vld [vmem:[#allocation4 + $0x730] sm:$0xff]
        %v5464 = vld [vmem:[#allocation4 + $0x738] sm:$0xff]
        %v5465 = vld [vmem:[#allocation4 + $0x740] sm:$0xff]
        %v5466 = vld [vmem:[#allocation4 + $0x748] sm:$0xff]
        %v5467 = vld [vmem:[#allocation4 + $0x750] sm:$0xff]
        %v5468 = vld [vmem:[#allocation4 + $0x758] sm:$0xff]
        %v5469 = vld [vmem:[#allocation4 + $0x760] sm:$0xff]
        %v5470 = vld [vmem:[#allocation4 + $0x768] sm:$0xff]
        %v5471 = vld [vmem:[#allocation4 + $0x770] sm:$0xff]
        %v5472 = vld [vmem:[#allocation4 + $0x778] sm:$0xff]
        %v5473 = vld [vmem:[#allocation4 + $0x780] sm:$0xff]
        %v5474 = vld [vmem:[#allocation4 + $0x788] sm:$0xff]
        %v5475 = vld [vmem:[#allocation4 + $0x790] sm:$0xff]
        %v5476 = vld [vmem:[#allocation4 + $0x798] sm:$0xff]
        %v5477 = vld [vmem:[#allocation4 + $0x7a0] sm:$0xff]
        %v5478 = vld [vmem:[#allocation4 + $0x7a8] sm:$0xff]
        %v5479 = vld [vmem:[#allocation4 + $0x7b0] sm:$0xff]
        %v5480 = vld [vmem:[#allocation4 + $0x7b8] sm:$0xff]
        %v5481 = vld [vmem:[#allocation4 + $0x7c0] sm:$0xff]
        %v5482 = vld [vmem:[#allocation4 + $0x7c8] sm:$0xff]
        %v5483 = vld [vmem:[#allocation4 + $0x7d0] sm:$0xff]
        %v5484 = vld [vmem:[#allocation4 + $0x7d8] sm:$0xff]
        %v5485 = vld [vmem:[#allocation4 + $0x7e0] sm:$0xff]
        %v5486 = vld [vmem:[#allocation4 + $0x7e8] sm:$0xff]
        %v5487 = vld [vmem:[#allocation4 + $0x7f0] sm:$0xff]
        %v5488 = vld [vmem:[#allocation4 + $0x7f8] sm:$0xff]
        %v5489 = vld [vmem:[%s22] sm:$0xf]
        %v5491 = vlaneseq
        %v5492 = vshrl.u32 %v5491, 7
        %v5493 = vsub.s32 0, %v5492
        %v5494 = vrot.slane %v5489, %v5493
        %v5495 = vlaneseq
        %v5496 = vshrl.u32 %v5495, 7
        %v5497 = vsub.s32 1, %v5496
        %v5498 = vrot.slane %v5489, %v5497
        %v5499 = vlaneseq
        %v5500 = vshrl.u32 %v5499, 7
        %v5501 = vsub.s32 2, %v5500
        %v5502 = vrot.slane %v5489, %v5501
        %v5503 = vlaneseq
        %v5504 = vshrl.u32 %v5503, 7
        %v5505 = vsub.s32 3, %v5504
        %v5506 = vrot.slane %v5489, %v5505
        %5511 = vmatprep.subr.bf16.mxu0 %v5234
        %5512 = vmatpush1.bf16.msra.mxu0 %v5233
        %5513 = vmatprep.subr.bf16.mxu0 %v5238
        %5514 = vmatpush1.bf16.msra.mxu0 %v5237
        %5515 = vmatprep.subr.bf16.mxu0 %v5242
        %5516 = vmatpush1.bf16.msra.mxu0 %v5241
        %5517 = vmatprep.subr.bf16.mxu0 %v5246
        %5518 = vmatpush1.bf16.msra.mxu0 %v5245
        %5519 = vmatprep.subr.bf16.mxu0 %v5250
        %5520 = vmatpush1.bf16.msra.mxu0 %v5249
        %5521 = vmatprep.subr.bf16.mxu0 %v5254
        %5522 = vmatpush1.bf16.msra.mxu0 %v5253
        %5523 = vmatprep.subr.bf16.mxu0 %v5258
        %5524 = vmatpush1.bf16.msra.mxu0 %v5257
        %5525 = vmatprep.subr.bf16.mxu0 %v5262
        %5526 = vmatpush1.bf16.msra.mxu0 %v5261
        %5527 = vmatprep.subr.bf16.mxu0 %v5266
        %5528 = vmatpush1.bf16.msra.mxu0 %v5265
        %5529 = vmatprep.subr.bf16.mxu0 %v5270
        %5530 = vmatpush1.bf16.msra.mxu0 %v5269
        %5531 = vmatprep.subr.bf16.mxu0 %v5274
        %5532 = vmatpush1.bf16.msra.mxu0 %v5273
        %5533 = vmatprep.subr.bf16.mxu0 %v5278
        %5534 = vmatpush1.bf16.msra.mxu0 %v5277
        %5535 = vmatprep.subr.bf16.mxu0 %v5282
        %5536 = vmatpush1.bf16.msra.mxu0 %v5281
        %5537 = vmatprep.subr.bf16.mxu0 %v5286
        %5538 = vmatpush1.bf16.msra.mxu0 %v5285
        %5539 = vmatprep.subr.bf16.mxu0 %v5290
        %5540 = vmatpush1.bf16.msra.mxu0 %v5289
        %5541 = vmatprep.subr.bf16.mxu0 %v5294
        %5542 = vmatpush1.bf16.msra.mxu0 %v5293
        %5543 = vmatprep.mubr.bf16.mxu0 %v5166
        %5544 = vmatmul.mubr.bf16.gmra.mrb[0].mxu0 %v5165
        %v5545 = vpop.f32.mrb[0].mxu0
        %v5546 = vadd.f32 %v5494, %v5545
        %v5547 = vpop.f32.mrb[0].mxu0
        %v5548 = vadd.f32 %v5498, %v5547
        %v5549 = vpop.f32.mrb[0].mxu0
        %v5550 = vadd.f32 %v5494, %v5549
        %v5551 = vpop.f32.mrb[0].mxu0
        %v5552 = vadd.f32 %v5498, %v5551
        %5553 = vmatprep.mubr.bf16.mxu0 %v5174
        %5554 = vmatmul.mubr.bf16.gmra.mrb[0].mxu0 %v5173
        %v5555 = vpop.f32.mrb[0].mxu0
        %v5556 = vadd.f32 %v5494, %v5555
        %v5557 = vpop.f32.mrb[0].mxu0
        %v5558 = vadd.f32 %v5498, %v5557
        %v5559 = vpop.f32.mrb[0].mxu0
        %v5560 = vadd.f32 %v5494, %v5559
        %v5561 = vpop.f32.mrb[0].mxu0
        %v5562 = vadd.f32 %v5498, %v5561
        %5563 = vmatprep.mubr.bf16.mxu0 %v5182
        %5564 = vmatmul.mubr.bf16.gmra.mrb[0].mxu0 %v5181
        %v5565 = vpop.f32.mrb[0].mxu0
        %v5566 = vadd.f32 %v5494, %v5565
        %v5567 = vpop.f32.mrb[0].mxu0
        %v5568 = vadd.f32 %v5498, %v5567
        %v5569 = vpop.f32.mrb[0].mxu0
        %v5570 = vadd.f32 %v5494, %v5569
        %v5571 = vpop.f32.mrb[0].mxu0
        %v5572 = vadd.f32 %v5498, %v5571
        %5573 = vmatprep.mubr.bf16.mxu0 %v5190
        %5574 = vmatmul.mubr.bf16.gmra.mrb[0].mxu0 %v5189
        %v5575 = vpop.f32.mrb[0].mxu0
        %v5576 = vadd.f32 %v5494, %v5575
        %v5577 = vpop.f32.mrb[0].mxu0
        %v5578 = vadd.f32 %v5498, %v5577
        %v5579 = vpop.f32.mrb[0].mxu0
        %v5580 = vadd.f32 %v5494, %v5579
        %v5581 = vpop.f32.mrb[0].mxu0
        %v5582 = vadd.f32 %v5498, %v5581
        %5583 = vmatprep.mubr.bf16.mxu0 %v5198
        %5584 = vmatmul.mubr.bf16.gmra.mrb[0].mxu0 %v5197
        %v5585 = vpop.f32.mrb[0].mxu0
        %v5586 = vadd.f32 %v5494, %v5585
        %v5587 = vpop.f32.mrb[0].mxu0
        %v5588 = vadd.f32 %v5498, %v5587
        %v5589 = vpop.f32.mrb[0].mxu0
        %v5590 = vadd.f32 %v5494, %v5589
        %v5591 = vpop.f32.mrb[0].mxu0
        %v5592 = vadd.f32 %v5498, %v5591
        %5593 = vmatprep.mubr.bf16.mxu0 %v5206
        %5594 = vmatmul.mubr.bf16.gmra.mrb[0].mxu0 %v5205
        %v5595 = vpop.f32.mrb[0].mxu0
        %v5596 = vadd.f32 %v5494, %v5595
        %v5597 = vpop.f32.mrb[0].mxu0
        %v5598 = vadd.f32 %v5498, %v5597
        %v5599 = vpop.f32.mrb[0].mxu0
        %v5600 = vadd.f32 %v5494, %v5599
        %v5601 = vpop.f32.mrb[0].mxu0
        %v5602 = vadd.f32 %v5498, %v5601
        %5603 = vmatprep.mubr.bf16.mxu0 %v5214
        %5604 = vmatmul.mubr.bf16.gmra.mrb[0].mxu0 %v5213
        %v5605 = vpop.f32.mrb[0].mxu0
        %v5606 = vadd.f32 %v5494, %v5605
        %v5607 = vpop.f32.mrb[0].mxu0
        %v5608 = vadd.f32 %v5498, %v5607
        %v5609 = vpop.f32.mrb[0].mxu0
        %v5610 = vadd.f32 %v5494, %v5609
        %v5611 = vpop.f32.mrb[0].mxu0
        %v5612 = vadd.f32 %v5498, %v5611
        %5613 = vmatprep.mubr.bf16.mxu0 %v5222
        %5614 = vmatmul.mubr.bf16.gmra.mrb[0].mxu0 %v5221
        %v5615 = vpop.f32.mrb[0].mxu0
        %v5616 = vadd.f32 %v5494, %v5615
        %v5617 = vpop.f32.mrb[0].mxu0
        %v5618 = vadd.f32 %v5498, %v5617
        %v5619 = vpop.f32.mrb[0].mxu0
        %v5620 = vadd.f32 %v5494, %v5619
        %v5621 = vpop.f32.mrb[0].mxu0
        %v5622 = vadd.f32 %v5498, %v5621
        %5623 = vdwg.mxu0
        %5624 = vmatprep.subr.bf16.mxu0 %v5298
        %5625 = vmatpush1.bf16.msra.mxu0 %v5297
        %5626 = vmatprep.subr.bf16.mxu0 %v5302
        %5627 = vmatpush1.bf16.msra.mxu0 %v5301
        %5628 = vmatprep.subr.bf16.mxu0 %v5306
        %5629 = vmatpush1.bf16.msra.mxu0 %v5305
        %5630 = vmatprep.subr.bf16.mxu0 %v5310
        %5631 = vmatpush1.bf16.msra.mxu0 %v5309
        %5632 = vmatprep.subr.bf16.mxu0 %v5314
        %5633 = vmatpush1.bf16.msra.mxu0 %v5313
        %5634 = vmatprep.subr.bf16.mxu0 %v5318
        %5635 = vmatpush1.bf16.msra.mxu0 %v5317
        %5636 = vmatprep.subr.bf16.mxu0 %v5322
        %5637 = vmatpush1.bf16.msra.mxu0 %v5321
        %5638 = vmatprep.subr.bf16.mxu0 %v5326
        %5639 = vmatpush1.bf16.msra.mxu0 %v5325
        %5640 = vmatprep.subr.bf16.mxu0 %v5330
        %5641 = vmatpush1.bf16.msra.mxu0 %v5329
        %5642 = vmatprep.subr.bf16.mxu0 %v5334
        %5643 = vmatpush1.bf16.msra.mxu0 %v5333
        %5644 = vmatprep.subr.bf16.mxu0 %v5338
        %5645 = vmatpush1.bf16.msra.mxu0 %v5337
        %5646 = vmatprep.subr.bf16.mxu0 %v5342
        %5647 = vmatpush1.bf16.msra.mxu0 %v5341
        %5648 = vmatprep.subr.bf16.mxu0 %v5346
        %5649 = vmatpush1.bf16.msra.mxu0 %v5345
        %5650 = vmatprep.subr.bf16.mxu0 %v5350
        %5651 = vmatpush1.bf16.msra.mxu0 %v5349
        %5652 = vmatprep.subr.bf16.mxu0 %v5354
        %5653 = vmatpush1.bf16.msra.mxu0 %v5353
        %5654 = vmatprep.subr.bf16.mxu0 %v5358
        %5655 = vmatpush1.bf16.msra.mxu0 %v5357
        %5656 = vmatprep.mubr.bf16.mxu0 %v5168
        %5657 = vmatmul.mubr.bf16.gmra.mrb[0].mxu0 %v5167
        %v5658 = vpop.f32.mrb[0].mxu0
        %v5659 = vadd.f32 %v5546, %v5658
        %v5660 = vpop.f32.mrb[0].mxu0
        %v5661 = vadd.f32 %v5548, %v5660
        %v5662 = vpop.f32.mrb[0].mxu0
        %v5663 = vadd.f32 %v5550, %v5662
        %v5664 = vpop.f32.mrb[0].mxu0
        %v5665 = vadd.f32 %v5552, %v5664
        %5666 = vmatprep.mubr.bf16.mxu0 %v5176
        %5667 = vmatmul.mubr.bf16.gmra.mrb[0].mxu0 %v5175
        %v5668 = vpop.f32.mrb[0].mxu0
        %v5669 = vadd.f32 %v5556, %v5668
        %v5670 = vpop.f32.mrb[0].mxu0
        %v5671 = vadd.f32 %v5558, %v5670
        %v5672 = vpop.f32.mrb[0].mxu0
        %v5673 = vadd.f32 %v5560, %v5672
        %v5674 = vpop.f32.mrb[0].mxu0
        %v5675 = vadd.f32 %v5562, %v5674
        %5676 = vmatprep.mubr.bf16.mxu0 %v5184
        %5677 = vmatmul.mubr.bf16.gmra.mrb[0].mxu0 %v5183
        %v5678 = vpop.f32.mrb[0].mxu0
        %v5679 = vadd.f32 %v5566, %v5678
        %v5680 = vpop.f32.mrb[0].mxu0
        %v5681 = vadd.f32 %v5568, %v5680
        %v5682 = vpop.f32.mrb[0].mxu0
        %v5683 = vadd.f32 %v5570, %v5682
        %v5684 = vpop.f32.mrb[0].mxu0
        %v5685 = vadd.f32 %v5572, %v5684
        %5686 = vmatprep.mubr.bf16.mxu0 %v5192
        %5687 = vmatmul.mubr.bf16.gmra.mrb[0].mxu0 %v5191
        %v5688 = vpop.f32.mrb[0].mxu0
        %v5689 = vadd.f32 %v5576, %v5688
        %v5690 = vpop.f32.mrb[0].mxu0
        %v5691 = vadd.f32 %v5578, %v5690
        %v5692 = vpop.f32.mrb[0].mxu0
        %v5693 = vadd.f32 %v5580, %v5692
        %v5694 = vpop.f32.mrb[0].mxu0
        %v5695 = vadd.f32 %v5582, %v5694
        %5696 = vmatprep.mubr.bf16.mxu0 %v5200
        %5697 = vmatmul.mubr.bf16.gmra.mrb[0].mxu0 %v5199
        %v5698 = vpop.f32.mrb[0].mxu0
        %v5699 = vadd.f32 %v5586, %v5698
        %v5700 = vpop.f32.mrb[0].mxu0
        %v5701 = vadd.f32 %v5588, %v5700
        %v5702 = vpop.f32.mrb[0].mxu0
        %v5703 = vadd.f32 %v5590, %v5702
        %v5704 = vpop.f32.mrb[0].mxu0
        %v5705 = vadd.f32 %v5592, %v5704
        %5706 = vmatprep.mubr.bf16.mxu0 %v5208
        %5707 = vmatmul.mubr.bf16.gmra.mrb[0].mxu0 %v5207
        %v5708 = vpop.f32.mrb[0].mxu0
        %v5709 = vadd.f32 %v5596, %v5708
        %v5710 = vpop.f32.mrb[0].mxu0
        %v5711 = vadd.f32 %v5598, %v5710
        %v5712 = vpop.f32.mrb[0].mxu0
        %v5713 = vadd.f32 %v5600, %v5712
        %v5714 = vpop.f32.mrb[0].mxu0
        %v5715 = vadd.f32 %v5602, %v5714
        %5716 = vmatprep.mubr.bf16.mxu0 %v5216
        %5717 = vmatmul.mubr.bf16.gmra.mrb[0].mxu0 %v5215
        %v5718 = vpop.f32.mrb[0].mxu0
        %v5719 = vadd.f32 %v5606, %v5718
        %v5720 = vpop.f32.mrb[0].mxu0
        %v5721 = vadd.f32 %v5608, %v5720
        %v5722 = vpop.f32.mrb[0].mxu0
        %v5723 = vadd.f32 %v5610, %v5722
        %v5724 = vpop.f32.mrb[0].mxu0
        %v5725 = vadd.f32 %v5612, %v5724
        %5726 = vmatprep.mubr.bf16.mxu0 %v5224
        %5727 = vmatmul.mubr.bf16.gmra.mrb[0].mxu0 %v5223
        %v5728 = vpop.f32.mrb[0].mxu0
        %v5729 = vadd.f32 %v5616, %v5728
        %v5730 = vpop.f32.mrb[0].mxu0
        %v5731 = vadd.f32 %v5618, %v5730
        %v5732 = vpop.f32.mrb[0].mxu0
        %v5733 = vadd.f32 %v5620, %v5732
        %v5734 = vpop.f32.mrb[0].mxu0
        %v5735 = vadd.f32 %v5622, %v5734
        %5736 = vdwg.mxu0
        %5737 = vmatprep.subr.bf16.mxu0 %v5362
        %5738 = vmatpush1.bf16.msra.mxu0 %v5361
        %5739 = vmatprep.subr.bf16.mxu0 %v5366
        %5740 = vmatpush1.bf16.msra.mxu0 %v5365
        %5741 = vmatprep.subr.bf16.mxu0 %v5370
        %5742 = vmatpush1.bf16.msra.mxu0 %v5369
        %5743 = vmatprep.subr.bf16.mxu0 %v5374
        %5744 = vmatpush1.bf16.msra.mxu0 %v5373
        %5745 = vmatprep.subr.bf16.mxu0 %v5378
        %5746 = vmatpush1.bf16.msra.mxu0 %v5377
        %5747 = vmatprep.subr.bf16.mxu0 %v5382
        %5748 = vmatpush1.bf16.msra.mxu0 %v5381
        %5749 = vmatprep.subr.bf16.mxu0 %v5386
        %5750 = vmatpush1.bf16.msra.mxu0 %v5385
        %5751 = vmatprep.subr.bf16.mxu0 %v5390
        %5752 = vmatpush1.bf16.msra.mxu0 %v5389
        %5753 = vmatprep.subr.bf16.mxu0 %v5394
        %5754 = vmatpush1.bf16.msra.mxu0 %v5393
        %5755 = vmatprep.subr.bf16.mxu0 %v5398
        %5756 = vmatpush1.bf16.msra.mxu0 %v5397
        %5757 = vmatprep.subr.bf16.mxu0 %v5402
        %5758 = vmatpush1.bf16.msra.mxu0 %v5401
        %5759 = vmatprep.subr.bf16.mxu0 %v5406
        %5760 = vmatpush1.bf16.msra.mxu0 %v5405
        %5761 = vmatprep.subr.bf16.mxu0 %v5410
        %5762 = vmatpush1.bf16.msra.mxu0 %v5409
        %5763 = vmatprep.subr.bf16.mxu0 %v5414
        %5764 = vmatpush1.bf16.msra.mxu0 %v5413
        %5765 = vmatprep.subr.bf16.mxu0 %v5418
        %5766 = vmatpush1.bf16.msra.mxu0 %v5417
        %5767 = vmatprep.subr.bf16.mxu0 %v5422
        %5768 = vmatpush1.bf16.msra.mxu0 %v5421
        %5769 = vmatprep.mubr.bf16.mxu0 %v5170
        %5770 = vmatmul.mubr.bf16.gmra.mrb[0].mxu0 %v5169
        %v5771 = vpop.f32.mrb[0].mxu0
        %v5772 = vadd.f32 %v5659, %v5771
        %v5773 = vpop.f32.mrb[0].mxu0
        %v5774 = vadd.f32 %v5661, %v5773
        %v5775 = vpop.f32.mrb[0].mxu0
        %v5776 = vadd.f32 %v5663, %v5775
        %v5777 = vpop.f32.mrb[0].mxu0
        %v5778 = vadd.f32 %v5665, %v5777
        %5779 = vmatprep.mubr.bf16.mxu0 %v5178
        %5780 = vmatmul.mubr.bf16.gmra.mrb[0].mxu0 %v5177
        %v5781 = vpop.f32.mrb[0].mxu0
        %v5782 = vadd.f32 %v5669, %v5781
        %v5783 = vpop.f32.mrb[0].mxu0
        %v5784 = vadd.f32 %v5671, %v5783
        %v5785 = vpop.f32.mrb[0].mxu0
        %v5786 = vadd.f32 %v5673, %v5785
        %v5787 = vpop.f32.mrb[0].mxu0
        %v5788 = vadd.f32 %v5675, %v5787
        %5789 = vmatprep.mubr.bf16.mxu0 %v5186
        %5790 = vmatmul.mubr.bf16.gmra.mrb[0].mxu0 %v5185
        %v5791 = vpop.f32.mrb[0].mxu0
        %v5792 = vadd.f32 %v5679, %v5791
        %v5793 = vpop.f32.mrb[0].mxu0
        %v5794 = vadd.f32 %v5681, %v5793
        %v5795 = vpop.f32.mrb[0].mxu0
        %v5796 = vadd.f32 %v5683, %v5795
        %v5797 = vpop.f32.mrb[0].mxu0
        %v5798 = vadd.f32 %v5685, %v5797
        %5799 = vmatprep.mubr.bf16.mxu0 %v5194
        %5800 = vmatmul.mubr.bf16.gmra.mrb[0].mxu0 %v5193
        %v5801 = vpop.f32.mrb[0].mxu0
        %v5802 = vadd.f32 %v5689, %v5801
        %v5803 = vpop.f32.mrb[0].mxu0
        %v5804 = vadd.f32 %v5691, %v5803
        %v5805 = vpop.f32.mrb[0].mxu0
        %v5806 = vadd.f32 %v5693, %v5805
        %v5807 = vpop.f32.mrb[0].mxu0
        %v5808 = vadd.f32 %v5695, %v5807
        %5809 = vmatprep.mubr.bf16.mxu0 %v5202
        %5810 = vmatmul.mubr.bf16.gmra.mrb[0].mxu0 %v5201
        %v5811 = vpop.f32.mrb[0].mxu0
        %v5812 = vadd.f32 %v5699, %v5811
        %v5813 = vpop.f32.mrb[0].mxu0
        %v5814 = vadd.f32 %v5701, %v5813
        %v5815 = vpop.f32.mrb[0].mxu0
        %v5816 = vadd.f32 %v5703, %v5815
        %v5817 = vpop.f32.mrb[0].mxu0
        %v5818 = vadd.f32 %v5705, %v5817
        %5819 = vmatprep.mubr.bf16.mxu0 %v5210
        %5820 = vmatmul.mubr.bf16.gmra.mrb[0].mxu0 %v5209
        %v5821 = vpop.f32.mrb[0].mxu0
        %v5822 = vadd.f32 %v5709, %v5821
        %v5823 = vpop.f32.mrb[0].mxu0
        %v5824 = vadd.f32 %v5711, %v5823
        %v5825 = vpop.f32.mrb[0].mxu0
        %v5826 = vadd.f32 %v5713, %v5825
        %v5827 = vpop.f32.mrb[0].mxu0
        %v5828 = vadd.f32 %v5715, %v5827
        %5829 = vmatprep.mubr.bf16.mxu0 %v5218
        %5830 = vmatmul.mubr.bf16.gmra.mrb[0].mxu0 %v5217
        %v5831 = vpop.f32.mrb[0].mxu0
        %v5832 = vadd.f32 %v5719, %v5831
        %v5833 = vpop.f32.mrb[0].mxu0
        %v5834 = vadd.f32 %v5721, %v5833
        %v5835 = vpop.f32.mrb[0].mxu0
        %v5836 = vadd.f32 %v5723, %v5835
        %v5837 = vpop.f32.mrb[0].mxu0
        %v5838 = vadd.f32 %v5725, %v5837
        %5839 = vmatprep.mubr.bf16.mxu0 %v5226
        %5840 = vmatmul.mubr.bf16.gmra.mrb[0].mxu0 %v5225
        %v5841 = vpop.f32.mrb[0].mxu0
        %v5842 = vadd.f32 %v5729, %v5841
        %v5843 = vpop.f32.mrb[0].mxu0
        %v5844 = vadd.f32 %v5731, %v5843
        %v5845 = vpop.f32.mrb[0].mxu0
        %v5846 = vadd.f32 %v5733, %v5845
        %v5847 = vpop.f32.mrb[0].mxu0
        %v5848 = vadd.f32 %v5735, %v5847
        %5849 = vdwg.mxu0
        %5850 = vmatprep.subr.bf16.mxu0 %v5426
        %5851 = vmatpush1.bf16.msra.mxu0 %v5425
        %5852 = vmatprep.subr.bf16.mxu0 %v5430
        %5853 = vmatpush1.bf16.msra.mxu0 %v5429
        %5854 = vmatprep.subr.bf16.mxu0 %v5434
        %5855 = vmatpush1.bf16.msra.mxu0 %v5433
        %5856 = vmatprep.subr.bf16.mxu0 %v5438
        %5857 = vmatpush1.bf16.msra.mxu0 %v5437
        %5858 = vmatprep.subr.bf16.mxu0 %v5442
        %5859 = vmatpush1.bf16.msra.mxu0 %v5441
        %5860 = vmatprep.subr.bf16.mxu0 %v5446
        %5861 = vmatpush1.bf16.msra.mxu0 %v5445
        %5862 = vmatprep.subr.bf16.mxu0 %v5450
        %5863 = vmatpush1.bf16.msra.mxu0 %v5449
        %5864 = vmatprep.subr.bf16.mxu0 %v5454
        %5865 = vmatpush1.bf16.msra.mxu0 %v5453
        %5866 = vmatprep.subr.bf16.mxu0 %v5458
        %5867 = vmatpush1.bf16.msra.mxu0 %v5457
        %5868 = vmatprep.subr.bf16.mxu0 %v5462
        %5869 = vmatpush1.bf16.msra.mxu0 %v5461
        %5870 = vmatprep.subr.bf16.mxu0 %v5466
        %5871 = vmatpush1.bf16.msra.mxu0 %v5465
        %5872 = vmatprep.subr.bf16.mxu0 %v5470
        %5873 = vmatpush1.bf16.msra.mxu0 %v5469
        %5874 = vmatprep.subr.bf16.mxu0 %v5474
        %5875 = vmatpush1.bf16.msra.mxu0 %v5473
        %5876 = vmatprep.subr.bf16.mxu0 %v5478
        %5877 = vmatpush1.bf16.msra.mxu0 %v5477
        %5878 = vmatprep.subr.bf16.mxu0 %v5482
        %5879 = vmatpush1.bf16.msra.mxu0 %v5481
        %5880 = vmatprep.subr.bf16.mxu0 %v5486
        %5881 = vmatpush1.bf16.msra.mxu0 %v5485
        %5882 = vmatprep.mubr.bf16.mxu0 %v5172
        %5883 = vmatmul.mubr.bf16.gmra.mrb[0].mxu0 %v5171
        %v5884 = vpop.f32.mrb[0].mxu0
        %v5885 = vadd.f32 %v5772, %v5884
        %v5886 = vpop.f32.mrb[0].mxu0
        %v5887 = vadd.f32 %v5774, %v5886
        %v5888 = vpop.f32.mrb[0].mxu0
        %v5889 = vadd.f32 %v5776, %v5888
        %v5890 = vpop.f32.mrb[0].mxu0
        %v5891 = vadd.f32 %v5778, %v5890
        %5892 = vmatprep.mubr.bf16.mxu0 %v5180
        %5893 = vmatmul.mubr.bf16.gmra.mrb[0].mxu0 %v5179
        %v5894 = vpop.f32.mrb[0].mxu0
        %v5895 = vadd.f32 %v5782, %v5894
        %v5896 = vpop.f32.mrb[0].mxu0
        %v5897 = vadd.f32 %v5784, %v5896
        %v5898 = vpop.f32.mrb[0].mxu0
        %v5899 = vadd.f32 %v5786, %v5898
        %v5900 = vpop.f32.mrb[0].mxu0
        %v5901 = vadd.f32 %v5788, %v5900
        %5902 = vmatprep.mubr.bf16.mxu0 %v5188
        %5903 = vmatmul.mubr.bf16.gmra.mrb[0].mxu0 %v5187
        %v5904 = vpop.f32.mrb[0].mxu0
        %v5905 = vadd.f32 %v5792, %v5904
        %v5906 = vpop.f32.mrb[0].mxu0
        %v5907 = vadd.f32 %v5794, %v5906
        %v5908 = vpop.f32.mrb[0].mxu0
        %v5909 = vadd.f32 %v5796, %v5908
        %v5910 = vpop.f32.mrb[0].mxu0
        %v5911 = vadd.f32 %v5798, %v5910
        %5912 = vmatprep.mubr.bf16.mxu0 %v5196
        %5913 = vmatmul.mubr.bf16.gmra.mrb[0].mxu0 %v5195
        %v5914 = vpop.f32.mrb[0].mxu0
        %v5915 = vadd.f32 %v5802, %v5914
        %v5916 = vpop.f32.mrb[0].mxu0
        %v5917 = vadd.f32 %v5804, %v5916
        %v5918 = vpop.f32.mrb[0].mxu0
        %v5919 = vadd.f32 %v5806, %v5918
        %v5920 = vpop.f32.mrb[0].mxu0
        %v5921 = vadd.f32 %v5808, %v5920
        %5922 = vmatprep.mubr.bf16.mxu0 %v5204
        %5923 = vmatmul.mubr.bf16.gmra.mrb[0].mxu0 %v5203
        %v5924 = vpop.f32.mrb[0].mxu0
        %v5925 = vadd.f32 %v5812, %v5924
        %v5926 = vpop.f32.mrb[0].mxu0
        %v5927 = vadd.f32 %v5814, %v5926
        %v5928 = vpop.f32.mrb[0].mxu0
        %v5929 = vadd.f32 %v5816, %v5928
        %v5930 = vpop.f32.mrb[0].mxu0
        %v5931 = vadd.f32 %v5818, %v5930
        %5932 = vmatprep.mubr.bf16.mxu0 %v5212
        %5933 = vmatmul.mubr.bf16.gmra.mrb[0].mxu0 %v5211
        %v5934 = vpop.f32.mrb[0].mxu0
        %v5935 = vadd.f32 %v5822, %v5934
        %v5936 = vpop.f32.mrb[0].mxu0
        %v5937 = vadd.f32 %v5824, %v5936
        %v5938 = vpop.f32.mrb[0].mxu0
        %v5939 = vadd.f32 %v5826, %v5938
        %v5940 = vpop.f32.mrb[0].mxu0
        %v5941 = vadd.f32 %v5828, %v5940
        %5942 = vmatprep.mubr.bf16.mxu0 %v5220
        %5943 = vmatmul.mubr.bf16.gmra.mrb[0].mxu0 %v5219
        %v5944 = vpop.f32.mrb[0].mxu0
        %v5945 = vadd.f32 %v5832, %v5944
        %v5946 = vpop.f32.mrb[0].mxu0
        %v5947 = vadd.f32 %v5834, %v5946
        %v5948 = vpop.f32.mrb[0].mxu0
        %v5949 = vadd.f32 %v5836, %v5948
        %v5950 = vpop.f32.mrb[0].mxu0
        %v5951 = vadd.f32 %v5838, %v5950
        %5952 = vmatprep.mubr.bf16.mxu0 %v5228
        %5953 = vmatmul.mubr.bf16.gmra.mrb[0].mxu0 %v5227
        %v5954 = vpop.f32.mrb[0].mxu0
        %v5955 = vadd.f32 %v5842, %v5954
        %v5956 = vpop.f32.mrb[0].mxu0
        %v5957 = vadd.f32 %v5844, %v5956
        %v5958 = vpop.f32.mrb[0].mxu0
        %v5959 = vadd.f32 %v5846, %v5958
        %v5960 = vpop.f32.mrb[0].mxu0
        %v5961 = vadd.f32 %v5848, %v5960
        %5962 = vdwg.mxu0
        %5963 = vmatprep.subr.bf16.mxu0 %v5236
        %5964 = vmatpush1.bf16.msra.mxu0 %v5235
        %5965 = vmatprep.subr.bf16.mxu0 %v5240
        %5966 = vmatpush1.bf16.msra.mxu0 %v5239
        %5967 = vmatprep.subr.bf16.mxu0 %v5244
        %5968 = vmatpush1.bf16.msra.mxu0 %v5243
        %5969 = vmatprep.subr.bf16.mxu0 %v5248
        %5970 = vmatpush1.bf16.msra.mxu0 %v5247
        %5971 = vmatprep.subr.bf16.mxu0 %v5252
        %5972 = vmatpush1.bf16.msra.mxu0 %v5251
        %5973 = vmatprep.subr.bf16.mxu0 %v5256
        %5974 = vmatpush1.bf16.msra.mxu0 %v5255
        %5975 = vmatprep.subr.bf16.mxu0 %v5260
        %5976 = vmatpush1.bf16.msra.mxu0 %v5259
        %5977 = vmatprep.subr.bf16.mxu0 %v5264
        %5978 = vmatpush1.bf16.msra.mxu0 %v5263
        %5979 = vmatprep.subr.bf16.mxu0 %v5268
        %5980 = vmatpush1.bf16.msra.mxu0 %v5267
        %5981 = vmatprep.subr.bf16.mxu0 %v5272
        %5982 = vmatpush1.bf16.msra.mxu0 %v5271
        %5983 = vmatprep.subr.bf16.mxu0 %v5276
        %5984 = vmatpush1.bf16.msra.mxu0 %v5275
        %5985 = vmatprep.subr.bf16.mxu0 %v5280
        %5986 = vmatpush1.bf16.msra.mxu0 %v5279
        %5987 = vmatprep.subr.bf16.mxu0 %v5284
        %5988 = vmatpush1.bf16.msra.mxu0 %v5283
        %5989 = vmatprep.subr.bf16.mxu0 %v5288
        %5990 = vmatpush1.bf16.msra.mxu0 %v5287
        %5991 = vmatprep.subr.bf16.mxu0 %v5292
        %5992 = vmatpush1.bf16.msra.mxu0 %v5291
        %5993 = vmatprep.subr.bf16.mxu0 %v5296
        %5994 = vmatpush1.bf16.msra.mxu0 %v5295
        %5995 = vmatprep.mubr.bf16.mxu0 %v5166
        %5996 = vmatmul.mubr.bf16.gmra.mrb[0].mxu0 %v5165
        %v5997 = vpop.f32.mrb[0].mxu0
        %v5998 = vadd.f32 %v5502, %v5997
        %v5999 = vpop.f32.mrb[0].mxu0
        %v6000 = vadd.f32 %v5506, %v5999
        %v6001 = vpop.f32.mrb[0].mxu0
        %v6002 = vadd.f32 %v5502, %v6001
        %v6003 = vpop.f32.mrb[0].mxu0
        %v6004 = vadd.f32 %v5506, %v6003
        %6005 = vmatprep.mubr.bf16.mxu0 %v5174
        %6006 = vmatmul.mubr.bf16.gmra.mrb[0].mxu0 %v5173
        %v6007 = vpop.f32.mrb[0].mxu0
        %v6008 = vadd.f32 %v5502, %v6007
        %v6009 = vpop.f32.mrb[0].mxu0
        %v6010 = vadd.f32 %v5506, %v6009
        %v6011 = vpop.f32.mrb[0].mxu0
        %v6012 = vadd.f32 %v5502, %v6011
        %v6013 = vpop.f32.mrb[0].mxu0
        %v6014 = vadd.f32 %v5506, %v6013
        %6015 = vmatprep.mubr.bf16.mxu0 %v5182
        %6016 = vmatmul.mubr.bf16.gmra.mrb[0].mxu0 %v5181
        %v6017 = vpop.f32.mrb[0].mxu0
        %v6018 = vadd.f32 %v5502, %v6017
        %v6019 = vpop.f32.mrb[0].mxu0
        %v6020 = vadd.f32 %v5506, %v6019
        %v6021 = vpop.f32.mrb[0].mxu0
        %v6022 = vadd.f32 %v5502, %v6021
        %v6023 = vpop.f32.mrb[0].mxu0
        %v6024 = vadd.f32 %v5506, %v6023
        %6025 = vmatprep.mubr.bf16.mxu0 %v5190
        %6026 = vmatmul.mubr.bf16.gmra.mrb[0].mxu0 %v5189
        %v6027 = vpop.f32.mrb[0].mxu0
        %v6028 = vadd.f32 %v5502, %v6027
        %v6029 = vpop.f32.mrb[0].mxu0
        %v6030 = vadd.f32 %v5506, %v6029
        %v6031 = vpop.f32.mrb[0].mxu0
        %v6032 = vadd.f32 %v5502, %v6031
        %v6033 = vpop.f32.mrb[0].mxu0
        %v6034 = vadd.f32 %v5506, %v6033
        %6035 = vmatprep.mubr.bf16.mxu0 %v5198
        %6036 = vmatmul.mubr.bf16.gmra.mrb[0].mxu0 %v5197
        %v6037 = vpop.f32.mrb[0].mxu0
        %v6038 = vadd.f32 %v5502, %v6037
        %v6039 = vpop.f32.mrb[0].mxu0
        %v6040 = vadd.f32 %v5506, %v6039
        %v6041 = vpop.f32.mrb[0].mxu0
        %v6042 = vadd.f32 %v5502, %v6041
        %v6043 = vpop.f32.mrb[0].mxu0
        %v6044 = vadd.f32 %v5506, %v6043
        %6045 = vmatprep.mubr.bf16.mxu0 %v5206
        %6046 = vmatmul.mubr.bf16.gmra.mrb[0].mxu0 %v5205
        %v6047 = vpop.f32.mrb[0].mxu0
        %v6048 = vadd.f32 %v5502, %v6047
        %v6049 = vpop.f32.mrb[0].mxu0
        %v6050 = vadd.f32 %v5506, %v6049
        %v6051 = vpop.f32.mrb[0].mxu0
        %v6052 = vadd.f32 %v5502, %v6051
        %v6053 = vpop.f32.mrb[0].mxu0
        %v6054 = vadd.f32 %v5506, %v6053
        %6055 = vmatprep.mubr.bf16.mxu0 %v5214
        %6056 = vmatmul.mubr.bf16.gmra.mrb[0].mxu0 %v5213
        %v6057 = vpop.f32.mrb[0].mxu0
        %v6058 = vadd.f32 %v5502, %v6057
        %v6059 = vpop.f32.mrb[0].mxu0
        %v6060 = vadd.f32 %v5506, %v6059
        %v6061 = vpop.f32.mrb[0].mxu0
        %v6062 = vadd.f32 %v5502, %v6061
        %v6063 = vpop.f32.mrb[0].mxu0
        %v6064 = vadd.f32 %v5506, %v6063
        %6065 = vmatprep.mubr.bf16.mxu0 %v5222
        %6066 = vmatmul.mubr.bf16.gmra.mrb[0].mxu0 %v5221
        %v6067 = vpop.f32.mrb[0].mxu0
        %v6068 = vadd.f32 %v5502, %v6067
        %v6069 = vpop.f32.mrb[0].mxu0
        %v6070 = vadd.f32 %v5506, %v6069
        %v6071 = vpop.f32.mrb[0].mxu0
        %v6072 = vadd.f32 %v5502, %v6071
        %v6073 = vpop.f32.mrb[0].mxu0
        %v6074 = vadd.f32 %v5506, %v6073
        %6075 = vdwg.mxu0
        %6076 = vmatprep.subr.bf16.mxu0 %v5300
        %6077 = vmatpush1.bf16.msra.mxu0 %v5299
        %6078 = vmatprep.subr.bf16.mxu0 %v5304
        %6079 = vmatpush1.bf16.msra.mxu0 %v5303
        %6080 = vmatprep.subr.bf16.mxu0 %v5308
        %6081 = vmatpush1.bf16.msra.mxu0 %v5307
        %6082 = vmatprep.subr.bf16.mxu0 %v5312
        %6083 = vmatpush1.bf16.msra.mxu0 %v5311
        %6084 = vmatprep.subr.bf16.mxu0 %v5316
        %6085 = vmatpush1.bf16.msra.mxu0 %v5315
        %6086 = vmatprep.subr.bf16.mxu0 %v5320
        %6087 = vmatpush1.bf16.msra.mxu0 %v5319
        %6088 = vmatprep.subr.bf16.mxu0 %v5324
        %6089 = vmatpush1.bf16.msra.mxu0 %v5323
        %6090 = vmatprep.subr.bf16.mxu0 %v5328
        %6091 = vmatpush1.bf16.msra.mxu0 %v5327
        %6092 = vmatprep.subr.bf16.mxu0 %v5332
        %6093 = vmatpush1.bf16.msra.mxu0 %v5331
        %6094 = vmatprep.subr.bf16.mxu0 %v5336
        %6095 = vmatpush1.bf16.msra.mxu0 %v5335
        %6096 = vmatprep.subr.bf16.mxu0 %v5340
        %6097 = vmatpush1.bf16.msra.mxu0 %v5339
        %6098 = vmatprep.subr.bf16.mxu0 %v5344
        %6099 = vmatpush1.bf16.msra.mxu0 %v5343
        %6100 = vmatprep.subr.bf16.mxu0 %v5348
        %6101 = vmatpush1.bf16.msra.mxu0 %v5347
        %6102 = vmatprep.subr.bf16.mxu0 %v5352
        %6103 = vmatpush1.bf16.msra.mxu0 %v5351
        %6104 = vmatprep.subr.bf16.mxu0 %v5356
        %6105 = vmatpush1.bf16.msra.mxu0 %v5355
        %6106 = vmatprep.subr.bf16.mxu0 %v5360
        %6107 = vmatpush1.bf16.msra.mxu0 %v5359
        %6108 = vmatprep.mubr.bf16.mxu0 %v5168
        %6109 = vmatmul.mubr.bf16.gmra.mrb[0].mxu0 %v5167
        %v6110 = vpop.f32.mrb[0].mxu0
        %v6111 = vadd.f32 %v5998, %v6110
        %v6112 = vpop.f32.mrb[0].mxu0
        %v6113 = vadd.f32 %v6000, %v6112
        %v6114 = vpop.f32.mrb[0].mxu0
        %v6115 = vadd.f32 %v6002, %v6114
        %v6116 = vpop.f32.mrb[0].mxu0
        %v6117 = vadd.f32 %v6004, %v6116
        %6118 = vmatprep.mubr.bf16.mxu0 %v5176
        %6119 = vmatmul.mubr.bf16.gmra.mrb[0].mxu0 %v5175
        %v6120 = vpop.f32.mrb[0].mxu0
        %v6121 = vadd.f32 %v6008, %v6120
        %v6122 = vpop.f32.mrb[0].mxu0
        %v6123 = vadd.f32 %v6010, %v6122
        %v6124 = vpop.f32.mrb[0].mxu0
        %v6125 = vadd.f32 %v6012, %v6124
        %v6126 = vpop.f32.mrb[0].mxu0
        %v6127 = vadd.f32 %v6014, %v6126
        %6128 = vmatprep.mubr.bf16.mxu0 %v5184
        %6129 = vmatmul.mubr.bf16.gmra.mrb[0].mxu0 %v5183
        %v6130 = vpop.f32.mrb[0].mxu0
        %v6131 = vadd.f32 %v6018, %v6130
        %v6132 = vpop.f32.mrb[0].mxu0
        %v6133 = vadd.f32 %v6020, %v6132
        %v6134 = vpop.f32.mrb[0].mxu0
        %v6135 = vadd.f32 %v6022, %v6134
        %v6136 = vpop.f32.mrb[0].mxu0
        %v6137 = vadd.f32 %v6024, %v6136
        %6138 = vmatprep.mubr.bf16.mxu0 %v5192
        %6139 = vmatmul.mubr.bf16.gmra.mrb[0].mxu0 %v5191
        %v6140 = vpop.f32.mrb[0].mxu0
        %v6141 = vadd.f32 %v6028, %v6140
        %v6142 = vpop.f32.mrb[0].mxu0
        %v6143 = vadd.f32 %v6030, %v6142
        %v6144 = vpop.f32.mrb[0].mxu0
        %v6145 = vadd.f32 %v6032, %v6144
        %v6146 = vpop.f32.mrb[0].mxu0
        %v6147 = vadd.f32 %v6034, %v6146
        %6148 = vmatprep.mubr.bf16.mxu0 %v5200
        %6149 = vmatmul.mubr.bf16.gmra.mrb[0].mxu0 %v5199
        %v6150 = vpop.f32.mrb[0].mxu0
        %v6151 = vadd.f32 %v6038, %v6150
        %v6152 = vpop.f32.mrb[0].mxu0
        %v6153 = vadd.f32 %v6040, %v6152
        %v6154 = vpop.f32.mrb[0].mxu0
        %v6155 = vadd.f32 %v6042, %v6154
        %v6156 = vpop.f32.mrb[0].mxu0
        %v6157 = vadd.f32 %v6044, %v6156
        %6158 = vmatprep.mubr.bf16.mxu0 %v5208
        %6159 = vmatmul.mubr.bf16.gmra.mrb[0].mxu0 %v5207
        %v6160 = vpop.f32.mrb[0].mxu0
        %v6161 = vadd.f32 %v6048, %v6160
        %v6162 = vpop.f32.mrb[0].mxu0
        %v6163 = vadd.f32 %v6050, %v6162
        %v6164 = vpop.f32.mrb[0].mxu0
        %v6165 = vadd.f32 %v6052, %v6164
        %v6166 = vpop.f32.mrb[0].mxu0
        %v6167 = vadd.f32 %v6054, %v6166
        %6168 = vmatprep.mubr.bf16.mxu0 %v5216
        %6169 = vmatmul.mubr.bf16.gmra.mrb[0].mxu0 %v5215
        %v6170 = vpop.f32.mrb[0].mxu0
        %v6171 = vadd.f32 %v6058, %v6170
        %v6172 = vpop.f32.mrb[0].mxu0
        %v6173 = vadd.f32 %v6060, %v6172
        %v6174 = vpop.f32.mrb[0].mxu0
        %v6175 = vadd.f32 %v6062, %v6174
        %v6176 = vpop.f32.mrb[0].mxu0
        %v6177 = vadd.f32 %v6064, %v6176
        %6178 = vmatprep.mubr.bf16.mxu0 %v5224
        %6179 = vmatmul.mubr.bf16.gmra.mrb[0].mxu0 %v5223
        %v6180 = vpop.f32.mrb[0].mxu0
        %v6181 = vadd.f32 %v6068, %v6180
        %v6182 = vpop.f32.mrb[0].mxu0
        %v6183 = vadd.f32 %v6070, %v6182
        %v6184 = vpop.f32.mrb[0].mxu0
        %v6185 = vadd.f32 %v6072, %v6184
        %v6186 = vpop.f32.mrb[0].mxu0
        %v6187 = vadd.f32 %v6074, %v6186
        %6188 = vdwg.mxu0
        %6189 = vmatprep.subr.bf16.mxu0 %v5364
        %6190 = vmatpush1.bf16.msra.mxu0 %v5363
        %6191 = vmatprep.subr.bf16.mxu0 %v5368
        %6192 = vmatpush1.bf16.msra.mxu0 %v5367
        %6193 = vmatprep.subr.bf16.mxu0 %v5372
        %6194 = vmatpush1.bf16.msra.mxu0 %v5371
        %6195 = vmatprep.subr.bf16.mxu0 %v5376
        %6196 = vmatpush1.bf16.msra.mxu0 %v5375
        %6197 = vmatprep.subr.bf16.mxu0 %v5380
        %6198 = vmatpush1.bf16.msra.mxu0 %v5379
        %6199 = vmatprep.subr.bf16.mxu0 %v5384
        %6200 = vmatpush1.bf16.msra.mxu0 %v5383
        %6201 = vmatprep.subr.bf16.mxu0 %v5388
        %6202 = vmatpush1.bf16.msra.mxu0 %v5387
        %6203 = vmatprep.subr.bf16.mxu0 %v5392
        %6204 = vmatpush1.bf16.msra.mxu0 %v5391
        %6205 = vmatprep.subr.bf16.mxu0 %v5396
        %6206 = vmatpush1.bf16.msra.mxu0 %v5395
        %6207 = vmatprep.subr.bf16.mxu0 %v5400
        %6208 = vmatpush1.bf16.msra.mxu0 %v5399
        %6209 = vmatprep.subr.bf16.mxu0 %v5404
        %6210 = vmatpush1.bf16.msra.mxu0 %v5403
        %6211 = vmatprep.subr.bf16.mxu0 %v5408
        %6212 = vmatpush1.bf16.msra.mxu0 %v5407
        %6213 = vmatprep.subr.bf16.mxu0 %v5412
        %6214 = vmatpush1.bf16.msra.mxu0 %v5411
        %6215 = vmatprep.subr.bf16.mxu0 %v5416
        %6216 = vmatpush1.bf16.msra.mxu0 %v5415
        %6217 = vmatprep.subr.bf16.mxu0 %v5420
        %6218 = vmatpush1.bf16.msra.mxu0 %v5419
        %6219 = vmatprep.subr.bf16.mxu0 %v5424
        %6220 = vmatpush1.bf16.msra.mxu0 %v5423
        %6221 = vmatprep.mubr.bf16.mxu0 %v5170
        %6222 = vmatmul.mubr.bf16.gmra.mrb[0].mxu0 %v5169
        %v6223 = vpop.f32.mrb[0].mxu0
        %v6224 = vadd.f32 %v6111, %v6223
        %v6225 = vpop.f32.mrb[0].mxu0
        %v6226 = vadd.f32 %v6113, %v6225
        %v6227 = vpop.f32.mrb[0].mxu0
        %v6228 = vadd.f32 %v6115, %v6227
        %v6229 = vpop.f32.mrb[0].mxu0
        %v6230 = vadd.f32 %v6117, %v6229
        %6231 = vmatprep.mubr.bf16.mxu0 %v5178
        %6232 = vmatmul.mubr.bf16.gmra.mrb[0].mxu0 %v5177
        %v6233 = vpop.f32.mrb[0].mxu0
        %v6234 = vadd.f32 %v6121, %v6233
        %v6235 = vpop.f32.mrb[0].mxu0
        %v6236 = vadd.f32 %v6123, %v6235
        %v6237 = vpop.f32.mrb[0].mxu0
        %v6238 = vadd.f32 %v6125, %v6237
        %v6239 = vpop.f32.mrb[0].mxu0
        %v6240 = vadd.f32 %v6127, %v6239
        %6241 = vmatprep.mubr.bf16.mxu0 %v5186
        %6242 = vmatmul.mubr.bf16.gmra.mrb[0].mxu0 %v5185
        %v6243 = vpop.f32.mrb[0].mxu0
        %v6244 = vadd.f32 %v6131, %v6243
        %v6245 = vpop.f32.mrb[0].mxu0
        %v6246 = vadd.f32 %v6133, %v6245
        %v6247 = vpop.f32.mrb[0].mxu0
        %v6248 = vadd.f32 %v6135, %v6247
        %v6249 = vpop.f32.mrb[0].mxu0
        %v6250 = vadd.f32 %v6137, %v6249
        %6251 = vmatprep.mubr.bf16.mxu0 %v5194
        %6252 = vmatmul.mubr.bf16.gmra.mrb[0].mxu0 %v5193
        %v6253 = vpop.f32.mrb[0].mxu0
        %v6254 = vadd.f32 %v6141, %v6253
        %v6255 = vpop.f32.mrb[0].mxu0
        %v6256 = vadd.f32 %v6143, %v6255
        %v6257 = vpop.f32.mrb[0].mxu0
        %v6258 = vadd.f32 %v6145, %v6257
        %v6259 = vpop.f32.mrb[0].mxu0
        %v6260 = vadd.f32 %v6147, %v6259
        %6261 = vmatprep.mubr.bf16.mxu0 %v5202
        %6262 = vmatmul.mubr.bf16.gmra.mrb[0].mxu0 %v5201
        %v6263 = vpop.f32.mrb[0].mxu0
        %v6264 = vadd.f32 %v6151, %v6263
        %v6265 = vpop.f32.mrb[0].mxu0
        %v6266 = vadd.f32 %v6153, %v6265
        %v6267 = vpop.f32.mrb[0].mxu0
        %v6268 = vadd.f32 %v6155, %v6267
        %v6269 = vpop.f32.mrb[0].mxu0
        %v6270 = vadd.f32 %v6157, %v6269
        %6271 = vmatprep.mubr.bf16.mxu0 %v5210
        %6272 = vmatmul.mubr.bf16.gmra.mrb[0].mxu0 %v5209
        %v6273 = vpop.f32.mrb[0].mxu0
        %v6274 = vadd.f32 %v6161, %v6273
        %v6275 = vpop.f32.mrb[0].mxu0
        %v6276 = vadd.f32 %v6163, %v6275
        %v6277 = vpop.f32.mrb[0].mxu0
        %v6278 = vadd.f32 %v6165, %v6277
        %v6279 = vpop.f32.mrb[0].mxu0
        %v6280 = vadd.f32 %v6167, %v6279
        %6281 = vmatprep.mubr.bf16.mxu0 %v5218
        %6282 = vmatmul.mubr.bf16.gmra.mrb[0].mxu0 %v5217
        %v6283 = vpop.f32.mrb[0].mxu0
        %v6284 = vadd.f32 %v6171, %v6283
        %v6285 = vpop.f32.mrb[0].mxu0
        %v6286 = vadd.f32 %v6173, %v6285
        %v6287 = vpop.f32.mrb[0].mxu0
        %v6288 = vadd.f32 %v6175, %v6287
        %v6289 = vpop.f32.mrb[0].mxu0
        %v6290 = vadd.f32 %v6177, %v6289
        %6291 = vmatprep.mubr.bf16.mxu0 %v5226
        %6292 = vmatmul.mubr.bf16.gmra.mrb[0].mxu0 %v5225
        %v6293 = vpop.f32.mrb[0].mxu0
        %v6294 = vadd.f32 %v6181, %v6293
        %v6295 = vpop.f32.mrb[0].mxu0
        %v6296 = vadd.f32 %v6183, %v6295
        %v6297 = vpop.f32.mrb[0].mxu0
        %v6298 = vadd.f32 %v6185, %v6297
        %v6299 = vpop.f32.mrb[0].mxu0
        %v6300 = vadd.f32 %v6187, %v6299
        %6301 = vdwg.mxu0
        %6302 = vmatprep.subr.bf16.mxu0 %v5428
        %6303 = vmatpush1.bf16.msra.mxu0 %v5427
        %6304 = vmatprep.subr.bf16.mxu0 %v5432
        %6305 = vmatpush1.bf16.msra.mxu0 %v5431
        %6306 = vmatprep.subr.bf16.mxu0 %v5436
        %6307 = vmatpush1.bf16.msra.mxu0 %v5435
        %6308 = vmatprep.subr.bf16.mxu0 %v5440
        %6309 = vmatpush1.bf16.msra.mxu0 %v5439
        %6310 = vmatprep.subr.bf16.mxu0 %v5444
        %6311 = vmatpush1.bf16.msra.mxu0 %v5443
        %6312 = vmatprep.subr.bf16.mxu0 %v5448
        %6313 = vmatpush1.bf16.msra.mxu0 %v5447
        %6314 = vmatprep.subr.bf16.mxu0 %v5452
        %6315 = vmatpush1.bf16.msra.mxu0 %v5451
        %6316 = vmatprep.subr.bf16.mxu0 %v5456
        %6317 = vmatpush1.bf16.msra.mxu0 %v5455
        %6318 = vmatprep.subr.bf16.mxu0 %v5460
        %6319 = vmatpush1.bf16.msra.mxu0 %v5459
        %6320 = vmatprep.subr.bf16.mxu0 %v5464
        %6321 = vmatpush1.bf16.msra.mxu0 %v5463
        %6322 = vmatprep.subr.bf16.mxu0 %v5468
        %6323 = vmatpush1.bf16.msra.mxu0 %v5467
        %6324 = vmatprep.subr.bf16.mxu0 %v5472
        %6325 = vmatpush1.bf16.msra.mxu0 %v5471
        %6326 = vmatprep.subr.bf16.mxu0 %v5476
        %6327 = vmatpush1.bf16.msra.mxu0 %v5475
        %6328 = vmatprep.subr.bf16.mxu0 %v5480
        %6329 = vmatpush1.bf16.msra.mxu0 %v5479
        %6330 = vmatprep.subr.bf16.mxu0 %v5484
        %6331 = vmatpush1.bf16.msra.mxu0 %v5483
        %6332 = vmatprep.subr.bf16.mxu0 %v5488
        %6333 = vmatpush1.bf16.msra.mxu0 %v5487
        %6334 = vmatprep.mubr.bf16.mxu0 %v5172
        %6335 = vmatmul.mubr.bf16.gmra.mrb[0].mxu0 %v5171
        %v6336 = vpop.f32.mrb[0].mxu0
        %v6337 = vadd.f32 %v6224, %v6336
        %v6338 = vpop.f32.mrb[0].mxu0
        %v6339 = vadd.f32 %v6226, %v6338
        %v6340 = vpop.f32.mrb[0].mxu0
        %v6341 = vadd.f32 %v6228, %v6340
        %v6342 = vpop.f32.mrb[0].mxu0
        %v6343 = vadd.f32 %v6230, %v6342
        %6344 = vmatprep.mubr.bf16.mxu0 %v5180
        %6345 = vmatmul.mubr.bf16.gmra.mrb[0].mxu0 %v5179
        %v6346 = vpop.f32.mrb[0].mxu0
        %v6347 = vadd.f32 %v6234, %v6346
        %v6348 = vpop.f32.mrb[0].mxu0
        %v6349 = vadd.f32 %v6236, %v6348
        %v6350 = vpop.f32.mrb[0].mxu0
        %v6351 = vadd.f32 %v6238, %v6350
        %v6352 = vpop.f32.mrb[0].mxu0
        %v6353 = vadd.f32 %v6240, %v6352
        %6354 = vmatprep.mubr.bf16.mxu0 %v5188
        %6355 = vmatmul.mubr.bf16.gmra.mrb[0].mxu0 %v5187
        %v6356 = vpop.f32.mrb[0].mxu0
        %v6357 = vadd.f32 %v6244, %v6356
        %v6358 = vpop.f32.mrb[0].mxu0
        %v6359 = vadd.f32 %v6246, %v6358
        %v6360 = vpop.f32.mrb[0].mxu0
        %v6361 = vadd.f32 %v6248, %v6360
        %v6362 = vpop.f32.mrb[0].mxu0
        %v6363 = vadd.f32 %v6250, %v6362
        %6364 = vmatprep.mubr.bf16.mxu0 %v5196
        %6365 = vmatmul.mubr.bf16.gmra.mrb[0].mxu0 %v5195
        %v6366 = vpop.f32.mrb[0].mxu0
        %v6367 = vadd.f32 %v6254, %v6366
        %v6368 = vpop.f32.mrb[0].mxu0
        %v6369 = vadd.f32 %v6256, %v6368
        %v6370 = vpop.f32.mrb[0].mxu0
        %v6371 = vadd.f32 %v6258, %v6370
        %v6372 = vpop.f32.mrb[0].mxu0
        %v6373 = vadd.f32 %v6260, %v6372
        %6374 = vmatprep.mubr.bf16.mxu0 %v5204
        %6375 = vmatmul.mubr.bf16.gmra.mrb[0].mxu0 %v5203
        %v6376 = vpop.f32.mrb[0].mxu0
        %v6377 = vadd.f32 %v6264, %v6376
        %v6378 = vpop.f32.mrb[0].mxu0
        %v6379 = vadd.f32 %v6266, %v6378
        %v6380 = vpop.f32.mrb[0].mxu0
        %v6381 = vadd.f32 %v6268, %v6380
        %v6382 = vpop.f32.mrb[0].mxu0
        %v6383 = vadd.f32 %v6270, %v6382
        %6384 = vmatprep.mubr.bf16.mxu0 %v5212
        %6385 = vmatmul.mubr.bf16.gmra.mrb[0].mxu0 %v5211
        %v6386 = vpop.f32.mrb[0].mxu0
        %v6387 = vadd.f32 %v6274, %v6386
        %v6388 = vpop.f32.mrb[0].mxu0
        %v6389 = vadd.f32 %v6276, %v6388
        %v6390 = vpop.f32.mrb[0].mxu0
        %v6391 = vadd.f32 %v6278, %v6390
        %v6392 = vpop.f32.mrb[0].mxu0
        %v6393 = vadd.f32 %v6280, %v6392
        %6394 = vmatprep.mubr.bf16.mxu0 %v5220
        %6395 = vmatmul.mubr.bf16.gmra.mrb[0].mxu0 %v5219
        %v6396 = vpop.f32.mrb[0].mxu0
        %v6397 = vadd.f32 %v6284, %v6396
        %v6398 = vpop.f32.mrb[0].mxu0
        %v6399 = vadd.f32 %v6286, %v6398
        %v6400 = vpop.f32.mrb[0].mxu0
        %v6401 = vadd.f32 %v6288, %v6400
        %v6402 = vpop.f32.mrb[0].mxu0
        %v6403 = vadd.f32 %v6290, %v6402
        %6404 = vmatprep.mubr.bf16.mxu0 %v5228
        %6405 = vmatmul.mubr.bf16.gmra.mrb[0].mxu0 %v5227
        %v6406 = vpop.f32.mrb[0].mxu0
        %v6407 = vadd.f32 %v6294, %v6406
        %v6408 = vpop.f32.mrb[0].mxu0
        %v6409 = vadd.f32 %v6296, %v6408
        %v6410 = vpop.f32.mrb[0].mxu0
        %v6411 = vadd.f32 %v6298, %v6410
        %v6412 = vpop.f32.mrb[0].mxu0
        %v6413 = vadd.f32 %v6300, %v6412
        %6414 = vdwg.mxu0
        %v6415 = vmax.f32 %v5885, 0.0
        %v6416 = vmax.f32 %v5887, 0.0
        %v6417 = vmax.f32 %v6337, 0.0
        %v6418 = vmax.f32 %v6339, 0.0
        %v6419 = vmax.f32 %v5889, 0.0
        %v6420 = vmax.f32 %v5891, 0.0
        %v6421 = vmax.f32 %v6341, 0.0
        %v6422 = vmax.f32 %v6343, 0.0
        %v6423 = vmax.f32 %v5895, 0.0
        %v6424 = vmax.f32 %v5897, 0.0
        %v6425 = vmax.f32 %v6347, 0.0
        %v6426 = vmax.f32 %v6349, 0.0
        %v6427 = vmax.f32 %v5899, 0.0
        %v6428 = vmax.f32 %v5901, 0.0
        %v6429 = vmax.f32 %v6351, 0.0
        %v6430 = vmax.f32 %v6353, 0.0
        %v6431 = vmax.f32 %v5905, 0.0
        %v6432 = vmax.f32 %v5907, 0.0
        %v6433 = vmax.f32 %v6357, 0.0
        %v6434 = vmax.f32 %v6359, 0.0
        %v6435 = vmax.f32 %v5909, 0.0
        %v6436 = vmax.f32 %v5911, 0.0
        %v6437 = vmax.f32 %v6361, 0.0
        %v6438 = vmax.f32 %v6363, 0.0
        %v6439 = vmax.f32 %v5915, 0.0
        %v6440 = vmax.f32 %v5917, 0.0
        %v6441 = vmax.f32 %v6367, 0.0
        %v6442 = vmax.f32 %v6369, 0.0
        %v6443 = vmax.f32 %v5919, 0.0
        %v6444 = vmax.f32 %v5921, 0.0
        %v6445 = vmax.f32 %v6371, 0.0
        %v6446 = vmax.f32 %v6373, 0.0
        %v6447 = vmax.f32 %v5925, 0.0
        %v6448 = vmax.f32 %v5927, 0.0
        %v6449 = vmax.f32 %v6377, 0.0
        %v6450 = vmax.f32 %v6379, 0.0
        %v6451 = vmax.f32 %v5929, 0.0
        %v6452 = vmax.f32 %v5931, 0.0
        %v6453 = vmax.f32 %v6381, 0.0
        %v6454 = vmax.f32 %v6383, 0.0
        %v6455 = vmax.f32 %v5935, 0.0
        %v6456 = vmax.f32 %v5937, 0.0
        %v6457 = vmax.f32 %v6387, 0.0
        %v6458 = vmax.f32 %v6389, 0.0
        %v6459 = vmax.f32 %v5939, 0.0
        %v6460 = vmax.f32 %v5941, 0.0
        %v6461 = vmax.f32 %v6391, 0.0
        %v6462 = vmax.f32 %v6393, 0.0
        %v6463 = vmax.f32 %v5945, 0.0
        %v6464 = vmax.f32 %v5947, 0.0
        %v6465 = vmax.f32 %v6397, 0.0
        %v6466 = vmax.f32 %v6399, 0.0
        %v6467 = vmax.f32 %v5949, 0.0
        %v6468 = vmax.f32 %v5951, 0.0
        %v6469 = vmax.f32 %v6401, 0.0
        %v6470 = vmax.f32 %v6403, 0.0
        %v6471 = vmax.f32 %v5955, 0.0
        %v6472 = vmax.f32 %v5957, 0.0
        %v6473 = vmax.f32 %v6407, 0.0
        %v6474 = vmax.f32 %v6409, 0.0
        %v6475 = vmax.f32 %v5959, 0.0
        %v6476 = vmax.f32 %v5961, 0.0
        %v6477 = vmax.f32 %v6411, 0.0
        %v6478 = vmax.f32 %v6413, 0.0
        %v6479 = vpack.c.bf16 %v6419, %v6415
        %v6480 = vpack.c.bf16 %v6420, %v6416
        %v6481 = vpack.c.bf16 %v6421, %v6417
        %v6482 = vpack.c.bf16 %v6422, %v6418
        %v6483 = vpack.c.bf16 %v6427, %v6423
        %v6484 = vpack.c.bf16 %v6428, %v6424
        %v6485 = vpack.c.bf16 %v6429, %v6425
        %v6486 = vpack.c.bf16 %v6430, %v6426
        %v6487 = vpack.c.bf16 %v6435, %v6431
        %v6488 = vpack.c.bf16 %v6436, %v6432
        %v6489 = vpack.c.bf16 %v6437, %v6433
        %v6490 = vpack.c.bf16 %v6438, %v6434
        %v6491 = vpack.c.bf16 %v6443, %v6439
        %v6492 = vpack.c.bf16 %v6444, %v6440
        %v6493 = vpack.c.bf16 %v6445, %v6441
        %v6494 = vpack.c.bf16 %v6446, %v6442
        %v6495 = vpack.c.bf16 %v6451, %v6447
        %v6496 = vpack.c.bf16 %v6452, %v6448
        %v6497 = vpack.c.bf16 %v6453, %v6449
        %v6498 = vpack.c.bf16 %v6454, %v6450
        %v6499 = vpack.c.bf16 %v6459, %v6455
        %v6500 = vpack.c.bf16 %v6460, %v6456
        %v6501 = vpack.c.bf16 %v6461, %v6457
        %v6502 = vpack.c.bf16 %v6462, %v6458
        %v6503 = vpack.c.bf16 %v6467, %v6463
        %v6504 = vpack.c.bf16 %v6468, %v6464
        %v6505 = vpack.c.bf16 %v6469, %v6465
        %v6506 = vpack.c.bf16 %v6470, %v6466
        %v6507 = vpack.c.bf16 %v6475, %v6471
        %v6508 = vpack.c.bf16 %v6476, %v6472
        %v6509 = vpack.c.bf16 %v6477, %v6473
        %v6510 = vpack.c.bf16 %v6478, %v6474
        %v6511 = vld [vmem:[#allocation26] sm:$0xff]
        %v6512 = vld [vmem:[#allocation26 + $0x8] sm:$0xff]
        %v6513 = vld [vmem:[#allocation26 + $0x10] sm:$0xff]
        %v6514 = vld [vmem:[#allocation26 + $0x18] sm:$0xff]
        %v6515 = vld [vmem:[#allocation26 + $0x20] sm:$0xff]
        %v6516 = vld [vmem:[#allocation26 + $0x28] sm:$0xff]
        %v6517 = vld [vmem:[#allocation26 + $0x30] sm:$0xff]
        %v6518 = vld [vmem:[#allocation26 + $0x38] sm:$0xff]
        %v6519 = vld [vmem:[#allocation26 + $0x40] sm:$0xff]
        %v6520 = vld [vmem:[#allocation26 + $0x48] sm:$0xff]
        %v6521 = vld [vmem:[#allocation26 + $0x50] sm:$0xff]
        %v6522 = vld [vmem:[#allocation26 + $0x58] sm:$0xff]
        %v6523 = vld [vmem:[#allocation26 + $0x60] sm:$0xff]
        %v6524 = vld [vmem:[#allocation26 + $0x68] sm:$0xff]
        %v6525 = vld [vmem:[#allocation26 + $0x70] sm:$0xff]
        %v6526 = vld [vmem:[#allocation26 + $0x78] sm:$0xff]
        %v6527 = vld [vmem:[#allocation26 + $0x80] sm:$0xff]
        %v6528 = vld [vmem:[#allocation26 + $0x88] sm:$0xff]
        %v6529 = vld [vmem:[#allocation26 + $0x90] sm:$0xff]
        %v6530 = vld [vmem:[#allocation26 + $0x98] sm:$0xff]
        %v6531 = vld [vmem:[#allocation26 + $0xa0] sm:$0xff]
        %v6532 = vld [vmem:[#allocation26 + $0xa8] sm:$0xff]
        %v6533 = vld [vmem:[#allocation26 + $0xb0] sm:$0xff]
        %v6534 = vld [vmem:[#allocation26 + $0xb8] sm:$0xff]
        %v6535 = vld [vmem:[#allocation26 + $0xc0] sm:$0xff]
        %v6536 = vld [vmem:[#allocation26 + $0xc8] sm:$0xff]
        %v6537 = vld [vmem:[#allocation26 + $0xd0] sm:$0xff]
        %v6538 = vld [vmem:[#allocation26 + $0xd8] sm:$0xff]
        %v6539 = vld [vmem:[#allocation26 + $0xe0] sm:$0xff]
        %v6540 = vld [vmem:[#allocation26 + $0xe8] sm:$0xff]
        %v6541 = vld [vmem:[#allocation26 + $0xf0] sm:$0xff]
        %v6542 = vld [vmem:[#allocation26 + $0xf8] sm:$0xff]
        %v6543 = vld [vmem:[#allocation26 + $0x100] sm:$0xff]
        %v6544 = vld [vmem:[#allocation26 + $0x108] sm:$0xff]
        %v6545 = vld [vmem:[#allocation26 + $0x110] sm:$0xff]
        %v6546 = vld [vmem:[#allocation26 + $0x118] sm:$0xff]
        %v6547 = vld [vmem:[#allocation26 + $0x120] sm:$0xff]
        %v6548 = vld [vmem:[#allocation26 + $0x128] sm:$0xff]
        %v6549 = vld [vmem:[#allocation26 + $0x130] sm:$0xff]
        %v6550 = vld [vmem:[#allocation26 + $0x138] sm:$0xff]
        %v6551 = vld [vmem:[#allocation26 + $0x140] sm:$0xff]
        %v6552 = vld [vmem:[#allocation26 + $0x148] sm:$0xff]
        %v6553 = vld [vmem:[#allocation26 + $0x150] sm:$0xff]
        %v6554 = vld [vmem:[#allocation26 + $0x158] sm:$0xff]
        %v6555 = vld [vmem:[#allocation26 + $0x160] sm:$0xff]
        %v6556 = vld [vmem:[#allocation26 + $0x168] sm:$0xff]
        %v6557 = vld [vmem:[#allocation26 + $0x170] sm:$0xff]
        %v6558 = vld [vmem:[#allocation26 + $0x178] sm:$0xff]
        %v6559 = vld [vmem:[#allocation26 + $0x180] sm:$0xff]
        %v6560 = vld [vmem:[#allocation26 + $0x188] sm:$0xff]
        %v6561 = vld [vmem:[#allocation26 + $0x190] sm:$0xff]
        %v6562 = vld [vmem:[#allocation26 + $0x198] sm:$0xff]
        %v6563 = vld [vmem:[#allocation26 + $0x1a0] sm:$0xff]
        %v6564 = vld [vmem:[#allocation26 + $0x1a8] sm:$0xff]
        %v6565 = vld [vmem:[#allocation26 + $0x1b0] sm:$0xff]
        %v6566 = vld [vmem:[#allocation26 + $0x1b8] sm:$0xff]
        %v6567 = vld [vmem:[#allocation26 + $0x1c0] sm:$0xff]
        %v6568 = vld [vmem:[#allocation26 + $0x1c8] sm:$0xff]
        %v6569 = vld [vmem:[#allocation26 + $0x1d0] sm:$0xff]
        %v6570 = vld [vmem:[#allocation26 + $0x1d8] sm:$0xff]
        %v6571 = vld [vmem:[#allocation26 + $0x1e0] sm:$0xff]
        %v6572 = vld [vmem:[#allocation26 + $0x1e8] sm:$0xff]
        %v6573 = vld [vmem:[#allocation26 + $0x1f0] sm:$0xff]
        %v6574 = vld [vmem:[#allocation26 + $0x1f8] sm:$0xff]
        %v6575 = vld [vmem:[%s24] sm:$0x3]
        %v6577 = vlaneseq
        %v6578 = vshrl.u32 %v6577, 7
        %v6579 = vsub.s32 0, %v6578
        %v6580 = vrot.slane %v6575, %v6579
        %v6581 = vlaneseq
        %v6582 = vshrl.u32 %v6581, 7
        %v6583 = vsub.s32 1, %v6582
        %v6584 = vrot.slane %v6575, %v6583
        %v6651 = vunpack.c.l.b16 %v6511
        %v6652 = vunpack.c.h.b16 %v6511
        %v6653 = vunpack.c.l.b16 %v6512
        %v6654 = vunpack.c.h.b16 %v6512
        %v6655 = vunpack.c.l.b16 %v6513
        %v6656 = vunpack.c.h.b16 %v6513
        %v6657 = vunpack.c.l.b16 %v6514
        %v6658 = vunpack.c.h.b16 %v6514
        %v6659 = vunpack.c.l.b16 %v6515
        %v6660 = vunpack.c.h.b16 %v6515
        %v6661 = vunpack.c.l.b16 %v6516
        %v6662 = vunpack.c.h.b16 %v6516
        %v6663 = vunpack.c.l.b16 %v6517
        %v6664 = vunpack.c.h.b16 %v6517
        %v6665 = vunpack.c.l.b16 %v6518
        %v6666 = vunpack.c.h.b16 %v6518
        %v6667 = vunpack.c.l.b16 %v6519
        %v6668 = vunpack.c.h.b16 %v6519
        %v6669 = vunpack.c.l.b16 %v6520
        %v6670 = vunpack.c.h.b16 %v6520
        %v6671 = vunpack.c.l.b16 %v6521
        %v6672 = vunpack.c.h.b16 %v6521
        %v6673 = vunpack.c.l.b16 %v6522
        %v6674 = vunpack.c.h.b16 %v6522
        %v6675 = vunpack.c.l.b16 %v6523
        %v6676 = vunpack.c.h.b16 %v6523
        %v6677 = vunpack.c.l.b16 %v6524
        %v6678 = vunpack.c.h.b16 %v6524
        %v6679 = vunpack.c.l.b16 %v6525
        %v6680 = vunpack.c.h.b16 %v6525
        %v6681 = vunpack.c.l.b16 %v6526
        %v6682 = vunpack.c.h.b16 %v6526
        %v6683 = vunpack.c.l.b16 %v6527
        %v6684 = vunpack.c.h.b16 %v6527
        %v6685 = vunpack.c.l.b16 %v6528
        %v6686 = vunpack.c.h.b16 %v6528
        %v6687 = vunpack.c.l.b16 %v6529
        %v6688 = vunpack.c.h.b16 %v6529
        %v6689 = vunpack.c.l.b16 %v6530
        %v6690 = vunpack.c.h.b16 %v6530
        %v6691 = vunpack.c.l.b16 %v6531
        %v6692 = vunpack.c.h.b16 %v6531
        %v6693 = vunpack.c.l.b16 %v6532
        %v6694 = vunpack.c.h.b16 %v6532
        %v6695 = vunpack.c.l.b16 %v6533
        %v6696 = vunpack.c.h.b16 %v6533
        %v6697 = vunpack.c.l.b16 %v6534
        %v6698 = vunpack.c.h.b16 %v6534
        %v6699 = vunpack.c.l.b16 %v6535
        %v6700 = vunpack.c.h.b16 %v6535
        %v6701 = vunpack.c.l.b16 %v6536
        %v6702 = vunpack.c.h.b16 %v6536
        %v6703 = vunpack.c.l.b16 %v6537
        %v6704 = vunpack.c.h.b16 %v6537
        %v6705 = vunpack.c.l.b16 %v6538
        %v6706 = vunpack.c.h.b16 %v6538
        %v6707 = vunpack.c.l.b16 %v6539
        %v6708 = vunpack.c.h.b16 %v6539
        %v6709 = vunpack.c.l.b16 %v6540
        %v6710 = vunpack.c.h.b16 %v6540
        %v6711 = vunpack.c.l.b16 %v6541
        %v6712 = vunpack.c.h.b16 %v6541
        %v6713 = vunpack.c.l.b16 %v6542
        %v6714 = vunpack.c.h.b16 %v6542
        %v6715 = vunpack.c.l.b16 %v6543
        %v6716 = vunpack.c.h.b16 %v6543
        %v6717 = vunpack.c.l.b16 %v6544
        %v6718 = vunpack.c.h.b16 %v6544
        %v6719 = vunpack.c.l.b16 %v6545
        %v6720 = vunpack.c.h.b16 %v6545
        %v6721 = vunpack.c.l.b16 %v6546
        %v6722 = vunpack.c.h.b16 %v6546
        %v6723 = vunpack.c.l.b16 %v6547
        %v6724 = vunpack.c.h.b16 %v6547
        %v6725 = vunpack.c.l.b16 %v6548
        %v6726 = vunpack.c.h.b16 %v6548
        %v6727 = vunpack.c.l.b16 %v6549
        %v6728 = vunpack.c.h.b16 %v6549
        %v6729 = vunpack.c.l.b16 %v6550
        %v6730 = vunpack.c.h.b16 %v6550
        %v6731 = vunpack.c.l.b16 %v6551
        %v6732 = vunpack.c.h.b16 %v6551
        %v6733 = vunpack.c.l.b16 %v6552
        %v6734 = vunpack.c.h.b16 %v6552
        %v6735 = vunpack.c.l.b16 %v6553
        %v6736 = vunpack.c.h.b16 %v6553
        %v6737 = vunpack.c.l.b16 %v6554
        %v6738 = vunpack.c.h.b16 %v6554
        %v6739 = vunpack.c.l.b16 %v6555
        %v6740 = vunpack.c.h.b16 %v6555
        %v6741 = vunpack.c.l.b16 %v6556
        %v6742 = vunpack.c.h.b16 %v6556
        %v6743 = vunpack.c.l.b16 %v6557
        %v6744 = vunpack.c.h.b16 %v6557
        %v6745 = vunpack.c.l.b16 %v6558
        %v6746 = vunpack.c.h.b16 %v6558
        %v6747 = vunpack.c.l.b16 %v6559
        %v6748 = vunpack.c.h.b16 %v6559
        %v6749 = vunpack.c.l.b16 %v6560
        %v6750 = vunpack.c.h.b16 %v6560
        %v6751 = vunpack.c.l.b16 %v6561
        %v6752 = vunpack.c.h.b16 %v6561
        %v6753 = vunpack.c.l.b16 %v6562
        %v6754 = vunpack.c.h.b16 %v6562
        %v6755 = vunpack.c.l.b16 %v6563
        %v6756 = vunpack.c.h.b16 %v6563
        %v6757 = vunpack.c.l.b16 %v6564
        %v6758 = vunpack.c.h.b16 %v6564
        %v6759 = vunpack.c.l.b16 %v6565
        %v6760 = vunpack.c.h.b16 %v6565
        %v6761 = vunpack.c.l.b16 %v6566
        %v6762 = vunpack.c.h.b16 %v6566
        %v6763 = vunpack.c.l.b16 %v6567
        %v6764 = vunpack.c.h.b16 %v6567
        %v6765 = vunpack.c.l.b16 %v6568
        %v6766 = vunpack.c.h.b16 %v6568
        %v6767 = vunpack.c.l.b16 %v6569
        %v6768 = vunpack.c.h.b16 %v6569
        %v6769 = vunpack.c.l.b16 %v6570
        %v6770 = vunpack.c.h.b16 %v6570
        %v6771 = vunpack.c.l.b16 %v6571
        %v6772 = vunpack.c.h.b16 %v6571
        %v6773 = vunpack.c.l.b16 %v6572
        %v6774 = vunpack.c.h.b16 %v6572
        %v6775 = vunpack.c.l.b16 %v6573
        %v6776 = vunpack.c.h.b16 %v6573
        %v6777 = vunpack.c.l.b16 %v6574
        %v6778 = vunpack.c.h.b16 %v6574
        %v6779 = vpack.c.b16 %v6653, %v6651
        %v6780 = vpack.c.b16 %v6654, %v6652
        %v6781 = vpack.c.b16 %v6657, %v6655
        %v6782 = vpack.c.b16 %v6658, %v6656
        %v6783 = vpack.c.b16 %v6661, %v6659
        %v6784 = vpack.c.b16 %v6662, %v6660
        %v6785 = vpack.c.b16 %v6665, %v6663
        %v6786 = vpack.c.b16 %v6666, %v6664
        %v6787 = vpack.c.b16 %v6669, %v6667
        %v6788 = vpack.c.b16 %v6670, %v6668
        %v6789 = vpack.c.b16 %v6673, %v6671
        %v6790 = vpack.c.b16 %v6674, %v6672
        %v6791 = vpack.c.b16 %v6677, %v6675
        %v6792 = vpack.c.b16 %v6678, %v6676
        %v6793 = vpack.c.b16 %v6681, %v6679
        %v6794 = vpack.c.b16 %v6682, %v6680
        %v6795 = vpack.c.b16 %v6685, %v6683
        %v6796 = vpack.c.b16 %v6686, %v6684
        %v6797 = vpack.c.b16 %v6689, %v6687
        %v6798 = vpack.c.b16 %v6690, %v6688
        %v6799 = vpack.c.b16 %v6693, %v6691
        %v6800 = vpack.c.b16 %v6694, %v6692
        %v6801 = vpack.c.b16 %v6697, %v6695
        %v6802 = vpack.c.b16 %v6698, %v6696
        %v6803 = vpack.c.b16 %v6701, %v6699
        %v6804 = vpack.c.b16 %v6702, %v6700
        %v6805 = vpack.c.b16 %v6705, %v6703
        %v6806 = vpack.c.b16 %v6706, %v6704
        %v6807 = vpack.c.b16 %v6709, %v6707
        %v6808 = vpack.c.b16 %v6710, %v6708
        %v6809 = vpack.c.b16 %v6713, %v6711
        %v6810 = vpack.c.b16 %v6714, %v6712
        %v6811 = vpack.c.b16 %v6717, %v6715
        %v6812 = vpack.c.b16 %v6718, %v6716
        %v6813 = vpack.c.b16 %v6721, %v6719
        %v6814 = vpack.c.b16 %v6722, %v6720
        %v6815 = vpack.c.b16 %v6725, %v6723
        %v6816 = vpack.c.b16 %v6726, %v6724
        %v6817 = vpack.c.b16 %v6729, %v6727
        %v6818 = vpack.c.b16 %v6730, %v6728
        %v6819 = vpack.c.b16 %v6733, %v6731
        %v6820 = vpack.c.b16 %v6734, %v6732
        %v6821 = vpack.c.b16 %v6737, %v6735
        %v6822 = vpack.c.b16 %v6738, %v6736
        %v6823 = vpack.c.b16 %v6741, %v6739
        %v6824 = vpack.c.b16 %v6742, %v6740
        %v6825 = vpack.c.b16 %v6745, %v6743
        %v6826 = vpack.c.b16 %v6746, %v6744
        %v6827 = vpack.c.b16 %v6749, %v6747
        %v6828 = vpack.c.b16 %v6750, %v6748
        %v6829 = vpack.c.b16 %v6753, %v6751
        %v6830 = vpack.c.b16 %v6754, %v6752
        %v6831 = vpack.c.b16 %v6757, %v6755
        %v6832 = vpack.c.b16 %v6758, %v6756
        %v6833 = vpack.c.b16 %v6761, %v6759
        %v6834 = vpack.c.b16 %v6762, %v6760
        %v6835 = vpack.c.b16 %v6765, %v6763
        %v6836 = vpack.c.b16 %v6766, %v6764
        %v6837 = vpack.c.b16 %v6769, %v6767
        %v6838 = vpack.c.b16 %v6770, %v6768
        %v6839 = vpack.c.b16 %v6773, %v6771
        %v6840 = vpack.c.b16 %v6774, %v6772
        %v6841 = vpack.c.b16 %v6777, %v6775
        %v6842 = vpack.c.b16 %v6778, %v6776
        %6907 = vmatprep.subr.bf16.mxu0 %v6780
        %6908 = vmatpush1.bf16.msra.mxu0 %v6779
        %6909 = vmatprep.subr.bf16.mxu0 %v6782
        %6910 = vmatpush1.bf16.msra.mxu0 %v6781
        %6911 = vmatprep.subr.bf16.mxu0 %v6784
        %6912 = vmatpush1.bf16.msra.mxu0 %v6783
        %6913 = vmatprep.subr.bf16.mxu0 %v6786
        %6914 = vmatpush1.bf16.msra.mxu0 %v6785
        %6915 = vmatprep.subr.bf16.mxu0 %v6788
        %6916 = vmatpush1.bf16.msra.mxu0 %v6787
        %6917 = vmatprep.subr.bf16.mxu0 %v6790
        %6918 = vmatpush1.bf16.msra.mxu0 %v6789
        %6919 = vmatprep.subr.bf16.mxu0 %v6792
        %6920 = vmatpush1.bf16.msra.mxu0 %v6791
        %6921 = vmatprep.subr.bf16.mxu0 %v6794
        %6922 = vmatpush1.bf16.msra.mxu0 %v6793
        %6923 = vmatprep.subr.bf16.mxu0 %v6796
        %6924 = vmatpush1.bf16.msra.mxu0 %v6795
        %6925 = vmatprep.subr.bf16.mxu0 %v6798
        %6926 = vmatpush1.bf16.msra.mxu0 %v6797
        %6927 = vmatprep.subr.bf16.mxu0 %v6800
        %6928 = vmatpush1.bf16.msra.mxu0 %v6799
        %6929 = vmatprep.subr.bf16.mxu0 %v6802
        %6930 = vmatpush1.bf16.msra.mxu0 %v6801
        %6931 = vmatprep.subr.bf16.mxu0 %v6804
        %6932 = vmatpush1.bf16.msra.mxu0 %v6803
        %6933 = vmatprep.subr.bf16.mxu0 %v6806
        %6934 = vmatpush1.bf16.msra.mxu0 %v6805
        %6935 = vmatprep.subr.bf16.mxu0 %v6808
        %6936 = vmatpush1.bf16.msra.mxu0 %v6807
        %6937 = vmatprep.subr.bf16.mxu0 %v6810
        %6938 = vmatpush1.bf16.msra.mxu0 %v6809
        %6939 = vmatprep.mubr.bf16.mxu0 %v6480
        %6940 = vmatmul.mubr.bf16.gmra.mrb[0].mxu0 %v6479
        %v6941 = vpop.f32.mrb[0].mxu0
        %v6942 = vadd.f32 %v6580, %v6941
        %v6943 = vpop.f32.mrb[0].mxu0
        %v6944 = vadd.f32 %v6584, %v6943
        %v6945 = vpop.f32.mrb[0].mxu0
        %v6946 = vadd.f32 %v6580, %v6945
        %v6947 = vpop.f32.mrb[0].mxu0
        %v6948 = vadd.f32 %v6584, %v6947
        %6949 = vmatprep.mubr.bf16.mxu0 %v6484
        %6950 = vmatmul.mubr.bf16.gmra.mrb[0].mxu0 %v6483
        %v6951 = vpop.f32.mrb[0].mxu0
        %v6952 = vadd.f32 %v6580, %v6951
        %v6953 = vpop.f32.mrb[0].mxu0
        %v6954 = vadd.f32 %v6584, %v6953
        %v6955 = vpop.f32.mrb[0].mxu0
        %v6956 = vadd.f32 %v6580, %v6955
        %v6957 = vpop.f32.mrb[0].mxu0
        %v6958 = vadd.f32 %v6584, %v6957
        %6959 = vmatprep.mubr.bf16.mxu0 %v6488
        %6960 = vmatmul.mubr.bf16.gmra.mrb[0].mxu0 %v6487
        %v6961 = vpop.f32.mrb[0].mxu0
        %v6962 = vadd.f32 %v6580, %v6961
        %v6963 = vpop.f32.mrb[0].mxu0
        %v6964 = vadd.f32 %v6584, %v6963
        %v6965 = vpop.f32.mrb[0].mxu0
        %v6966 = vadd.f32 %v6580, %v6965
        %v6967 = vpop.f32.mrb[0].mxu0
        %v6968 = vadd.f32 %v6584, %v6967
        %6969 = vmatprep.mubr.bf16.mxu0 %v6492
        %6970 = vmatmul.mubr.bf16.gmra.mrb[0].mxu0 %v6491
        %v6971 = vpop.f32.mrb[0].mxu0
        %v6972 = vadd.f32 %v6580, %v6971
        %v6973 = vpop.f32.mrb[0].mxu0
        %v6974 = vadd.f32 %v6584, %v6973
        %v6975 = vpop.f32.mrb[0].mxu0
        %v6976 = vadd.f32 %v6580, %v6975
        %v6977 = vpop.f32.mrb[0].mxu0
        %v6978 = vadd.f32 %v6584, %v6977
        %6979 = vmatprep.mubr.bf16.mxu0 %v6496
        %6980 = vmatmul.mubr.bf16.gmra.mrb[0].mxu0 %v6495
        %v6981 = vpop.f32.mrb[0].mxu0
        %v6982 = vadd.f32 %v6580, %v6981
        %v6983 = vpop.f32.mrb[0].mxu0
        %v6984 = vadd.f32 %v6584, %v6983
        %v6985 = vpop.f32.mrb[0].mxu0
        %v6986 = vadd.f32 %v6580, %v6985
        %v6987 = vpop.f32.mrb[0].mxu0
        %v6988 = vadd.f32 %v6584, %v6987
        %6989 = vmatprep.mubr.bf16.mxu0 %v6500
        %6990 = vmatmul.mubr.bf16.gmra.mrb[0].mxu0 %v6499
        %v6991 = vpop.f32.mrb[0].mxu0
        %v6992 = vadd.f32 %v6580, %v6991
        %v6993 = vpop.f32.mrb[0].mxu0
        %v6994 = vadd.f32 %v6584, %v6993
        %v6995 = vpop.f32.mrb[0].mxu0
        %v6996 = vadd.f32 %v6580, %v6995
        %v6997 = vpop.f32.mrb[0].mxu0
        %v6998 = vadd.f32 %v6584, %v6997
        %6999 = vmatprep.mubr.bf16.mxu0 %v6504
        %7000 = vmatmul.mubr.bf16.gmra.mrb[0].mxu0 %v6503
        %v7001 = vpop.f32.mrb[0].mxu0
        %v7002 = vadd.f32 %v6580, %v7001
        %v7003 = vpop.f32.mrb[0].mxu0
        %v7004 = vadd.f32 %v6584, %v7003
        %v7005 = vpop.f32.mrb[0].mxu0
        %v7006 = vadd.f32 %v6580, %v7005
        %v7007 = vpop.f32.mrb[0].mxu0
        %v7008 = vadd.f32 %v6584, %v7007
        %7009 = vmatprep.mubr.bf16.mxu0 %v6508
        %7010 = vmatmul.mubr.bf16.gmra.mrb[0].mxu0 %v6507
        %v7011 = vpop.f32.mrb[0].mxu0
        %v7012 = vadd.f32 %v6580, %v7011
        %v7013 = vpop.f32.mrb[0].mxu0
        %v7014 = vadd.f32 %v6584, %v7013
        %v7015 = vpop.f32.mrb[0].mxu0
        %v7016 = vadd.f32 %v6580, %v7015
        %v7017 = vpop.f32.mrb[0].mxu0
        %v7018 = vadd.f32 %v6584, %v7017
        %7019 = vdwg.mxu0
        %7020 = vmatprep.subr.bf16.mxu0 %v6812
        %7021 = vmatpush1.bf16.msra.mxu0 %v6811
        %7022 = vmatprep.subr.bf16.mxu0 %v6814
        %7023 = vmatpush1.bf16.msra.mxu0 %v6813
        %7024 = vmatprep.subr.bf16.mxu0 %v6816
        %7025 = vmatpush1.bf16.msra.mxu0 %v6815
        %7026 = vmatprep.subr.bf16.mxu0 %v6818
        %7027 = vmatpush1.bf16.msra.mxu0 %v6817
        %7028 = vmatprep.subr.bf16.mxu0 %v6820
        %7029 = vmatpush1.bf16.msra.mxu0 %v6819
        %7030 = vmatprep.subr.bf16.mxu0 %v6822
        %7031 = vmatpush1.bf16.msra.mxu0 %v6821
        %7032 = vmatprep.subr.bf16.mxu0 %v6824
        %7033 = vmatpush1.bf16.msra.mxu0 %v6823
        %7034 = vmatprep.subr.bf16.mxu0 %v6826
        %7035 = vmatpush1.bf16.msra.mxu0 %v6825
        %7036 = vmatprep.subr.bf16.mxu0 %v6828
        %7037 = vmatpush1.bf16.msra.mxu0 %v6827
        %7038 = vmatprep.subr.bf16.mxu0 %v6830
        %7039 = vmatpush1.bf16.msra.mxu0 %v6829
        %7040 = vmatprep.subr.bf16.mxu0 %v6832
        %7041 = vmatpush1.bf16.msra.mxu0 %v6831
        %7042 = vmatprep.subr.bf16.mxu0 %v6834
        %7043 = vmatpush1.bf16.msra.mxu0 %v6833
        %7044 = vmatprep.subr.bf16.mxu0 %v6836
        %7045 = vmatpush1.bf16.msra.mxu0 %v6835
        %7046 = vmatprep.subr.bf16.mxu0 %v6838
        %7047 = vmatpush1.bf16.msra.mxu0 %v6837
        %7048 = vmatprep.subr.bf16.mxu0 %v6840
        %7049 = vmatpush1.bf16.msra.mxu0 %v6839
        %7050 = vmatprep.subr.bf16.mxu0 %v6842
        %7051 = vmatpush1.bf16.msra.mxu0 %v6841
        %7052 = vmatprep.mubr.bf16.mxu0 %v6482
        %7053 = vmatmul.mubr.bf16.gmra.mrb[0].mxu0 %v6481
        %v7054 = vpop.f32.mrb[0].mxu0
        %v7055 = vadd.f32 %v6942, %v7054
        %v7056 = vpop.f32.mrb[0].mxu0
        %v7057 = vadd.f32 %v6944, %v7056
        %v7058 = vpop.f32.mrb[0].mxu0
        %v7059 = vadd.f32 %v6946, %v7058
        %v7060 = vpop.f32.mrb[0].mxu0
        %v7061 = vadd.f32 %v6948, %v7060
        %7062 = vmatprep.mubr.bf16.mxu0 %v6486
        %7063 = vmatmul.mubr.bf16.gmra.mrb[0].mxu0 %v6485
        %v7064 = vpop.f32.mrb[0].mxu0
        %v7065 = vadd.f32 %v6952, %v7064
        %v7066 = vpop.f32.mrb[0].mxu0
        %v7067 = vadd.f32 %v6954, %v7066
        %v7068 = vpop.f32.mrb[0].mxu0
        %v7069 = vadd.f32 %v6956, %v7068
        %v7070 = vpop.f32.mrb[0].mxu0
        %v7071 = vadd.f32 %v6958, %v7070
        %7072 = vmatprep.mubr.bf16.mxu0 %v6490
        %7073 = vmatmul.mubr.bf16.gmra.mrb[0].mxu0 %v6489
        %v7074 = vpop.f32.mrb[0].mxu0
        %v7075 = vadd.f32 %v6962, %v7074
        %v7076 = vpop.f32.mrb[0].mxu0
        %v7077 = vadd.f32 %v6964, %v7076
        %v7078 = vpop.f32.mrb[0].mxu0
        %v7079 = vadd.f32 %v6966, %v7078
        %v7080 = vpop.f32.mrb[0].mxu0
        %v7081 = vadd.f32 %v6968, %v7080
        %7082 = vmatprep.mubr.bf16.mxu0 %v6494
        %7083 = vmatmul.mubr.bf16.gmra.mrb[0].mxu0 %v6493
        %v7084 = vpop.f32.mrb[0].mxu0
        %v7085 = vadd.f32 %v6972, %v7084
        %v7086 = vpop.f32.mrb[0].mxu0
        %v7087 = vadd.f32 %v6974, %v7086
        %v7088 = vpop.f32.mrb[0].mxu0
        %v7089 = vadd.f32 %v6976, %v7088
        %v7090 = vpop.f32.mrb[0].mxu0
        %v7091 = vadd.f32 %v6978, %v7090
        %7092 = vmatprep.mubr.bf16.mxu0 %v6498
        %7093 = vmatmul.mubr.bf16.gmra.mrb[0].mxu0 %v6497
        %v7094 = vpop.f32.mrb[0].mxu0
        %v7095 = vadd.f32 %v6982, %v7094
        %v7096 = vpop.f32.mrb[0].mxu0
        %v7097 = vadd.f32 %v6984, %v7096
        %v7098 = vpop.f32.mrb[0].mxu0
        %v7099 = vadd.f32 %v6986, %v7098
        %v7100 = vpop.f32.mrb[0].mxu0
        %v7101 = vadd.f32 %v6988, %v7100
        %7102 = vmatprep.mubr.bf16.mxu0 %v6502
        %7103 = vmatmul.mubr.bf16.gmra.mrb[0].mxu0 %v6501
        %v7104 = vpop.f32.mrb[0].mxu0
        %v7105 = vadd.f32 %v6992, %v7104
        %v7106 = vpop.f32.mrb[0].mxu0
        %v7107 = vadd.f32 %v6994, %v7106
        %v7108 = vpop.f32.mrb[0].mxu0
        %v7109 = vadd.f32 %v6996, %v7108
        %v7110 = vpop.f32.mrb[0].mxu0
        %v7111 = vadd.f32 %v6998, %v7110
        %7112 = vmatprep.mubr.bf16.mxu0 %v6506
        %7113 = vmatmul.mubr.bf16.gmra.mrb[0].mxu0 %v6505
        %v7114 = vpop.f32.mrb[0].mxu0
        %v7115 = vadd.f32 %v7002, %v7114
        %v7116 = vpop.f32.mrb[0].mxu0
        %v7117 = vadd.f32 %v7004, %v7116
        %v7118 = vpop.f32.mrb[0].mxu0
        %v7119 = vadd.f32 %v7006, %v7118
        %v7120 = vpop.f32.mrb[0].mxu0
        %v7121 = vadd.f32 %v7008, %v7120
        %7122 = vmatprep.mubr.bf16.mxu0 %v6510
        %7123 = vmatmul.mubr.bf16.gmra.mrb[0].mxu0 %v6509
        %v7124 = vpop.f32.mrb[0].mxu0
        %v7125 = vadd.f32 %v7012, %v7124
        %v7126 = vpop.f32.mrb[0].mxu0
        %v7127 = vadd.f32 %v7014, %v7126
        %v7128 = vpop.f32.mrb[0].mxu0
        %v7129 = vadd.f32 %v7016, %v7128
        %v7130 = vpop.f32.mrb[0].mxu0
        %v7131 = vadd.f32 %v7018, %v7130
        %7132 = vdwg.mxu0
        %v7133 = vmax.f32 %v7055, 0.0
        %v7134 = vmax.f32 %v7057, 0.0
        %v7135 = vmax.f32 %v7059, 0.0
        %v7136 = vmax.f32 %v7061, 0.0
        %v7137 = vmax.f32 %v7065, 0.0
        %v7138 = vmax.f32 %v7067, 0.0
        %v7139 = vmax.f32 %v7069, 0.0
        %v7140 = vmax.f32 %v7071, 0.0
        %v7141 = vmax.f32 %v7075, 0.0
        %v7142 = vmax.f32 %v7077, 0.0
        %v7143 = vmax.f32 %v7079, 0.0
        %v7144 = vmax.f32 %v7081, 0.0
        %v7145 = vmax.f32 %v7085, 0.0
        %v7146 = vmax.f32 %v7087, 0.0
        %v7147 = vmax.f32 %v7089, 0.0
        %v7148 = vmax.f32 %v7091, 0.0
        %v7149 = vmax.f32 %v7095, 0.0
        %v7150 = vmax.f32 %v7097, 0.0
        %v7151 = vmax.f32 %v7099, 0.0
        %v7152 = vmax.f32 %v7101, 0.0
        %v7153 = vmax.f32 %v7105, 0.0
        %v7154 = vmax.f32 %v7107, 0.0
        %v7155 = vmax.f32 %v7109, 0.0
        %v7156 = vmax.f32 %v7111, 0.0
        %v7157 = vmax.f32 %v7115, 0.0
        %v7158 = vmax.f32 %v7117, 0.0
        %v7159 = vmax.f32 %v7119, 0.0
        %v7160 = vmax.f32 %v7121, 0.0
        %v7161 = vmax.f32 %v7125, 0.0
        %v7162 = vmax.f32 %v7127, 0.0
        %v7163 = vmax.f32 %v7129, 0.0
        %v7164 = vmax.f32 %v7131, 0.0
        %v7165 = vpack.c.bf16 %v7135, %v7133
        %v7166 = vpack.c.bf16 %v7136, %v7134
        %v7167 = vpack.c.bf16 %v7139, %v7137
        %v7168 = vpack.c.bf16 %v7140, %v7138
        %v7169 = vpack.c.bf16 %v7143, %v7141
        %v7170 = vpack.c.bf16 %v7144, %v7142
        %v7171 = vpack.c.bf16 %v7147, %v7145
        %v7172 = vpack.c.bf16 %v7148, %v7146
        %v7173 = vpack.c.bf16 %v7151, %v7149
        %v7174 = vpack.c.bf16 %v7152, %v7150
        %v7175 = vpack.c.bf16 %v7155, %v7153
        %v7176 = vpack.c.bf16 %v7156, %v7154
        %v7177 = vpack.c.bf16 %v7159, %v7157
        %v7178 = vpack.c.bf16 %v7160, %v7158
        %v7179 = vpack.c.bf16 %v7163, %v7161
        %v7180 = vpack.c.bf16 %v7164, %v7162
        %v7181 = vld [vmem:[#allocation28] sm:$0xf]
        %v7182 = vld [vmem:[#allocation28 + $0x4] sm:$0xf]
        %v7183 = vld [vmem:[#allocation28 + $0x8] sm:$0xf]
        %v7184 = vld [vmem:[#allocation28 + $0xc] sm:$0xf]
        %v7185 = vld [vmem:[#allocation28 + $0x10] sm:$0xf]
        %v7186 = vld [vmem:[#allocation28 + $0x14] sm:$0xf]
        %v7187 = vld [vmem:[#allocation28 + $0x18] sm:$0xf]
        %v7188 = vld [vmem:[#allocation28 + $0x1c] sm:$0xf]
        %v7189 = vld [vmem:[#allocation28 + $0x20] sm:$0xf]
        %v7190 = vld [vmem:[#allocation28 + $0x24] sm:$0xf]
        %v7191 = vld [vmem:[#allocation28 + $0x28] sm:$0xf]
        %v7192 = vld [vmem:[#allocation28 + $0x2c] sm:$0xf]
        %v7193 = vld [vmem:[#allocation28 + $0x30] sm:$0xf]
        %v7194 = vld [vmem:[#allocation28 + $0x34] sm:$0xf]
        %v7195 = vld [vmem:[#allocation28 + $0x38] sm:$0xf]
        %v7196 = vld [vmem:[#allocation28 + $0x3c] sm:$0xf]
        %v7197 = vld [vmem:[#allocation28 + $0x40] sm:$0xf]
        %v7198 = vld [vmem:[#allocation28 + $0x44] sm:$0xf]
        %v7199 = vld [vmem:[#allocation28 + $0x48] sm:$0xf]
        %v7200 = vld [vmem:[#allocation28 + $0x4c] sm:$0xf]
        %v7201 = vld [vmem:[#allocation28 + $0x50] sm:$0xf]
        %v7202 = vld [vmem:[#allocation28 + $0x54] sm:$0xf]
        %v7203 = vld [vmem:[#allocation28 + $0x58] sm:$0xf]
        %v7204 = vld [vmem:[#allocation28 + $0x5c] sm:$0xf]
        %v7205 = vld [vmem:[#allocation28 + $0x60] sm:$0xf]
        %v7206 = vld [vmem:[#allocation28 + $0x64] sm:$0xf]
        %v7207 = vld [vmem:[#allocation28 + $0x68] sm:$0xf]
        %v7208 = vld [vmem:[#allocation28 + $0x6c] sm:$0xf]
        %v7209 = vld [vmem:[#allocation28 + $0x70] sm:$0xf]
        %v7210 = vld [vmem:[#allocation28 + $0x74] sm:$0xf]
        %v7211 = vld [vmem:[#allocation28 + $0x78] sm:$0xf]
        %v7212 = vld [vmem:[#allocation28 + $0x7c] sm:$0xf]
        %v7213 = vld [vmem:[%s26] sm:$0x1]
        %v7215 = vlaneseq
        %v7216 = vshrl.u32 %v7215, 7
        %v7217 = vsub.s32 0, %v7216
        %v7218 = vrot.slane %v7213, %v7217
        %v7252 = vunpack.c.l.b16 %v7181
        %v7253 = vunpack.c.l.b16 %v7182
        %v7254 = vunpack.c.l.b16 %v7183
        %v7255 = vunpack.c.l.b16 %v7184
        %v7256 = vunpack.c.l.b16 %v7185
        %v7257 = vunpack.c.l.b16 %v7186
        %v7258 = vunpack.c.l.b16 %v7187
        %v7259 = vunpack.c.l.b16 %v7188
        %v7260 = vunpack.c.l.b16 %v7189
        %v7261 = vunpack.c.l.b16 %v7190
        %v7262 = vunpack.c.l.b16 %v7191
        %v7263 = vunpack.c.l.b16 %v7192
        %v7264 = vunpack.c.l.b16 %v7193
        %v7265 = vunpack.c.l.b16 %v7194
        %v7266 = vunpack.c.l.b16 %v7195
        %v7267 = vunpack.c.l.b16 %v7196
        %v7268 = vunpack.c.l.b16 %v7197
        %v7269 = vunpack.c.l.b16 %v7198
        %v7270 = vunpack.c.l.b16 %v7199
        %v7271 = vunpack.c.l.b16 %v7200
        %v7272 = vunpack.c.l.b16 %v7201
        %v7273 = vunpack.c.l.b16 %v7202
        %v7274 = vunpack.c.l.b16 %v7203
        %v7275 = vunpack.c.l.b16 %v7204
        %v7276 = vunpack.c.l.b16 %v7205
        %v7277 = vunpack.c.l.b16 %v7206
        %v7278 = vunpack.c.l.b16 %v7207
        %v7279 = vunpack.c.l.b16 %v7208
        %v7280 = vunpack.c.l.b16 %v7209
        %v7281 = vunpack.c.l.b16 %v7210
        %v7282 = vunpack.c.l.b16 %v7211
        %v7283 = vunpack.c.l.b16 %v7212
        %v7284 = vpack.c.b16 %v7253, %v7252
        %v7285 = vpack.c.b16 %v7255, %v7254
        %v7286 = vpack.c.b16 %v7257, %v7256
        %v7287 = vpack.c.b16 %v7259, %v7258
        %v7288 = vpack.c.b16 %v7261, %v7260
        %v7289 = vpack.c.b16 %v7263, %v7262
        %v7290 = vpack.c.b16 %v7265, %v7264
        %v7291 = vpack.c.b16 %v7267, %v7266
        %v7292 = vpack.c.b16 %v7269, %v7268
        %v7293 = vpack.c.b16 %v7271, %v7270
        %v7294 = vpack.c.b16 %v7273, %v7272
        %v7295 = vpack.c.b16 %v7275, %v7274
        %v7296 = vpack.c.b16 %v7277, %v7276
        %v7297 = vpack.c.b16 %v7279, %v7278
        %v7298 = vpack.c.b16 %v7281, %v7280
        %v7299 = vpack.c.b16 %v7283, %v7282
        %7316 = vmatprep.subr.bf16.mxu0 0
        %7317 = vmatpush1.bf16.msra.mxu0 %v7284
        %7318 = vmatprep.subr.bf16.mxu0 0
        %7319 = vmatpush1.bf16.msra.mxu0 %v7285
        %7320 = vmatprep.subr.bf16.mxu0 0
        %7321 = vmatpush1.bf16.msra.mxu0 %v7286
        %7322 = vmatprep.subr.bf16.mxu0 0
        %7323 = vmatpush1.bf16.msra.mxu0 %v7287
        %7324 = vmatprep.subr.bf16.mxu0 0
        %7325 = vmatpush1.bf16.msra.mxu0 %v7288
        %7326 = vmatprep.subr.bf16.mxu0 0
        %7327 = vmatpush1.bf16.msra.mxu0 %v7289
        %7328 = vmatprep.subr.bf16.mxu0 0
        %7329 = vmatpush1.bf16.msra.mxu0 %v7290
        %7330 = vmatprep.subr.bf16.mxu0 0
        %7331 = vmatpush1.bf16.msra.mxu0 %v7291
        %7332 = vmatprep.subr.bf16.mxu0 0
        %7333 = vmatpush1.bf16.msra.mxu0 %v7292
        %7334 = vmatprep.subr.bf16.mxu0 0
        %7335 = vmatpush1.bf16.msra.mxu0 %v7293
        %7336 = vmatprep.subr.bf16.mxu0 0
        %7337 = vmatpush1.bf16.msra.mxu0 %v7294
        %7338 = vmatprep.subr.bf16.mxu0 0
        %7339 = vmatpush1.bf16.msra.mxu0 %v7295
        %7340 = vmatprep.subr.bf16.mxu0 0
        %7341 = vmatpush1.bf16.msra.mxu0 %v7296
        %7342 = vmatprep.subr.bf16.mxu0 0
        %7343 = vmatpush1.bf16.msra.mxu0 %v7297
        %7344 = vmatprep.subr.bf16.mxu0 0
        %7345 = vmatpush1.bf16.msra.mxu0 %v7298
        %7346 = vmatprep.subr.bf16.mxu0 0
        %7347 = vmatpush1.bf16.msra.mxu0 %v7299
        %7348 = vmatprep.mubr.bf16.mxu0 %v7166
        %7349 = vmatmul.mubr.bf16.gmra.mrb[0].mxu0 %v7165
        %v7350 = vpop.f32.mrb[0].mxu0
        %v7351 = vadd.f32 %v7218, %v7350
        %v7352 = vpop.f32.mrb[0].mxu0
        %v7353 = vpop.f32.mrb[0].mxu0
        %v7354 = vadd.f32 %v7218, %v7353
        %v7355 = vpop.f32.mrb[0].mxu0
        %7356 = vmatprep.mubr.bf16.mxu0 %v7168
        %7357 = vmatmul.mubr.bf16.gmra.mrb[0].mxu0 %v7167
        %v7358 = vpop.f32.mrb[0].mxu0
        %v7359 = vadd.f32 %v7218, %v7358
        %v7360 = vpop.f32.mrb[0].mxu0
        %v7361 = vpop.f32.mrb[0].mxu0
        %v7362 = vadd.f32 %v7218, %v7361
        %v7363 = vpop.f32.mrb[0].mxu0
        %7364 = vmatprep.mubr.bf16.mxu0 %v7170
        %7365 = vmatmul.mubr.bf16.gmra.mrb[0].mxu0 %v7169
        %v7366 = vpop.f32.mrb[0].mxu0
        %v7367 = vadd.f32 %v7218, %v7366
        %v7368 = vpop.f32.mrb[0].mxu0
        %v7369 = vpop.f32.mrb[0].mxu0
        %v7370 = vadd.f32 %v7218, %v7369
        %v7371 = vpop.f32.mrb[0].mxu0
        %7372 = vmatprep.mubr.bf16.mxu0 %v7172
        %7373 = vmatmul.mubr.bf16.gmra.mrb[0].mxu0 %v7171
        %v7374 = vpop.f32.mrb[0].mxu0
        %v7375 = vadd.f32 %v7218, %v7374
        %v7376 = vpop.f32.mrb[0].mxu0
        %v7377 = vpop.f32.mrb[0].mxu0
        %v7378 = vadd.f32 %v7218, %v7377
        %v7379 = vpop.f32.mrb[0].mxu0
        %7380 = vmatprep.mubr.bf16.mxu0 %v7174
        %7381 = vmatmul.mubr.bf16.gmra.mrb[0].mxu0 %v7173
        %v7382 = vpop.f32.mrb[0].mxu0
        %v7383 = vadd.f32 %v7218, %v7382
        %v7384 = vpop.f32.mrb[0].mxu0
        %v7385 = vpop.f32.mrb[0].mxu0
        %v7386 = vadd.f32 %v7218, %v7385
        %v7387 = vpop.f32.mrb[0].mxu0
        %7388 = vmatprep.mubr.bf16.mxu0 %v7176
        %7389 = vmatmul.mubr.bf16.gmra.mrb[0].mxu0 %v7175
        %v7390 = vpop.f32.mrb[0].mxu0
        %v7391 = vadd.f32 %v7218, %v7390
        %v7392 = vpop.f32.mrb[0].mxu0
        %v7393 = vpop.f32.mrb[0].mxu0
        %v7394 = vadd.f32 %v7218, %v7393
        %v7395 = vpop.f32.mrb[0].mxu0
        %7396 = vmatprep.mubr.bf16.mxu0 %v7178
        %7397 = vmatmul.mubr.bf16.gmra.mrb[0].mxu0 %v7177
        %v7398 = vpop.f32.mrb[0].mxu0
        %v7399 = vadd.f32 %v7218, %v7398
        %v7400 = vpop.f32.mrb[0].mxu0
        %v7401 = vpop.f32.mrb[0].mxu0
        %v7402 = vadd.f32 %v7218, %v7401
        %v7403 = vpop.f32.mrb[0].mxu0
        %7404 = vmatprep.mubr.bf16.mxu0 %v7180
        %7405 = vmatmul.mubr.bf16.gmra.mrb[0].mxu0 %v7179
        %v7406 = vpop.f32.mrb[0].mxu0
        %v7407 = vadd.f32 %v7218, %v7406
        %v7408 = vpop.f32.mrb[0].mxu0
        %v7409 = vpop.f32.mrb[0].mxu0
        %v7410 = vadd.f32 %v7218, %v7409
        %v7411 = vpop.f32.mrb[0].mxu0
        %7412 = vdwg.mxu0
        %7413 = vst [vmem:[%s942] sm:$0xff] %v7351
        %7414 = vst [vmem:[%s942 + $0x8] sm:$0xff] %v7354
        %7415 = vst [vmem:[%s942 + $0x10] sm:$0xff] %v7359
        %7416 = vst [vmem:[%s942 + $0x18] sm:$0xff] %v7362
        %7417 = vst [vmem:[%s942 + $0x20] sm:$0xff] %v7367
        %7418 = vst [vmem:[%s942 + $0x28] sm:$0xff] %v7370
        %7419 = vst [vmem:[%s942 + $0x30] sm:$0xff] %v7375
        %7420 = vst [vmem:[%s942 + $0x38] sm:$0xff] %v7378
        %7421 = vst [vmem:[%s942 + $0x40] sm:$0xff] %v7383
        %7422 = vst [vmem:[%s942 + $0x48] sm:$0xff] %v7386
        %7423 = vst [vmem:[%s942 + $0x50] sm:$0xff] %v7391
        %7424 = vst [vmem:[%s942 + $0x58] sm:$0xff] %v7394
        %7425 = vst [vmem:[%s942 + $0x60] sm:$0xff] %v7399
        %7426 = vst [vmem:[%s942 + $0x68] sm:$0xff] %v7402
        %7427 = vst [vmem:[%s942 + $0x70] sm:$0xff] %v7407
        %7428 = vst [vmem:[%s942 + $0x78] sm:$0xff] %v7410
        %s7429 = smul.u32 16, %s46
        %p7430 = scmp.lt.s32.totalorder %s7429, 31
        %s7431 = scalar_select %p7430, %s7429, 31
        %s7432 = smul.addr %s7431, 8
        %s7433 = scalar_lea.vmem %s27, %s7432
        // Predicated region
        $region214: #{pointnet2_forward.1} parent=115 // pred_check
          %p7434 = pneg %p573
        $region215: #{pointnet2_forward.1} parent=115 // pred_check_branch
          %7436 = sbr.rel (%p7434) target = $region217
        $region216: #{pointnet2_forward.1} parent=115 // pred_region
          %s7437 = smul.u32 16, %s46
        $region217: #{pointnet2_forward.1} parent=115 // pred_fallthru
          _
      $region116: #{pointnet2_forward.1} parent=5 // pred_fallthru
        _
      %p7438 = scmp.le.s32.totalorder 2, %s41
      // Predicated region
      $region218: #{pointnet2_forward.1} parent=5 // pred_check
        %p7439 = pneg %p7438
      $region219: #{pointnet2_forward.1} parent=5 // pred_check_branch
        %7441 = sbr.rel (%p7439) target = $region221
      $region220: #{pointnet2_forward.1} parent=5 // pred_region
        %s7442 = ssub.s32 %s41, 2
        // Predicated region
        $region222: #{pointnet2_forward.1} parent=220 // pred_check
          %p7443 = pneg %p579
        $region223: #{pointnet2_forward.1} parent=220 // pred_check_branch
          %7445 = sbr.rel (%p7443) target = $region225
        $region224: #{pointnet2_forward.1} parent=220 // pred_region
          %s7446 = smul.u32 16, %s47
          %p7447 = scmp.lt.s32.totalorder %s7446, 31
          %s7448 = scalar_select %p7447, %s7446, 31
          %s7449 = smul.addr %s7448, 8
          %s7450 = scalar_lea.vmem %s27, %s7449
        $region225: #{pointnet2_forward.1} parent=220 // pred_fallthru
          _
      $region221: #{pointnet2_forward.1} parent=5 // pred_fallthru
        _
    $region6: #{pointnet2_forward.1} parent=1 // loop_footer
      %s45 = sadd.s32 1, %s41
    $region7: #{pointnet2_forward.1} parent=1 // loop_footer_branch
      %40 = sbr.rel target = $region3
    $region8: #{pointnet2_forward.1} parent=1 // loop_exit
      _
    %7451 = vsyncpa [#allocation7], 1
    %s7452 = scalar_lea.sflag [#allocation7], 1
    %7453 = vsyncpa %s7452, 1
    %7454 = vsyncpa [#allocation9], 1
    %7455 = vsyncpa [#allocation12], 1
    %7456 = vsyncpa [#allocation15], 1
    %7457 = vsyncpa [#allocation18], 1
    %7458 = vsyncpa [#allocation21], 1
    %7459 = vsyncpa [#allocation24], 1
    %7460 = vsyncpa [#allocation27], 1
  %7461 = vsyncmov [#allocation5]
  %s7462 = vpop.sfrf %7461
  %p7463 = scmp.eq.s32.totalorder %s7462, 0
  %p7464 = pneg %p7463
  %7466 = shalt.err (%p7464)
  %s7467 = scalar_lea.sflag [#allocation5], 1
  %7468 = vsyncmov %s7467
  %s7469 = vpop.sfrf %7468
  %p7470 = scmp.eq.s32.totalorder %s7469, 0
  %p7471 = pneg %p7470
  %7473 = shalt.err (%p7471)
  %s7474 = scalar_lea.sflag [#allocation5], 2
  %7475 = vsyncmov %s7474
  %s7476 = vpop.sfrf %7475
  %p7477 = scmp.eq.s32.totalorder %s7476, 0
  %p7478 = pneg %p7477
  %7480 = shalt.err (%p7478)

</llo_original>
